<compile_context>
chip_gen: v7x
topology: tpu7x:2x2x1
jax: 0.10.0
libtpu: 0.0.40
codegen_flags: <defaults>
</compile_context>

<pallas_src>
import functools
import math

import jax
import jax.numpy as jnp
from jax import lax
from jax.scipy.special import erf as _jax_erf
from jax.experimental import pallas as pl
from jax.experimental.pallas import tpu as pltpu

LN_EPS = 1e-5  # torch.nn.LayerNorm default eps

# f32 rational erf approximation (same polynomial XLA uses for f32 erf).
# Built only from mul/add/clamp/reciprocal so it lowers cleanly inside Mosaic.
# TODO(synk): exact lax.erf is not relied upon inside the kernel; this
# polynomial matches XLA's f32 erf to a few ulps.
_ERF_ALPHA = (-2.72614225801306e-10, 2.77068142495902e-08, -2.10102402082508e-06,
              -5.69250639462346e-05, -7.34990630326855e-04, -2.95459980854025e-03,
              -1.60960333262415e-02)
_ERF_BETA = (-1.45660718464996e-05, -2.13374055278905e-04, -1.68282697438203e-03,
             -7.37332916720468e-03, -1.42647390514189e-02)


def _erf_f32(x):
    x = jnp.clip(x, -4.0, 4.0)
    x2 = x * x
    p = x2 * _ERF_ALPHA[0] + _ERF_ALPHA[1]
    for c in _ERF_ALPHA[2:]:
        p = p * x2 + c
    q = x2 * _ERF_BETA[0] + _ERF_BETA[1]
    for c in _ERF_BETA[2:]:
        q = q * x2 + c
    # divide -> EUP approx reciprocal (VALU slot freed; q is bounded away from 0)
    return x * p * pl.reciprocal(q, approx=True)


def _gelu_exact(x):
    # x * 0.5 * (1 + erf(x / sqrt(2))) -- exact-erf GELU as in the reference.
    return x * 0.5 * (1.0 + _erf_f32(x * (1.0 / math.sqrt(2.0))))


def _layernorm(v, g, b):
    mu = jnp.mean(v, axis=-1, keepdims=True)
    c = v - mu
    var = jnp.mean(c * c, axis=-1, keepdims=True)
    return c * lax.rsqrt(var + LN_EPS) * g + b


# ----------------------------- fused Block kernel -----------------------------
def _block_kernel(x_ref, noise_ref, ns_ref, g1_ref, b1_ref,
                  wqkv_ref, bias_ref, wproj_ref, bp_ref,
                  g2_ref, b2_ref, w1_ref, b1f_ref, w2_ref, b2f_ref,
                  o_ref, *, num_heads, num_windows, window, scale):
    H, TW, N = num_heads, num_windows, window
    R, C = x_ref.shape                                  # R = TW * N tokens
    hd = C // H

    x0 = x_ref[...]                                     # (R, C) f32, lane-dense

    # ---- attention branch: LN1 -> +noise*strength -> fused QKV --------------
    h = _layernorm(x0, g1_ref[...], b1_ref[...])
    # Attention adds noise to its input (= norm1(x)): x + randn(B,N,1)*strength
    h = h + noise_ref[...] * ns_ref[0]                  # (R,1)*scalar broadcast

    # one lane-dense (R,C)@(C,3C) bf16 matmul; f32 accumulation
    qkv = jnp.dot(h.astype(jnp.bfloat16), wqkv_ref[...],
                  preferred_element_type=jnp.float32)   # (R, 3C) f32
    qkv_bf = qkv.astype(jnp.bfloat16)

    # ---- per-window, per-head attention core (tiny static unroll) -----------
    merged_rows = []
    for w in range(TW):
        r0 = w * N
        head_outs = []
        for hh in range(H):
            c0 = hh * hd
            q = qkv_bf[r0:r0 + N, c0:c0 + hd]                       # (N, hd)
            k = qkv_bf[r0:r0 + N, C + c0:C + c0 + hd]
            v = qkv_bf[r0:r0 + N, 2 * C + c0:2 * C + c0 + hd]
            s = lax.dot_general(q, k, (((1,), (1,)), ((), ())),
                                preferred_element_type=jnp.float32) * scale
            s = s + bias_ref[hh]                        # relative-position bias
            s = s - jnp.max(s, axis=-1, keepdims=True)  # softmax (f32 stats)
            p = jnp.exp(s)
            p = p * pl.reciprocal(jnp.sum(p, axis=-1, keepdims=True), approx=True)
            o = jnp.dot(p.astype(jnp.bfloat16), v,
                        preferred_element_type=jnp.float32)          # (N, hd)
            head_outs.append(o)
        merged_rows.append(jnp.concatenate(head_outs, axis=-1))      # (N, C)
    attn = jnp.concatenate(merged_rows, axis=0)                      # (R, C)

    # ---- single head-merge projection + bias + residual ---------------------
    x1 = jnp.dot(attn.astype(jnp.bfloat16), wproj_ref[...],
                 preferred_element_type=jnp.float32) + bp_ref[...] + x0

    # ---- mlp branch (reference returns 2*mlp(ln2(x1)); residual discarded) --
    h2 = _layernorm(x1, g2_ref[...], b2_ref[...])
    h2 = jnp.dot(h2.astype(jnp.bfloat16), w1_ref[...],
                 preferred_element_type=jnp.float32) + b1f_ref[...]
    h2 = _gelu_exact(h2)
    h2 = jnp.dot(h2.astype(jnp.bfloat16), w2_ref[...],
                 preferred_element_type=jnp.float32) + b2f_ref[...]
    o_ref[...] = h2 + h2                                # x = x + drop_path(x)


def block_forward_pallas(params, x, noise, *, num_heads, windows_per_step=None):
    """Fused Block forward. x: (M, N, C) windows, noise: (M, N, 1)."""
    M, N, C = x.shape
    H = num_heads
    hd = C // H
    hidden = params['fc1_w'].shape[1]
    scale = hd ** (-0.5)

    # Pick windows-per-step: biggest TW with TW*N <= 256 (MXU rows on v6e/v7x),
    # preferring an even grid length so v7x's 2 TensorCores both get work.
    if windows_per_step is None:
        cands = [tw for tw in range(1, M + 1) if M % tw == 0 and tw * N <= 256]
        if not cands:
            cands = [1]
        even = [tw for tw in cands if (M // tw) % 2 == 0]
        windows_per_step = max(even) if even else max(cands)
    TW = windows_per_step
    assert M % TW == 0
    G = M // TW
    R = TW * N

    x2 = x.reshape(M * N, C)
    noise2 = noise.reshape(M * N, 1)

    row_blk = lambda i: (i, 0)
    c2 = lambda i: (0, 0)
    c3 = lambda i: (0, 0, 0)

    flops = (2 * M * N * (C * 3 * C + C * C + 2 * C * hidden)
             + 4 * M * H * N * N * hd)
    transcendentals = M * H * N * N + M * N * hidden
    bytes_accessed = (2 * M * N * C * 4 + M * N * 4
                      + (C * 3 * C + C * C + 2 * C * hidden) * 2
                      + (H * N * N + 6 * C + hidden) * 4)

    out = pl.pallas_call(
        functools.partial(_block_kernel, num_heads=H, num_windows=TW,
                          window=N, scale=scale),
        grid=(G,),
        in_specs=[
            pl.BlockSpec((R, C), row_blk),              # x rows (TW windows)
            pl.BlockSpec((R, 1), row_blk),              # per-token noise
            pl.BlockSpec(memory_space=pltpu.MemorySpace.SMEM),  # noise_strength_1
            pl.BlockSpec((1, C), c2),                   # ln1 gamma
            pl.BlockSpec((1, C), c2),                   # ln1 beta
            pl.BlockSpec((C, 3 * C), c2),               # fused QKV weight (bf16)
            pl.BlockSpec((H, N, N), c3),                # precomputed rel-pos bias
            pl.BlockSpec((C, C), c2),                   # proj weight (bf16)
            pl.BlockSpec((1, C), c2),                   # proj bias
            pl.BlockSpec((1, C), c2),                   # ln2 gamma
            pl.BlockSpec((1, C), c2),                   # ln2 beta
            pl.BlockSpec((C, hidden), c2),              # fc1 W (bf16)
            pl.BlockSpec((1, hidden), c2),              # fc1 b
            pl.BlockSpec((hidden, C), c2),              # fc2 W (bf16)
            pl.BlockSpec((1, C), c2),                   # fc2 b
        ],
        out_specs=pl.BlockSpec((R, C), row_blk),
        out_shape=jax.ShapeDtypeStruct((M * N, C), jnp.float32),
        compiler_params=pltpu.CompilerParams(
            dimension_semantics=("parallel",)),         # windows independent
        cost_estimate=pl.CostEstimate(flops=flops,
                                      transcendentals=transcendentals,
                                      bytes_accessed=bytes_accessed),
    )(
        x2, noise2,
        params['noise_strength'].reshape(1),
        params['ln1_g'].reshape(1, C), params['ln1_b'].reshape(1, C),
        params['qkv_w_bf16'],
        params['attn_bias'],
        params['proj_w_bf16'],
        params['proj_b'].reshape(1, C),
        params['ln2_g'].reshape(1, C), params['ln2_b'].reshape(1, C),
        params['fc1_w_bf16'], params['fc1_b'].reshape(1, hidden),
        params['fc2_w_bf16'], params['fc2_b'].reshape(1, C),
    )
    return out.reshape(M, N, C)


# ------------------------- pure-JAX reference (torch math) -------------------
def block_reference(params, x, noise, *, num_heads):
    B, N, C = x.shape
    hd = C // num_heads
    scale = hd ** (-0.5)

    def ln(v, g, b):
        mu = v.mean(-1, keepdims=True)
        c = v - mu
        var = (c * c).mean(-1, keepdims=True)
        return c / jnp.sqrt(var + LN_EPS) * g + b

    h = ln(x, params['ln1_g'], params['ln1_b'])
    h = h + noise * params['noise_strength']
    qkv = h @ params['qkv_w']                                    # qkv_bias=False
    qkv = qkv.reshape(B, N, 3, num_heads, hd).transpose(2, 0, 3, 1, 4)
    q, k, v = qkv[0], qkv[1], qkv[2]
    s = jnp.einsum('bhqd,bhkd->bhqk', q, k) * scale + params['attn_bias'][None]
    p = jax.nn.softmax(s, axis=-1)
    a = jnp.einsum('bhqk,bhkd->bhqd', p, v)
    a = a.transpose(0, 2, 1, 3).reshape(B, N, C)
    a = a @ params['proj_w'] + params['proj_b']
    x1 = a + x

    h2 = ln(x1, params['ln2_g'], params['ln2_b'])
    h2 = h2 @ params['fc1_w'] + params['fc1_b']
    h2 = h2 * 0.5 * (1.0 + _jax_erf(h2 / math.sqrt(2.0)))
    h2 = h2 @ params['fc2_w'] + params['fc2_b']
    return h2 + h2


# ------------------------------- parameter init -------------------------------
def init_block_params(key, dim, num_heads, window_size, mlp_ratio=4.0):
    hidden = int(dim * mlp_ratio)
    ks = jax.random.split(key, 8)

    def w(k, i, o):
        return jax.random.normal(k, (i, o), jnp.float32) * 0.02

    qkv_w = w(ks[0], dim, 3 * dim)                               # qkv_bias=False
    proj_w = w(ks[1], dim, dim)
    proj_b = jax.random.normal(ks[2], (dim,), jnp.float32) * 0.02
    rel_table = jax.random.normal(ks[3], (2 * window_size - 1, num_heads),
                                  jnp.float32) * 0.02
    fc1_w = w(ks[4], dim, hidden)
    fc1_b = jax.random.normal(ks[5], (hidden,), jnp.float32) * 0.02
    fc2_w = w(ks[6], hidden, dim)
    fc2_b = jax.random.normal(ks[7], (dim,), jnp.float32) * 0.02
    # noise_strength_1 initializes to 0 in the module; use a nonzero value so
    # the noise path (needed for trained checkpoints) is actually exercised.
    noise_strength = jnp.array(0.05, jnp.float32)

    # Precompute the relative-position bias (heads, ws, ws) once at init
    # (removes a gather + transpose from every forward).
    idx = jnp.arange(window_size)
    rel = idx[:, None] - idx[None, :] + (window_size - 1)
    attn_bias = jnp.transpose(rel_table[rel], (2, 0, 1))

    return dict(
        ln1_g=jnp.ones((dim,), jnp.float32), ln1_b=jnp.zeros((dim,), jnp.float32),
        ln2_g=jnp.ones((dim,), jnp.float32), ln2_b=jnp.zeros((dim,), jnp.float32),
        qkv_w=qkv_w, proj_w=proj_w, proj_b=proj_b,
        attn_bias=attn_bias,
        fc1_w=fc1_w, fc1_b=fc1_b, fc2_w=fc2_w, fc2_b=fc2_b,
        noise_strength=noise_strength,
        # bf16 copies stored in HBM for the MXU (f32 accumulation in-kernel):
        qkv_w_bf16=qkv_w.astype(jnp.bfloat16),
        proj_w_bf16=proj_w.astype(jnp.bfloat16),
        fc1_w_bf16=fc1_w.astype(jnp.bfloat16),
        fc2_w_bf16=fc2_w.astype(jnp.bfloat16),
    )


# ------------------------------------ main ------------------------------------
if __name__ == "__main__":
    # Small shapes consistent with the Generator's use of Block:
    # 8 windows of 32 tokens, embed dim 128, 4 heads, mlp_ratio 4.
    # (auto-tiling picks 4 windows / 128 tokens per grid step -> grid of 2.)
    M, N, C, HEADS = 8, 32, 128, 4

    key = jax.random.PRNGKey(0)
    kx, kn, kp = jax.random.split(key, 3)
    x = jax.random.normal(kx, (M, N, C), jnp.float32)
    # Stand-in for torch.randn([B, N, 1]) drawn inside Attention.forward.
    noise = jax.random.normal(kn, (M, N, 1), jnp.float32)
    params = init_block_params(kp, C, HEADS, N)

    fwd = jax.jit(functools.partial(block_forward_pallas, num_heads=HEADS))
    out = jax.block_until_ready(fwd(params, x, noise))

    ref = block_reference(params, x, noise, num_heads=HEADS)
    assert out.shape == (M, N, C), out.shape
    assert bool(jnp.all(jnp.isfinite(out)))
    max_err = float(jnp.max(jnp.abs(out - ref)))
    # bf16 MXU operands vs f32 reference weights -> loosened tolerance.
    assert max_err < 2e-2, max_err
    print("KERNEL_OK")
</pallas_src>

<mosaic_0001>
module attributes {stable_mosaic.version = 11 : i64} {
  func.func @_block_kernel(%arg0: i32, %arg1: memref<128x128xf32, #tpu.memory_space<vmem>>, %arg2: memref<128x1xf32, #tpu.memory_space<vmem>>, %arg3: memref<1xf32, #tpu.memory_space<smem>>, %arg4: memref<1x128xf32, #tpu.memory_space<vmem>>, %arg5: memref<1x128xf32, #tpu.memory_space<vmem>>, %arg6: memref<128x384xbf16, #tpu.memory_space<vmem>>, %arg7: memref<4x32x32xf32, #tpu.memory_space<vmem>>, %arg8: memref<128x128xbf16, #tpu.memory_space<vmem>>, %arg9: memref<1x128xf32, #tpu.memory_space<vmem>>, %arg10: memref<1x128xf32, #tpu.memory_space<vmem>>, %arg11: memref<1x128xf32, #tpu.memory_space<vmem>>, %arg12: memref<128x512xbf16, #tpu.memory_space<vmem>>, %arg13: memref<1x512xf32, #tpu.memory_space<vmem>>, %arg14: memref<512x128xbf16, #tpu.memory_space<vmem>>, %arg15: memref<1x128xf32, #tpu.memory_space<vmem>>, %arg16: memref<128x128xf32, #tpu.memory_space<vmem>>) attributes {dimension_semantics = [#tpu.dimension_semantics<parallel>], iteration_bounds = array<i64: 2>, scalar_prefetch = 0 : i64, scratch_operands = 0 : i64, tpu.core_type = #tpu.core_type<tc>, window_params = [{transform_indices = @transform_0, window_bounds = array<i64: 128, 128>}, {transform_indices = @transform_1, window_bounds = array<i64: 128, 1>}, {transform_indices = @transform_2, window_bounds = array<i64: 1>}, {pipeline_mode = #tpu.pipeline_mode<synchronous>, transform_indices = @transform_3, window_bounds = array<i64: 1, 128>}, {pipeline_mode = #tpu.pipeline_mode<synchronous>, transform_indices = @transform_4, window_bounds = array<i64: 1, 128>}, {pipeline_mode = #tpu.pipeline_mode<synchronous>, transform_indices = @transform_5, window_bounds = array<i64: 128, 384>}, {pipeline_mode = #tpu.pipeline_mode<synchronous>, transform_indices = @transform_6, window_bounds = array<i64: 4, 32, 32>}, {pipeline_mode = #tpu.pipeline_mode<synchronous>, transform_indices = @transform_7, window_bounds = array<i64: 128, 128>}, {pipeline_mode = #tpu.pipeline_mode<synchronous>, transform_indices = @transform_8, window_bounds = array<i64: 1, 128>}, {pipeline_mode = #tpu.pipeline_mode<synchronous>, transform_indices = @transform_9, window_bounds = array<i64: 1, 128>}, {pipeline_mode = #tpu.pipeline_mode<synchronous>, transform_indices = @transform_10, window_bounds = array<i64: 1, 128>}, {pipeline_mode = #tpu.pipeline_mode<synchronous>, transform_indices = @transform_11, window_bounds = array<i64: 128, 512>}, {pipeline_mode = #tpu.pipeline_mode<synchronous>, transform_indices = @transform_12, window_bounds = array<i64: 1, 512>}, {pipeline_mode = #tpu.pipeline_mode<synchronous>, transform_indices = @transform_13, window_bounds = array<i64: 512, 128>}, {pipeline_mode = #tpu.pipeline_mode<synchronous>, transform_indices = @transform_14, window_bounds = array<i64: 1, 128>}, {transform_indices = @transform_15, window_bounds = array<i64: 128, 128>}]} {
    %c0 = arith.constant 0 : index
    %c0_0 = arith.constant 0 : index
    %0 = vector.load %arg1[%c0, %c0_0] : memref<128x128xf32, #tpu.memory_space<vmem>>, vector<128x128xf32>
    %c0_1 = arith.constant 0 : index
    %c0_2 = arith.constant 0 : index
    %1 = vector.load %arg4[%c0_1, %c0_2] : memref<1x128xf32, #tpu.memory_space<vmem>>, vector<1x128xf32>
    %c0_3 = arith.constant 0 : index
    %c0_4 = arith.constant 0 : index
    %2 = vector.load %arg5[%c0_3, %c0_4] : memref<1x128xf32, #tpu.memory_space<vmem>>, vector<1x128xf32>
    %cst = arith.constant dense<0.000000e+00> : vector<128xf32>
    %3 = vector.multi_reduction <add>, %0, %cst [1] : vector<128x128xf32> to vector<128xf32>
    %4 = vector.shape_cast %3 : vector<128xf32> to vector<128x1xf32>
    %cst_5 = arith.constant 1.280000e+02 : f32
    %5 = vector.broadcast %cst_5 : f32 to vector<128x1xf32>
    %6 = arith.divf %4, %5 : vector<128x1xf32>
    %7 = vector.broadcast %6 : vector<128x1xf32> to vector<128x128xf32>
    %8 = arith.subf %0, %7 : vector<128x128xf32>
    %9 = arith.mulf %8, %8 : vector<128x128xf32>
    %cst_6 = arith.constant dense<0.000000e+00> : vector<128xf32>
    %10 = vector.multi_reduction <add>, %9, %cst_6 [1] : vector<128x128xf32> to vector<128xf32>
    %11 = vector.shape_cast %10 : vector<128xf32> to vector<128x1xf32>
    %cst_7 = arith.constant 1.280000e+02 : f32
    %12 = vector.broadcast %cst_7 : f32 to vector<128x1xf32>
    %13 = arith.divf %11, %12 : vector<128x1xf32>
    %cst_8 = arith.constant 9.99999974E-6 : f32
    %14 = vector.broadcast %cst_8 : f32 to vector<128x1xf32>
    %15 = arith.addf %13, %14 : vector<128x1xf32>
    %16 = math.rsqrt %15 : vector<128x1xf32>
    %17 = vector.broadcast %16 : vector<128x1xf32> to vector<128x128xf32>
    %18 = arith.mulf %8, %17 : vector<128x128xf32>
    %19 = vector.broadcast %1 : vector<1x128xf32> to vector<128x128xf32>
    %20 = arith.mulf %18, %19 : vector<128x128xf32>
    %21 = vector.broadcast %2 : vector<1x128xf32> to vector<128x128xf32>
    %22 = arith.addf %20, %21 : vector<128x128xf32>
    %c0_9 = arith.constant 0 : index
    %c0_10 = arith.constant 0 : index
    %23 = vector.load %arg2[%c0_9, %c0_10] : memref<128x1xf32, #tpu.memory_space<vmem>>, vector<128x1xf32>
    %c0_11 = arith.constant 0 : index
    %24 = memref.load %arg3[%c0_11] : memref<1xf32, #tpu.memory_space<smem>>
    %25 = vector.broadcast %24 : f32 to vector<128x1xf32>
    %26 = arith.mulf %23, %25 : vector<128x1xf32>
    %27 = vector.broadcast %26 : vector<128x1xf32> to vector<128x128xf32>
    %28 = arith.addf %22, %27 : vector<128x128xf32>
    %29 = arith.truncf %28 : vector<128x128xf32> to vector<128x128xbf16>
    %c0_12 = arith.constant 0 : index
    %c0_13 = arith.constant 0 : index
    %30 = vector.load %arg6[%c0_12, %c0_13] : memref<128x384xbf16, #tpu.memory_space<vmem>>, vector<128x384xbf16>
    %cst_14 = arith.constant dense<0.000000e+00> : vector<128x384xf32>
    %31 = tpu.matmul %29, %30, %cst_14 {dimension_numbers = #tpu.dot_dimension_numbers<[1], [0], [0], [1], [0, 0, 1, 1], [], []>} : vector<128x128xbf16>, vector<128x384xbf16>, vector<128x384xf32> -> vector<128x384xf32>
    %32 = arith.truncf %31 : vector<128x384xf32> to vector<128x384xbf16>
    %33 = vector.extract_strided_slice %32 {offsets = [0, 0], sizes = [32, 32], strides = [1, 1]} : vector<128x384xbf16> to vector<32x32xbf16>
    %34 = vector.extract_strided_slice %32 {offsets = [0, 128], sizes = [32, 32], strides = [1, 1]} : vector<128x384xbf16> to vector<32x32xbf16>
    %35 = vector.extract_strided_slice %32 {offsets = [0, 256], sizes = [32, 32], strides = [1, 1]} : vector<128x384xbf16> to vector<32x32xbf16>
    %cst_15 = arith.constant dense<0.000000e+00> : vector<32x32xf32>
    %36 = tpu.matmul %33, %34, %cst_15 {dimension_numbers = #tpu.dot_dimension_numbers<[1], [1], [0], [0], [0, 0, 1, 0], [], []>} : vector<32x32xbf16>, vector<32x32xbf16>, vector<32x32xf32> -> vector<32x32xf32>
    %cst_16 = arith.constant 0.176776692 : f32
    %37 = vector.broadcast %cst_16 : f32 to vector<32x32xf32>
    %38 = arith.mulf %36, %37 : vector<32x32xf32>
    %c0_17 = arith.constant 0 : index
    %c0_18 = arith.constant 0 : index
    %c0_19 = arith.constant 0 : index
    %39 = vector.load %arg7[%c0_17, %c0_18, %c0_19] : memref<4x32x32xf32, #tpu.memory_space<vmem>>, vector<1x32x32xf32>
    %40 = vector.shape_cast %39 : vector<1x32x32xf32> to vector<32x32xf32>
    %41 = arith.addf %38, %40 : vector<32x32xf32>
    %cst_20 = arith.constant dense<0xFF800000> : vector<32xf32>
    %42 = vector.multi_reduction <maximumf>, %41, %cst_20 [1] : vector<32x32xf32> to vector<32xf32>
    %43 = vector.shape_cast %42 : vector<32xf32> to vector<32x1xf32>
    %44 = vector.broadcast %43 : vector<32x1xf32> to vector<32x32xf32>
    %45 = arith.subf %41, %44 : vector<32x32xf32>
    %46 = math.exp %45 : vector<32x32xf32>
    %cst_21 = arith.constant dense<0.000000e+00> : vector<32xf32>
    %47 = vector.multi_reduction <add>, %46, %cst_21 [1] : vector<32x32xf32> to vector<32xf32>
    %48 = vector.shape_cast %47 : vector<32xf32> to vector<32x1xf32>
    %49 = tpu.reciprocal %48 {approx = true} : vector<32x1xf32> -> vector<32x1xf32>
    %50 = vector.broadcast %49 : vector<32x1xf32> to vector<32x32xf32>
    %51 = arith.mulf %46, %50 : vector<32x32xf32>
    %52 = arith.truncf %51 : vector<32x32xf32> to vector<32x32xbf16>
    %cst_22 = arith.constant dense<0.000000e+00> : vector<32x32xf32>
    %53 = tpu.matmul %52, %35, %cst_22 {dimension_numbers = #tpu.dot_dimension_numbers<[1], [0], [0], [1], [0, 0, 1, 1], [], []>} : vector<32x32xbf16>, vector<32x32xbf16>, vector<32x32xf32> -> vector<32x32xf32>
    %54 = vector.extract_strided_slice %32 {offsets = [0, 32], sizes = [32, 32], strides = [1, 1]} : vector<128x384xbf16> to vector<32x32xbf16>
    %55 = vector.extract_strided_slice %32 {offsets = [0, 160], sizes = [32, 32], strides = [1, 1]} : vector<128x384xbf16> to vector<32x32xbf16>
    %56 = vector.extract_strided_slice %32 {offsets = [0, 288], sizes = [32, 32], strides = [1, 1]} : vector<128x384xbf16> to vector<32x32xbf16>
    %cst_23 = arith.constant dense<0.000000e+00> : vector<32x32xf32>
    %57 = tpu.matmul %54, %55, %cst_23 {dimension_numbers = #tpu.dot_dimension_numbers<[1], [1], [0], [0], [0, 0, 1, 0], [], []>} : vector<32x32xbf16>, vector<32x32xbf16>, vector<32x32xf32> -> vector<32x32xf32>
    %cst_24 = arith.constant 0.176776692 : f32
    %58 = vector.broadcast %cst_24 : f32 to vector<32x32xf32>
    %59 = arith.mulf %57, %58 : vector<32x32xf32>
    %c1 = arith.constant 1 : index
    %c0_25 = arith.constant 0 : index
    %c0_26 = arith.constant 0 : index
    %60 = vector.load %arg7[%c1, %c0_25, %c0_26] : memref<4x32x32xf32, #tpu.memory_space<vmem>>, vector<1x32x32xf32>
    %61 = vector.shape_cast %60 : vector<1x32x32xf32> to vector<32x32xf32>
    %62 = arith.addf %59, %61 : vector<32x32xf32>
    %cst_27 = arith.constant dense<0xFF800000> : vector<32xf32>
    %63 = vector.multi_reduction <maximumf>, %62, %cst_27 [1] : vector<32x32xf32> to vector<32xf32>
    %64 = vector.shape_cast %63 : vector<32xf32> to vector<32x1xf32>
    %65 = vector.broadcast %64 : vector<32x1xf32> to vector<32x32xf32>
    %66 = arith.subf %62, %65 : vector<32x32xf32>
    %67 = math.exp %66 : vector<32x32xf32>
    %cst_28 = arith.constant dense<0.000000e+00> : vector<32xf32>
    %68 = vector.multi_reduction <add>, %67, %cst_28 [1] : vector<32x32xf32> to vector<32xf32>
    %69 = vector.shape_cast %68 : vector<32xf32> to vector<32x1xf32>
    %70 = tpu.reciprocal %69 {approx = true} : vector<32x1xf32> -> vector<32x1xf32>
    %71 = vector.broadcast %70 : vector<32x1xf32> to vector<32x32xf32>
    %72 = arith.mulf %67, %71 : vector<32x32xf32>
    %73 = arith.truncf %72 : vector<32x32xf32> to vector<32x32xbf16>
    %cst_29 = arith.constant dense<0.000000e+00> : vector<32x32xf32>
    %74 = tpu.matmul %73, %56, %cst_29 {dimension_numbers = #tpu.dot_dimension_numbers<[1], [0], [0], [1], [0, 0, 1, 1], [], []>} : vector<32x32xbf16>, vector<32x32xbf16>, vector<32x32xf32> -> vector<32x32xf32>
    %75 = vector.extract_strided_slice %32 {offsets = [0, 64], sizes = [32, 32], strides = [1, 1]} : vector<128x384xbf16> to vector<32x32xbf16>
    %76 = vector.extract_strided_slice %32 {offsets = [0, 192], sizes = [32, 32], strides = [1, 1]} : vector<128x384xbf16> to vector<32x32xbf16>
    %77 = vector.extract_strided_slice %32 {offsets = [0, 320], sizes = [32, 32], strides = [1, 1]} : vector<128x384xbf16> to vector<32x32xbf16>
    %cst_30 = arith.constant dense<0.000000e+00> : vector<32x32xf32>
    %78 = tpu.matmul %75, %76, %cst_30 {dimension_numbers = #tpu.dot_dimension_numbers<[1], [1], [0], [0], [0, 0, 1, 0], [], []>} : vector<32x32xbf16>, vector<32x32xbf16>, vector<32x32xf32> -> vector<32x32xf32>
    %cst_31 = arith.constant 0.176776692 : f32
    %79 = vector.broadcast %cst_31 : f32 to vector<32x32xf32>
    %80 = arith.mulf %78, %79 : vector<32x32xf32>
    %c2 = arith.constant 2 : index
    %c0_32 = arith.constant 0 : index
    %c0_33 = arith.constant 0 : index
    %81 = vector.load %arg7[%c2, %c0_32, %c0_33] : memref<4x32x32xf32, #tpu.memory_space<vmem>>, vector<1x32x32xf32>
    %82 = vector.shape_cast %81 : vector<1x32x32xf32> to vector<32x32xf32>
    %83 = arith.addf %80, %82 : vector<32x32xf32>
    %cst_34 = arith.constant dense<0xFF800000> : vector<32xf32>
    %84 = vector.multi_reduction <maximumf>, %83, %cst_34 [1] : vector<32x32xf32> to vector<32xf32>
    %85 = vector.shape_cast %84 : vector<32xf32> to vector<32x1xf32>
    %86 = vector.broadcast %85 : vector<32x1xf32> to vector<32x32xf32>
    %87 = arith.subf %83, %86 : vector<32x32xf32>
    %88 = math.exp %87 : vector<32x32xf32>
    %cst_35 = arith.constant dense<0.000000e+00> : vector<32xf32>
    %89 = vector.multi_reduction <add>, %88, %cst_35 [1] : vector<32x32xf32> to vector<32xf32>
    %90 = vector.shape_cast %89 : vector<32xf32> to vector<32x1xf32>
    %91 = tpu.reciprocal %90 {approx = true} : vector<32x1xf32> -> vector<32x1xf32>
    %92 = vector.broadcast %91 : vector<32x1xf32> to vector<32x32xf32>
    %93 = arith.mulf %88, %92 : vector<32x32xf32>
    %94 = arith.truncf %93 : vector<32x32xf32> to vector<32x32xbf16>
    %cst_36 = arith.constant dense<0.000000e+00> : vector<32x32xf32>
    %95 = tpu.matmul %94, %77, %cst_36 {dimension_numbers = #tpu.dot_dimension_numbers<[1], [0], [0], [1], [0, 0, 1, 1], [], []>} : vector<32x32xbf16>, vector<32x32xbf16>, vector<32x32xf32> -> vector<32x32xf32>
    %96 = vector.extract_strided_slice %32 {offsets = [0, 96], sizes = [32, 32], strides = [1, 1]} : vector<128x384xbf16> to vector<32x32xbf16>
    %97 = vector.extract_strided_slice %32 {offsets = [0, 224], sizes = [32, 32], strides = [1, 1]} : vector<128x384xbf16> to vector<32x32xbf16>
    %98 = vector.extract_strided_slice %32 {offsets = [0, 352], sizes = [32, 32], strides = [1, 1]} : vector<128x384xbf16> to vector<32x32xbf16>
    %cst_37 = arith.constant dense<0.000000e+00> : vector<32x32xf32>
    %99 = tpu.matmul %96, %97, %cst_37 {dimension_numbers = #tpu.dot_dimension_numbers<[1], [1], [0], [0], [0, 0, 1, 0], [], []>} : vector<32x32xbf16>, vector<32x32xbf16>, vector<32x32xf32> -> vector<32x32xf32>
    %cst_38 = arith.constant 0.176776692 : f32
    %100 = vector.broadcast %cst_38 : f32 to vector<32x32xf32>
    %101 = arith.mulf %99, %100 : vector<32x32xf32>
    %c3 = arith.constant 3 : index
    %c0_39 = arith.constant 0 : index
    %c0_40 = arith.constant 0 : index
    %102 = vector.load %arg7[%c3, %c0_39, %c0_40] : memref<4x32x32xf32, #tpu.memory_space<vmem>>, vector<1x32x32xf32>
    %103 = vector.shape_cast %102 : vector<1x32x32xf32> to vector<32x32xf32>
    %104 = arith.addf %101, %103 : vector<32x32xf32>
    %cst_41 = arith.constant dense<0xFF800000> : vector<32xf32>
    %105 = vector.multi_reduction <maximumf>, %104, %cst_41 [1] : vector<32x32xf32> to vector<32xf32>
    %106 = vector.shape_cast %105 : vector<32xf32> to vector<32x1xf32>
    %107 = vector.broadcast %106 : vector<32x1xf32> to vector<32x32xf32>
    %108 = arith.subf %104, %107 : vector<32x32xf32>
    %109 = math.exp %108 : vector<32x32xf32>
    %cst_42 = arith.constant dense<0.000000e+00> : vector<32xf32>
    %110 = vector.multi_reduction <add>, %109, %cst_42 [1] : vector<32x32xf32> to vector<32xf32>
    %111 = vector.shape_cast %110 : vector<32xf32> to vector<32x1xf32>
    %112 = tpu.reciprocal %111 {approx = true} : vector<32x1xf32> -> vector<32x1xf32>
    %113 = vector.broadcast %112 : vector<32x1xf32> to vector<32x32xf32>
    %114 = arith.mulf %109, %113 : vector<32x32xf32>
    %115 = arith.truncf %114 : vector<32x32xf32> to vector<32x32xbf16>
    %cst_43 = arith.constant dense<0.000000e+00> : vector<32x32xf32>
    %116 = tpu.matmul %115, %98, %cst_43 {dimension_numbers = #tpu.dot_dimension_numbers<[1], [0], [0], [1], [0, 0, 1, 1], [], []>} : vector<32x32xbf16>, vector<32x32xbf16>, vector<32x32xf32> -> vector<32x32xf32>
    %117 = tpu.concatenate %53, %74, %95, %116 in 1 : vector<32x32xf32>, vector<32x32xf32>, vector<32x32xf32>, vector<32x32xf32> -> vector<32x128xf32>
    %118 = vector.extract_strided_slice %32 {offsets = [32, 0], sizes = [32, 32], strides = [1, 1]} : vector<128x384xbf16> to vector<32x32xbf16>
    %119 = vector.extract_strided_slice %32 {offsets = [32, 128], sizes = [32, 32], strides = [1, 1]} : vector<128x384xbf16> to vector<32x32xbf16>
    %120 = vector.extract_strided_slice %32 {offsets = [32, 256], sizes = [32, 32], strides = [1, 1]} : vector<128x384xbf16> to vector<32x32xbf16>
    %cst_44 = arith.constant dense<0.000000e+00> : vector<32x32xf32>
    %121 = tpu.matmul %118, %119, %cst_44 {dimension_numbers = #tpu.dot_dimension_numbers<[1], [1], [0], [0], [0, 0, 1, 0], [], []>} : vector<32x32xbf16>, vector<32x32xbf16>, vector<32x32xf32> -> vector<32x32xf32>
    %cst_45 = arith.constant 0.176776692 : f32
    %122 = vector.broadcast %cst_45 : f32 to vector<32x32xf32>
    %123 = arith.mulf %121, %122 : vector<32x32xf32>
    %c0_46 = arith.constant 0 : index
    %c0_47 = arith.constant 0 : index
    %c0_48 = arith.constant 0 : index
    %124 = vector.load %arg7[%c0_46, %c0_47, %c0_48] : memref<4x32x32xf32, #tpu.memory_space<vmem>>, vector<1x32x32xf32>
    %125 = vector.shape_cast %124 : vector<1x32x32xf32> to vector<32x32xf32>
    %126 = arith.addf %123, %125 : vector<32x32xf32>
    %cst_49 = arith.constant dense<0xFF800000> : vector<32xf32>
    %127 = vector.multi_reduction <maximumf>, %126, %cst_49 [1] : vector<32x32xf32> to vector<32xf32>
    %128 = vector.shape_cast %127 : vector<32xf32> to vector<32x1xf32>
    %129 = vector.broadcast %128 : vector<32x1xf32> to vector<32x32xf32>
    %130 = arith.subf %126, %129 : vector<32x32xf32>
    %131 = math.exp %130 : vector<32x32xf32>
    %cst_50 = arith.constant dense<0.000000e+00> : vector<32xf32>
    %132 = vector.multi_reduction <add>, %131, %cst_50 [1] : vector<32x32xf32> to vector<32xf32>
    %133 = vector.shape_cast %132 : vector<32xf32> to vector<32x1xf32>
    %134 = tpu.reciprocal %133 {approx = true} : vector<32x1xf32> -> vector<32x1xf32>
    %135 = vector.broadcast %134 : vector<32x1xf32> to vector<32x32xf32>
    %136 = arith.mulf %131, %135 : vector<32x32xf32>
    %137 = arith.truncf %136 : vector<32x32xf32> to vector<32x32xbf16>
    %cst_51 = arith.constant dense<0.000000e+00> : vector<32x32xf32>
    %138 = tpu.matmul %137, %120, %cst_51 {dimension_numbers = #tpu.dot_dimension_numbers<[1], [0], [0], [1], [0, 0, 1, 1], [], []>} : vector<32x32xbf16>, vector<32x32xbf16>, vector<32x32xf32> -> vector<32x32xf32>
    %139 = vector.extract_strided_slice %32 {offsets = [32, 32], sizes = [32, 32], strides = [1, 1]} : vector<128x384xbf16> to vector<32x32xbf16>
    %140 = vector.extract_strided_slice %32 {offsets = [32, 160], sizes = [32, 32], strides = [1, 1]} : vector<128x384xbf16> to vector<32x32xbf16>
    %141 = vector.extract_strided_slice %32 {offsets = [32, 288], sizes = [32, 32], strides = [1, 1]} : vector<128x384xbf16> to vector<32x32xbf16>
    %cst_52 = arith.constant dense<0.000000e+00> : vector<32x32xf32>
    %142 = tpu.matmul %139, %140, %cst_52 {dimension_numbers = #tpu.dot_dimension_numbers<[1], [1], [0], [0], [0, 0, 1, 0], [], []>} : vector<32x32xbf16>, vector<32x32xbf16>, vector<32x32xf32> -> vector<32x32xf32>
    %cst_53 = arith.constant 0.176776692 : f32
    %143 = vector.broadcast %cst_53 : f32 to vector<32x32xf32>
    %144 = arith.mulf %142, %143 : vector<32x32xf32>
    %c1_54 = arith.constant 1 : index
    %c0_55 = arith.constant 0 : index
    %c0_56 = arith.constant 0 : index
    %145 = vector.load %arg7[%c1_54, %c0_55, %c0_56] : memref<4x32x32xf32, #tpu.memory_space<vmem>>, vector<1x32x32xf32>
    %146 = vector.shape_cast %145 : vector<1x32x32xf32> to vector<32x32xf32>
    %147 = arith.addf %144, %146 : vector<32x32xf32>
    %cst_57 = arith.constant dense<0xFF800000> : vector<32xf32>
    %148 = vector.multi_reduction <maximumf>, %147, %cst_57 [1] : vector<32x32xf32> to vector<32xf32>
    %149 = vector.shape_cast %148 : vector<32xf32> to vector<32x1xf32>
    %150 = vector.broadcast %149 : vector<32x1xf32> to vector<32x32xf32>
    %151 = arith.subf %147, %150 : vector<32x32xf32>
    %152 = math.exp %151 : vector<32x32xf32>
    %cst_58 = arith.constant dense<0.000000e+00> : vector<32xf32>
    %153 = vector.multi_reduction <add>, %152, %cst_58 [1] : vector<32x32xf32> to vector<32xf32>
    %154 = vector.shape_cast %153 : vector<32xf32> to vector<32x1xf32>
    %155 = tpu.reciprocal %154 {approx = true} : vector<32x1xf32> -> vector<32x1xf32>
    %156 = vector.broadcast %155 : vector<32x1xf32> to vector<32x32xf32>
    %157 = arith.mulf %152, %156 : vector<32x32xf32>
    %158 = arith.truncf %157 : vector<32x32xf32> to vector<32x32xbf16>
    %cst_59 = arith.constant dense<0.000000e+00> : vector<32x32xf32>
    %159 = tpu.matmul %158, %141, %cst_59 {dimension_numbers = #tpu.dot_dimension_numbers<[1], [0], [0], [1], [0, 0, 1, 1], [], []>} : vector<32x32xbf16>, vector<32x32xbf16>, vector<32x32xf32> -> vector<32x32xf32>
    %160 = vector.extract_strided_slice %32 {offsets = [32, 64], sizes = [32, 32], strides = [1, 1]} : vector<128x384xbf16> to vector<32x32xbf16>
    %161 = vector.extract_strided_slice %32 {offsets = [32, 192], sizes = [32, 32], strides = [1, 1]} : vector<128x384xbf16> to vector<32x32xbf16>
    %162 = vector.extract_strided_slice %32 {offsets = [32, 320], sizes = [32, 32], strides = [1, 1]} : vector<128x384xbf16> to vector<32x32xbf16>
    %cst_60 = arith.constant dense<0.000000e+00> : vector<32x32xf32>
    %163 = tpu.matmul %160, %161, %cst_60 {dimension_numbers = #tpu.dot_dimension_numbers<[1], [1], [0], [0], [0, 0, 1, 0], [], []>} : vector<32x32xbf16>, vector<32x32xbf16>, vector<32x32xf32> -> vector<32x32xf32>
    %cst_61 = arith.constant 0.176776692 : f32
    %164 = vector.broadcast %cst_61 : f32 to vector<32x32xf32>
    %165 = arith.mulf %163, %164 : vector<32x32xf32>
    %c2_62 = arith.constant 2 : index
    %c0_63 = arith.constant 0 : index
    %c0_64 = arith.constant 0 : index
    %166 = vector.load %arg7[%c2_62, %c0_63, %c0_64] : memref<4x32x32xf32, #tpu.memory_space<vmem>>, vector<1x32x32xf32>
    %167 = vector.shape_cast %166 : vector<1x32x32xf32> to vector<32x32xf32>
    %168 = arith.addf %165, %167 : vector<32x32xf32>
    %cst_65 = arith.constant dense<0xFF800000> : vector<32xf32>
    %169 = vector.multi_reduction <maximumf>, %168, %cst_65 [1] : vector<32x32xf32> to vector<32xf32>
    %170 = vector.shape_cast %169 : vector<32xf32> to vector<32x1xf32>
    %171 = vector.broadcast %170 : vector<32x1xf32> to vector<32x32xf32>
    %172 = arith.subf %168, %171 : vector<32x32xf32>
    %173 = math.exp %172 : vector<32x32xf32>
    %cst_66 = arith.constant dense<0.000000e+00> : vector<32xf32>
    %174 = vector.multi_reduction <add>, %173, %cst_66 [1] : vector<32x32xf32> to vector<32xf32>
    %175 = vector.shape_cast %174 : vector<32xf32> to vector<32x1xf32>
    %176 = tpu.reciprocal %175 {approx = true} : vector<32x1xf32> -> vector<32x1xf32>
    %177 = vector.broadcast %176 : vector<32x1xf32> to vector<32x32xf32>
    %178 = arith.mulf %173, %177 : vector<32x32xf32>
    %179 = arith.truncf %178 : vector<32x32xf32> to vector<32x32xbf16>
    %cst_67 = arith.constant dense<0.000000e+00> : vector<32x32xf32>
    %180 = tpu.matmul %179, %162, %cst_67 {dimension_numbers = #tpu.dot_dimension_numbers<[1], [0], [0], [1], [0, 0, 1, 1], [], []>} : vector<32x32xbf16>, vector<32x32xbf16>, vector<32x32xf32> -> vector<32x32xf32>
    %181 = vector.extract_strided_slice %32 {offsets = [32, 96], sizes = [32, 32], strides = [1, 1]} : vector<128x384xbf16> to vector<32x32xbf16>
    %182 = vector.extract_strided_slice %32 {offsets = [32, 224], sizes = [32, 32], strides = [1, 1]} : vector<128x384xbf16> to vector<32x32xbf16>
    %183 = vector.extract_strided_slice %32 {offsets = [32, 352], sizes = [32, 32], strides = [1, 1]} : vector<128x384xbf16> to vector<32x32xbf16>
    %cst_68 = arith.constant dense<0.000000e+00> : vector<32x32xf32>
    %184 = tpu.matmul %181, %182, %cst_68 {dimension_numbers = #tpu.dot_dimension_numbers<[1], [1], [0], [0], [0, 0, 1, 0], [], []>} : vector<32x32xbf16>, vector<32x32xbf16>, vector<32x32xf32> -> vector<32x32xf32>
    %cst_69 = arith.constant 0.176776692 : f32
    %185 = vector.broadcast %cst_69 : f32 to vector<32x32xf32>
    %186 = arith.mulf %184, %185 : vector<32x32xf32>
    %c3_70 = arith.constant 3 : index
    %c0_71 = arith.constant 0 : index
    %c0_72 = arith.constant 0 : index
    %187 = vector.load %arg7[%c3_70, %c0_71, %c0_72] : memref<4x32x32xf32, #tpu.memory_space<vmem>>, vector<1x32x32xf32>
    %188 = vector.shape_cast %187 : vector<1x32x32xf32> to vector<32x32xf32>
    %189 = arith.addf %186, %188 : vector<32x32xf32>
    %cst_73 = arith.constant dense<0xFF800000> : vector<32xf32>
    %190 = vector.multi_reduction <maximumf>, %189, %cst_73 [1] : vector<32x32xf32> to vector<32xf32>
    %191 = vector.shape_cast %190 : vector<32xf32> to vector<32x1xf32>
    %192 = vector.broadcast %191 : vector<32x1xf32> to vector<32x32xf32>
    %193 = arith.subf %189, %192 : vector<32x32xf32>
    %194 = math.exp %193 : vector<32x32xf32>
    %cst_74 = arith.constant dense<0.000000e+00> : vector<32xf32>
    %195 = vector.multi_reduction <add>, %194, %cst_74 [1] : vector<32x32xf32> to vector<32xf32>
    %196 = vector.shape_cast %195 : vector<32xf32> to vector<32x1xf32>
    %197 = tpu.reciprocal %196 {approx = true} : vector<32x1xf32> -> vector<32x1xf32>
    %198 = vector.broadcast %197 : vector<32x1xf32> to vector<32x32xf32>
    %199 = arith.mulf %194, %198 : vector<32x32xf32>
    %200 = arith.truncf %199 : vector<32x32xf32> to vector<32x32xbf16>
    %cst_75 = arith.constant dense<0.000000e+00> : vector<32x32xf32>
    %201 = tpu.matmul %200, %183, %cst_75 {dimension_numbers = #tpu.dot_dimension_numbers<[1], [0], [0], [1], [0, 0, 1, 1], [], []>} : vector<32x32xbf16>, vector<32x32xbf16>, vector<32x32xf32> -> vector<32x32xf32>
    %202 = tpu.concatenate %138, %159, %180, %201 in 1 : vector<32x32xf32>, vector<32x32xf32>, vector<32x32xf32>, vector<32x32xf32> -> vector<32x128xf32>
    %203 = vector.extract_strided_slice %32 {offsets = [64, 0], sizes = [32, 32], strides = [1, 1]} : vector<128x384xbf16> to vector<32x32xbf16>
    %204 = vector.extract_strided_slice %32 {offsets = [64, 128], sizes = [32, 32], strides = [1, 1]} : vector<128x384xbf16> to vector<32x32xbf16>
    %205 = vector.extract_strided_slice %32 {offsets = [64, 256], sizes = [32, 32], strides = [1, 1]} : vector<128x384xbf16> to vector<32x32xbf16>
    %cst_76 = arith.constant dense<0.000000e+00> : vector<32x32xf32>
    %206 = tpu.matmul %203, %204, %cst_76 {dimension_numbers = #tpu.dot_dimension_numbers<[1], [1], [0], [0], [0, 0, 1, 0], [], []>} : vector<32x32xbf16>, vector<32x32xbf16>, vector<32x32xf32> -> vector<32x32xf32>
    %cst_77 = arith.constant 0.176776692 : f32
    %207 = vector.broadcast %cst_77 : f32 to vector<32x32xf32>
    %208 = arith.mulf %206, %207 : vector<32x32xf32>
    %c0_78 = arith.constant 0 : index
    %c0_79 = arith.constant 0 : index
    %c0_80 = arith.constant 0 : index
    %209 = vector.load %arg7[%c0_78, %c0_79, %c0_80] : memref<4x32x32xf32, #tpu.memory_space<vmem>>, vector<1x32x32xf32>
    %210 = vector.shape_cast %209 : vector<1x32x32xf32> to vector<32x32xf32>
    %211 = arith.addf %208, %210 : vector<32x32xf32>
    %cst_81 = arith.constant dense<0xFF800000> : vector<32xf32>
    %212 = vector.multi_reduction <maximumf>, %211, %cst_81 [1] : vector<32x32xf32> to vector<32xf32>
    %213 = vector.shape_cast %212 : vector<32xf32> to vector<32x1xf32>
    %214 = vector.broadcast %213 : vector<32x1xf32> to vector<32x32xf32>
    %215 = arith.subf %211, %214 : vector<32x32xf32>
    %216 = math.exp %215 : vector<32x32xf32>
    %cst_82 = arith.constant dense<0.000000e+00> : vector<32xf32>
    %217 = vector.multi_reduction <add>, %216, %cst_82 [1] : vector<32x32xf32> to vector<32xf32>
    %218 = vector.shape_cast %217 : vector<32xf32> to vector<32x1xf32>
    %219 = tpu.reciprocal %218 {approx = true} : vector<32x1xf32> -> vector<32x1xf32>
    %220 = vector.broadcast %219 : vector<32x1xf32> to vector<32x32xf32>
    %221 = arith.mulf %216, %220 : vector<32x32xf32>
    %222 = arith.truncf %221 : vector<32x32xf32> to vector<32x32xbf16>
    %cst_83 = arith.constant dense<0.000000e+00> : vector<32x32xf32>
    %223 = tpu.matmul %222, %205, %cst_83 {dimension_numbers = #tpu.dot_dimension_numbers<[1], [0], [0], [1], [0, 0, 1, 1], [], []>} : vector<32x32xbf16>, vector<32x32xbf16>, vector<32x32xf32> -> vector<32x32xf32>
    %224 = vector.extract_strided_slice %32 {offsets = [64, 32], sizes = [32, 32], strides = [1, 1]} : vector<128x384xbf16> to vector<32x32xbf16>
    %225 = vector.extract_strided_slice %32 {offsets = [64, 160], sizes = [32, 32], strides = [1, 1]} : vector<128x384xbf16> to vector<32x32xbf16>
    %226 = vector.extract_strided_slice %32 {offsets = [64, 288], sizes = [32, 32], strides = [1, 1]} : vector<128x384xbf16> to vector<32x32xbf16>
    %cst_84 = arith.constant dense<0.000000e+00> : vector<32x32xf32>
    %227 = tpu.matmul %224, %225, %cst_84 {dimension_numbers = #tpu.dot_dimension_numbers<[1], [1], [0], [0], [0, 0, 1, 0], [], []>} : vector<32x32xbf16>, vector<32x32xbf16>, vector<32x32xf32> -> vector<32x32xf32>
    %cst_85 = arith.constant 0.176776692 : f32
    %228 = vector.broadcast %cst_85 : f32 to vector<32x32xf32>
    %229 = arith.mulf %227, %228 : vector<32x32xf32>
    %c1_86 = arith.constant 1 : index
    %c0_87 = arith.constant 0 : index
    %c0_88 = arith.constant 0 : index
    %230 = vector.load %arg7[%c1_86, %c0_87, %c0_88] : memref<4x32x32xf32, #tpu.memory_space<vmem>>, vector<1x32x32xf32>
    %231 = vector.shape_cast %230 : vector<1x32x32xf32> to vector<32x32xf32>
    %232 = arith.addf %229, %231 : vector<32x32xf32>
    %cst_89 = arith.constant dense<0xFF800000> : vector<32xf32>
    %233 = vector.multi_reduction <maximumf>, %232, %cst_89 [1] : vector<32x32xf32> to vector<32xf32>
    %234 = vector.shape_cast %233 : vector<32xf32> to vector<32x1xf32>
    %235 = vector.broadcast %234 : vector<32x1xf32> to vector<32x32xf32>
    %236 = arith.subf %232, %235 : vector<32x32xf32>
    %237 = math.exp %236 : vector<32x32xf32>
    %cst_90 = arith.constant dense<0.000000e+00> : vector<32xf32>
    %238 = vector.multi_reduction <add>, %237, %cst_90 [1] : vector<32x32xf32> to vector<32xf32>
    %239 = vector.shape_cast %238 : vector<32xf32> to vector<32x1xf32>
    %240 = tpu.reciprocal %239 {approx = true} : vector<32x1xf32> -> vector<32x1xf32>
    %241 = vector.broadcast %240 : vector<32x1xf32> to vector<32x32xf32>
    %242 = arith.mulf %237, %241 : vector<32x32xf32>
    %243 = arith.truncf %242 : vector<32x32xf32> to vector<32x32xbf16>
    %cst_91 = arith.constant dense<0.000000e+00> : vector<32x32xf32>
    %244 = tpu.matmul %243, %226, %cst_91 {dimension_numbers = #tpu.dot_dimension_numbers<[1], [0], [0], [1], [0, 0, 1, 1], [], []>} : vector<32x32xbf16>, vector<32x32xbf16>, vector<32x32xf32> -> vector<32x32xf32>
    %245 = vector.extract_strided_slice %32 {offsets = [64, 64], sizes = [32, 32], strides = [1, 1]} : vector<128x384xbf16> to vector<32x32xbf16>
    %246 = vector.extract_strided_slice %32 {offsets = [64, 192], sizes = [32, 32], strides = [1, 1]} : vector<128x384xbf16> to vector<32x32xbf16>
    %247 = vector.extract_strided_slice %32 {offsets = [64, 320], sizes = [32, 32], strides = [1, 1]} : vector<128x384xbf16> to vector<32x32xbf16>
    %cst_92 = arith.constant dense<0.000000e+00> : vector<32x32xf32>
    %248 = tpu.matmul %245, %246, %cst_92 {dimension_numbers = #tpu.dot_dimension_numbers<[1], [1], [0], [0], [0, 0, 1, 0], [], []>} : vector<32x32xbf16>, vector<32x32xbf16>, vector<32x32xf32> -> vector<32x32xf32>
    %cst_93 = arith.constant 0.176776692 : f32
    %249 = vector.broadcast %cst_93 : f32 to vector<32x32xf32>
    %250 = arith.mulf %248, %249 : vector<32x32xf32>
    %c2_94 = arith.constant 2 : index
    %c0_95 = arith.constant 0 : index
    %c0_96 = arith.constant 0 : index
    %251 = vector.load %arg7[%c2_94, %c0_95, %c0_96] : memref<4x32x32xf32, #tpu.memory_space<vmem>>, vector<1x32x32xf32>
    %252 = vector.shape_cast %251 : vector<1x32x32xf32> to vector<32x32xf32>
    %253 = arith.addf %250, %252 : vector<32x32xf32>
    %cst_97 = arith.constant dense<0xFF800000> : vector<32xf32>
    %254 = vector.multi_reduction <maximumf>, %253, %cst_97 [1] : vector<32x32xf32> to vector<32xf32>
    %255 = vector.shape_cast %254 : vector<32xf32> to vector<32x1xf32>
    %256 = vector.broadcast %255 : vector<32x1xf32> to vector<32x32xf32>
    %257 = arith.subf %253, %256 : vector<32x32xf32>
    %258 = math.exp %257 : vector<32x32xf32>
    %cst_98 = arith.constant dense<0.000000e+00> : vector<32xf32>
    %259 = vector.multi_reduction <add>, %258, %cst_98 [1] : vector<32x32xf32> to vector<32xf32>
    %260 = vector.shape_cast %259 : vector<32xf32> to vector<32x1xf32>
    %261 = tpu.reciprocal %260 {approx = true} : vector<32x1xf32> -> vector<32x1xf32>
    %262 = vector.broadcast %261 : vector<32x1xf32> to vector<32x32xf32>
    %263 = arith.mulf %258, %262 : vector<32x32xf32>
    %264 = arith.truncf %263 : vector<32x32xf32> to vector<32x32xbf16>
    %cst_99 = arith.constant dense<0.000000e+00> : vector<32x32xf32>
    %265 = tpu.matmul %264, %247, %cst_99 {dimension_numbers = #tpu.dot_dimension_numbers<[1], [0], [0], [1], [0, 0, 1, 1], [], []>} : vector<32x32xbf16>, vector<32x32xbf16>, vector<32x32xf32> -> vector<32x32xf32>
    %266 = vector.extract_strided_slice %32 {offsets = [64, 96], sizes = [32, 32], strides = [1, 1]} : vector<128x384xbf16> to vector<32x32xbf16>
    %267 = vector.extract_strided_slice %32 {offsets = [64, 224], sizes = [32, 32], strides = [1, 1]} : vector<128x384xbf16> to vector<32x32xbf16>
    %268 = vector.extract_strided_slice %32 {offsets = [64, 352], sizes = [32, 32], strides = [1, 1]} : vector<128x384xbf16> to vector<32x32xbf16>
    %cst_100 = arith.constant dense<0.000000e+00> : vector<32x32xf32>
    %269 = tpu.matmul %266, %267, %cst_100 {dimension_numbers = #tpu.dot_dimension_numbers<[1], [1], [0], [0], [0, 0, 1, 0], [], []>} : vector<32x32xbf16>, vector<32x32xbf16>, vector<32x32xf32> -> vector<32x32xf32>
    %cst_101 = arith.constant 0.176776692 : f32
    %270 = vector.broadcast %cst_101 : f32 to vector<32x32xf32>
    %271 = arith.mulf %269, %270 : vector<32x32xf32>
    %c3_102 = arith.constant 3 : index
    %c0_103 = arith.constant 0 : index
    %c0_104 = arith.constant 0 : index
    %272 = vector.load %arg7[%c3_102, %c0_103, %c0_104] : memref<4x32x32xf32, #tpu.memory_space<vmem>>, vector<1x32x32xf32>
    %273 = vector.shape_cast %272 : vector<1x32x32xf32> to vector<32x32xf32>
    %274 = arith.addf %271, %273 : vector<32x32xf32>
    %cst_105 = arith.constant dense<0xFF800000> : vector<32xf32>
    %275 = vector.multi_reduction <maximumf>, %274, %cst_105 [1] : vector<32x32xf32> to vector<32xf32>
    %276 = vector.shape_cast %275 : vector<32xf32> to vector<32x1xf32>
    %277 = vector.broadcast %276 : vector<32x1xf32> to vector<32x32xf32>
    %278 = arith.subf %274, %277 : vector<32x32xf32>
    %279 = math.exp %278 : vector<32x32xf32>
    %cst_106 = arith.constant dense<0.000000e+00> : vector<32xf32>
    %280 = vector.multi_reduction <add>, %279, %cst_106 [1] : vector<32x32xf32> to vector<32xf32>
    %281 = vector.shape_cast %280 : vector<32xf32> to vector<32x1xf32>
    %282 = tpu.reciprocal %281 {approx = true} : vector<32x1xf32> -> vector<32x1xf32>
    %283 = vector.broadcast %282 : vector<32x1xf32> to vector<32x32xf32>
    %284 = arith.mulf %279, %283 : vector<32x32xf32>
    %285 = arith.truncf %284 : vector<32x32xf32> to vector<32x32xbf16>
    %cst_107 = arith.constant dense<0.000000e+00> : vector<32x32xf32>
    %286 = tpu.matmul %285, %268, %cst_107 {dimension_numbers = #tpu.dot_dimension_numbers<[1], [0], [0], [1], [0, 0, 1, 1], [], []>} : vector<32x32xbf16>, vector<32x32xbf16>, vector<32x32xf32> -> vector<32x32xf32>
    %287 = tpu.concatenate %223, %244, %265, %286 in 1 : vector<32x32xf32>, vector<32x32xf32>, vector<32x32xf32>, vector<32x32xf32> -> vector<32x128xf32>
    %288 = vector.extract_strided_slice %32 {offsets = [96, 0], sizes = [32, 32], strides = [1, 1]} : vector<128x384xbf16> to vector<32x32xbf16>
    %289 = vector.extract_strided_slice %32 {offsets = [96, 128], sizes = [32, 32], strides = [1, 1]} : vector<128x384xbf16> to vector<32x32xbf16>
    %290 = vector.extract_strided_slice %32 {offsets = [96, 256], sizes = [32, 32], strides = [1, 1]} : vector<128x384xbf16> to vector<32x32xbf16>
    %cst_108 = arith.constant dense<0.000000e+00> : vector<32x32xf32>
    %291 = tpu.matmul %288, %289, %cst_108 {dimension_numbers = #tpu.dot_dimension_numbers<[1], [1], [0], [0], [0, 0, 1, 0], [], []>} : vector<32x32xbf16>, vector<32x32xbf16>, vector<32x32xf32> -> vector<32x32xf32>
    %cst_109 = arith.constant 0.176776692 : f32
    %292 = vector.broadcast %cst_109 : f32 to vector<32x32xf32>
    %293 = arith.mulf %291, %292 : vector<32x32xf32>
    %c0_110 = arith.constant 0 : index
    %c0_111 = arith.constant 0 : index
    %c0_112 = arith.constant 0 : index
    %294 = vector.load %arg7[%c0_110, %c0_111, %c0_112] : memref<4x32x32xf32, #tpu.memory_space<vmem>>, vector<1x32x32xf32>
    %295 = vector.shape_cast %294 : vector<1x32x32xf32> to vector<32x32xf32>
    %296 = arith.addf %293, %295 : vector<32x32xf32>
    %cst_113 = arith.constant dense<0xFF800000> : vector<32xf32>
    %297 = vector.multi_reduction <maximumf>, %296, %cst_113 [1] : vector<32x32xf32> to vector<32xf32>
    %298 = vector.shape_cast %297 : vector<32xf32> to vector<32x1xf32>
    %299 = vector.broadcast %298 : vector<32x1xf32> to vector<32x32xf32>
    %300 = arith.subf %296, %299 : vector<32x32xf32>
    %301 = math.exp %300 : vector<32x32xf32>
    %cst_114 = arith.constant dense<0.000000e+00> : vector<32xf32>
    %302 = vector.multi_reduction <add>, %301, %cst_114 [1] : vector<32x32xf32> to vector<32xf32>
    %303 = vector.shape_cast %302 : vector<32xf32> to vector<32x1xf32>
    %304 = tpu.reciprocal %303 {approx = true} : vector<32x1xf32> -> vector<32x1xf32>
    %305 = vector.broadcast %304 : vector<32x1xf32> to vector<32x32xf32>
    %306 = arith.mulf %301, %305 : vector<32x32xf32>
    %307 = arith.truncf %306 : vector<32x32xf32> to vector<32x32xbf16>
    %cst_115 = arith.constant dense<0.000000e+00> : vector<32x32xf32>
    %308 = tpu.matmul %307, %290, %cst_115 {dimension_numbers = #tpu.dot_dimension_numbers<[1], [0], [0], [1], [0, 0, 1, 1], [], []>} : vector<32x32xbf16>, vector<32x32xbf16>, vector<32x32xf32> -> vector<32x32xf32>
    %309 = vector.extract_strided_slice %32 {offsets = [96, 32], sizes = [32, 32], strides = [1, 1]} : vector<128x384xbf16> to vector<32x32xbf16>
    %310 = vector.extract_strided_slice %32 {offsets = [96, 160], sizes = [32, 32], strides = [1, 1]} : vector<128x384xbf16> to vector<32x32xbf16>
    %311 = vector.extract_strided_slice %32 {offsets = [96, 288], sizes = [32, 32], strides = [1, 1]} : vector<128x384xbf16> to vector<32x32xbf16>
    %cst_116 = arith.constant dense<0.000000e+00> : vector<32x32xf32>
    %312 = tpu.matmul %309, %310, %cst_116 {dimension_numbers = #tpu.dot_dimension_numbers<[1], [1], [0], [0], [0, 0, 1, 0], [], []>} : vector<32x32xbf16>, vector<32x32xbf16>, vector<32x32xf32> -> vector<32x32xf32>
    %cst_117 = arith.constant 0.176776692 : f32
    %313 = vector.broadcast %cst_117 : f32 to vector<32x32xf32>
    %314 = arith.mulf %312, %313 : vector<32x32xf32>
    %c1_118 = arith.constant 1 : index
    %c0_119 = arith.constant 0 : index
    %c0_120 = arith.constant 0 : index
    %315 = vector.load %arg7[%c1_118, %c0_119, %c0_120] : memref<4x32x32xf32, #tpu.memory_space<vmem>>, vector<1x32x32xf32>
    %316 = vector.shape_cast %315 : vector<1x32x32xf32> to vector<32x32xf32>
    %317 = arith.addf %314, %316 : vector<32x32xf32>
    %cst_121 = arith.constant dense<0xFF800000> : vector<32xf32>
    %318 = vector.multi_reduction <maximumf>, %317, %cst_121 [1] : vector<32x32xf32> to vector<32xf32>
    %319 = vector.shape_cast %318 : vector<32xf32> to vector<32x1xf32>
    %320 = vector.broadcast %319 : vector<32x1xf32> to vector<32x32xf32>
    %321 = arith.subf %317, %320 : vector<32x32xf32>
    %322 = math.exp %321 : vector<32x32xf32>
    %cst_122 = arith.constant dense<0.000000e+00> : vector<32xf32>
    %323 = vector.multi_reduction <add>, %322, %cst_122 [1] : vector<32x32xf32> to vector<32xf32>
    %324 = vector.shape_cast %323 : vector<32xf32> to vector<32x1xf32>
    %325 = tpu.reciprocal %324 {approx = true} : vector<32x1xf32> -> vector<32x1xf32>
    %326 = vector.broadcast %325 : vector<32x1xf32> to vector<32x32xf32>
    %327 = arith.mulf %322, %326 : vector<32x32xf32>
    %328 = arith.truncf %327 : vector<32x32xf32> to vector<32x32xbf16>
    %cst_123 = arith.constant dense<0.000000e+00> : vector<32x32xf32>
    %329 = tpu.matmul %328, %311, %cst_123 {dimension_numbers = #tpu.dot_dimension_numbers<[1], [0], [0], [1], [0, 0, 1, 1], [], []>} : vector<32x32xbf16>, vector<32x32xbf16>, vector<32x32xf32> -> vector<32x32xf32>
    %330 = vector.extract_strided_slice %32 {offsets = [96, 64], sizes = [32, 32], strides = [1, 1]} : vector<128x384xbf16> to vector<32x32xbf16>
    %331 = vector.extract_strided_slice %32 {offsets = [96, 192], sizes = [32, 32], strides = [1, 1]} : vector<128x384xbf16> to vector<32x32xbf16>
    %332 = vector.extract_strided_slice %32 {offsets = [96, 320], sizes = [32, 32], strides = [1, 1]} : vector<128x384xbf16> to vector<32x32xbf16>
    %cst_124 = arith.constant dense<0.000000e+00> : vector<32x32xf32>
    %333 = tpu.matmul %330, %331, %cst_124 {dimension_numbers = #tpu.dot_dimension_numbers<[1], [1], [0], [0], [0, 0, 1, 0], [], []>} : vector<32x32xbf16>, vector<32x32xbf16>, vector<32x32xf32> -> vector<32x32xf32>
    %cst_125 = arith.constant 0.176776692 : f32
    %334 = vector.broadcast %cst_125 : f32 to vector<32x32xf32>
    %335 = arith.mulf %333, %334 : vector<32x32xf32>
    %c2_126 = arith.constant 2 : index
    %c0_127 = arith.constant 0 : index
    %c0_128 = arith.constant 0 : index
    %336 = vector.load %arg7[%c2_126, %c0_127, %c0_128] : memref<4x32x32xf32, #tpu.memory_space<vmem>>, vector<1x32x32xf32>
    %337 = vector.shape_cast %336 : vector<1x32x32xf32> to vector<32x32xf32>
    %338 = arith.addf %335, %337 : vector<32x32xf32>
    %cst_129 = arith.constant dense<0xFF800000> : vector<32xf32>
    %339 = vector.multi_reduction <maximumf>, %338, %cst_129 [1] : vector<32x32xf32> to vector<32xf32>
    %340 = vector.shape_cast %339 : vector<32xf32> to vector<32x1xf32>
    %341 = vector.broadcast %340 : vector<32x1xf32> to vector<32x32xf32>
    %342 = arith.subf %338, %341 : vector<32x32xf32>
    %343 = math.exp %342 : vector<32x32xf32>
    %cst_130 = arith.constant dense<0.000000e+00> : vector<32xf32>
    %344 = vector.multi_reduction <add>, %343, %cst_130 [1] : vector<32x32xf32> to vector<32xf32>
    %345 = vector.shape_cast %344 : vector<32xf32> to vector<32x1xf32>
    %346 = tpu.reciprocal %345 {approx = true} : vector<32x1xf32> -> vector<32x1xf32>
    %347 = vector.broadcast %346 : vector<32x1xf32> to vector<32x32xf32>
    %348 = arith.mulf %343, %347 : vector<32x32xf32>
    %349 = arith.truncf %348 : vector<32x32xf32> to vector<32x32xbf16>
    %cst_131 = arith.constant dense<0.000000e+00> : vector<32x32xf32>
    %350 = tpu.matmul %349, %332, %cst_131 {dimension_numbers = #tpu.dot_dimension_numbers<[1], [0], [0], [1], [0, 0, 1, 1], [], []>} : vector<32x32xbf16>, vector<32x32xbf16>, vector<32x32xf32> -> vector<32x32xf32>
    %351 = vector.extract_strided_slice %32 {offsets = [96, 96], sizes = [32, 32], strides = [1, 1]} : vector<128x384xbf16> to vector<32x32xbf16>
    %352 = vector.extract_strided_slice %32 {offsets = [96, 224], sizes = [32, 32], strides = [1, 1]} : vector<128x384xbf16> to vector<32x32xbf16>
    %353 = vector.extract_strided_slice %32 {offsets = [96, 352], sizes = [32, 32], strides = [1, 1]} : vector<128x384xbf16> to vector<32x32xbf16>
    %cst_132 = arith.constant dense<0.000000e+00> : vector<32x32xf32>
    %354 = tpu.matmul %351, %352, %cst_132 {dimension_numbers = #tpu.dot_dimension_numbers<[1], [1], [0], [0], [0, 0, 1, 0], [], []>} : vector<32x32xbf16>, vector<32x32xbf16>, vector<32x32xf32> -> vector<32x32xf32>
    %cst_133 = arith.constant 0.176776692 : f32
    %355 = vector.broadcast %cst_133 : f32 to vector<32x32xf32>
    %356 = arith.mulf %354, %355 : vector<32x32xf32>
    %c3_134 = arith.constant 3 : index
    %c0_135 = arith.constant 0 : index
    %c0_136 = arith.constant 0 : index
    %357 = vector.load %arg7[%c3_134, %c0_135, %c0_136] : memref<4x32x32xf32, #tpu.memory_space<vmem>>, vector<1x32x32xf32>
    %358 = vector.shape_cast %357 : vector<1x32x32xf32> to vector<32x32xf32>
    %359 = arith.addf %356, %358 : vector<32x32xf32>
    %cst_137 = arith.constant dense<0xFF800000> : vector<32xf32>
    %360 = vector.multi_reduction <maximumf>, %359, %cst_137 [1] : vector<32x32xf32> to vector<32xf32>
    %361 = vector.shape_cast %360 : vector<32xf32> to vector<32x1xf32>
    %362 = vector.broadcast %361 : vector<32x1xf32> to vector<32x32xf32>
    %363 = arith.subf %359, %362 : vector<32x32xf32>
    %364 = math.exp %363 : vector<32x32xf32>
    %cst_138 = arith.constant dense<0.000000e+00> : vector<32xf32>
    %365 = vector.multi_reduction <add>, %364, %cst_138 [1] : vector<32x32xf32> to vector<32xf32>
    %366 = vector.shape_cast %365 : vector<32xf32> to vector<32x1xf32>
    %367 = tpu.reciprocal %366 {approx = true} : vector<32x1xf32> -> vector<32x1xf32>
    %368 = vector.broadcast %367 : vector<32x1xf32> to vector<32x32xf32>
    %369 = arith.mulf %364, %368 : vector<32x32xf32>
    %370 = arith.truncf %369 : vector<32x32xf32> to vector<32x32xbf16>
    %cst_139 = arith.constant dense<0.000000e+00> : vector<32x32xf32>
    %371 = tpu.matmul %370, %353, %cst_139 {dimension_numbers = #tpu.dot_dimension_numbers<[1], [0], [0], [1], [0, 0, 1, 1], [], []>} : vector<32x32xbf16>, vector<32x32xbf16>, vector<32x32xf32> -> vector<32x32xf32>
    %372 = tpu.concatenate %308, %329, %350, %371 in 1 : vector<32x32xf32>, vector<32x32xf32>, vector<32x32xf32>, vector<32x32xf32> -> vector<32x128xf32>
    %373 = tpu.concatenate %117, %202, %287, %372 in 0 : vector<32x128xf32>, vector<32x128xf32>, vector<32x128xf32>, vector<32x128xf32> -> vector<128x128xf32>
    %374 = arith.truncf %373 : vector<128x128xf32> to vector<128x128xbf16>
    %c0_140 = arith.constant 0 : index
    %c0_141 = arith.constant 0 : index
    %375 = vector.load %arg8[%c0_140, %c0_141] : memref<128x128xbf16, #tpu.memory_space<vmem>>, vector<128x128xbf16>
    %cst_142 = arith.constant dense<0.000000e+00> : vector<128x128xf32>
    %376 = tpu.matmul %374, %375, %cst_142 {dimension_numbers = #tpu.dot_dimension_numbers<[1], [0], [0], [1], [0, 0, 1, 1], [], []>} : vector<128x128xbf16>, vector<128x128xbf16>, vector<128x128xf32> -> vector<128x128xf32>
    %c0_143 = arith.constant 0 : index
    %c0_144 = arith.constant 0 : index
    %377 = vector.load %arg9[%c0_143, %c0_144] : memref<1x128xf32, #tpu.memory_space<vmem>>, vector<1x128xf32>
    %378 = vector.broadcast %377 : vector<1x128xf32> to vector<128x128xf32>
    %379 = arith.addf %376, %378 : vector<128x128xf32>
    %380 = arith.addf %379, %0 : vector<128x128xf32>
    %c0_145 = arith.constant 0 : index
    %c0_146 = arith.constant 0 : index
    %381 = vector.load %arg10[%c0_145, %c0_146] : memref<1x128xf32, #tpu.memory_space<vmem>>, vector<1x128xf32>
    %c0_147 = arith.constant 0 : index
    %c0_148 = arith.constant 0 : index
    %382 = vector.load %arg11[%c0_147, %c0_148] : memref<1x128xf32, #tpu.memory_space<vmem>>, vector<1x128xf32>
    %cst_149 = arith.constant dense<0.000000e+00> : vector<128xf32>
    %383 = vector.multi_reduction <add>, %380, %cst_149 [1] : vector<128x128xf32> to vector<128xf32>
    %384 = vector.shape_cast %383 : vector<128xf32> to vector<128x1xf32>
    %cst_150 = arith.constant 1.280000e+02 : f32
    %385 = vector.broadcast %cst_150 : f32 to vector<128x1xf32>
    %386 = arith.divf %384, %385 : vector<128x1xf32>
    %387 = vector.broadcast %386 : vector<128x1xf32> to vector<128x128xf32>
    %388 = arith.subf %380, %387 : vector<128x128xf32>
    %389 = arith.mulf %388, %388 : vector<128x128xf32>
    %cst_151 = arith.constant dense<0.000000e+00> : vector<128xf32>
    %390 = vector.multi_reduction <add>, %389, %cst_151 [1] : vector<128x128xf32> to vector<128xf32>
    %391 = vector.shape_cast %390 : vector<128xf32> to vector<128x1xf32>
    %cst_152 = arith.constant 1.280000e+02 : f32
    %392 = vector.broadcast %cst_152 : f32 to vector<128x1xf32>
    %393 = arith.divf %391, %392 : vector<128x1xf32>
    %cst_153 = arith.constant 9.99999974E-6 : f32
    %394 = vector.broadcast %cst_153 : f32 to vector<128x1xf32>
    %395 = arith.addf %393, %394 : vector<128x1xf32>
    %396 = math.rsqrt %395 : vector<128x1xf32>
    %397 = vector.broadcast %396 : vector<128x1xf32> to vector<128x128xf32>
    %398 = arith.mulf %388, %397 : vector<128x128xf32>
    %399 = vector.broadcast %381 : vector<1x128xf32> to vector<128x128xf32>
    %400 = arith.mulf %398, %399 : vector<128x128xf32>
    %401 = vector.broadcast %382 : vector<1x128xf32> to vector<128x128xf32>
    %402 = arith.addf %400, %401 : vector<128x128xf32>
    %403 = arith.truncf %402 : vector<128x128xf32> to vector<128x128xbf16>
    %c0_154 = arith.constant 0 : index
    %c0_155 = arith.constant 0 : index
    %404 = vector.load %arg12[%c0_154, %c0_155] : memref<128x512xbf16, #tpu.memory_space<vmem>>, vector<128x512xbf16>
    %cst_156 = arith.constant dense<0.000000e+00> : vector<128x512xf32>
    %405 = tpu.matmul %403, %404, %cst_156 {dimension_numbers = #tpu.dot_dimension_numbers<[1], [0], [0], [1], [0, 0, 1, 1], [], []>} : vector<128x128xbf16>, vector<128x512xbf16>, vector<128x512xf32> -> vector<128x512xf32>
    %c0_157 = arith.constant 0 : index
    %c0_158 = arith.constant 0 : index
    %406 = vector.load %arg13[%c0_157, %c0_158] : memref<1x512xf32, #tpu.memory_space<vmem>>, vector<1x512xf32>
    %407 = vector.broadcast %406 : vector<1x512xf32> to vector<128x512xf32>
    %408 = arith.addf %405, %407 : vector<128x512xf32>
    %cst_159 = arith.constant 5.000000e-01 : f32
    %409 = vector.broadcast %cst_159 : f32 to vector<128x512xf32>
    %410 = arith.mulf %408, %409 : vector<128x512xf32>
    %cst_160 = arith.constant 0.707106769 : f32
    %411 = vector.broadcast %cst_160 : f32 to vector<128x512xf32>
    %412 = arith.mulf %408, %411 : vector<128x512xf32>
    %cst_161 = arith.constant -4.000000e+00 : f32
    %cst_162 = arith.constant 4.000000e+00 : f32
    %413 = vector.broadcast %cst_161 : f32 to vector<128x512xf32>
    %414 = arith.maximumf %413, %412 : vector<128x512xf32>
    %415 = vector.broadcast %cst_162 : f32 to vector<128x512xf32>
    %416 = arith.minimumf %415, %414 : vector<128x512xf32>
    %417 = arith.mulf %416, %416 : vector<128x512xf32>
    %cst_163 = arith.constant -2.72614237E-10 : f32
    %418 = vector.broadcast %cst_163 : f32 to vector<128x512xf32>
    %419 = arith.mulf %417, %418 : vector<128x512xf32>
    %cst_164 = arith.constant 2.77068146E-8 : f32
    %420 = vector.broadcast %cst_164 : f32 to vector<128x512xf32>
    %421 = arith.addf %419, %420 : vector<128x512xf32>
    %422 = arith.mulf %421, %417 : vector<128x512xf32>
    %cst_165 = arith.constant -2.10102394E-6 : f32
    %423 = vector.broadcast %cst_165 : f32 to vector<128x512xf32>
    %424 = arith.addf %422, %423 : vector<128x512xf32>
    %425 = arith.mulf %424, %417 : vector<128x512xf32>
    %cst_166 = arith.constant -5.69250624E-5 : f32
    %426 = vector.broadcast %cst_166 : f32 to vector<128x512xf32>
    %427 = arith.addf %425, %426 : vector<128x512xf32>
    %428 = arith.mulf %427, %417 : vector<128x512xf32>
    %cst_167 = arith.constant -7.34990637E-4 : f32
    %429 = vector.broadcast %cst_167 : f32 to vector<128x512xf32>
    %430 = arith.addf %428, %429 : vector<128x512xf32>
    %431 = arith.mulf %430, %417 : vector<128x512xf32>
    %cst_168 = arith.constant -2.954600e-03 : f32
    %432 = vector.broadcast %cst_168 : f32 to vector<128x512xf32>
    %433 = arith.addf %431, %432 : vector<128x512xf32>
    %434 = arith.mulf %433, %417 : vector<128x512xf32>
    %cst_169 = arith.constant -0.0160960332 : f32
    %435 = vector.broadcast %cst_169 : f32 to vector<128x512xf32>
    %436 = arith.addf %434, %435 : vector<128x512xf32>
    %cst_170 = arith.constant -1.45660715E-5 : f32
    %437 = vector.broadcast %cst_170 : f32 to vector<128x512xf32>
    %438 = arith.mulf %417, %437 : vector<128x512xf32>
    %cst_171 = arith.constant -2.13374049E-4 : f32
    %439 = vector.broadcast %cst_171 : f32 to vector<128x512xf32>
    %440 = arith.addf %438, %439 : vector<128x512xf32>
    %441 = arith.mulf %440, %417 : vector<128x512xf32>
    %cst_172 = arith.constant -0.00168282702 : f32
    %442 = vector.broadcast %cst_172 : f32 to vector<128x512xf32>
    %443 = arith.addf %441, %442 : vector<128x512xf32>
    %444 = arith.mulf %443, %417 : vector<128x512xf32>
    %cst_173 = arith.constant -0.00737332925 : f32
    %445 = vector.broadcast %cst_173 : f32 to vector<128x512xf32>
    %446 = arith.addf %444, %445 : vector<128x512xf32>
    %447 = arith.mulf %446, %417 : vector<128x512xf32>
    %cst_174 = arith.constant -0.0142647391 : f32
    %448 = vector.broadcast %cst_174 : f32 to vector<128x512xf32>
    %449 = arith.addf %447, %448 : vector<128x512xf32>
    %450 = arith.mulf %416, %436 : vector<128x512xf32>
    %451 = tpu.reciprocal %449 {approx = true} : vector<128x512xf32> -> vector<128x512xf32>
    %452 = arith.mulf %450, %451 : vector<128x512xf32>
    %cst_175 = arith.constant 1.000000e+00 : f32
    %453 = vector.broadcast %cst_175 : f32 to vector<128x512xf32>
    %454 = arith.addf %453, %452 : vector<128x512xf32>
    %455 = arith.mulf %410, %454 : vector<128x512xf32>
    %456 = arith.truncf %455 : vector<128x512xf32> to vector<128x512xbf16>
    %c0_176 = arith.constant 0 : index
    %c0_177 = arith.constant 0 : index
    %457 = vector.load %arg14[%c0_176, %c0_177] : memref<512x128xbf16, #tpu.memory_space<vmem>>, vector<512x128xbf16>
    %cst_178 = arith.constant dense<0.000000e+00> : vector<128x128xf32>
    %458 = tpu.matmul %456, %457, %cst_178 {dimension_numbers = #tpu.dot_dimension_numbers<[1], [0], [0], [1], [0, 0, 1, 1], [], []>} : vector<128x512xbf16>, vector<512x128xbf16>, vector<128x128xf32> -> vector<128x128xf32>
    %c0_179 = arith.constant 0 : index
    %c0_180 = arith.constant 0 : index
    %459 = vector.load %arg15[%c0_179, %c0_180] : memref<1x128xf32, #tpu.memory_space<vmem>>, vector<1x128xf32>
    %460 = vector.broadcast %459 : vector<1x128xf32> to vector<128x128xf32>
    %461 = arith.addf %458, %460 : vector<128x128xf32>
    %462 = arith.addf %461, %461 : vector<128x128xf32>
    %c0_181 = arith.constant 0 : index
    %c0_182 = arith.constant 0 : index
    %463 = vector.load %arg16[%c0_181, %c0_182] : memref<128x128xf32, #tpu.memory_space<vmem>>, vector<128x128xf32>
    tpu.vector_store %arg16[%c0_181, %c0_182], %462 {strides = array<i32>} : memref<128x128xf32, #tpu.memory_space<vmem>>, vector<128x128xf32>,
    return
  }
  func.func @transform_0(%arg0: i32) -> (i32, i32) {
    %c0_i32 = arith.constant 0 : i32
    %c0_i32_0 = arith.constant 0 : i32
    return %arg0, %c0_i32 : i32, i32
  }
  func.func @transform_1(%arg0: i32) -> (i32, i32) {
    %c0_i32 = arith.constant 0 : i32
    %c0_i32_0 = arith.constant 0 : i32
    return %arg0, %c0_i32 : i32, i32
  }
  func.func @transform_2(%arg0: i32) -> i32 {
    %c0_i32 = arith.constant 0 : i32
    %c0_i32_0 = arith.constant 0 : i32
    return %c0_i32 : i32
  }
  func.func @transform_3(%arg0: i32) -> (i32, i32) {
    %c0_i32 = arith.constant 0 : i32
    %c0_i32_0 = arith.constant 0 : i32
    %c0_i32_1 = arith.constant 0 : i32
    return %c0_i32, %c0_i32_0 : i32, i32
  }
  func.func @transform_4(%arg0: i32) -> (i32, i32) {
    %c0_i32 = arith.constant 0 : i32
    %c0_i32_0 = arith.constant 0 : i32
    %c0_i32_1 = arith.constant 0 : i32
    return %c0_i32, %c0_i32_0 : i32, i32
  }
  func.func @transform_5(%arg0: i32) -> (i32, i32) {
    %c0_i32 = arith.constant 0 : i32
    %c0_i32_0 = arith.constant 0 : i32
    %c0_i32_1 = arith.constant 0 : i32
    return %c0_i32, %c0_i32_0 : i32, i32
  }
  func.func @transform_6(%arg0: i32) -> (i32, i32, i32) {
    %c0_i32 = arith.constant 0 : i32
    %c0_i32_0 = arith.constant 0 : i32
    %c0_i32_1 = arith.constant 0 : i32
    %c0_i32_2 = arith.constant 0 : i32
    return %c0_i32, %c0_i32_0, %c0_i32_1 : i32, i32, i32
  }
  func.func @transform_7(%arg0: i32) -> (i32, i32) {
    %c0_i32 = arith.constant 0 : i32
    %c0_i32_0 = arith.constant 0 : i32
    %c0_i32_1 = arith.constant 0 : i32
    return %c0_i32, %c0_i32_0 : i32, i32
  }
  func.func @transform_8(%arg0: i32) -> (i32, i32) {
    %c0_i32 = arith.constant 0 : i32
    %c0_i32_0 = arith.constant 0 : i32
    %c0_i32_1 = arith.constant 0 : i32
    return %c0_i32, %c0_i32_0 : i32, i32
  }
  func.func @transform_9(%arg0: i32) -> (i32, i32) {
    %c0_i32 = arith.constant 0 : i32
    %c0_i32_0 = arith.constant 0 : i32
    %c0_i32_1 = arith.constant 0 : i32
    return %c0_i32, %c0_i32_0 : i32, i32
  }
  func.func @transform_10(%arg0: i32) -> (i32, i32) {
    %c0_i32 = arith.constant 0 : i32
    %c0_i32_0 = arith.constant 0 : i32
    %c0_i32_1 = arith.constant 0 : i32
    return %c0_i32, %c0_i32_0 : i32, i32
  }
  func.func @transform_11(%arg0: i32) -> (i32, i32) {
    %c0_i32 = arith.constant 0 : i32
    %c0_i32_0 = arith.constant 0 : i32
    %c0_i32_1 = arith.constant 0 : i32
    return %c0_i32, %c0_i32_0 : i32, i32
  }
  func.func @transform_12(%arg0: i32) -> (i32, i32) {
    %c0_i32 = arith.constant 0 : i32
    %c0_i32_0 = arith.constant 0 : i32
    %c0_i32_1 = arith.constant 0 : i32
    return %c0_i32, %c0_i32_0 : i32, i32
  }
  func.func @transform_13(%arg0: i32) -> (i32, i32) {
    %c0_i32 = arith.constant 0 : i32
    %c0_i32_0 = arith.constant 0 : i32
    %c0_i32_1 = arith.constant 0 : i32
    return %c0_i32, %c0_i32_0 : i32, i32
  }
  func.func @transform_14(%arg0: i32) -> (i32, i32) {
    %c0_i32 = arith.constant 0 : i32
    %c0_i32_0 = arith.constant 0 : i32
    %c0_i32_1 = arith.constant 0 : i32
    return %c0_i32, %c0_i32_0 : i32, i32
  }
  func.func @transform_15(%arg0: i32) -> (i32, i32) {
    %c0_i32 = arith.constant 0 : i32
    %c0_i32_0 = arith.constant 0 : i32
    return %arg0, %c0_i32 : i32, i32
  }
}

</mosaic_0001>

<llo_original>
// kernel: block_forward_pallas.1
$region0: #{block_forward_pallas.1}
  #allocation0 [shape = 'u32[]', space=smem, size = 0x4, offset = 0x4, fixed_abs, tag = 'smem constant byte address 0x4 - core index']
  #allocation1 [shape = 'u32[144,128]{1,0:T(1,128)}', space=vmem, size = 0x12000, scoped, tag = 'internal scratch']
  #allocation2 [shape = 'f32[1]{0:T(128)S(6)}', space=smem, size = 0x200, scoped, tag = 'scoped memory for block_forward_pallas.1']
  %s0 = inlined_call_operand.vmem [shape: f32[256,128], index: 0, kind: input, shape index: {}]
  %s1 = inlined_call_operand.vmem [shape: f32[256,1], index: 1, kind: input, shape index: {}]
  %s2 = inlined_call_operand.<no memory space> [shape: f32[1], index: 2, kind: input, shape index: {}]
  %s3 = inlined_call_operand.vmem [shape: f32[1,128], index: 3, kind: input, shape index: {}]
  %s4 = inlined_call_operand.vmem [shape: f32[1,128], index: 4, kind: input, shape index: {}]
  %s5 = inlined_call_operand.hbm [shape: bf16[128,384], index: 5, kind: input, shape index: {}]
  %s6 = inlined_call_operand.hbm [shape: f32[4,32,32], index: 6, kind: input, shape index: {}]
  %s7 = inlined_call_operand.vmem [shape: bf16[128,128], index: 7, kind: input, shape index: {}]
  %s8 = inlined_call_operand.vmem [shape: f32[1,128], index: 8, kind: input, shape index: {}]
  %s9 = inlined_call_operand.vmem [shape: f32[1,128], index: 9, kind: input, shape index: {}]
  %s10 = inlined_call_operand.vmem [shape: f32[1,128], index: 10, kind: input, shape index: {}]
  %s11 = inlined_call_operand.hbm [shape: bf16[128,512], index: 11, kind: input, shape index: {}]
  %s12 = inlined_call_operand.vmem [shape: f32[1,512], index: 12, kind: input, shape index: {}]
  %s13 = inlined_call_operand.hbm [shape: bf16[512,128], index: 13, kind: input, shape index: {}]
  %s14 = inlined_call_operand.vmem [shape: f32[1,128], index: 14, kind: input, shape index: {}]
  %s15 = inlined_call_operand.hbm [shape: f32[256,128], index: 15, kind: output, shape index: {}]
  %s16 = sld [smem:[#allocation0]]
  $region109: #{block_forward_pallas.1} parent=0
    _
  %s18 = ssub.s32 1, %s16
  %s19 = scalar_select 0, %s18, %s16
  %20 = sst [smem:[#allocation2]] %s2
  $region1: #{block_forward_pallas.1} parent=0
    #allocation3 [shape = 'u8[98304]{0}', space=vmem, size = 0x18000, scoped, tag = 'input window, operand 5, single buffered']
    #allocation4 [shape = 's32[2]{0}', space=sflag, size = 0x8, scoped, tag = 'scoped memory for block_forward_pallas.1']
    #allocation5 [shape = 's32[2]{0}', space=sflag, size = 0x8, scoped, tag = 'scoped memory for block_forward_pallas.1']
    #allocation6 [shape = 'u8[65536]{0}', space=vmem, size = 0x10000, scoped, tag = 'input window, operand 6, single buffered']
    #allocation7 [shape = 's32[1]{0}', space=sflag, size = 0x4, scoped, tag = 'scoped memory for block_forward_pallas.1']
    #allocation8 [shape = 'u8[131072]{0}', space=vmem, size = 0x20000, scoped, tag = 'input window, operand 11, single buffered']
    #allocation9 [shape = 'u8[131072]{0}', space=vmem, size = 0x20000, scoped, tag = 'input window, operand 13, single buffered']
    #allocation10 [shape = 's32[1]{0}', space=sflag, size = 0x4, scoped, tag = 'scoped memory for block_forward_pallas.1']
    #allocation11 [shape = 'u8[131072]{0}', space=vmem, size = 0x20000, scoped, tag = 'output window, operand 0']
    %21 = vsyncpa [#allocation4], 0
    %22 = vsyncpa [#allocation7], 0
    %23 = vsyncpa [#allocation10], 0
    %24 = vsyncpa [#allocation5], 0
    %s25 = scalar_lea.sflag [#allocation5], 1
    %26 = vsyncpa %s25, 0
    loop: start=0, step=1, limit=4
    $region2: #{block_forward_pallas.1} parent=1 // loop_pre_header
      _
    $region3: #{block_forward_pallas.1} parent=1 // loop_header
      %s28 = sphi 0, %s32
      %p29 = scmp.ge.s32.totalorder %s28, 4
      %s38 = sphi 0, %s40
      %s41 = sphi 0, %s38
      %s42 = sphi 0, %s41
      %s58 = sphi 0, %s42
      %s64 = sphi 0, %s66
      %s67 = sphi 0, %s64
      %s68 = sphi 0, %s67
      %s84 = sphi 0, %s68
      %s88 = sphi 0, %s88
      %s90 = sphi 0, %s88
      %s91 = sphi 0, %s90
      %s105 = sphi 0, %s91
      %s109 = sphi 0, %s109
      %s111 = sphi 0, %s109
      %s112 = sphi 0, %s111
      %s126 = sphi 0, %s112
      %s130 = sphi 0, %s130
      %s132 = sphi 0, %s130
      %s133 = sphi 0, %s132
      %s147 = sphi 0, %s133
      %s151 = sphi 0, %s151
      %s153 = sphi 0, %s151
      %s154 = sphi 0, %s153
      %s168 = sphi 0, %s154
      %s172 = sphi 0, %s172
      %s174 = sphi 0, %s172
      %s175 = sphi 0, %s174
      %s189 = sphi 0, %s175
      %s193 = sphi 0, %s193
      %s195 = sphi 0, %s193
      %s196 = sphi 0, %s195
      %s210 = sphi 0, %s196
      %s214 = sphi 0, %s214
      %s216 = sphi 0, %s214
      %s217 = sphi 0, %s216
      %s231 = sphi 0, %s217
      %s235 = sphi 0, %s235
      %s237 = sphi 0, %s235
      %s238 = sphi 0, %s237
      %s252 = sphi 0, %s238
      %s256 = sphi 0, %s256
      %s258 = sphi 0, %s256
      %s259 = sphi 0, %s258
      %s273 = sphi 0, %s259
      %s277 = sphi 0, %s277
      %s279 = sphi 0, %s277
      %s280 = sphi 0, %s279
      %s294 = sphi 0, %s280
      %s298 = sphi 0, %s298
      %s300 = sphi 0, %s298
      %s301 = sphi 0, %s300
      %s315 = sphi 0, %s301
      %s319 = sphi 0, %s319
      %s321 = sphi 0, %s319
      %s322 = sphi 0, %s321
      %s336 = sphi 0, %s322
      %s340 = sphi 0, %s340
      %s342 = sphi 0, %s340
      %s343 = sphi 0, %s342
      %s357 = sphi 0, %s343
      %s363 = sphi 0, %s365
      %s366 = sphi 0, %s363
      %s367 = sphi 0, %s366
      %s383 = sphi 0, %s367
    $region4: #{block_forward_pallas.1} parent=1 // loop_header_branch
      %31 = sbr.rel (%p29) target = $region8
    $region5: #{block_forward_pallas.1} parent=1 // loop_body
      %s33 = ssub.s32 %s28, 1
      %s34 = ssub.s32 %s28, 2
      %s35 = sadd.s32 %s28, 1
      %s36 = ssub.s32 %s28, %s35
      %p37 = scmp.eq.s32.totalorder %s36, 0
      %s39 = sadd.s32 %s38, 1
      %s40 = scalar_select %p37, %s38, %s39
      %p43 = pneg %p37
      %p44 = scmp.eq.s32.totalorder %s28, 1
      %p45 = por %p43, %p44
      %p46 = scmp.ne.s32.totalorder %s38, %s41
      %p47 = scmp.eq.s32.totalorder %s28, 0
      %p48 = por %p46, %p47
      %p49 = scmp.ne.s32.totalorder %s38, %s41
      %p50 = scmp.eq.s32.totalorder %s33, 1
      %p51 = por %p49, %p50
      %p52 = scmp.ne.s32.totalorder %s41, %s42
      %p53 = scmp.eq.s32.totalorder %s33, 0
      %p54 = por %p52, %p53
      %p55 = scmp.ne.s32.totalorder %s41, %s42
      %p56 = scmp.eq.s32.totalorder %s34, 1
      %p57 = por %p55, %p56
      %p59 = scmp.ne.s32.totalorder %s42, %s58
      %p60 = scmp.eq.s32.totalorder %s34, 0
      %p61 = por %p59, %p60
      %s62 = ssub.s32 %s28, %s35
      %p63 = scmp.eq.s32.totalorder %s62, 0
      %s65 = sadd.s32 %s64, 1
      %s66 = scalar_select %p63, %s64, %s65
      %p69 = pneg %p63
      %p70 = scmp.eq.s32.totalorder %s28, 1
      %p71 = por %p69, %p70
      %p72 = scmp.ne.s32.totalorder %s64, %s67
      %p73 = scmp.eq.s32.totalorder %s28, 0
      %p74 = por %p72, %p73
      %p75 = scmp.ne.s32.totalorder %s64, %s67
      %p76 = scmp.eq.s32.totalorder %s33, 1
      %p77 = por %p75, %p76
      %p78 = scmp.ne.s32.totalorder %s67, %s68
      %p79 = scmp.eq.s32.totalorder %s33, 0
      %p80 = por %p78, %p79
      %p81 = scmp.ne.s32.totalorder %s67, %s68
      %p82 = scmp.eq.s32.totalorder %s34, 1
      %p83 = por %p81, %p82
      %p85 = scmp.ne.s32.totalorder %s68, %s84
      %p86 = scmp.eq.s32.totalorder %s34, 0
      %p87 = por %p85, %p86
      %s89 = sadd.s32 %s88, 1
      %p92 = scmp.eq.s32.totalorder %s28, 1
      %p93 = scmp.ne.s32.totalorder %s88, %s90
      %p94 = scmp.eq.s32.totalorder %s28, 0
      %p95 = por %p93, %p94
      %p96 = scmp.ne.s32.totalorder %s88, %s90
      %p97 = scmp.eq.s32.totalorder %s33, 1
      %p98 = por %p96, %p97
      %p99 = scmp.ne.s32.totalorder %s90, %s91
      %p100 = scmp.eq.s32.totalorder %s33, 0
      %p101 = por %p99, %p100
      %p102 = scmp.ne.s32.totalorder %s90, %s91
      %p103 = scmp.eq.s32.totalorder %s34, 1
      %p104 = por %p102, %p103
      %p106 = scmp.ne.s32.totalorder %s91, %s105
      %p107 = scmp.eq.s32.totalorder %s34, 0
      %p108 = por %p106, %p107
      %s110 = sadd.s32 %s109, 1
      %p113 = scmp.eq.s32.totalorder %s28, 1
      %p114 = scmp.ne.s32.totalorder %s109, %s111
      %p115 = scmp.eq.s32.totalorder %s28, 0
      %p116 = por %p114, %p115
      %p117 = scmp.ne.s32.totalorder %s109, %s111
      %p118 = scmp.eq.s32.totalorder %s33, 1
      %p119 = por %p117, %p118
      %p120 = scmp.ne.s32.totalorder %s111, %s112
      %p121 = scmp.eq.s32.totalorder %s33, 0
      %p122 = por %p120, %p121
      %p123 = scmp.ne.s32.totalorder %s111, %s112
      %p124 = scmp.eq.s32.totalorder %s34, 1
      %p125 = por %p123, %p124
      %p127 = scmp.ne.s32.totalorder %s112, %s126
      %p128 = scmp.eq.s32.totalorder %s34, 0
      %p129 = por %p127, %p128
      %s131 = sadd.s32 %s130, 1
      %p134 = scmp.eq.s32.totalorder %s28, 1
      %p135 = scmp.ne.s32.totalorder %s130, %s132
      %p136 = scmp.eq.s32.totalorder %s28, 0
      %p137 = por %p135, %p136
      %p138 = scmp.ne.s32.totalorder %s130, %s132
      %p139 = scmp.eq.s32.totalorder %s33, 1
      %p140 = por %p138, %p139
      %p141 = scmp.ne.s32.totalorder %s132, %s133
      %p142 = scmp.eq.s32.totalorder %s33, 0
      %p143 = por %p141, %p142
      %p144 = scmp.ne.s32.totalorder %s132, %s133
      %p145 = scmp.eq.s32.totalorder %s34, 1
      %p146 = por %p144, %p145
      %p148 = scmp.ne.s32.totalorder %s133, %s147
      %p149 = scmp.eq.s32.totalorder %s34, 0
      %p150 = por %p148, %p149
      %s152 = sadd.s32 %s151, 1
      %p155 = scmp.eq.s32.totalorder %s28, 1
      %p156 = scmp.ne.s32.totalorder %s151, %s153
      %p157 = scmp.eq.s32.totalorder %s28, 0
      %p158 = por %p156, %p157
      %p159 = scmp.ne.s32.totalorder %s151, %s153
      %p160 = scmp.eq.s32.totalorder %s33, 1
      %p161 = por %p159, %p160
      %p162 = scmp.ne.s32.totalorder %s153, %s154
      %p163 = scmp.eq.s32.totalorder %s33, 0
      %p164 = por %p162, %p163
      %p165 = scmp.ne.s32.totalorder %s153, %s154
      %p166 = scmp.eq.s32.totalorder %s34, 1
      %p167 = por %p165, %p166
      %p169 = scmp.ne.s32.totalorder %s154, %s168
      %p170 = scmp.eq.s32.totalorder %s34, 0
      %p171 = por %p169, %p170
      %s173 = sadd.s32 %s172, 1
      %p176 = scmp.eq.s32.totalorder %s28, 1
      %p177 = scmp.ne.s32.totalorder %s172, %s174
      %p178 = scmp.eq.s32.totalorder %s28, 0
      %p179 = por %p177, %p178
      %p180 = scmp.ne.s32.totalorder %s172, %s174
      %p181 = scmp.eq.s32.totalorder %s33, 1
      %p182 = por %p180, %p181
      %p183 = scmp.ne.s32.totalorder %s174, %s175
      %p184 = scmp.eq.s32.totalorder %s33, 0
      %p185 = por %p183, %p184
      %p186 = scmp.ne.s32.totalorder %s174, %s175
      %p187 = scmp.eq.s32.totalorder %s34, 1
      %p188 = por %p186, %p187
      %p190 = scmp.ne.s32.totalorder %s175, %s189
      %p191 = scmp.eq.s32.totalorder %s34, 0
      %p192 = por %p190, %p191
      %s194 = sadd.s32 %s193, 1
      %p197 = scmp.eq.s32.totalorder %s28, 1
      %p198 = scmp.ne.s32.totalorder %s193, %s195
      %p199 = scmp.eq.s32.totalorder %s28, 0
      %p200 = por %p198, %p199
      %p201 = scmp.ne.s32.totalorder %s193, %s195
      %p202 = scmp.eq.s32.totalorder %s33, 1
      %p203 = por %p201, %p202
      %p204 = scmp.ne.s32.totalorder %s195, %s196
      %p205 = scmp.eq.s32.totalorder %s33, 0
      %p206 = por %p204, %p205
      %p207 = scmp.ne.s32.totalorder %s195, %s196
      %p208 = scmp.eq.s32.totalorder %s34, 1
      %p209 = por %p207, %p208
      %p211 = scmp.ne.s32.totalorder %s196, %s210
      %p212 = scmp.eq.s32.totalorder %s34, 0
      %p213 = por %p211, %p212
      %s215 = sadd.s32 %s214, 1
      %p218 = scmp.eq.s32.totalorder %s28, 1
      %p219 = scmp.ne.s32.totalorder %s214, %s216
      %p220 = scmp.eq.s32.totalorder %s28, 0
      %p221 = por %p219, %p220
      %p222 = scmp.ne.s32.totalorder %s214, %s216
      %p223 = scmp.eq.s32.totalorder %s33, 1
      %p224 = por %p222, %p223
      %p225 = scmp.ne.s32.totalorder %s216, %s217
      %p226 = scmp.eq.s32.totalorder %s33, 0
      %p227 = por %p225, %p226
      %p228 = scmp.ne.s32.totalorder %s216, %s217
      %p229 = scmp.eq.s32.totalorder %s34, 1
      %p230 = por %p228, %p229
      %p232 = scmp.ne.s32.totalorder %s217, %s231
      %p233 = scmp.eq.s32.totalorder %s34, 0
      %p234 = por %p232, %p233
      %s236 = sadd.s32 %s235, 1
      %p239 = scmp.eq.s32.totalorder %s28, 1
      %p240 = scmp.ne.s32.totalorder %s235, %s237
      %p241 = scmp.eq.s32.totalorder %s28, 0
      %p242 = por %p240, %p241
      %p243 = scmp.ne.s32.totalorder %s235, %s237
      %p244 = scmp.eq.s32.totalorder %s33, 1
      %p245 = por %p243, %p244
      %p246 = scmp.ne.s32.totalorder %s237, %s238
      %p247 = scmp.eq.s32.totalorder %s33, 0
      %p248 = por %p246, %p247
      %p249 = scmp.ne.s32.totalorder %s237, %s238
      %p250 = scmp.eq.s32.totalorder %s34, 1
      %p251 = por %p249, %p250
      %p253 = scmp.ne.s32.totalorder %s238, %s252
      %p254 = scmp.eq.s32.totalorder %s34, 0
      %p255 = por %p253, %p254
      %s257 = sadd.s32 %s256, 1
      %p260 = scmp.eq.s32.totalorder %s28, 1
      %p261 = scmp.ne.s32.totalorder %s256, %s258
      %p262 = scmp.eq.s32.totalorder %s28, 0
      %p263 = por %p261, %p262
      %p264 = scmp.ne.s32.totalorder %s256, %s258
      %p265 = scmp.eq.s32.totalorder %s33, 1
      %p266 = por %p264, %p265
      %p267 = scmp.ne.s32.totalorder %s258, %s259
      %p268 = scmp.eq.s32.totalorder %s33, 0
      %p269 = por %p267, %p268
      %p270 = scmp.ne.s32.totalorder %s258, %s259
      %p271 = scmp.eq.s32.totalorder %s34, 1
      %p272 = por %p270, %p271
      %p274 = scmp.ne.s32.totalorder %s259, %s273
      %p275 = scmp.eq.s32.totalorder %s34, 0
      %p276 = por %p274, %p275
      %s278 = sadd.s32 %s277, 1
      %p281 = scmp.eq.s32.totalorder %s28, 1
      %p282 = scmp.ne.s32.totalorder %s277, %s279
      %p283 = scmp.eq.s32.totalorder %s28, 0
      %p284 = por %p282, %p283
      %p285 = scmp.ne.s32.totalorder %s277, %s279
      %p286 = scmp.eq.s32.totalorder %s33, 1
      %p287 = por %p285, %p286
      %p288 = scmp.ne.s32.totalorder %s279, %s280
      %p289 = scmp.eq.s32.totalorder %s33, 0
      %p290 = por %p288, %p289
      %p291 = scmp.ne.s32.totalorder %s279, %s280
      %p292 = scmp.eq.s32.totalorder %s34, 1
      %p293 = por %p291, %p292
      %p295 = scmp.ne.s32.totalorder %s280, %s294
      %p296 = scmp.eq.s32.totalorder %s34, 0
      %p297 = por %p295, %p296
      %s299 = sadd.s32 %s298, 1
      %p302 = scmp.eq.s32.totalorder %s28, 1
      %p303 = scmp.ne.s32.totalorder %s298, %s300
      %p304 = scmp.eq.s32.totalorder %s28, 0
      %p305 = por %p303, %p304
      %p306 = scmp.ne.s32.totalorder %s298, %s300
      %p307 = scmp.eq.s32.totalorder %s33, 1
      %p308 = por %p306, %p307
      %p309 = scmp.ne.s32.totalorder %s300, %s301
      %p310 = scmp.eq.s32.totalorder %s33, 0
      %p311 = por %p309, %p310
      %p312 = scmp.ne.s32.totalorder %s300, %s301
      %p313 = scmp.eq.s32.totalorder %s34, 1
      %p314 = por %p312, %p313
      %p316 = scmp.ne.s32.totalorder %s301, %s315
      %p317 = scmp.eq.s32.totalorder %s34, 0
      %p318 = por %p316, %p317
      %s320 = sadd.s32 %s319, 1
      %p323 = scmp.eq.s32.totalorder %s28, 1
      %p324 = scmp.ne.s32.totalorder %s319, %s321
      %p325 = scmp.eq.s32.totalorder %s28, 0
      %p326 = por %p324, %p325
      %p327 = scmp.ne.s32.totalorder %s319, %s321
      %p328 = scmp.eq.s32.totalorder %s33, 1
      %p329 = por %p327, %p328
      %p330 = scmp.ne.s32.totalorder %s321, %s322
      %p331 = scmp.eq.s32.totalorder %s33, 0
      %p332 = por %p330, %p331
      %p333 = scmp.ne.s32.totalorder %s321, %s322
      %p334 = scmp.eq.s32.totalorder %s34, 1
      %p335 = por %p333, %p334
      %p337 = scmp.ne.s32.totalorder %s322, %s336
      %p338 = scmp.eq.s32.totalorder %s34, 0
      %p339 = por %p337, %p338
      %s341 = sadd.s32 %s340, 1
      %p344 = scmp.eq.s32.totalorder %s28, 1
      %p345 = scmp.ne.s32.totalorder %s340, %s342
      %p346 = scmp.eq.s32.totalorder %s28, 0
      %p347 = por %p345, %p346
      %p348 = scmp.ne.s32.totalorder %s340, %s342
      %p349 = scmp.eq.s32.totalorder %s33, 1
      %p350 = por %p348, %p349
      %p351 = scmp.ne.s32.totalorder %s342, %s343
      %p352 = scmp.eq.s32.totalorder %s33, 0
      %p353 = por %p351, %p352
      %p354 = scmp.ne.s32.totalorder %s342, %s343
      %p355 = scmp.eq.s32.totalorder %s34, 1
      %p356 = por %p354, %p355
      %p358 = scmp.ne.s32.totalorder %s343, %s357
      %p359 = scmp.eq.s32.totalorder %s34, 0
      %p360 = por %p358, %p359
      %s361 = ssub.s32 %s28, %s35
      %p362 = scmp.eq.s32.totalorder %s361, 0
      %s364 = sadd.s32 %s363, 1
      %s365 = scalar_select %p362, %s363, %s364
      %p368 = pneg %p362
      %p369 = scmp.eq.s32.totalorder %s28, 1
      %p370 = por %p368, %p369
      %p371 = scmp.ne.s32.totalorder %s363, %s366
      %p372 = scmp.eq.s32.totalorder %s28, 0
      %p373 = por %p371, %p372
      %p374 = scmp.ne.s32.totalorder %s363, %s366
      %p375 = scmp.eq.s32.totalorder %s33, 1
      %p376 = por %p374, %p375
      %p377 = scmp.ne.s32.totalorder %s366, %s367
      %p378 = scmp.eq.s32.totalorder %s33, 0
      %p379 = por %p377, %p378
      %p380 = scmp.ne.s32.totalorder %s366, %s367
      %p381 = scmp.eq.s32.totalorder %s34, 1
      %p382 = por %p380, %p381
      %p384 = scmp.ne.s32.totalorder %s367, %s383
      %p385 = scmp.eq.s32.totalorder %s34, 0
      %p386 = por %p384, %p385
      %p387 = scmp.le.s32.totalorder 1, %s28
      %p388 = scmp.lt.s32.totalorder %s28, 3
      %p389 = pnand %p387, %p388
      %p390 = pneg %p389
      // Predicated region
      $region9: #{block_forward_pallas.1} parent=5 // pred_check
        _
      $region10: #{block_forward_pallas.1} parent=5 // pred_check_branch
        %392 = sbr.rel (%p389) target = $region12
      $region11: #{block_forward_pallas.1} parent=5 // pred_region
        %s393 = ssub.s32 %s28, 1
        // Predicated region
        $region13: #{block_forward_pallas.1} parent=11 // pred_check
          %p394 = pneg %p101
        $region14: #{block_forward_pallas.1} parent=11 // pred_check_branch
          %396 = sbr.rel (%p394) target = $region16
        $region15: #{block_forward_pallas.1} parent=11 // pred_region
          _
        $region16: #{block_forward_pallas.1} parent=11 // pred_fallthru
          _
        // Predicated region
        $region17: #{block_forward_pallas.1} parent=11 // pred_check
          %p397 = pneg %p122
        $region18: #{block_forward_pallas.1} parent=11 // pred_check_branch
          %399 = sbr.rel (%p397) target = $region20
        $region19: #{block_forward_pallas.1} parent=11 // pred_region
          _
        $region20: #{block_forward_pallas.1} parent=11 // pred_fallthru
          _
        // Predicated region
        $region21: #{block_forward_pallas.1} parent=11 // pred_check
          %p400 = pneg %p143
        $region22: #{block_forward_pallas.1} parent=11 // pred_check_branch
          %402 = sbr.rel (%p400) target = $region24
        $region23: #{block_forward_pallas.1} parent=11 // pred_region
          _
        $region24: #{block_forward_pallas.1} parent=11 // pred_fallthru
          _
        // Predicated region
        $region25: #{block_forward_pallas.1} parent=11 // pred_check
          %p403 = pneg %p164
        $region26: #{block_forward_pallas.1} parent=11 // pred_check_branch
          %405 = sbr.rel (%p403) target = $region28
        $region27: #{block_forward_pallas.1} parent=11 // pred_region
          %s407 = ssub.s32 3072, 3072
          %408 = vsyncadd [#allocation4], %s407
          %s409 = sshll.u32 [#allocation3], 4
          %s410 = int_to_ptr.vmem [resolvable:$true] %s409
          %415 = dma.hbm_to_vmem [thread:$0]  %s5, 3072, %s410, [#allocation4], 192, 192, 12
        $region28: #{block_forward_pallas.1} parent=11 // pred_fallthru
          _
        // Predicated region
        $region29: #{block_forward_pallas.1} parent=11 // pred_check
          %p416 = pneg %p185
        $region30: #{block_forward_pallas.1} parent=11 // pred_check_branch
          %418 = sbr.rel (%p416) target = $region32
        $region31: #{block_forward_pallas.1} parent=11 // pred_region
          %s420 = ssub.s32 2048, 2048
          %421 = vsyncadd [#allocation7], %s420
          %s422 = sshll.u32 [#allocation6], 4
          %s423 = int_to_ptr.vmem [resolvable:$true] %s422
          %428 = dma.hbm_to_vmem [thread:$0]  %s6, 2048, %s423, [#allocation7], 128, 128, 8
        $region32: #{block_forward_pallas.1} parent=11 // pred_fallthru
          _
        // Predicated region
        $region33: #{block_forward_pallas.1} parent=11 // pred_check
          %p429 = pneg %p206
        $region34: #{block_forward_pallas.1} parent=11 // pred_check_branch
          %431 = sbr.rel (%p429) target = $region36
        $region35: #{block_forward_pallas.1} parent=11 // pred_region
          _
        $region36: #{block_forward_pallas.1} parent=11 // pred_fallthru
          _
        // Predicated region
        $region37: #{block_forward_pallas.1} parent=11 // pred_check
          %p432 = pneg %p227
        $region38: #{block_forward_pallas.1} parent=11 // pred_check_branch
          %434 = sbr.rel (%p432) target = $region40
        $region39: #{block_forward_pallas.1} parent=11 // pred_region
          _
        $region40: #{block_forward_pallas.1} parent=11 // pred_fallthru
          _
        // Predicated region
        $region41: #{block_forward_pallas.1} parent=11 // pred_check
          %p435 = pneg %p248
        $region42: #{block_forward_pallas.1} parent=11 // pred_check_branch
          %437 = sbr.rel (%p435) target = $region44
        $region43: #{block_forward_pallas.1} parent=11 // pred_region
          _
        $region44: #{block_forward_pallas.1} parent=11 // pred_fallthru
          _
        // Predicated region
        $region45: #{block_forward_pallas.1} parent=11 // pred_check
          %p438 = pneg %p269
        $region46: #{block_forward_pallas.1} parent=11 // pred_check_branch
          %440 = sbr.rel (%p438) target = $region48
        $region47: #{block_forward_pallas.1} parent=11 // pred_region
          _
        $region48: #{block_forward_pallas.1} parent=11 // pred_fallthru
          _
        // Predicated region
        $region49: #{block_forward_pallas.1} parent=11 // pred_check
          %p441 = pneg %p290
        $region50: #{block_forward_pallas.1} parent=11 // pred_check_branch
          %443 = sbr.rel (%p441) target = $region52
        $region51: #{block_forward_pallas.1} parent=11 // pred_region
          %s445 = ssub.s32 4096, 4096
          %446 = vsyncadd [#allocation7], %s445
          %s447 = sshll.u32 [#allocation8], 4
          %s448 = int_to_ptr.vmem [resolvable:$true] %s447
          %453 = dma.hbm_to_vmem [thread:$0]  %s11, 4096, %s448, [#allocation7], 256, 256, 16
        $region52: #{block_forward_pallas.1} parent=11 // pred_fallthru
          _
        // Predicated region
        $region53: #{block_forward_pallas.1} parent=11 // pred_check
          %p454 = pneg %p311
        $region54: #{block_forward_pallas.1} parent=11 // pred_check_branch
          %456 = sbr.rel (%p454) target = $region56
        $region55: #{block_forward_pallas.1} parent=11 // pred_region
          _
        $region56: #{block_forward_pallas.1} parent=11 // pred_fallthru
          _
        // Predicated region
        $region57: #{block_forward_pallas.1} parent=11 // pred_check
          %p457 = pneg %p332
        $region58: #{block_forward_pallas.1} parent=11 // pred_check_branch
          %459 = sbr.rel (%p457) target = $region60
        $region59: #{block_forward_pallas.1} parent=11 // pred_region
          %s461 = ssub.s32 4096, 4096
          %462 = vsyncadd [#allocation10], %s461
          %s463 = sshll.u32 [#allocation9], 4
          %s464 = int_to_ptr.vmem [resolvable:$true] %s463
          %469 = dma.hbm_to_vmem [thread:$0]  %s13, 4096, %s464, [#allocation10], 64, 64, 4
        $region60: #{block_forward_pallas.1} parent=11 // pred_fallthru
          _
        // Predicated region
        $region61: #{block_forward_pallas.1} parent=11 // pred_check
          %p470 = pneg %p353
        $region62: #{block_forward_pallas.1} parent=11 // pred_check_branch
          %472 = sbr.rel (%p470) target = $region64
        $region63: #{block_forward_pallas.1} parent=11 // pred_region
          _
        $region64: #{block_forward_pallas.1} parent=11 // pred_fallthru
          _
      $region12: #{block_forward_pallas.1} parent=5 // pred_fallthru
        _
      %p473 = scmp.lt.s32.totalorder %s28, 2
      // Predicated region
      $region65: #{block_forward_pallas.1} parent=5 // pred_check
        %p474 = pneg %p473
      $region66: #{block_forward_pallas.1} parent=5 // pred_check_branch
        %476 = sbr.rel (%p474) target = $region68
      $region67: #{block_forward_pallas.1} parent=5 // pred_region
        // Predicated region
        $region69: #{block_forward_pallas.1} parent=67 // pred_check
          %p477 = pneg %p48
        $region70: #{block_forward_pallas.1} parent=67 // pred_check_branch
          %479 = sbr.rel (%p477) target = $region72
        $region71: #{block_forward_pallas.1} parent=67 // pred_region
          %s480 = smul.u32 16, %s28
          %p481 = scmp.lt.s32.totalorder %s480, 31
          %s482 = scalar_select %p481, %s480, 31
          %s483 = smul.addr %s482, 8
          %s484 = scalar_lea.vmem %s0, %s483
          %s485 = smul.u32 16, %s28
        $region72: #{block_forward_pallas.1} parent=67 // pred_fallthru
          _
        // Predicated region
        $region73: #{block_forward_pallas.1} parent=67 // pred_check
          %p486 = pneg %p74
        $region74: #{block_forward_pallas.1} parent=67 // pred_check_branch
          %488 = sbr.rel (%p486) target = $region76
        $region75: #{block_forward_pallas.1} parent=67 // pred_region
          %s489 = smul.u32 16, %s28
          %p490 = scmp.lt.s32.totalorder %s489, 31
          %s491 = scalar_select %p490, %s489, 31
          %s492 = smul.addr %s491, 8
          %s493 = scalar_lea.vmem %s1, %s492
          %s494 = smul.u32 16, %s28
        $region76: #{block_forward_pallas.1} parent=67 // pred_fallthru
          _
      $region68: #{block_forward_pallas.1} parent=5 // pred_fallthru
        _
      %p495 = scmp.le.s32.totalorder 1, %s28
      %p496 = scmp.lt.s32.totalorder %s28, 3
      %p497 = pnand %p495, %p496
      %p498 = pneg %p497
      // Predicated region
      $region77: #{block_forward_pallas.1} parent=5 // pred_check
        _
      $region78: #{block_forward_pallas.1} parent=5 // pred_check_branch
        %500 = sbr.rel (%p497) target = $region80
      $region79: #{block_forward_pallas.1} parent=5 // pred_region
        %s501 = ssub.s32 %s28, 1
        // Predicated region
        $region81: #{block_forward_pallas.1} parent=79 // pred_check
          %p502 = pneg %p164
        $region82: #{block_forward_pallas.1} parent=79 // pred_check_branch
          %504 = sbr.rel (%p502) target = $region84
        $region83: #{block_forward_pallas.1} parent=79 // pred_region
          %505 = dma.done [#allocation4], 3072
        $region84: #{block_forward_pallas.1} parent=79 // pred_fallthru
          _
        // Predicated region
        $region85: #{block_forward_pallas.1} parent=79 // pred_check
          %p506 = pneg %p185
        $region86: #{block_forward_pallas.1} parent=79 // pred_check_branch
          %508 = sbr.rel (%p506) target = $region88
        $region87: #{block_forward_pallas.1} parent=79 // pred_region
          %509 = dma.done [#allocation7], 2048
        $region88: #{block_forward_pallas.1} parent=79 // pred_fallthru
          _
        // Predicated region
        $region89: #{block_forward_pallas.1} parent=79 // pred_check
          %p510 = pneg %p290
        $region90: #{block_forward_pallas.1} parent=79 // pred_check_branch
          %512 = sbr.rel (%p510) target = $region92
        $region91: #{block_forward_pallas.1} parent=79 // pred_region
          %513 = dma.done [#allocation7], 4096
        $region92: #{block_forward_pallas.1} parent=79 // pred_fallthru
          _
        // Predicated region
        $region93: #{block_forward_pallas.1} parent=79 // pred_check
          %p514 = pneg %p332
        $region94: #{block_forward_pallas.1} parent=79 // pred_check_branch
          %516 = sbr.rel (%p514) target = $region96
        $region95: #{block_forward_pallas.1} parent=79 // pred_region
          %517 = dma.done [#allocation10], 4096
        $region96: #{block_forward_pallas.1} parent=79 // pred_fallthru
          _
        %s518 = smul.u32 16, %s33
        %p519 = scmp.lt.s32.totalorder %s518, 31
        %s520 = scalar_select %p519, %s518, 31
        %s521 = smul.addr %s520, 8
        %s522 = scalar_lea.vmem %s0, %s521
        %p523 = pneg %p54
        %p524 = pneg %p51
        %s525 = smul.u32 16, %s33
        %p526 = scmp.lt.s32.totalorder %s525, 31
        %s527 = scalar_select %p526, %s525, 31
        %s528 = smul.addr %s527, 8
        %s529 = scalar_lea.vmem %s1, %s528
        %p530 = pneg %p80
        %p531 = pneg %p77
        %p532 = pneg %p101
        %p533 = pneg %p98
        %p534 = pneg %p122
        %p535 = pneg %p119
        %p536 = pneg %p143
        %p537 = pneg %p140
        %p538 = pneg %p164
        %p539 = pneg %p161
        %p540 = pneg %p185
        %p541 = pneg %p182
        %p542 = pneg %p206
        %p543 = pneg %p203
        %p544 = pneg %p227
        %p545 = pneg %p224
        %p546 = pneg %p248
        %p547 = pneg %p245
        %p548 = pneg %p269
        %p549 = pneg %p266
        %p550 = pneg %p290
        %p551 = pneg %p287
        %p552 = pneg %p311
        %p553 = pneg %p308
        %p554 = pneg %p332
        %p555 = pneg %p329
        %p556 = pneg %p353
        %p557 = pneg %p350
        %p558 = pneg %p379
        %p559 = pneg %p376
        %s560 = sand.u32 %s366, 1
        %s561 = scalar_lea.sflag [#allocation5], %s560
        %s562 = sand.u32 %s366, 1
        %s563 = smul.addr %s562, 128
        %s564 = scalar_lea.vmem [#allocation11], %s563
        %s565 = smul.u32 16, %s33
        %p566 = scmp.lt.s32.totalorder %s565, 31
        %s567 = scalar_select %p566, %s565, 31
        %s568 = smul.addr %s567, 8
        %s569 = scalar_lea.vmem %s0, %s568
        %s570 = smul.u32 16, %s33
        %s571 = smul.u32 16, %s33
        %p572 = scmp.lt.s32.totalorder %s571, 31
        %s573 = scalar_select %p572, %s571, 31
        %s574 = smul.addr %s573, 8
        %s575 = scalar_lea.vmem %s1, %s574
        %s576 = smul.u32 16, %s33
        %s577 = smul.u32 16, %s33
        %v579 = vld [vmem:[%s569] sm:$0xff]
        %v580 = vld [vmem:[%s569 + $0x8] sm:$0xff]
        %v581 = vld [vmem:[%s569 + $0x10] sm:$0xff]
        %v582 = vld [vmem:[%s569 + $0x18] sm:$0xff]
        %v583 = vld [vmem:[%s569 + $0x20] sm:$0xff]
        %v584 = vld [vmem:[%s569 + $0x28] sm:$0xff]
        %v585 = vld [vmem:[%s569 + $0x30] sm:$0xff]
        %v586 = vld [vmem:[%s569 + $0x38] sm:$0xff]
        %v587 = vld [vmem:[%s569 + $0x40] sm:$0xff]
        %v588 = vld [vmem:[%s569 + $0x48] sm:$0xff]
        %v589 = vld [vmem:[%s569 + $0x50] sm:$0xff]
        %v590 = vld [vmem:[%s569 + $0x58] sm:$0xff]
        %v591 = vld [vmem:[%s569 + $0x60] sm:$0xff]
        %v592 = vld [vmem:[%s569 + $0x68] sm:$0xff]
        %v593 = vld [vmem:[%s569 + $0x70] sm:$0xff]
        %v594 = vld [vmem:[%s569 + $0x78] sm:$0xff]
        %v595 = vld [vmem:[%s3] sm:$0x1]
        %v596 = vld [vmem:[%s4] sm:$0x1]
        %597 = vadd.xlane.f32.xlu0 %v579
        %v598 = vpop.xlane.xlu0 %597
        %599 = vadd.xlane.f32.xlu0 %v580
        %v600 = vpop.xlane.xlu0 %599
        %601 = vadd.xlane.f32.xlu0 %v581
        %v602 = vpop.xlane.xlu0 %601
        %603 = vadd.xlane.f32.xlu0 %v582
        %v604 = vpop.xlane.xlu0 %603
        %605 = vadd.xlane.f32.xlu0 %v583
        %v606 = vpop.xlane.xlu0 %605
        %607 = vadd.xlane.f32.xlu0 %v584
        %v608 = vpop.xlane.xlu0 %607
        %609 = vadd.xlane.f32.xlu0 %v585
        %v610 = vpop.xlane.xlu0 %609
        %611 = vadd.xlane.f32.xlu0 %v586
        %v612 = vpop.xlane.xlu0 %611
        %613 = vadd.xlane.f32.xlu0 %v587
        %v614 = vpop.xlane.xlu0 %613
        %615 = vadd.xlane.f32.xlu0 %v588
        %v616 = vpop.xlane.xlu0 %615
        %617 = vadd.xlane.f32.xlu0 %v589
        %v618 = vpop.xlane.xlu0 %617
        %619 = vadd.xlane.f32.xlu0 %v590
        %v620 = vpop.xlane.xlu0 %619
        %621 = vadd.xlane.f32.xlu0 %v591
        %v622 = vpop.xlane.xlu0 %621
        %623 = vadd.xlane.f32.xlu0 %v592
        %v624 = vpop.xlane.xlu0 %623
        %625 = vadd.xlane.f32.xlu0 %v593
        %v626 = vpop.xlane.xlu0 %625
        %627 = vadd.xlane.f32.xlu0 %v594
        %v628 = vpop.xlane.xlu0 %627
        %v629 = vrcp.pop 128.0
        %v630 = vmul.f32 %v598, %v629
        %v631 = vmul.f32 %v600, %v629
        %v632 = vmul.f32 %v602, %v629
        %v633 = vmul.f32 %v604, %v629
        %v634 = vmul.f32 %v606, %v629
        %v635 = vmul.f32 %v608, %v629
        %v636 = vmul.f32 %v610, %v629
        %v637 = vmul.f32 %v612, %v629
        %v638 = vmul.f32 %v614, %v629
        %v639 = vmul.f32 %v616, %v629
        %v640 = vmul.f32 %v618, %v629
        %v641 = vmul.f32 %v620, %v629
        %v642 = vmul.f32 %v622, %v629
        %v643 = vmul.f32 %v624, %v629
        %v644 = vmul.f32 %v626, %v629
        %v645 = vmul.f32 %v628, %v629
        %v646 = vsub.f32 %v579, %v630
        %v647 = vsub.f32 %v580, %v631
        %v648 = vsub.f32 %v581, %v632
        %v649 = vsub.f32 %v582, %v633
        %v650 = vsub.f32 %v583, %v634
        %v651 = vsub.f32 %v584, %v635
        %v652 = vsub.f32 %v585, %v636
        %v653 = vsub.f32 %v586, %v637
        %v654 = vsub.f32 %v587, %v638
        %v655 = vsub.f32 %v588, %v639
        %v656 = vsub.f32 %v589, %v640
        %v657 = vsub.f32 %v590, %v641
        %v658 = vsub.f32 %v591, %v642
        %v659 = vsub.f32 %v592, %v643
        %v660 = vsub.f32 %v593, %v644
        %v661 = vsub.f32 %v594, %v645
        %v662 = vmul.f32 %v646, %v646
        %v663 = vmul.f32 %v647, %v647
        %v664 = vmul.f32 %v648, %v648
        %v665 = vmul.f32 %v649, %v649
        %v666 = vmul.f32 %v650, %v650
        %v667 = vmul.f32 %v651, %v651
        %v668 = vmul.f32 %v652, %v652
        %v669 = vmul.f32 %v653, %v653
        %v670 = vmul.f32 %v654, %v654
        %v671 = vmul.f32 %v655, %v655
        %v672 = vmul.f32 %v656, %v656
        %v673 = vmul.f32 %v657, %v657
        %v674 = vmul.f32 %v658, %v658
        %v675 = vmul.f32 %v659, %v659
        %v676 = vmul.f32 %v660, %v660
        %v677 = vmul.f32 %v661, %v661
        %678 = vadd.xlane.f32.xlu0 %v662
        %v679 = vpop.xlane.xlu0 %678
        %680 = vadd.xlane.f32.xlu0 %v663
        %v681 = vpop.xlane.xlu0 %680
        %682 = vadd.xlane.f32.xlu0 %v664
        %v683 = vpop.xlane.xlu0 %682
        %684 = vadd.xlane.f32.xlu0 %v665
        %v685 = vpop.xlane.xlu0 %684
        %686 = vadd.xlane.f32.xlu0 %v666
        %v687 = vpop.xlane.xlu0 %686
        %688 = vadd.xlane.f32.xlu0 %v667
        %v689 = vpop.xlane.xlu0 %688
        %690 = vadd.xlane.f32.xlu0 %v668
        %v691 = vpop.xlane.xlu0 %690
        %692 = vadd.xlane.f32.xlu0 %v669
        %v693 = vpop.xlane.xlu0 %692
        %694 = vadd.xlane.f32.xlu0 %v670
        %v695 = vpop.xlane.xlu0 %694
        %696 = vadd.xlane.f32.xlu0 %v671
        %v697 = vpop.xlane.xlu0 %696
        %698 = vadd.xlane.f32.xlu0 %v672
        %v699 = vpop.xlane.xlu0 %698
        %700 = vadd.xlane.f32.xlu0 %v673
        %v701 = vpop.xlane.xlu0 %700
        %702 = vadd.xlane.f32.xlu0 %v674
        %v703 = vpop.xlane.xlu0 %702
        %704 = vadd.xlane.f32.xlu0 %v675
        %v705 = vpop.xlane.xlu0 %704
        %706 = vadd.xlane.f32.xlu0 %v676
        %v707 = vpop.xlane.xlu0 %706
        %708 = vadd.xlane.f32.xlu0 %v677
        %v709 = vpop.xlane.xlu0 %708
        %v710 = vmul.f32 %v679, %v629
        %v711 = vmul.f32 %v681, %v629
        %v712 = vmul.f32 %v683, %v629
        %v713 = vmul.f32 %v685, %v629
        %v714 = vmul.f32 %v687, %v629
        %v715 = vmul.f32 %v689, %v629
        %v716 = vmul.f32 %v691, %v629
        %v717 = vmul.f32 %v693, %v629
        %v718 = vmul.f32 %v695, %v629
        %v719 = vmul.f32 %v697, %v629
        %v720 = vmul.f32 %v699, %v629
        %v721 = vmul.f32 %v701, %v629
        %v722 = vmul.f32 %v703, %v629
        %v723 = vmul.f32 %v705, %v629
        %v724 = vmul.f32 %v707, %v629
        %v725 = vmul.f32 %v709, %v629
        %v726 = vadd.f32 %v710, 1e-05
        %v727 = vadd.f32 %v711, 1e-05
        %v728 = vadd.f32 %v712, 1e-05
        %v729 = vadd.f32 %v713, 1e-05
        %v730 = vadd.f32 %v714, 1e-05
        %v731 = vadd.f32 %v715, 1e-05
        %v732 = vadd.f32 %v716, 1e-05
        %v733 = vadd.f32 %v717, 1e-05
        %v734 = vadd.f32 %v718, 1e-05
        %v735 = vadd.f32 %v719, 1e-05
        %v736 = vadd.f32 %v720, 1e-05
        %v737 = vadd.f32 %v721, 1e-05
        %v738 = vadd.f32 %v722, 1e-05
        %v739 = vadd.f32 %v723, 1e-05
        %v740 = vadd.f32 %v724, 1e-05
        %v741 = vadd.f32 %v725, 1e-05
        %v742 = vrsqrt.pop %v726
        %v743 = vrsqrt.pop %v727
        %v744 = vrsqrt.pop %v728
        %v745 = vrsqrt.pop %v729
        %v746 = vrsqrt.pop %v730
        %v747 = vrsqrt.pop %v731
        %v748 = vrsqrt.pop %v732
        %v749 = vrsqrt.pop %v733
        %v750 = vrsqrt.pop %v734
        %v751 = vrsqrt.pop %v735
        %v752 = vrsqrt.pop %v736
        %v753 = vrsqrt.pop %v737
        %v754 = vrsqrt.pop %v738
        %v755 = vrsqrt.pop %v739
        %v756 = vrsqrt.pop %v740
        %v757 = vrsqrt.pop %v741
        %v758 = vmul.f32 %v646, %v742
        %v759 = vmul.f32 %v647, %v743
        %v760 = vmul.f32 %v648, %v744
        %v761 = vmul.f32 %v649, %v745
        %v762 = vmul.f32 %v650, %v746
        %v763 = vmul.f32 %v651, %v747
        %v764 = vmul.f32 %v652, %v748
        %v765 = vmul.f32 %v653, %v749
        %v766 = vmul.f32 %v654, %v750
        %v767 = vmul.f32 %v655, %v751
        %v768 = vmul.f32 %v656, %v752
        %v769 = vmul.f32 %v657, %v753
        %v770 = vmul.f32 %v658, %v754
        %v771 = vmul.f32 %v659, %v755
        %v772 = vmul.f32 %v660, %v756
        %v773 = vmul.f32 %v661, %v757
        %v775 = vlaneseq
        %v776 = vshrl.u32 %v775, 7
        %v777 = vsub.s32 0, %v776
        %v778 = vrot.slane %v595, %v777
        %v780 = vmul.f32 %v758, %v778
        %v781 = vmul.f32 %v759, %v778
        %v782 = vmul.f32 %v760, %v778
        %v783 = vmul.f32 %v761, %v778
        %v784 = vmul.f32 %v762, %v778
        %v785 = vmul.f32 %v763, %v778
        %v786 = vmul.f32 %v764, %v778
        %v787 = vmul.f32 %v765, %v778
        %v788 = vmul.f32 %v766, %v778
        %v789 = vmul.f32 %v767, %v778
        %v790 = vmul.f32 %v768, %v778
        %v791 = vmul.f32 %v769, %v778
        %v792 = vmul.f32 %v770, %v778
        %v793 = vmul.f32 %v771, %v778
        %v794 = vmul.f32 %v772, %v778
        %v795 = vmul.f32 %v773, %v778
        %v797 = vlaneseq
        %v798 = vshrl.u32 %v797, 7
        %v799 = vsub.s32 0, %v798
        %v800 = vrot.slane %v596, %v799
        %v802 = vadd.f32 %v780, %v800
        %v803 = vadd.f32 %v781, %v800
        %v804 = vadd.f32 %v782, %v800
        %v805 = vadd.f32 %v783, %v800
        %v806 = vadd.f32 %v784, %v800
        %v807 = vadd.f32 %v785, %v800
        %v808 = vadd.f32 %v786, %v800
        %v809 = vadd.f32 %v787, %v800
        %v810 = vadd.f32 %v788, %v800
        %v811 = vadd.f32 %v789, %v800
        %v812 = vadd.f32 %v790, %v800
        %v813 = vadd.f32 %v791, %v800
        %v814 = vadd.f32 %v792, %v800
        %v815 = vadd.f32 %v793, %v800
        %v816 = vadd.f32 %v794, %v800
        %v817 = vadd.f32 %v795, %v800
        %v818 = vld [vmem:[%s575] sm:$0xff]
        %v819 = vld [vmem:[%s575 + $0x8] sm:$0xff]
        %v820 = vld [vmem:[%s575 + $0x10] sm:$0xff]
        %v821 = vld [vmem:[%s575 + $0x18] sm:$0xff]
        %v822 = vld [vmem:[%s575 + $0x20] sm:$0xff]
        %v823 = vld [vmem:[%s575 + $0x28] sm:$0xff]
        %v824 = vld [vmem:[%s575 + $0x30] sm:$0xff]
        %v825 = vld [vmem:[%s575 + $0x38] sm:$0xff]
        %v826 = vld [vmem:[%s575 + $0x40] sm:$0xff]
        %v827 = vld [vmem:[%s575 + $0x48] sm:$0xff]
        %v828 = vld [vmem:[%s575 + $0x50] sm:$0xff]
        %v829 = vld [vmem:[%s575 + $0x58] sm:$0xff]
        %v830 = vld [vmem:[%s575 + $0x60] sm:$0xff]
        %v831 = vld [vmem:[%s575 + $0x68] sm:$0xff]
        %v832 = vld [vmem:[%s575 + $0x70] sm:$0xff]
        %v833 = vld [vmem:[%s575 + $0x78] sm:$0xff]
        %s834 = sld [smem:[#allocation2]]
        %v835 = vstv %s834
        %v836 = vmul.f32 %v818, %v835
        %v837 = vmul.f32 %v819, %v835
        %v838 = vmul.f32 %v820, %v835
        %v839 = vmul.f32 %v821, %v835
        %v840 = vmul.f32 %v822, %v835
        %v841 = vmul.f32 %v823, %v835
        %v842 = vmul.f32 %v824, %v835
        %v843 = vmul.f32 %v825, %v835
        %v844 = vmul.f32 %v826, %v835
        %v845 = vmul.f32 %v827, %v835
        %v846 = vmul.f32 %v828, %v835
        %v847 = vmul.f32 %v829, %v835
        %v848 = vmul.f32 %v830, %v835
        %v849 = vmul.f32 %v831, %v835
        %v850 = vmul.f32 %v832, %v835
        %v851 = vmul.f32 %v833, %v835
        %853 = vset.pattern.permute.xlu0 0
        %854 = vperm.xlu0 %853, %v836
        %v855 = vpop.permute.xlu0 %854
        %858 = vset.pattern.permute.xlu0 0
        %859 = vperm.xlu0 %858, %v837
        %v860 = vpop.permute.xlu0 %859
        %863 = vset.pattern.permute.xlu0 0
        %864 = vperm.xlu0 %863, %v838
        %v865 = vpop.permute.xlu0 %864
        %868 = vset.pattern.permute.xlu0 0
        %869 = vperm.xlu0 %868, %v839
        %v870 = vpop.permute.xlu0 %869
        %873 = vset.pattern.permute.xlu0 0
        %874 = vperm.xlu0 %873, %v840
        %v875 = vpop.permute.xlu0 %874
        %878 = vset.pattern.permute.xlu0 0
        %879 = vperm.xlu0 %878, %v841
        %v880 = vpop.permute.xlu0 %879
        %883 = vset.pattern.permute.xlu0 0
        %884 = vperm.xlu0 %883, %v842
        %v885 = vpop.permute.xlu0 %884
        %888 = vset.pattern.permute.xlu0 0
        %889 = vperm.xlu0 %888, %v843
        %v890 = vpop.permute.xlu0 %889
        %893 = vset.pattern.permute.xlu0 0
        %894 = vperm.xlu0 %893, %v844
        %v895 = vpop.permute.xlu0 %894
        %898 = vset.pattern.permute.xlu0 0
        %899 = vperm.xlu0 %898, %v845
        %v900 = vpop.permute.xlu0 %899
        %903 = vset.pattern.permute.xlu0 0
        %904 = vperm.xlu0 %903, %v846
        %v905 = vpop.permute.xlu0 %904
        %908 = vset.pattern.permute.xlu0 0
        %909 = vperm.xlu0 %908, %v847
        %v910 = vpop.permute.xlu0 %909
        %913 = vset.pattern.permute.xlu0 0
        %914 = vperm.xlu0 %913, %v848
        %v915 = vpop.permute.xlu0 %914
        %918 = vset.pattern.permute.xlu0 0
        %919 = vperm.xlu0 %918, %v849
        %v920 = vpop.permute.xlu0 %919
        %923 = vset.pattern.permute.xlu0 0
        %924 = vperm.xlu0 %923, %v850
        %v925 = vpop.permute.xlu0 %924
        %928 = vset.pattern.permute.xlu0 0
        %929 = vperm.xlu0 %928, %v851
        %v930 = vpop.permute.xlu0 %929
        %v932 = vadd.f32 %v802, %v855
        %v933 = vadd.f32 %v803, %v860
        %v934 = vadd.f32 %v804, %v865
        %v935 = vadd.f32 %v805, %v870
        %v936 = vadd.f32 %v806, %v875
        %v937 = vadd.f32 %v807, %v880
        %v938 = vadd.f32 %v808, %v885
        %v939 = vadd.f32 %v809, %v890
        %v940 = vadd.f32 %v810, %v895
        %v941 = vadd.f32 %v811, %v900
        %v942 = vadd.f32 %v812, %v905
        %v943 = vadd.f32 %v813, %v910
        %v944 = vadd.f32 %v814, %v915
        %v945 = vadd.f32 %v815, %v920
        %v946 = vadd.f32 %v816, %v925
        %v947 = vadd.f32 %v817, %v930
        %v948 = vpack.c.bf16 %v933, %v932
        %v949 = vpack.c.bf16 %v935, %v934
        %v950 = vpack.c.bf16 %v937, %v936
        %v951 = vpack.c.bf16 %v939, %v938
        %v952 = vpack.c.bf16 %v941, %v940
        %v953 = vpack.c.bf16 %v943, %v942
        %v954 = vpack.c.bf16 %v945, %v944
        %v955 = vpack.c.bf16 %v947, %v946
        %v956 = vld [vmem:[#allocation3] sm:$0xff]
        %v957 = vld [vmem:[#allocation3 + $0x8] sm:$0xf]
        %v958 = vld [vmem:[#allocation3 + $0xc] sm:$0xff]
        %v959 = vld [vmem:[#allocation3 + $0x14] sm:$0xf]
        %v960 = vld [vmem:[#allocation3 + $0x18] sm:$0xff]
        %v961 = vld [vmem:[#allocation3 + $0x20] sm:$0xf]
        %v962 = vld [vmem:[#allocation3 + $0x24] sm:$0xff]
        %v963 = vld [vmem:[#allocation3 + $0x2c] sm:$0xf]
        %v964 = vld [vmem:[#allocation3 + $0x30] sm:$0xff]
        %v965 = vld [vmem:[#allocation3 + $0x38] sm:$0xf]
        %v966 = vld [vmem:[#allocation3 + $0x3c] sm:$0xff]
        %v967 = vld [vmem:[#allocation3 + $0x44] sm:$0xf]
        %v968 = vld [vmem:[#allocation3 + $0x48] sm:$0xff]
        %v969 = vld [vmem:[#allocation3 + $0x50] sm:$0xf]
        %v970 = vld [vmem:[#allocation3 + $0x54] sm:$0xff]
        %v971 = vld [vmem:[#allocation3 + $0x5c] sm:$0xf]
        %v972 = vld [vmem:[#allocation3 + $0x60] sm:$0xff]
        %v973 = vld [vmem:[#allocation3 + $0x68] sm:$0xf]
        %v974 = vld [vmem:[#allocation3 + $0x6c] sm:$0xff]
        %v975 = vld [vmem:[#allocation3 + $0x74] sm:$0xf]
        %v976 = vld [vmem:[#allocation3 + $0x78] sm:$0xff]
        %v977 = vld [vmem:[#allocation3 + $0x80] sm:$0xf]
        %v978 = vld [vmem:[#allocation3 + $0x84] sm:$0xff]
        %v979 = vld [vmem:[#allocation3 + $0x8c] sm:$0xf]
        %v980 = vld [vmem:[#allocation3 + $0x90] sm:$0xff]
        %v981 = vld [vmem:[#allocation3 + $0x98] sm:$0xf]
        %v982 = vld [vmem:[#allocation3 + $0x9c] sm:$0xff]
        %v983 = vld [vmem:[#allocation3 + $0xa4] sm:$0xf]
        %v984 = vld [vmem:[#allocation3 + $0xa8] sm:$0xff]
        %v985 = vld [vmem:[#allocation3 + $0xb0] sm:$0xf]
        %v986 = vld [vmem:[#allocation3 + $0xb4] sm:$0xff]
        %v987 = vld [vmem:[#allocation3 + $0xbc] sm:$0xf]
        %v1020 = vunpack.c.l.b16 %v956
        %v1021 = vunpack.c.h.b16 %v956
        %v1022 = vunpack.c.l.b16 %v957
        %v1023 = vunpack.c.l.b16 %v958
        %v1024 = vunpack.c.h.b16 %v958
        %v1025 = vunpack.c.l.b16 %v959
        %v1026 = vunpack.c.l.b16 %v960
        %v1027 = vunpack.c.h.b16 %v960
        %v1028 = vunpack.c.l.b16 %v961
        %v1029 = vunpack.c.l.b16 %v962
        %v1030 = vunpack.c.h.b16 %v962
        %v1031 = vunpack.c.l.b16 %v963
        %v1032 = vunpack.c.l.b16 %v964
        %v1033 = vunpack.c.h.b16 %v964
        %v1034 = vunpack.c.l.b16 %v965
        %v1035 = vunpack.c.l.b16 %v966
        %v1036 = vunpack.c.h.b16 %v966
        %v1037 = vunpack.c.l.b16 %v967
        %v1038 = vunpack.c.l.b16 %v968
        %v1039 = vunpack.c.h.b16 %v968
        %v1040 = vunpack.c.l.b16 %v969
        %v1041 = vunpack.c.l.b16 %v970
        %v1042 = vunpack.c.h.b16 %v970
        %v1043 = vunpack.c.l.b16 %v971
        %v1044 = vunpack.c.l.b16 %v972
        %v1045 = vunpack.c.h.b16 %v972
        %v1046 = vunpack.c.l.b16 %v973
        %v1047 = vunpack.c.l.b16 %v974
        %v1048 = vunpack.c.h.b16 %v974
        %v1049 = vunpack.c.l.b16 %v975
        %v1050 = vunpack.c.l.b16 %v976
        %v1051 = vunpack.c.h.b16 %v976
        %v1052 = vunpack.c.l.b16 %v977
        %v1053 = vunpack.c.l.b16 %v978
        %v1054 = vunpack.c.h.b16 %v978
        %v1055 = vunpack.c.l.b16 %v979
        %v1056 = vunpack.c.l.b16 %v980
        %v1057 = vunpack.c.h.b16 %v980
        %v1058 = vunpack.c.l.b16 %v981
        %v1059 = vunpack.c.l.b16 %v982
        %v1060 = vunpack.c.h.b16 %v982
        %v1061 = vunpack.c.l.b16 %v983
        %v1062 = vunpack.c.l.b16 %v984
        %v1063 = vunpack.c.h.b16 %v984
        %v1064 = vunpack.c.l.b16 %v985
        %v1065 = vunpack.c.l.b16 %v986
        %v1066 = vunpack.c.h.b16 %v986
        %v1067 = vunpack.c.l.b16 %v987
        %v1068 = vpack.c.b16 %v1023, %v1020
        %v1069 = vpack.c.b16 %v1024, %v1021
        %v1070 = vpack.c.b16 %v1025, %v1022
        %v1071 = vpack.c.b16 %v1029, %v1026
        %v1072 = vpack.c.b16 %v1030, %v1027
        %v1073 = vpack.c.b16 %v1031, %v1028
        %v1074 = vpack.c.b16 %v1035, %v1032
        %v1075 = vpack.c.b16 %v1036, %v1033
        %v1076 = vpack.c.b16 %v1037, %v1034
        %v1077 = vpack.c.b16 %v1041, %v1038
        %v1078 = vpack.c.b16 %v1042, %v1039
        %v1079 = vpack.c.b16 %v1043, %v1040
        %v1080 = vpack.c.b16 %v1047, %v1044
        %v1081 = vpack.c.b16 %v1048, %v1045
        %v1082 = vpack.c.b16 %v1049, %v1046
        %v1083 = vpack.c.b16 %v1053, %v1050
        %v1084 = vpack.c.b16 %v1054, %v1051
        %v1085 = vpack.c.b16 %v1055, %v1052
        %v1086 = vpack.c.b16 %v1059, %v1056
        %v1087 = vpack.c.b16 %v1060, %v1057
        %v1088 = vpack.c.b16 %v1061, %v1058
        %v1089 = vpack.c.b16 %v1065, %v1062
        %v1090 = vpack.c.b16 %v1066, %v1063
        %v1091 = vpack.c.b16 %v1067, %v1064
        %1116 = vmatprep.subr.bf16.mxu0 %v1069
        %1117 = vmatpush1.bf16.msra.mxu0 %v1068
        %1118 = vmatprep.subr.bf16.mxu0 %v1072
        %1119 = vmatpush1.bf16.msra.mxu0 %v1071
        %1120 = vmatprep.subr.bf16.mxu0 %v1075
        %1121 = vmatpush1.bf16.msra.mxu0 %v1074
        %1122 = vmatprep.subr.bf16.mxu0 %v1078
        %1123 = vmatpush1.bf16.msra.mxu0 %v1077
        %1124 = vmatprep.subr.bf16.mxu0 %v1081
        %1125 = vmatpush1.bf16.msra.mxu0 %v1080
        %1126 = vmatprep.subr.bf16.mxu0 %v1084
        %1127 = vmatpush1.bf16.msra.mxu0 %v1083
        %1128 = vmatprep.subr.bf16.mxu0 %v1087
        %1129 = vmatpush1.bf16.msra.mxu0 %v1086
        %1130 = vmatprep.subr.bf16.mxu0 %v1090
        %1131 = vmatpush1.bf16.msra.mxu0 %v1089
        %1132 = vmatprep.subr.bf16.mxu0 0
        %1133 = vmatpush1.bf16.msra.mxu0 0
        %1134 = vmatprep.subr.bf16.mxu0 0
        %1135 = vmatpush1.bf16.msra.mxu0 0
        %1136 = vmatprep.subr.bf16.mxu0 0
        %1137 = vmatpush1.bf16.msra.mxu0 0
        %1138 = vmatprep.subr.bf16.mxu0 0
        %1139 = vmatpush1.bf16.msra.mxu0 0
        %1140 = vmatprep.subr.bf16.mxu0 0
        %1141 = vmatpush1.bf16.msra.mxu0 0
        %1142 = vmatprep.subr.bf16.mxu0 0
        %1143 = vmatpush1.bf16.msra.mxu0 0
        %1144 = vmatprep.subr.bf16.mxu0 0
        %1145 = vmatpush1.bf16.msra.mxu0 0
        %1146 = vmatprep.subr.bf16.mxu0 0
        %1147 = vmatpush1.bf16.msra.mxu0 0
        %1148 = vmatprep.mubr.bf16.mxu0 0
        %1149 = vmatmul.mubr.bf16.gmra.mrb[0].mxu0 %v948
        %v1150 = vpop.f32.mrb[0].mxu0
        %v1151 = vadd.f32 0.0, %v1150
        %v1152 = vpop.f32.mrb[0].mxu0
        %v1153 = vadd.f32 0.0, %v1152
        %v1154 = vpop.f32.mrb[0].mxu0
        %v1155 = vadd.f32 0.0, %v1154
        %v1156 = vpop.f32.mrb[0].mxu0
        %v1157 = vadd.f32 0.0, %v1156
        %1158 = vmatprep.mubr.bf16.mxu0 0
        %1159 = vmatmul.mubr.bf16.gmra.mrb[0].mxu0 %v949
        %v1160 = vpop.f32.mrb[0].mxu0
        %v1161 = vadd.f32 0.0, %v1160
        %v1162 = vpop.f32.mrb[0].mxu0
        %v1163 = vadd.f32 0.0, %v1162
        %v1164 = vpop.f32.mrb[0].mxu0
        %v1165 = vadd.f32 0.0, %v1164
        %v1166 = vpop.f32.mrb[0].mxu0
        %v1167 = vadd.f32 0.0, %v1166
        %1168 = vmatprep.mubr.bf16.mxu0 0
        %1169 = vmatmul.mubr.bf16.gmra.mrb[0].mxu0 %v950
        %v1170 = vpop.f32.mrb[0].mxu0
        %v1171 = vadd.f32 0.0, %v1170
        %v1172 = vpop.f32.mrb[0].mxu0
        %v1173 = vadd.f32 0.0, %v1172
        %v1174 = vpop.f32.mrb[0].mxu0
        %v1175 = vadd.f32 0.0, %v1174
        %v1176 = vpop.f32.mrb[0].mxu0
        %v1177 = vadd.f32 0.0, %v1176
        %1178 = vmatprep.mubr.bf16.mxu0 0
        %1179 = vmatmul.mubr.bf16.gmra.mrb[0].mxu0 %v951
        %v1180 = vpop.f32.mrb[0].mxu0
        %v1181 = vadd.f32 0.0, %v1180
        %v1182 = vpop.f32.mrb[0].mxu0
        %v1183 = vadd.f32 0.0, %v1182
        %v1184 = vpop.f32.mrb[0].mxu0
        %v1185 = vadd.f32 0.0, %v1184
        %v1186 = vpop.f32.mrb[0].mxu0
        %v1187 = vadd.f32 0.0, %v1186
        %1188 = vmatprep.mubr.bf16.mxu0 0
        %1189 = vmatmul.mubr.bf16.gmra.mrb[0].mxu0 %v952
        %v1190 = vpop.f32.mrb[0].mxu0
        %v1191 = vadd.f32 0.0, %v1190
        %v1192 = vpop.f32.mrb[0].mxu0
        %v1193 = vadd.f32 0.0, %v1192
        %v1194 = vpop.f32.mrb[0].mxu0
        %v1195 = vadd.f32 0.0, %v1194
        %v1196 = vpop.f32.mrb[0].mxu0
        %v1197 = vadd.f32 0.0, %v1196
        %1198 = vmatprep.mubr.bf16.mxu0 0
        %1199 = vmatmul.mubr.bf16.gmra.mrb[0].mxu0 %v953
        %v1200 = vpop.f32.mrb[0].mxu0
        %v1201 = vadd.f32 0.0, %v1200
        %v1202 = vpop.f32.mrb[0].mxu0
        %v1203 = vadd.f32 0.0, %v1202
        %v1204 = vpop.f32.mrb[0].mxu0
        %v1205 = vadd.f32 0.0, %v1204
        %v1206 = vpop.f32.mrb[0].mxu0
        %v1207 = vadd.f32 0.0, %v1206
        %1208 = vmatprep.mubr.bf16.mxu0 0
        %1209 = vmatmul.mubr.bf16.gmra.mrb[0].mxu0 %v954
        %v1210 = vpop.f32.mrb[0].mxu0
        %v1211 = vadd.f32 0.0, %v1210
        %v1212 = vpop.f32.mrb[0].mxu0
        %v1213 = vadd.f32 0.0, %v1212
        %v1214 = vpop.f32.mrb[0].mxu0
        %v1215 = vadd.f32 0.0, %v1214
        %v1216 = vpop.f32.mrb[0].mxu0
        %v1217 = vadd.f32 0.0, %v1216
        %1218 = vmatprep.mubr.bf16.mxu0 0
        %1219 = vmatmul.mubr.bf16.gmra.mrb[0].mxu0 %v955
        %v1220 = vpop.f32.mrb[0].mxu0
        %v1221 = vadd.f32 0.0, %v1220
        %v1222 = vpop.f32.mrb[0].mxu0
        %v1223 = vadd.f32 0.0, %v1222
        %v1224 = vpop.f32.mrb[0].mxu0
        %v1225 = vadd.f32 0.0, %v1224
        %v1226 = vpop.f32.mrb[0].mxu0
        %v1227 = vadd.f32 0.0, %v1226
        %1228 = vdwg.mxu0
        %1229 = vmatprep.subr.bf16.mxu0 0
        %1230 = vmatpush1.bf16.msra.mxu0 %v1070
        %1231 = vmatprep.subr.bf16.mxu0 0
        %1232 = vmatpush1.bf16.msra.mxu0 %v1073
        %1233 = vmatprep.subr.bf16.mxu0 0
        %1234 = vmatpush1.bf16.msra.mxu0 %v1076
        %1235 = vmatprep.subr.bf16.mxu0 0
        %1236 = vmatpush1.bf16.msra.mxu0 %v1079
        %1237 = vmatprep.subr.bf16.mxu0 0
        %1238 = vmatpush1.bf16.msra.mxu0 %v1082
        %1239 = vmatprep.subr.bf16.mxu0 0
        %1240 = vmatpush1.bf16.msra.mxu0 %v1085
        %1241 = vmatprep.subr.bf16.mxu0 0
        %1242 = vmatpush1.bf16.msra.mxu0 %v1088
        %1243 = vmatprep.subr.bf16.mxu0 0
        %1244 = vmatpush1.bf16.msra.mxu0 %v1091
        %1245 = vmatprep.subr.bf16.mxu0 0
        %1246 = vmatpush1.bf16.msra.mxu0 0
        %1247 = vmatprep.subr.bf16.mxu0 0
        %1248 = vmatpush1.bf16.msra.mxu0 0
        %1249 = vmatprep.subr.bf16.mxu0 0
        %1250 = vmatpush1.bf16.msra.mxu0 0
        %1251 = vmatprep.subr.bf16.mxu0 0
        %1252 = vmatpush1.bf16.msra.mxu0 0
        %1253 = vmatprep.subr.bf16.mxu0 0
        %1254 = vmatpush1.bf16.msra.mxu0 0
        %1255 = vmatprep.subr.bf16.mxu0 0
        %1256 = vmatpush1.bf16.msra.mxu0 0
        %1257 = vmatprep.subr.bf16.mxu0 0
        %1258 = vmatpush1.bf16.msra.mxu0 0
        %1259 = vmatprep.subr.bf16.mxu0 0
        %1260 = vmatpush1.bf16.msra.mxu0 0
        %1261 = vmatprep.mubr.bf16.mxu0 0
        %1262 = vmatmul.mubr.bf16.gmra.mrb[0].mxu0 %v948
        %v1263 = vpop.f32.mrb[0].mxu0
        %v1264 = vadd.f32 0.0, %v1263
        %v1265 = vpop.f32.mrb[0].mxu0
        %v1266 = vpop.f32.mrb[0].mxu0
        %v1267 = vadd.f32 0.0, %v1266
        %v1268 = vpop.f32.mrb[0].mxu0
        %1269 = vmatprep.mubr.bf16.mxu0 0
        %1270 = vmatmul.mubr.bf16.gmra.mrb[0].mxu0 %v949
        %v1271 = vpop.f32.mrb[0].mxu0
        %v1272 = vadd.f32 0.0, %v1271
        %v1273 = vpop.f32.mrb[0].mxu0
        %v1274 = vpop.f32.mrb[0].mxu0
        %v1275 = vadd.f32 0.0, %v1274
        %v1276 = vpop.f32.mrb[0].mxu0
        %1277 = vmatprep.mubr.bf16.mxu0 0
        %1278 = vmatmul.mubr.bf16.gmra.mrb[0].mxu0 %v950
        %v1279 = vpop.f32.mrb[0].mxu0
        %v1280 = vadd.f32 0.0, %v1279
        %v1281 = vpop.f32.mrb[0].mxu0
        %v1282 = vpop.f32.mrb[0].mxu0
        %v1283 = vadd.f32 0.0, %v1282
        %v1284 = vpop.f32.mrb[0].mxu0
        %1285 = vmatprep.mubr.bf16.mxu0 0
        %1286 = vmatmul.mubr.bf16.gmra.mrb[0].mxu0 %v951
        %v1287 = vpop.f32.mrb[0].mxu0
        %v1288 = vadd.f32 0.0, %v1287
        %v1289 = vpop.f32.mrb[0].mxu0
        %v1290 = vpop.f32.mrb[0].mxu0
        %v1291 = vadd.f32 0.0, %v1290
        %v1292 = vpop.f32.mrb[0].mxu0
        %1293 = vmatprep.mubr.bf16.mxu0 0
        %1294 = vmatmul.mubr.bf16.gmra.mrb[0].mxu0 %v952
        %v1295 = vpop.f32.mrb[0].mxu0
        %v1296 = vadd.f32 0.0, %v1295
        %v1297 = vpop.f32.mrb[0].mxu0
        %v1298 = vpop.f32.mrb[0].mxu0
        %v1299 = vadd.f32 0.0, %v1298
        %v1300 = vpop.f32.mrb[0].mxu0
        %1301 = vmatprep.mubr.bf16.mxu0 0
        %1302 = vmatmul.mubr.bf16.gmra.mrb[0].mxu0 %v953
        %v1303 = vpop.f32.mrb[0].mxu0
        %v1304 = vadd.f32 0.0, %v1303
        %v1305 = vpop.f32.mrb[0].mxu0
        %v1306 = vpop.f32.mrb[0].mxu0
        %v1307 = vadd.f32 0.0, %v1306
        %v1308 = vpop.f32.mrb[0].mxu0
        %1309 = vmatprep.mubr.bf16.mxu0 0
        %1310 = vmatmul.mubr.bf16.gmra.mrb[0].mxu0 %v954
        %v1311 = vpop.f32.mrb[0].mxu0
        %v1312 = vadd.f32 0.0, %v1311
        %v1313 = vpop.f32.mrb[0].mxu0
        %v1314 = vpop.f32.mrb[0].mxu0
        %v1315 = vadd.f32 0.0, %v1314
        %v1316 = vpop.f32.mrb[0].mxu0
        %1317 = vmatprep.mubr.bf16.mxu0 0
        %1318 = vmatmul.mubr.bf16.gmra.mrb[0].mxu0 %v955
        %v1319 = vpop.f32.mrb[0].mxu0
        %v1320 = vadd.f32 0.0, %v1319
        %v1321 = vpop.f32.mrb[0].mxu0
        %v1322 = vpop.f32.mrb[0].mxu0
        %v1323 = vadd.f32 0.0, %v1322
        %v1324 = vpop.f32.mrb[0].mxu0
        %1325 = vdwg.mxu0
        %v1326 = vpack.c.bf16 %v1155, %v1151
        %v1327 = vpack.c.bf16 %v1157, %v1153
        %v1328 = vpack.c.bf16 %v1267, %v1264
        %v1329 = vpack.c.bf16 %v1165, %v1161
        %v1330 = vpack.c.bf16 %v1167, %v1163
        %v1331 = vpack.c.bf16 %v1275, %v1272
        %v1332 = vpack.c.bf16 %v1175, %v1171
        %v1333 = vpack.c.bf16 %v1177, %v1173
        %v1334 = vpack.c.bf16 %v1283, %v1280
        %v1335 = vpack.c.bf16 %v1185, %v1181
        %v1336 = vpack.c.bf16 %v1187, %v1183
        %v1337 = vpack.c.bf16 %v1291, %v1288
        %v1338 = vpack.c.bf16 %v1195, %v1191
        %v1339 = vpack.c.bf16 %v1197, %v1193
        %v1340 = vpack.c.bf16 %v1299, %v1296
        %v1341 = vpack.c.bf16 %v1205, %v1201
        %v1342 = vpack.c.bf16 %v1207, %v1203
        %v1343 = vpack.c.bf16 %v1307, %v1304
        %v1344 = vpack.c.bf16 %v1215, %v1211
        %v1345 = vpack.c.bf16 %v1217, %v1213
        %v1346 = vpack.c.bf16 %v1315, %v1312
        %v1347 = vpack.c.bf16 %v1225, %v1221
        %v1348 = vpack.c.bf16 %v1227, %v1223
        %v1349 = vpack.c.bf16 %v1323, %v1320
        %vm1350 = vcmask 261120
        %v1352 = vsel %vm1350, %v1326, 0
        %v1355 = vsel %vm1350, %v1329, 0
        %v1358 = vsel %vm1350, %v1327, 0
        %v1361 = vsel %vm1350, %v1330, 0
        %1363 = vmatprep.subr.bf16.mxu0 0
        %1364 = vmatpush1.bf16.xpose.msra.mxu0 %v1358
        %1365 = vmatprep.subr.bf16.mxu0 0
        %1366 = vmatpush1.bf16.xpose.msra.mxu0 %v1361
        %1367 = vmatprep.subr.bf16.mxu0 0
        %1368 = vmatpush1.bf16.xpose.msra.mxu0 0
        %1369 = vmatprep.subr.bf16.mxu0 0
        %1370 = vmatpush1.bf16.xpose.msra.mxu0 0
        %1371 = vmatprep.subr.bf16.mxu0 0
        %1372 = vmatpush1.bf16.xpose.msra.mxu0 0
        %1373 = vmatprep.subr.bf16.mxu0 0
        %1374 = vmatpush1.bf16.xpose.msra.mxu0 0
        %1375 = vmatprep.subr.bf16.mxu0 0
        %1376 = vmatpush1.bf16.xpose.msra.mxu0 0
        %1377 = vmatprep.subr.bf16.mxu0 0
        %1378 = vmatpush1.bf16.xpose.msra.mxu0 0
        %1379 = vmatprep.subr.bf16.mxu0 0
        %1380 = vmatpush1.bf16.xpose.msra.mxu0 0
        %1381 = vmatprep.subr.bf16.mxu0 0
        %1382 = vmatpush1.bf16.xpose.msra.mxu0 0
        %1383 = vmatprep.subr.bf16.mxu0 0
        %1384 = vmatpush1.bf16.xpose.msra.mxu0 0
        %1385 = vmatprep.subr.bf16.mxu0 0
        %1386 = vmatpush1.bf16.xpose.msra.mxu0 0
        %1387 = vmatprep.subr.bf16.mxu0 0
        %1388 = vmatpush1.bf16.xpose.msra.mxu0 0
        %1389 = vmatprep.subr.bf16.mxu0 0
        %1390 = vmatpush1.bf16.xpose.msra.mxu0 0
        %1391 = vmatprep.subr.bf16.mxu0 0
        %1392 = vmatpush1.bf16.xpose.msra.mxu0 0
        %1393 = vmatprep.subr.bf16.mxu0 0
        %1394 = vmatpush1.bf16.xpose.msra.mxu0 0
        %1395 = vmatprep.mubr.bf16.mxu0 0
        %1396 = vmatmul.mubr.bf16.gmra.mrb[0].mxu0 %v1352
        %v1397 = vpop.f32.mrb[0].mxu0
        %v1398 = vadd.f32 0.0, %v1397
        %v1399 = vpop.f32.mrb[0].mxu0
        %v1400 = vpop.f32.mrb[0].mxu0
        %v1401 = vadd.f32 0.0, %v1400
        %v1402 = vpop.f32.mrb[0].mxu0
        %1403 = vmatprep.mubr.bf16.mxu0 0
        %1404 = vmatmul.mubr.bf16.gmra.mrb[0].mxu0 %v1355
        %v1405 = vpop.f32.mrb[0].mxu0
        %v1406 = vadd.f32 0.0, %v1405
        %v1407 = vpop.f32.mrb[0].mxu0
        %v1408 = vpop.f32.mrb[0].mxu0
        %v1409 = vadd.f32 0.0, %v1408
        %v1410 = vpop.f32.mrb[0].mxu0
        %1411 = vdwg.mxu0
        %v1412 = vmul.f32 %v1398, 0.17677669
        %v1413 = vmul.f32 %v1401, 0.17677669
        %v1414 = vmul.f32 %v1406, 0.17677669
        %v1415 = vmul.f32 %v1409, 0.17677669
        %v1416 = vld [vmem:[#allocation6] sm:$0xff]
        %v1417 = vld [vmem:[#allocation6 + $0x8] sm:$0xff]
        %v1418 = vld [vmem:[#allocation6 + $0x10] sm:$0xff]
        %v1419 = vld [vmem:[#allocation6 + $0x18] sm:$0xff]
        %v1420 = vadd.f32 %v1412, %v1416
        %v1421 = vadd.f32 %v1413, %v1417
        %v1422 = vadd.f32 %v1414, %v1418
        %v1423 = vadd.f32 %v1415, %v1419
        %v1424 = vsel %vm1350, %v1420, -inf
        %1425 = vmax.xlane.f32.xlu0 %v1424
        %v1426 = vpop.xlane.xlu0 %1425
        %v1427 = vsel %vm1350, %v1421, -inf
        %1428 = vmax.xlane.f32.xlu0 %v1427
        %v1429 = vpop.xlane.xlu0 %1428
        %v1430 = vsel %vm1350, %v1422, -inf
        %1431 = vmax.xlane.f32.xlu0 %v1430
        %v1432 = vpop.xlane.xlu0 %1431
        %v1433 = vsel %vm1350, %v1423, -inf
        %1434 = vmax.xlane.f32.xlu0 %v1433
        %v1435 = vpop.xlane.xlu0 %1434
        %v1436 = vsub.f32 %v1420, %v1426
        %v1437 = vsub.f32 %v1421, %v1429
        %v1438 = vsub.f32 %v1422, %v1432
        %v1439 = vsub.f32 %v1423, %v1435
        %v1440 = vmul.f32 %v1436, 1.442695
        %v1441 = vpow.pop %v1440
        %v1442 = vmul.f32 %v1437, 1.442695
        %v1443 = vpow.pop %v1442
        %v1444 = vmul.f32 %v1438, 1.442695
        %v1445 = vpow.pop %v1444
        %v1446 = vmul.f32 %v1439, 1.442695
        %v1447 = vpow.pop %v1446
        %v1448 = vsel %vm1350, %v1441, 0.0
        %1449 = vadd.xlane.f32.xlu0 %v1448
        %v1450 = vpop.xlane.xlu0 %1449
        %v1451 = vsel %vm1350, %v1443, 0.0
        %1452 = vadd.xlane.f32.xlu0 %v1451
        %v1453 = vpop.xlane.xlu0 %1452
        %v1454 = vsel %vm1350, %v1445, 0.0
        %1455 = vadd.xlane.f32.xlu0 %v1454
        %v1456 = vpop.xlane.xlu0 %1455
        %v1457 = vsel %vm1350, %v1447, 0.0
        %1458 = vadd.xlane.f32.xlu0 %v1457
        %v1459 = vpop.xlane.xlu0 %1458
        %v1460 = vrcp.pop %v1450
        %v1461 = vrcp.pop %v1453
        %v1462 = vrcp.pop %v1456
        %v1463 = vrcp.pop %v1459
        %v1464 = vmul.f32 %v1441, %v1460
        %v1465 = vmul.f32 %v1443, %v1461
        %v1466 = vmul.f32 %v1445, %v1462
        %v1467 = vmul.f32 %v1447, %v1463
        %v1468 = vpack.c.bf16 %v1465, %v1464
        %v1469 = vpack.c.bf16 %v1467, %v1466
        %v1471 = vsel %vm1350, %v1468, 0
        %v1474 = vsel %vm1350, %v1469, 0
        %1476 = vmatprep.subr.bf16.mxu0 0
        %1477 = vmatpush1.bf16.msra.mxu0 %v1328
        %1478 = vmatprep.subr.bf16.mxu0 0
        %1479 = vmatpush1.bf16.msra.mxu0 %v1331
        %1480 = vmatprep.subr.bf16.mxu0 0
        %1481 = vmatpush1.bf16.msra.mxu0 0
        %1482 = vmatprep.subr.bf16.mxu0 0
        %1483 = vmatpush1.bf16.msra.mxu0 0
        %1484 = vmatprep.subr.bf16.mxu0 0
        %1485 = vmatpush1.bf16.msra.mxu0 0
        %1486 = vmatprep.subr.bf16.mxu0 0
        %1487 = vmatpush1.bf16.msra.mxu0 0
        %1488 = vmatprep.subr.bf16.mxu0 0
        %1489 = vmatpush1.bf16.msra.mxu0 0
        %1490 = vmatprep.subr.bf16.mxu0 0
        %1491 = vmatpush1.bf16.msra.mxu0 0
        %1492 = vmatprep.subr.bf16.mxu0 0
        %1493 = vmatpush1.bf16.msra.mxu0 0
        %1494 = vmatprep.subr.bf16.mxu0 0
        %1495 = vmatpush1.bf16.msra.mxu0 0
        %1496 = vmatprep.subr.bf16.mxu0 0
        %1497 = vmatpush1.bf16.msra.mxu0 0
        %1498 = vmatprep.subr.bf16.mxu0 0
        %1499 = vmatpush1.bf16.msra.mxu0 0
        %1500 = vmatprep.subr.bf16.mxu0 0
        %1501 = vmatpush1.bf16.msra.mxu0 0
        %1502 = vmatprep.subr.bf16.mxu0 0
        %1503 = vmatpush1.bf16.msra.mxu0 0
        %1504 = vmatprep.subr.bf16.mxu0 0
        %1505 = vmatpush1.bf16.msra.mxu0 0
        %1506 = vmatprep.subr.bf16.mxu0 0
        %1507 = vmatpush1.bf16.msra.mxu0 0
        %1508 = vmatprep.mubr.bf16.mxu0 0
        %1509 = vmatmul.mubr.bf16.gmra.mrb[0].mxu0 %v1471
        %v1510 = vpop.f32.mrb[0].mxu0
        %v1511 = vadd.f32 0.0, %v1510
        %v1512 = vpop.f32.mrb[0].mxu0
        %v1513 = vpop.f32.mrb[0].mxu0
        %v1514 = vadd.f32 0.0, %v1513
        %v1515 = vpop.f32.mrb[0].mxu0
        %1516 = vmatprep.mubr.bf16.mxu0 0
        %1517 = vmatmul.mubr.bf16.gmra.mrb[0].mxu0 %v1474
        %v1518 = vpop.f32.mrb[0].mxu0
        %v1519 = vadd.f32 0.0, %v1518
        %v1520 = vpop.f32.mrb[0].mxu0
        %v1521 = vpop.f32.mrb[0].mxu0
        %v1522 = vadd.f32 0.0, %v1521
        %v1523 = vpop.f32.mrb[0].mxu0
        %1524 = vdwg.mxu0
        %1527 = vrot.lane.b32.xlu0 %v1326, 96
        %v1528 = vpop.permute.xlu0 %1527
        %1529 = vrot.lane.b32.xlu0 %v1329, 96
        %v1530 = vpop.permute.xlu0 %1529
        %1533 = vrot.lane.b32.xlu0 %v1327, 96
        %v1534 = vpop.permute.xlu0 %1533
        %1535 = vrot.lane.b32.xlu0 %v1330, 96
        %v1536 = vpop.permute.xlu0 %1535
        %v1538 = vsel %vm1350, %v1528, 0
        %v1541 = vsel %vm1350, %v1530, 0
        %v1544 = vsel %vm1350, %v1534, 0
        %v1547 = vsel %vm1350, %v1536, 0
        %1549 = vmatprep.subr.bf16.mxu0 0
        %1550 = vmatpush1.bf16.xpose.msra.mxu0 %v1544
        %1551 = vmatprep.subr.bf16.mxu0 0
        %1552 = vmatpush1.bf16.xpose.msra.mxu0 %v1547
        %1553 = vmatprep.subr.bf16.mxu0 0
        %1554 = vmatpush1.bf16.xpose.msra.mxu0 0
        %1555 = vmatprep.subr.bf16.mxu0 0
        %1556 = vmatpush1.bf16.xpose.msra.mxu0 0
        %1557 = vmatprep.subr.bf16.mxu0 0
        %1558 = vmatpush1.bf16.xpose.msra.mxu0 0
        %1559 = vmatprep.subr.bf16.mxu0 0
        %1560 = vmatpush1.bf16.xpose.msra.mxu0 0
        %1561 = vmatprep.subr.bf16.mxu0 0
        %1562 = vmatpush1.bf16.xpose.msra.mxu0 0
        %1563 = vmatprep.subr.bf16.mxu0 0
        %1564 = vmatpush1.bf16.xpose.msra.mxu0 0
        %1565 = vmatprep.subr.bf16.mxu0 0
        %1566 = vmatpush1.bf16.xpose.msra.mxu0 0
        %1567 = vmatprep.subr.bf16.mxu0 0
        %1568 = vmatpush1.bf16.xpose.msra.mxu0 0
        %1569 = vmatprep.subr.bf16.mxu0 0
        %1570 = vmatpush1.bf16.xpose.msra.mxu0 0
        %1571 = vmatprep.subr.bf16.mxu0 0
        %1572 = vmatpush1.bf16.xpose.msra.mxu0 0
        %1573 = vmatprep.subr.bf16.mxu0 0
        %1574 = vmatpush1.bf16.xpose.msra.mxu0 0
        %1575 = vmatprep.subr.bf16.mxu0 0
        %1576 = vmatpush1.bf16.xpose.msra.mxu0 0
        %1577 = vmatprep.subr.bf16.mxu0 0
        %1578 = vmatpush1.bf16.xpose.msra.mxu0 0
        %1579 = vmatprep.subr.bf16.mxu0 0
        %1580 = vmatpush1.bf16.xpose.msra.mxu0 0
        %1581 = vmatprep.mubr.bf16.mxu0 0
        %1582 = vmatmul.mubr.bf16.gmra.mrb[0].mxu0 %v1538
        %v1583 = vpop.f32.mrb[0].mxu0
        %v1584 = vadd.f32 0.0, %v1583
        %v1585 = vpop.f32.mrb[0].mxu0
        %v1586 = vpop.f32.mrb[0].mxu0
        %v1587 = vadd.f32 0.0, %v1586
        %v1588 = vpop.f32.mrb[0].mxu0
        %1589 = vmatprep.mubr.bf16.mxu0 0
        %1590 = vmatmul.mubr.bf16.gmra.mrb[0].mxu0 %v1541
        %v1591 = vpop.f32.mrb[0].mxu0
        %v1592 = vadd.f32 0.0, %v1591
        %v1593 = vpop.f32.mrb[0].mxu0
        %v1594 = vpop.f32.mrb[0].mxu0
        %v1595 = vadd.f32 0.0, %v1594
        %v1596 = vpop.f32.mrb[0].mxu0
        %1597 = vdwg.mxu0
        %v1598 = vmul.f32 %v1584, 0.17677669
        %v1599 = vmul.f32 %v1587, 0.17677669
        %v1600 = vmul.f32 %v1592, 0.17677669
        %v1601 = vmul.f32 %v1595, 0.17677669
        %s1602 = scalar_lea.vmem [#allocation6], 32
        %v1603 = vld [vmem:[%s1602] sm:$0xff]
        %v1604 = vld [vmem:[%s1602 + $0x8] sm:$0xff]
        %v1605 = vld [vmem:[%s1602 + $0x10] sm:$0xff]
        %v1606 = vld [vmem:[%s1602 + $0x18] sm:$0xff]
        %v1607 = vadd.f32 %v1598, %v1603
        %v1608 = vadd.f32 %v1599, %v1604
        %v1609 = vadd.f32 %v1600, %v1605
        %v1610 = vadd.f32 %v1601, %v1606
        %v1611 = vsel %vm1350, %v1607, -inf
        %1612 = vmax.xlane.f32.xlu0 %v1611
        %v1613 = vpop.xlane.xlu0 %1612
        %v1614 = vsel %vm1350, %v1608, -inf
        %1615 = vmax.xlane.f32.xlu0 %v1614
        %v1616 = vpop.xlane.xlu0 %1615
        %v1617 = vsel %vm1350, %v1609, -inf
        %1618 = vmax.xlane.f32.xlu0 %v1617
        %v1619 = vpop.xlane.xlu0 %1618
        %v1620 = vsel %vm1350, %v1610, -inf
        %1621 = vmax.xlane.f32.xlu0 %v1620
        %v1622 = vpop.xlane.xlu0 %1621
        %v1623 = vsub.f32 %v1607, %v1613
        %v1624 = vsub.f32 %v1608, %v1616
        %v1625 = vsub.f32 %v1609, %v1619
        %v1626 = vsub.f32 %v1610, %v1622
        %v1627 = vmul.f32 %v1623, 1.442695
        %v1628 = vpow.pop %v1627
        %v1629 = vmul.f32 %v1624, 1.442695
        %v1630 = vpow.pop %v1629
        %v1631 = vmul.f32 %v1625, 1.442695
        %v1632 = vpow.pop %v1631
        %v1633 = vmul.f32 %v1626, 1.442695
        %v1634 = vpow.pop %v1633
        %v1635 = vsel %vm1350, %v1628, 0.0
        %1636 = vadd.xlane.f32.xlu0 %v1635
        %v1637 = vpop.xlane.xlu0 %1636
        %v1638 = vsel %vm1350, %v1630, 0.0
        %1639 = vadd.xlane.f32.xlu0 %v1638
        %v1640 = vpop.xlane.xlu0 %1639
        %v1641 = vsel %vm1350, %v1632, 0.0
        %1642 = vadd.xlane.f32.xlu0 %v1641
        %v1643 = vpop.xlane.xlu0 %1642
        %v1644 = vsel %vm1350, %v1634, 0.0
        %1645 = vadd.xlane.f32.xlu0 %v1644
        %v1646 = vpop.xlane.xlu0 %1645
        %v1647 = vrcp.pop %v1637
        %v1648 = vrcp.pop %v1640
        %v1649 = vrcp.pop %v1643
        %v1650 = vrcp.pop %v1646
        %v1651 = vmul.f32 %v1628, %v1647
        %v1652 = vmul.f32 %v1630, %v1648
        %v1653 = vmul.f32 %v1632, %v1649
        %v1654 = vmul.f32 %v1634, %v1650
        %v1655 = vpack.c.bf16 %v1652, %v1651
        %v1656 = vpack.c.bf16 %v1654, %v1653
        %1659 = vrot.lane.b32.xlu0 %v1328, 96
        %v1660 = vpop.permute.xlu0 %1659
        %1661 = vrot.lane.b32.xlu0 %v1331, 96
        %v1662 = vpop.permute.xlu0 %1661
        %v1666 = vsel %vm1350, %v1655, 0
        %v1669 = vsel %vm1350, %v1656, 0
        %1671 = vmatprep.subr.bf16.mxu0 0
        %1672 = vmatpush1.bf16.msra.mxu0 %v1660
        %1673 = vmatprep.subr.bf16.mxu0 0
        %1674 = vmatpush1.bf16.msra.mxu0 %v1662
        %1675 = vmatprep.subr.bf16.mxu0 0
        %1676 = vmatpush1.bf16.msra.mxu0 0
        %1677 = vmatprep.subr.bf16.mxu0 0
        %1678 = vmatpush1.bf16.msra.mxu0 0
        %1679 = vmatprep.subr.bf16.mxu0 0
        %1680 = vmatpush1.bf16.msra.mxu0 0
        %1681 = vmatprep.subr.bf16.mxu0 0
        %1682 = vmatpush1.bf16.msra.mxu0 0
        %1683 = vmatprep.subr.bf16.mxu0 0
        %1684 = vmatpush1.bf16.msra.mxu0 0
        %1685 = vmatprep.subr.bf16.mxu0 0
        %1686 = vmatpush1.bf16.msra.mxu0 0
        %1687 = vmatprep.subr.bf16.mxu0 0
        %1688 = vmatpush1.bf16.msra.mxu0 0
        %1689 = vmatprep.subr.bf16.mxu0 0
        %1690 = vmatpush1.bf16.msra.mxu0 0
        %1691 = vmatprep.subr.bf16.mxu0 0
        %1692 = vmatpush1.bf16.msra.mxu0 0
        %1693 = vmatprep.subr.bf16.mxu0 0
        %1694 = vmatpush1.bf16.msra.mxu0 0
        %1695 = vmatprep.subr.bf16.mxu0 0
        %1696 = vmatpush1.bf16.msra.mxu0 0
        %1697 = vmatprep.subr.bf16.mxu0 0
        %1698 = vmatpush1.bf16.msra.mxu0 0
        %1699 = vmatprep.subr.bf16.mxu0 0
        %1700 = vmatpush1.bf16.msra.mxu0 0
        %1701 = vmatprep.subr.bf16.mxu0 0
        %1702 = vmatpush1.bf16.msra.mxu0 0
        %1703 = vmatprep.mubr.bf16.mxu0 0
        %1704 = vmatmul.mubr.bf16.gmra.mrb[0].mxu0 %v1666
        %v1705 = vpop.f32.mrb[0].mxu0
        %v1706 = vadd.f32 0.0, %v1705
        %v1707 = vpop.f32.mrb[0].mxu0
        %v1708 = vpop.f32.mrb[0].mxu0
        %v1709 = vadd.f32 0.0, %v1708
        %v1710 = vpop.f32.mrb[0].mxu0
        %1711 = vmatprep.mubr.bf16.mxu0 0
        %1712 = vmatmul.mubr.bf16.gmra.mrb[0].mxu0 %v1669
        %v1713 = vpop.f32.mrb[0].mxu0
        %v1714 = vadd.f32 0.0, %v1713
        %v1715 = vpop.f32.mrb[0].mxu0
        %v1716 = vpop.f32.mrb[0].mxu0
        %v1717 = vadd.f32 0.0, %v1716
        %v1718 = vpop.f32.mrb[0].mxu0
        %1719 = vdwg.mxu0
        %1720 = vrot.lane.b32.xlu0 %v1326, 64
        %v1721 = vpop.permute.xlu0 %1720
        %1722 = vrot.lane.b32.xlu0 %v1329, 64
        %v1723 = vpop.permute.xlu0 %1722
        %1724 = vrot.lane.b32.xlu0 %v1327, 64
        %v1725 = vpop.permute.xlu0 %1724
        %1726 = vrot.lane.b32.xlu0 %v1330, 64
        %v1727 = vpop.permute.xlu0 %1726
        %v1729 = vsel %vm1350, %v1721, 0
        %v1732 = vsel %vm1350, %v1723, 0
        %v1735 = vsel %vm1350, %v1725, 0
        %v1738 = vsel %vm1350, %v1727, 0
        %1740 = vmatprep.subr.bf16.mxu0 0
        %1741 = vmatpush1.bf16.xpose.msra.mxu0 %v1735
        %1742 = vmatprep.subr.bf16.mxu0 0
        %1743 = vmatpush1.bf16.xpose.msra.mxu0 %v1738
        %1744 = vmatprep.subr.bf16.mxu0 0
        %1745 = vmatpush1.bf16.xpose.msra.mxu0 0
        %1746 = vmatprep.subr.bf16.mxu0 0
        %1747 = vmatpush1.bf16.xpose.msra.mxu0 0
        %1748 = vmatprep.subr.bf16.mxu0 0
        %1749 = vmatpush1.bf16.xpose.msra.mxu0 0
        %1750 = vmatprep.subr.bf16.mxu0 0
        %1751 = vmatpush1.bf16.xpose.msra.mxu0 0
        %1752 = vmatprep.subr.bf16.mxu0 0
        %1753 = vmatpush1.bf16.xpose.msra.mxu0 0
        %1754 = vmatprep.subr.bf16.mxu0 0
        %1755 = vmatpush1.bf16.xpose.msra.mxu0 0
        %1756 = vmatprep.subr.bf16.mxu0 0
        %1757 = vmatpush1.bf16.xpose.msra.mxu0 0
        %1758 = vmatprep.subr.bf16.mxu0 0
        %1759 = vmatpush1.bf16.xpose.msra.mxu0 0
        %1760 = vmatprep.subr.bf16.mxu0 0
        %1761 = vmatpush1.bf16.xpose.msra.mxu0 0
        %1762 = vmatprep.subr.bf16.mxu0 0
        %1763 = vmatpush1.bf16.xpose.msra.mxu0 0
        %1764 = vmatprep.subr.bf16.mxu0 0
        %1765 = vmatpush1.bf16.xpose.msra.mxu0 0
        %1766 = vmatprep.subr.bf16.mxu0 0
        %1767 = vmatpush1.bf16.xpose.msra.mxu0 0
        %1768 = vmatprep.subr.bf16.mxu0 0
        %1769 = vmatpush1.bf16.xpose.msra.mxu0 0
        %1770 = vmatprep.subr.bf16.mxu0 0
        %1771 = vmatpush1.bf16.xpose.msra.mxu0 0
        %1772 = vmatprep.mubr.bf16.mxu0 0
        %1773 = vmatmul.mubr.bf16.gmra.mrb[0].mxu0 %v1729
        %v1774 = vpop.f32.mrb[0].mxu0
        %v1775 = vadd.f32 0.0, %v1774
        %v1776 = vpop.f32.mrb[0].mxu0
        %v1777 = vpop.f32.mrb[0].mxu0
        %v1778 = vadd.f32 0.0, %v1777
        %v1779 = vpop.f32.mrb[0].mxu0
        %1780 = vmatprep.mubr.bf16.mxu0 0
        %1781 = vmatmul.mubr.bf16.gmra.mrb[0].mxu0 %v1732
        %v1782 = vpop.f32.mrb[0].mxu0
        %v1783 = vadd.f32 0.0, %v1782
        %v1784 = vpop.f32.mrb[0].mxu0
        %v1785 = vpop.f32.mrb[0].mxu0
        %v1786 = vadd.f32 0.0, %v1785
        %v1787 = vpop.f32.mrb[0].mxu0
        %1788 = vdwg.mxu0
        %v1789 = vmul.f32 %v1775, 0.17677669
        %v1790 = vmul.f32 %v1778, 0.17677669
        %v1791 = vmul.f32 %v1783, 0.17677669
        %v1792 = vmul.f32 %v1786, 0.17677669
        %s1793 = scalar_lea.vmem [#allocation6], 64
        %v1794 = vld [vmem:[%s1793] sm:$0xff]
        %v1795 = vld [vmem:[%s1793 + $0x8] sm:$0xff]
        %v1796 = vld [vmem:[%s1793 + $0x10] sm:$0xff]
        %v1797 = vld [vmem:[%s1793 + $0x18] sm:$0xff]
        %v1798 = vadd.f32 %v1789, %v1794
        %v1799 = vadd.f32 %v1790, %v1795
        %v1800 = vadd.f32 %v1791, %v1796
        %v1801 = vadd.f32 %v1792, %v1797
        %v1802 = vsel %vm1350, %v1798, -inf
        %1803 = vmax.xlane.f32.xlu0 %v1802
        %v1804 = vpop.xlane.xlu0 %1803
        %v1805 = vsel %vm1350, %v1799, -inf
        %1806 = vmax.xlane.f32.xlu0 %v1805
        %v1807 = vpop.xlane.xlu0 %1806
        %v1808 = vsel %vm1350, %v1800, -inf
        %1809 = vmax.xlane.f32.xlu0 %v1808
        %v1810 = vpop.xlane.xlu0 %1809
        %v1811 = vsel %vm1350, %v1801, -inf
        %1812 = vmax.xlane.f32.xlu0 %v1811
        %v1813 = vpop.xlane.xlu0 %1812
        %v1814 = vsub.f32 %v1798, %v1804
        %v1815 = vsub.f32 %v1799, %v1807
        %v1816 = vsub.f32 %v1800, %v1810
        %v1817 = vsub.f32 %v1801, %v1813
        %v1818 = vmul.f32 %v1814, 1.442695
        %v1819 = vpow.pop %v1818
        %v1820 = vmul.f32 %v1815, 1.442695
        %v1821 = vpow.pop %v1820
        %v1822 = vmul.f32 %v1816, 1.442695
        %v1823 = vpow.pop %v1822
        %v1824 = vmul.f32 %v1817, 1.442695
        %v1825 = vpow.pop %v1824
        %v1826 = vsel %vm1350, %v1819, 0.0
        %1827 = vadd.xlane.f32.xlu0 %v1826
        %v1828 = vpop.xlane.xlu0 %1827
        %v1829 = vsel %vm1350, %v1821, 0.0
        %1830 = vadd.xlane.f32.xlu0 %v1829
        %v1831 = vpop.xlane.xlu0 %1830
        %v1832 = vsel %vm1350, %v1823, 0.0
        %1833 = vadd.xlane.f32.xlu0 %v1832
        %v1834 = vpop.xlane.xlu0 %1833
        %v1835 = vsel %vm1350, %v1825, 0.0
        %1836 = vadd.xlane.f32.xlu0 %v1835
        %v1837 = vpop.xlane.xlu0 %1836
        %v1838 = vrcp.pop %v1828
        %v1839 = vrcp.pop %v1831
        %v1840 = vrcp.pop %v1834
        %v1841 = vrcp.pop %v1837
        %v1842 = vmul.f32 %v1819, %v1838
        %v1843 = vmul.f32 %v1821, %v1839
        %v1844 = vmul.f32 %v1823, %v1840
        %v1845 = vmul.f32 %v1825, %v1841
        %v1846 = vpack.c.bf16 %v1843, %v1842
        %v1847 = vpack.c.bf16 %v1845, %v1844
        %1848 = vrot.lane.b32.xlu0 %v1328, 64
        %v1849 = vpop.permute.xlu0 %1848
        %1850 = vrot.lane.b32.xlu0 %v1331, 64
        %v1851 = vpop.permute.xlu0 %1850
        %v1855 = vsel %vm1350, %v1846, 0
        %v1858 = vsel %vm1350, %v1847, 0
        %1860 = vmatprep.subr.bf16.mxu0 0
        %1861 = vmatpush1.bf16.msra.mxu0 %v1849
        %1862 = vmatprep.subr.bf16.mxu0 0
        %1863 = vmatpush1.bf16.msra.mxu0 %v1851
        %1864 = vmatprep.subr.bf16.mxu0 0
        %1865 = vmatpush1.bf16.msra.mxu0 0
        %1866 = vmatprep.subr.bf16.mxu0 0
        %1867 = vmatpush1.bf16.msra.mxu0 0
        %1868 = vmatprep.subr.bf16.mxu0 0
        %1869 = vmatpush1.bf16.msra.mxu0 0
        %1870 = vmatprep.subr.bf16.mxu0 0
        %1871 = vmatpush1.bf16.msra.mxu0 0
        %1872 = vmatprep.subr.bf16.mxu0 0
        %1873 = vmatpush1.bf16.msra.mxu0 0
        %1874 = vmatprep.subr.bf16.mxu0 0
        %1875 = vmatpush1.bf16.msra.mxu0 0
        %1876 = vmatprep.subr.bf16.mxu0 0
        %1877 = vmatpush1.bf16.msra.mxu0 0
        %1878 = vmatprep.subr.bf16.mxu0 0
        %1879 = vmatpush1.bf16.msra.mxu0 0
        %1880 = vmatprep.subr.bf16.mxu0 0
        %1881 = vmatpush1.bf16.msra.mxu0 0
        %1882 = vmatprep.subr.bf16.mxu0 0
        %1883 = vmatpush1.bf16.msra.mxu0 0
        %1884 = vmatprep.subr.bf16.mxu0 0
        %1885 = vmatpush1.bf16.msra.mxu0 0
        %1886 = vmatprep.subr.bf16.mxu0 0
        %1887 = vmatpush1.bf16.msra.mxu0 0
        %1888 = vmatprep.subr.bf16.mxu0 0
        %1889 = vmatpush1.bf16.msra.mxu0 0
        %1890 = vmatprep.subr.bf16.mxu0 0
        %1891 = vmatpush1.bf16.msra.mxu0 0
        %1892 = vmatprep.mubr.bf16.mxu0 0
        %1893 = vmatmul.mubr.bf16.gmra.mrb[0].mxu0 %v1855
        %v1894 = vpop.f32.mrb[0].mxu0
        %v1895 = vadd.f32 0.0, %v1894
        %v1896 = vpop.f32.mrb[0].mxu0
        %v1897 = vpop.f32.mrb[0].mxu0
        %v1898 = vadd.f32 0.0, %v1897
        %v1899 = vpop.f32.mrb[0].mxu0
        %1900 = vmatprep.mubr.bf16.mxu0 0
        %1901 = vmatmul.mubr.bf16.gmra.mrb[0].mxu0 %v1858
        %v1902 = vpop.f32.mrb[0].mxu0
        %v1903 = vadd.f32 0.0, %v1902
        %v1904 = vpop.f32.mrb[0].mxu0
        %v1905 = vpop.f32.mrb[0].mxu0
        %v1906 = vadd.f32 0.0, %v1905
        %v1907 = vpop.f32.mrb[0].mxu0
        %1908 = vdwg.mxu0
        %1909 = vrot.lane.b32.xlu0 %v1326, 32
        %v1910 = vpop.permute.xlu0 %1909
        %1911 = vrot.lane.b32.xlu0 %v1329, 32
        %v1912 = vpop.permute.xlu0 %1911
        %1913 = vrot.lane.b32.xlu0 %v1327, 32
        %v1914 = vpop.permute.xlu0 %1913
        %1915 = vrot.lane.b32.xlu0 %v1330, 32
        %v1916 = vpop.permute.xlu0 %1915
        %v1918 = vsel %vm1350, %v1910, 0
        %v1921 = vsel %vm1350, %v1912, 0
        %v1924 = vsel %vm1350, %v1914, 0
        %v1927 = vsel %vm1350, %v1916, 0
        %1929 = vmatprep.subr.bf16.mxu0 0
        %1930 = vmatpush1.bf16.xpose.msra.mxu0 %v1924
        %1931 = vmatprep.subr.bf16.mxu0 0
        %1932 = vmatpush1.bf16.xpose.msra.mxu0 %v1927
        %1933 = vmatprep.subr.bf16.mxu0 0
        %1934 = vmatpush1.bf16.xpose.msra.mxu0 0
        %1935 = vmatprep.subr.bf16.mxu0 0
        %1936 = vmatpush1.bf16.xpose.msra.mxu0 0
        %1937 = vmatprep.subr.bf16.mxu0 0
        %1938 = vmatpush1.bf16.xpose.msra.mxu0 0
        %1939 = vmatprep.subr.bf16.mxu0 0
        %1940 = vmatpush1.bf16.xpose.msra.mxu0 0
        %1941 = vmatprep.subr.bf16.mxu0 0
        %1942 = vmatpush1.bf16.xpose.msra.mxu0 0
        %1943 = vmatprep.subr.bf16.mxu0 0
        %1944 = vmatpush1.bf16.xpose.msra.mxu0 0
        %1945 = vmatprep.subr.bf16.mxu0 0
        %1946 = vmatpush1.bf16.xpose.msra.mxu0 0
        %1947 = vmatprep.subr.bf16.mxu0 0
        %1948 = vmatpush1.bf16.xpose.msra.mxu0 0
        %1949 = vmatprep.subr.bf16.mxu0 0
        %1950 = vmatpush1.bf16.xpose.msra.mxu0 0
        %1951 = vmatprep.subr.bf16.mxu0 0
        %1952 = vmatpush1.bf16.xpose.msra.mxu0 0
        %1953 = vmatprep.subr.bf16.mxu0 0
        %1954 = vmatpush1.bf16.xpose.msra.mxu0 0
        %1955 = vmatprep.subr.bf16.mxu0 0
        %1956 = vmatpush1.bf16.xpose.msra.mxu0 0
        %1957 = vmatprep.subr.bf16.mxu0 0
        %1958 = vmatpush1.bf16.xpose.msra.mxu0 0
        %1959 = vmatprep.subr.bf16.mxu0 0
        %1960 = vmatpush1.bf16.xpose.msra.mxu0 0
        %1961 = vmatprep.mubr.bf16.mxu0 0
        %1962 = vmatmul.mubr.bf16.gmra.mrb[0].mxu0 %v1918
        %v1963 = vpop.f32.mrb[0].mxu0
        %v1964 = vadd.f32 0.0, %v1963
        %v1965 = vpop.f32.mrb[0].mxu0
        %v1966 = vpop.f32.mrb[0].mxu0
        %v1967 = vadd.f32 0.0, %v1966
        %v1968 = vpop.f32.mrb[0].mxu0
        %1969 = vmatprep.mubr.bf16.mxu0 0
        %1970 = vmatmul.mubr.bf16.gmra.mrb[0].mxu0 %v1921
        %v1971 = vpop.f32.mrb[0].mxu0
        %v1972 = vadd.f32 0.0, %v1971
        %v1973 = vpop.f32.mrb[0].mxu0
        %v1974 = vpop.f32.mrb[0].mxu0
        %v1975 = vadd.f32 0.0, %v1974
        %v1976 = vpop.f32.mrb[0].mxu0
        %1977 = vdwg.mxu0
        %v1978 = vmul.f32 %v1964, 0.17677669
        %v1979 = vmul.f32 %v1967, 0.17677669
        %v1980 = vmul.f32 %v1972, 0.17677669
        %v1981 = vmul.f32 %v1975, 0.17677669
        %s1982 = scalar_lea.vmem [#allocation6], 96
        %v1983 = vld [vmem:[%s1982] sm:$0xff]
        %v1984 = vld [vmem:[%s1982 + $0x8] sm:$0xff]
        %v1985 = vld [vmem:[%s1982 + $0x10] sm:$0xff]
        %v1986 = vld [vmem:[%s1982 + $0x18] sm:$0xff]
        %v1987 = vadd.f32 %v1978, %v1983
        %v1988 = vadd.f32 %v1979, %v1984
        %v1989 = vadd.f32 %v1980, %v1985
        %v1990 = vadd.f32 %v1981, %v1986
        %v1991 = vsel %vm1350, %v1987, -inf
        %1992 = vmax.xlane.f32.xlu0 %v1991
        %v1993 = vpop.xlane.xlu0 %1992
        %v1994 = vsel %vm1350, %v1988, -inf
        %1995 = vmax.xlane.f32.xlu0 %v1994
        %v1996 = vpop.xlane.xlu0 %1995
        %v1997 = vsel %vm1350, %v1989, -inf
        %1998 = vmax.xlane.f32.xlu0 %v1997
        %v1999 = vpop.xlane.xlu0 %1998
        %v2000 = vsel %vm1350, %v1990, -inf
        %2001 = vmax.xlane.f32.xlu0 %v2000
        %v2002 = vpop.xlane.xlu0 %2001
        %v2003 = vsub.f32 %v1987, %v1993
        %v2004 = vsub.f32 %v1988, %v1996
        %v2005 = vsub.f32 %v1989, %v1999
        %v2006 = vsub.f32 %v1990, %v2002
        %v2007 = vmul.f32 %v2003, 1.442695
        %v2008 = vpow.pop %v2007
        %v2009 = vmul.f32 %v2004, 1.442695
        %v2010 = vpow.pop %v2009
        %v2011 = vmul.f32 %v2005, 1.442695
        %v2012 = vpow.pop %v2011
        %v2013 = vmul.f32 %v2006, 1.442695
        %v2014 = vpow.pop %v2013
        %v2015 = vsel %vm1350, %v2008, 0.0
        %2016 = vadd.xlane.f32.xlu0 %v2015
        %v2017 = vpop.xlane.xlu0 %2016
        %v2018 = vsel %vm1350, %v2010, 0.0
        %2019 = vadd.xlane.f32.xlu0 %v2018
        %v2020 = vpop.xlane.xlu0 %2019
        %v2021 = vsel %vm1350, %v2012, 0.0
        %2022 = vadd.xlane.f32.xlu0 %v2021
        %v2023 = vpop.xlane.xlu0 %2022
        %v2024 = vsel %vm1350, %v2014, 0.0
        %2025 = vadd.xlane.f32.xlu0 %v2024
        %v2026 = vpop.xlane.xlu0 %2025
        %v2027 = vrcp.pop %v2017
        %v2028 = vrcp.pop %v2020
        %v2029 = vrcp.pop %v2023
        %v2030 = vrcp.pop %v2026
        %v2031 = vmul.f32 %v2008, %v2027
        %v2032 = vmul.f32 %v2010, %v2028
        %v2033 = vmul.f32 %v2012, %v2029
        %v2034 = vmul.f32 %v2014, %v2030
        %v2035 = vpack.c.bf16 %v2032, %v2031
        %v2036 = vpack.c.bf16 %v2034, %v2033
        %2037 = vrot.lane.b32.xlu0 %v1328, 32
        %v2038 = vpop.permute.xlu0 %2037
        %2039 = vrot.lane.b32.xlu0 %v1331, 32
        %v2040 = vpop.permute.xlu0 %2039
        %v2044 = vsel %vm1350, %v2035, 0
        %v2047 = vsel %vm1350, %v2036, 0
        %2049 = vmatprep.subr.bf16.mxu0 0
        %2050 = vmatpush1.bf16.msra.mxu0 %v2038
        %2051 = vmatprep.subr.bf16.mxu0 0
        %2052 = vmatpush1.bf16.msra.mxu0 %v2040
        %2053 = vmatprep.subr.bf16.mxu0 0
        %2054 = vmatpush1.bf16.msra.mxu0 0
        %2055 = vmatprep.subr.bf16.mxu0 0
        %2056 = vmatpush1.bf16.msra.mxu0 0
        %2057 = vmatprep.subr.bf16.mxu0 0
        %2058 = vmatpush1.bf16.msra.mxu0 0
        %2059 = vmatprep.subr.bf16.mxu0 0
        %2060 = vmatpush1.bf16.msra.mxu0 0
        %2061 = vmatprep.subr.bf16.mxu0 0
        %2062 = vmatpush1.bf16.msra.mxu0 0
        %2063 = vmatprep.subr.bf16.mxu0 0
        %2064 = vmatpush1.bf16.msra.mxu0 0
        %2065 = vmatprep.subr.bf16.mxu0 0
        %2066 = vmatpush1.bf16.msra.mxu0 0
        %2067 = vmatprep.subr.bf16.mxu0 0
        %2068 = vmatpush1.bf16.msra.mxu0 0
        %2069 = vmatprep.subr.bf16.mxu0 0
        %2070 = vmatpush1.bf16.msra.mxu0 0
        %2071 = vmatprep.subr.bf16.mxu0 0
        %2072 = vmatpush1.bf16.msra.mxu0 0
        %2073 = vmatprep.subr.bf16.mxu0 0
        %2074 = vmatpush1.bf16.msra.mxu0 0
        %2075 = vmatprep.subr.bf16.mxu0 0
        %2076 = vmatpush1.bf16.msra.mxu0 0
        %2077 = vmatprep.subr.bf16.mxu0 0
        %2078 = vmatpush1.bf16.msra.mxu0 0
        %2079 = vmatprep.subr.bf16.mxu0 0
        %2080 = vmatpush1.bf16.msra.mxu0 0
        %2081 = vmatprep.mubr.bf16.mxu0 0
        %2082 = vmatmul.mubr.bf16.gmra.mrb[0].mxu0 %v2044
        %v2083 = vpop.f32.mrb[0].mxu0
        %v2084 = vadd.f32 0.0, %v2083
        %v2085 = vpop.f32.mrb[0].mxu0
        %v2086 = vpop.f32.mrb[0].mxu0
        %v2087 = vadd.f32 0.0, %v2086
        %v2088 = vpop.f32.mrb[0].mxu0
        %2089 = vmatprep.mubr.bf16.mxu0 0
        %2090 = vmatmul.mubr.bf16.gmra.mrb[0].mxu0 %v2047
        %v2091 = vpop.f32.mrb[0].mxu0
        %v2092 = vadd.f32 0.0, %v2091
        %v2093 = vpop.f32.mrb[0].mxu0
        %v2094 = vpop.f32.mrb[0].mxu0
        %v2095 = vadd.f32 0.0, %v2094
        %v2096 = vpop.f32.mrb[0].mxu0
        %2097 = vdwg.mxu0
        %2102 = vrot.lane.b32.xlu0 %v1706, 32
        %v2103 = vpop.permute.xlu0 %2102
        %2104 = vrot.lane.b32.xlu0 %v1709, 32
        %v2105 = vpop.permute.xlu0 %2104
        %2106 = vrot.lane.b32.xlu0 %v1714, 32
        %v2107 = vpop.permute.xlu0 %2106
        %2108 = vrot.lane.b32.xlu0 %v1717, 32
        %v2109 = vpop.permute.xlu0 %2108
        %2118 = vrot.lane.b32.xlu0 %v1895, 64
        %v2119 = vpop.permute.xlu0 %2118
        %2120 = vrot.lane.b32.xlu0 %v1898, 64
        %v2121 = vpop.permute.xlu0 %2120
        %2122 = vrot.lane.b32.xlu0 %v1903, 64
        %v2123 = vpop.permute.xlu0 %2122
        %2124 = vrot.lane.b32.xlu0 %v1906, 64
        %v2125 = vpop.permute.xlu0 %2124
        %2134 = vrot.lane.b32.xlu0 %v2084, 96
        %v2135 = vpop.permute.xlu0 %2134
        %2136 = vrot.lane.b32.xlu0 %v2087, 96
        %v2137 = vpop.permute.xlu0 %2136
        %2138 = vrot.lane.b32.xlu0 %v2092, 96
        %v2139 = vpop.permute.xlu0 %2138
        %2140 = vrot.lane.b32.xlu0 %v2095, 96
        %v2141 = vpop.permute.xlu0 %2140
        %v2146 = vsel %vm1350, %v1511, %v2103
        %v2147 = vsel %vm1350, %v1514, %v2105
        %v2148 = vsel %vm1350, %v1519, %v2107
        %v2149 = vsel %vm1350, %v1522, %v2109
        %vm2150 = vcmask 523264
        %v2151 = vsel %vm2150, %v2146, %v2119
        %v2152 = vsel %vm2150, %v2147, %v2121
        %v2153 = vsel %vm2150, %v2148, %v2123
        %v2154 = vsel %vm2150, %v2149, %v2125
        %vm2155 = vcmask 785408
        %v2156 = vsel %vm2155, %v2151, %v2135
        %v2157 = vsel %vm2155, %v2152, %v2137
        %v2158 = vsel %vm2155, %v2153, %v2139
        %v2159 = vsel %vm2155, %v2154, %v2141
        %v2161 = vsel %vm1350, %v1332, 0
        %v2164 = vsel %vm1350, %v1335, 0
        %v2167 = vsel %vm1350, %v1333, 0
        %v2170 = vsel %vm1350, %v1336, 0
        %2172 = vmatprep.subr.bf16.mxu0 0
        %2173 = vmatpush1.bf16.xpose.msra.mxu0 %v2167
        %2174 = vmatprep.subr.bf16.mxu0 0
        %2175 = vmatpush1.bf16.xpose.msra.mxu0 %v2170
        %2176 = vmatprep.subr.bf16.mxu0 0
        %2177 = vmatpush1.bf16.xpose.msra.mxu0 0
        %2178 = vmatprep.subr.bf16.mxu0 0
        %2179 = vmatpush1.bf16.xpose.msra.mxu0 0
        %2180 = vmatprep.subr.bf16.mxu0 0
        %2181 = vmatpush1.bf16.xpose.msra.mxu0 0
        %2182 = vmatprep.subr.bf16.mxu0 0
        %2183 = vmatpush1.bf16.xpose.msra.mxu0 0
        %2184 = vmatprep.subr.bf16.mxu0 0
        %2185 = vmatpush1.bf16.xpose.msra.mxu0 0
        %2186 = vmatprep.subr.bf16.mxu0 0
        %2187 = vmatpush1.bf16.xpose.msra.mxu0 0
        %2188 = vmatprep.subr.bf16.mxu0 0
        %2189 = vmatpush1.bf16.xpose.msra.mxu0 0
        %2190 = vmatprep.subr.bf16.mxu0 0
        %2191 = vmatpush1.bf16.xpose.msra.mxu0 0
        %2192 = vmatprep.subr.bf16.mxu0 0
        %2193 = vmatpush1.bf16.xpose.msra.mxu0 0
        %2194 = vmatprep.subr.bf16.mxu0 0
        %2195 = vmatpush1.bf16.xpose.msra.mxu0 0
        %2196 = vmatprep.subr.bf16.mxu0 0
        %2197 = vmatpush1.bf16.xpose.msra.mxu0 0
        %2198 = vmatprep.subr.bf16.mxu0 0
        %2199 = vmatpush1.bf16.xpose.msra.mxu0 0
        %2200 = vmatprep.subr.bf16.mxu0 0
        %2201 = vmatpush1.bf16.xpose.msra.mxu0 0
        %2202 = vmatprep.subr.bf16.mxu0 0
        %2203 = vmatpush1.bf16.xpose.msra.mxu0 0
        %2204 = vmatprep.mubr.bf16.mxu0 0
        %2205 = vmatmul.mubr.bf16.gmra.mrb[0].mxu0 %v2161
        %v2206 = vpop.f32.mrb[0].mxu0
        %v2207 = vadd.f32 0.0, %v2206
        %v2208 = vpop.f32.mrb[0].mxu0
        %v2209 = vpop.f32.mrb[0].mxu0
        %v2210 = vadd.f32 0.0, %v2209
        %v2211 = vpop.f32.mrb[0].mxu0
        %2212 = vmatprep.mubr.bf16.mxu0 0
        %2213 = vmatmul.mubr.bf16.gmra.mrb[0].mxu0 %v2164
        %v2214 = vpop.f32.mrb[0].mxu0
        %v2215 = vadd.f32 0.0, %v2214
        %v2216 = vpop.f32.mrb[0].mxu0
        %v2217 = vpop.f32.mrb[0].mxu0
        %v2218 = vadd.f32 0.0, %v2217
        %v2219 = vpop.f32.mrb[0].mxu0
        %2220 = vdwg.mxu0
        %v2221 = vmul.f32 %v2207, 0.17677669
        %v2222 = vmul.f32 %v2210, 0.17677669
        %v2223 = vmul.f32 %v2215, 0.17677669
        %v2224 = vmul.f32 %v2218, 0.17677669
        %v2225 = vadd.f32 %v2221, %v1416
        %v2226 = vadd.f32 %v2222, %v1417
        %v2227 = vadd.f32 %v2223, %v1418
        %v2228 = vadd.f32 %v2224, %v1419
        %v2229 = vsel %vm1350, %v2225, -inf
        %2230 = vmax.xlane.f32.xlu0 %v2229
        %v2231 = vpop.xlane.xlu0 %2230
        %v2232 = vsel %vm1350, %v2226, -inf
        %2233 = vmax.xlane.f32.xlu0 %v2232
        %v2234 = vpop.xlane.xlu0 %2233
        %v2235 = vsel %vm1350, %v2227, -inf
        %2236 = vmax.xlane.f32.xlu0 %v2235
        %v2237 = vpop.xlane.xlu0 %2236
        %v2238 = vsel %vm1350, %v2228, -inf
        %2239 = vmax.xlane.f32.xlu0 %v2238
        %v2240 = vpop.xlane.xlu0 %2239
        %v2241 = vsub.f32 %v2225, %v2231
        %v2242 = vsub.f32 %v2226, %v2234
        %v2243 = vsub.f32 %v2227, %v2237
        %v2244 = vsub.f32 %v2228, %v2240
        %v2245 = vmul.f32 %v2241, 1.442695
        %v2246 = vpow.pop %v2245
        %v2247 = vmul.f32 %v2242, 1.442695
        %v2248 = vpow.pop %v2247
        %v2249 = vmul.f32 %v2243, 1.442695
        %v2250 = vpow.pop %v2249
        %v2251 = vmul.f32 %v2244, 1.442695
        %v2252 = vpow.pop %v2251
        %v2253 = vsel %vm1350, %v2246, 0.0
        %2254 = vadd.xlane.f32.xlu0 %v2253
        %v2255 = vpop.xlane.xlu0 %2254
        %v2256 = vsel %vm1350, %v2248, 0.0
        %2257 = vadd.xlane.f32.xlu0 %v2256
        %v2258 = vpop.xlane.xlu0 %2257
        %v2259 = vsel %vm1350, %v2250, 0.0
        %2260 = vadd.xlane.f32.xlu0 %v2259
        %v2261 = vpop.xlane.xlu0 %2260
        %v2262 = vsel %vm1350, %v2252, 0.0
        %2263 = vadd.xlane.f32.xlu0 %v2262
        %v2264 = vpop.xlane.xlu0 %2263
        %v2265 = vrcp.pop %v2255
        %v2266 = vrcp.pop %v2258
        %v2267 = vrcp.pop %v2261
        %v2268 = vrcp.pop %v2264
        %v2269 = vmul.f32 %v2246, %v2265
        %v2270 = vmul.f32 %v2248, %v2266
        %v2271 = vmul.f32 %v2250, %v2267
        %v2272 = vmul.f32 %v2252, %v2268
        %v2273 = vpack.c.bf16 %v2270, %v2269
        %v2274 = vpack.c.bf16 %v2272, %v2271
        %v2276 = vsel %vm1350, %v2273, 0
        %v2279 = vsel %vm1350, %v2274, 0
        %2281 = vmatprep.subr.bf16.mxu0 0
        %2282 = vmatpush1.bf16.msra.mxu0 %v1334
        %2283 = vmatprep.subr.bf16.mxu0 0
        %2284 = vmatpush1.bf16.msra.mxu0 %v1337
        %2285 = vmatprep.subr.bf16.mxu0 0
        %2286 = vmatpush1.bf16.msra.mxu0 0
        %2287 = vmatprep.subr.bf16.mxu0 0
        %2288 = vmatpush1.bf16.msra.mxu0 0
        %2289 = vmatprep.subr.bf16.mxu0 0
        %2290 = vmatpush1.bf16.msra.mxu0 0
        %2291 = vmatprep.subr.bf16.mxu0 0
        %2292 = vmatpush1.bf16.msra.mxu0 0
        %2293 = vmatprep.subr.bf16.mxu0 0
        %2294 = vmatpush1.bf16.msra.mxu0 0
        %2295 = vmatprep.subr.bf16.mxu0 0
        %2296 = vmatpush1.bf16.msra.mxu0 0
        %2297 = vmatprep.subr.bf16.mxu0 0
        %2298 = vmatpush1.bf16.msra.mxu0 0
        %2299 = vmatprep.subr.bf16.mxu0 0
        %2300 = vmatpush1.bf16.msra.mxu0 0
        %2301 = vmatprep.subr.bf16.mxu0 0
        %2302 = vmatpush1.bf16.msra.mxu0 0
        %2303 = vmatprep.subr.bf16.mxu0 0
        %2304 = vmatpush1.bf16.msra.mxu0 0
        %2305 = vmatprep.subr.bf16.mxu0 0
        %2306 = vmatpush1.bf16.msra.mxu0 0
        %2307 = vmatprep.subr.bf16.mxu0 0
        %2308 = vmatpush1.bf16.msra.mxu0 0
        %2309 = vmatprep.subr.bf16.mxu0 0
        %2310 = vmatpush1.bf16.msra.mxu0 0
        %2311 = vmatprep.subr.bf16.mxu0 0
        %2312 = vmatpush1.bf16.msra.mxu0 0
        %2313 = vmatprep.mubr.bf16.mxu0 0
        %2314 = vmatmul.mubr.bf16.gmra.mrb[0].mxu0 %v2276
        %v2315 = vpop.f32.mrb[0].mxu0
        %v2316 = vadd.f32 0.0, %v2315
        %v2317 = vpop.f32.mrb[0].mxu0
        %v2318 = vpop.f32.mrb[0].mxu0
        %v2319 = vadd.f32 0.0, %v2318
        %v2320 = vpop.f32.mrb[0].mxu0
        %2321 = vmatprep.mubr.bf16.mxu0 0
        %2322 = vmatmul.mubr.bf16.gmra.mrb[0].mxu0 %v2279
        %v2323 = vpop.f32.mrb[0].mxu0
        %v2324 = vadd.f32 0.0, %v2323
        %v2325 = vpop.f32.mrb[0].mxu0
        %v2326 = vpop.f32.mrb[0].mxu0
        %v2327 = vadd.f32 0.0, %v2326
        %v2328 = vpop.f32.mrb[0].mxu0
        %2329 = vdwg.mxu0
        %2332 = vrot.lane.b32.xlu0 %v1332, 96
        %v2333 = vpop.permute.xlu0 %2332
        %2334 = vrot.lane.b32.xlu0 %v1335, 96
        %v2335 = vpop.permute.xlu0 %2334
        %2338 = vrot.lane.b32.xlu0 %v1333, 96
        %v2339 = vpop.permute.xlu0 %2338
        %2340 = vrot.lane.b32.xlu0 %v1336, 96
        %v2341 = vpop.permute.xlu0 %2340
        %v2343 = vsel %vm1350, %v2333, 0
        %v2346 = vsel %vm1350, %v2335, 0
        %v2349 = vsel %vm1350, %v2339, 0
        %v2352 = vsel %vm1350, %v2341, 0
        %2354 = vmatprep.subr.bf16.mxu0 0
        %2355 = vmatpush1.bf16.xpose.msra.mxu0 %v2349
        %2356 = vmatprep.subr.bf16.mxu0 0
        %2357 = vmatpush1.bf16.xpose.msra.mxu0 %v2352
        %2358 = vmatprep.subr.bf16.mxu0 0
        %2359 = vmatpush1.bf16.xpose.msra.mxu0 0
        %2360 = vmatprep.subr.bf16.mxu0 0
        %2361 = vmatpush1.bf16.xpose.msra.mxu0 0
        %2362 = vmatprep.subr.bf16.mxu0 0
        %2363 = vmatpush1.bf16.xpose.msra.mxu0 0
        %2364 = vmatprep.subr.bf16.mxu0 0
        %2365 = vmatpush1.bf16.xpose.msra.mxu0 0
        %2366 = vmatprep.subr.bf16.mxu0 0
        %2367 = vmatpush1.bf16.xpose.msra.mxu0 0
        %2368 = vmatprep.subr.bf16.mxu0 0
        %2369 = vmatpush1.bf16.xpose.msra.mxu0 0
        %2370 = vmatprep.subr.bf16.mxu0 0
        %2371 = vmatpush1.bf16.xpose.msra.mxu0 0
        %2372 = vmatprep.subr.bf16.mxu0 0
        %2373 = vmatpush1.bf16.xpose.msra.mxu0 0
        %2374 = vmatprep.subr.bf16.mxu0 0
        %2375 = vmatpush1.bf16.xpose.msra.mxu0 0
        %2376 = vmatprep.subr.bf16.mxu0 0
        %2377 = vmatpush1.bf16.xpose.msra.mxu0 0
        %2378 = vmatprep.subr.bf16.mxu0 0
        %2379 = vmatpush1.bf16.xpose.msra.mxu0 0
        %2380 = vmatprep.subr.bf16.mxu0 0
        %2381 = vmatpush1.bf16.xpose.msra.mxu0 0
        %2382 = vmatprep.subr.bf16.mxu0 0
        %2383 = vmatpush1.bf16.xpose.msra.mxu0 0
        %2384 = vmatprep.subr.bf16.mxu0 0
        %2385 = vmatpush1.bf16.xpose.msra.mxu0 0
        %2386 = vmatprep.mubr.bf16.mxu0 0
        %2387 = vmatmul.mubr.bf16.gmra.mrb[0].mxu0 %v2343
        %v2388 = vpop.f32.mrb[0].mxu0
        %v2389 = vadd.f32 0.0, %v2388
        %v2390 = vpop.f32.mrb[0].mxu0
        %v2391 = vpop.f32.mrb[0].mxu0
        %v2392 = vadd.f32 0.0, %v2391
        %v2393 = vpop.f32.mrb[0].mxu0
        %2394 = vmatprep.mubr.bf16.mxu0 0
        %2395 = vmatmul.mubr.bf16.gmra.mrb[0].mxu0 %v2346
        %v2396 = vpop.f32.mrb[0].mxu0
        %v2397 = vadd.f32 0.0, %v2396
        %v2398 = vpop.f32.mrb[0].mxu0
        %v2399 = vpop.f32.mrb[0].mxu0
        %v2400 = vadd.f32 0.0, %v2399
        %v2401 = vpop.f32.mrb[0].mxu0
        %2402 = vdwg.mxu0
        %v2403 = vmul.f32 %v2389, 0.17677669
        %v2404 = vmul.f32 %v2392, 0.17677669
        %v2405 = vmul.f32 %v2397, 0.17677669
        %v2406 = vmul.f32 %v2400, 0.17677669
        %v2407 = vadd.f32 %v2403, %v1603
        %v2408 = vadd.f32 %v2404, %v1604
        %v2409 = vadd.f32 %v2405, %v1605
        %v2410 = vadd.f32 %v2406, %v1606
        %v2411 = vsel %vm1350, %v2407, -inf
        %2412 = vmax.xlane.f32.xlu0 %v2411
        %v2413 = vpop.xlane.xlu0 %2412
        %v2414 = vsel %vm1350, %v2408, -inf
        %2415 = vmax.xlane.f32.xlu0 %v2414
        %v2416 = vpop.xlane.xlu0 %2415
        %v2417 = vsel %vm1350, %v2409, -inf
        %2418 = vmax.xlane.f32.xlu0 %v2417
        %v2419 = vpop.xlane.xlu0 %2418
        %v2420 = vsel %vm1350, %v2410, -inf
        %2421 = vmax.xlane.f32.xlu0 %v2420
        %v2422 = vpop.xlane.xlu0 %2421
        %v2423 = vsub.f32 %v2407, %v2413
        %v2424 = vsub.f32 %v2408, %v2416
        %v2425 = vsub.f32 %v2409, %v2419
        %v2426 = vsub.f32 %v2410, %v2422
        %v2427 = vmul.f32 %v2423, 1.442695
        %v2428 = vpow.pop %v2427
        %v2429 = vmul.f32 %v2424, 1.442695
        %v2430 = vpow.pop %v2429
        %v2431 = vmul.f32 %v2425, 1.442695
        %v2432 = vpow.pop %v2431
        %v2433 = vmul.f32 %v2426, 1.442695
        %v2434 = vpow.pop %v2433
        %v2435 = vsel %vm1350, %v2428, 0.0
        %2436 = vadd.xlane.f32.xlu0 %v2435
        %v2437 = vpop.xlane.xlu0 %2436
        %v2438 = vsel %vm1350, %v2430, 0.0
        %2439 = vadd.xlane.f32.xlu0 %v2438
        %v2440 = vpop.xlane.xlu0 %2439
        %v2441 = vsel %vm1350, %v2432, 0.0
        %2442 = vadd.xlane.f32.xlu0 %v2441
        %v2443 = vpop.xlane.xlu0 %2442
        %v2444 = vsel %vm1350, %v2434, 0.0
        %2445 = vadd.xlane.f32.xlu0 %v2444
        %v2446 = vpop.xlane.xlu0 %2445
        %v2447 = vrcp.pop %v2437
        %v2448 = vrcp.pop %v2440
        %v2449 = vrcp.pop %v2443
        %v2450 = vrcp.pop %v2446
        %v2451 = vmul.f32 %v2428, %v2447
        %v2452 = vmul.f32 %v2430, %v2448
        %v2453 = vmul.f32 %v2432, %v2449
        %v2454 = vmul.f32 %v2434, %v2450
        %v2455 = vpack.c.bf16 %v2452, %v2451
        %v2456 = vpack.c.bf16 %v2454, %v2453
        %2459 = vrot.lane.b32.xlu0 %v1334, 96
        %v2460 = vpop.permute.xlu0 %2459
        %2461 = vrot.lane.b32.xlu0 %v1337, 96
        %v2462 = vpop.permute.xlu0 %2461
        %v2466 = vsel %vm1350, %v2455, 0
        %v2469 = vsel %vm1350, %v2456, 0
        %2471 = vmatprep.subr.bf16.mxu0 0
        %2472 = vmatpush1.bf16.msra.mxu0 %v2460
        %2473 = vmatprep.subr.bf16.mxu0 0
        %2474 = vmatpush1.bf16.msra.mxu0 %v2462
        %2475 = vmatprep.subr.bf16.mxu0 0
        %2476 = vmatpush1.bf16.msra.mxu0 0
        %2477 = vmatprep.subr.bf16.mxu0 0
        %2478 = vmatpush1.bf16.msra.mxu0 0
        %2479 = vmatprep.subr.bf16.mxu0 0
        %2480 = vmatpush1.bf16.msra.mxu0 0
        %2481 = vmatprep.subr.bf16.mxu0 0
        %2482 = vmatpush1.bf16.msra.mxu0 0
        %2483 = vmatprep.subr.bf16.mxu0 0
        %2484 = vmatpush1.bf16.msra.mxu0 0
        %2485 = vmatprep.subr.bf16.mxu0 0
        %2486 = vmatpush1.bf16.msra.mxu0 0
        %2487 = vmatprep.subr.bf16.mxu0 0
        %2488 = vmatpush1.bf16.msra.mxu0 0
        %2489 = vmatprep.subr.bf16.mxu0 0
        %2490 = vmatpush1.bf16.msra.mxu0 0
        %2491 = vmatprep.subr.bf16.mxu0 0
        %2492 = vmatpush1.bf16.msra.mxu0 0
        %2493 = vmatprep.subr.bf16.mxu0 0
        %2494 = vmatpush1.bf16.msra.mxu0 0
        %2495 = vmatprep.subr.bf16.mxu0 0
        %2496 = vmatpush1.bf16.msra.mxu0 0
        %2497 = vmatprep.subr.bf16.mxu0 0
        %2498 = vmatpush1.bf16.msra.mxu0 0
        %2499 = vmatprep.subr.bf16.mxu0 0
        %2500 = vmatpush1.bf16.msra.mxu0 0
        %2501 = vmatprep.subr.bf16.mxu0 0
        %2502 = vmatpush1.bf16.msra.mxu0 0
        %2503 = vmatprep.mubr.bf16.mxu0 0
        %2504 = vmatmul.mubr.bf16.gmra.mrb[0].mxu0 %v2466
        %v2505 = vpop.f32.mrb[0].mxu0
        %v2506 = vadd.f32 0.0, %v2505
        %v2507 = vpop.f32.mrb[0].mxu0
        %v2508 = vpop.f32.mrb[0].mxu0
        %v2509 = vadd.f32 0.0, %v2508
        %v2510 = vpop.f32.mrb[0].mxu0
        %2511 = vmatprep.mubr.bf16.mxu0 0
        %2512 = vmatmul.mubr.bf16.gmra.mrb[0].mxu0 %v2469
        %v2513 = vpop.f32.mrb[0].mxu0
        %v2514 = vadd.f32 0.0, %v2513
        %v2515 = vpop.f32.mrb[0].mxu0
        %v2516 = vpop.f32.mrb[0].mxu0
        %v2517 = vadd.f32 0.0, %v2516
        %v2518 = vpop.f32.mrb[0].mxu0
        %2519 = vdwg.mxu0
        %2520 = vrot.lane.b32.xlu0 %v1332, 64
        %v2521 = vpop.permute.xlu0 %2520
        %2522 = vrot.lane.b32.xlu0 %v1335, 64
        %v2523 = vpop.permute.xlu0 %2522
        %2524 = vrot.lane.b32.xlu0 %v1333, 64
        %v2525 = vpop.permute.xlu0 %2524
        %2526 = vrot.lane.b32.xlu0 %v1336, 64
        %v2527 = vpop.permute.xlu0 %2526
        %v2529 = vsel %vm1350, %v2521, 0
        %v2532 = vsel %vm1350, %v2523, 0
        %v2535 = vsel %vm1350, %v2525, 0
        %v2538 = vsel %vm1350, %v2527, 0
        %2540 = vmatprep.subr.bf16.mxu0 0
        %2541 = vmatpush1.bf16.xpose.msra.mxu0 %v2535
        %2542 = vmatprep.subr.bf16.mxu0 0
        %2543 = vmatpush1.bf16.xpose.msra.mxu0 %v2538
        %2544 = vmatprep.subr.bf16.mxu0 0
        %2545 = vmatpush1.bf16.xpose.msra.mxu0 0
        %2546 = vmatprep.subr.bf16.mxu0 0
        %2547 = vmatpush1.bf16.xpose.msra.mxu0 0
        %2548 = vmatprep.subr.bf16.mxu0 0
        %2549 = vmatpush1.bf16.xpose.msra.mxu0 0
        %2550 = vmatprep.subr.bf16.mxu0 0
        %2551 = vmatpush1.bf16.xpose.msra.mxu0 0
        %2552 = vmatprep.subr.bf16.mxu0 0
        %2553 = vmatpush1.bf16.xpose.msra.mxu0 0
        %2554 = vmatprep.subr.bf16.mxu0 0
        %2555 = vmatpush1.bf16.xpose.msra.mxu0 0
        %2556 = vmatprep.subr.bf16.mxu0 0
        %2557 = vmatpush1.bf16.xpose.msra.mxu0 0
        %2558 = vmatprep.subr.bf16.mxu0 0
        %2559 = vmatpush1.bf16.xpose.msra.mxu0 0
        %2560 = vmatprep.subr.bf16.mxu0 0
        %2561 = vmatpush1.bf16.xpose.msra.mxu0 0
        %2562 = vmatprep.subr.bf16.mxu0 0
        %2563 = vmatpush1.bf16.xpose.msra.mxu0 0
        %2564 = vmatprep.subr.bf16.mxu0 0
        %2565 = vmatpush1.bf16.xpose.msra.mxu0 0
        %2566 = vmatprep.subr.bf16.mxu0 0
        %2567 = vmatpush1.bf16.xpose.msra.mxu0 0
        %2568 = vmatprep.subr.bf16.mxu0 0
        %2569 = vmatpush1.bf16.xpose.msra.mxu0 0
        %2570 = vmatprep.subr.bf16.mxu0 0
        %2571 = vmatpush1.bf16.xpose.msra.mxu0 0
        %2572 = vmatprep.mubr.bf16.mxu0 0
        %2573 = vmatmul.mubr.bf16.gmra.mrb[0].mxu0 %v2529
        %v2574 = vpop.f32.mrb[0].mxu0
        %v2575 = vadd.f32 0.0, %v2574
        %v2576 = vpop.f32.mrb[0].mxu0
        %v2577 = vpop.f32.mrb[0].mxu0
        %v2578 = vadd.f32 0.0, %v2577
        %v2579 = vpop.f32.mrb[0].mxu0
        %2580 = vmatprep.mubr.bf16.mxu0 0
        %2581 = vmatmul.mubr.bf16.gmra.mrb[0].mxu0 %v2532
        %v2582 = vpop.f32.mrb[0].mxu0
        %v2583 = vadd.f32 0.0, %v2582
        %v2584 = vpop.f32.mrb[0].mxu0
        %v2585 = vpop.f32.mrb[0].mxu0
        %v2586 = vadd.f32 0.0, %v2585
        %v2587 = vpop.f32.mrb[0].mxu0
        %2588 = vdwg.mxu0
        %v2589 = vmul.f32 %v2575, 0.17677669
        %v2590 = vmul.f32 %v2578, 0.17677669
        %v2591 = vmul.f32 %v2583, 0.17677669
        %v2592 = vmul.f32 %v2586, 0.17677669
        %v2593 = vadd.f32 %v2589, %v1794
        %v2594 = vadd.f32 %v2590, %v1795
        %v2595 = vadd.f32 %v2591, %v1796
        %v2596 = vadd.f32 %v2592, %v1797
        %v2597 = vsel %vm1350, %v2593, -inf
        %2598 = vmax.xlane.f32.xlu0 %v2597
        %v2599 = vpop.xlane.xlu0 %2598
        %v2600 = vsel %vm1350, %v2594, -inf
        %2601 = vmax.xlane.f32.xlu0 %v2600
        %v2602 = vpop.xlane.xlu0 %2601
        %v2603 = vsel %vm1350, %v2595, -inf
        %2604 = vmax.xlane.f32.xlu0 %v2603
        %v2605 = vpop.xlane.xlu0 %2604
        %v2606 = vsel %vm1350, %v2596, -inf
        %2607 = vmax.xlane.f32.xlu0 %v2606
        %v2608 = vpop.xlane.xlu0 %2607
        %v2609 = vsub.f32 %v2593, %v2599
        %v2610 = vsub.f32 %v2594, %v2602
        %v2611 = vsub.f32 %v2595, %v2605
        %v2612 = vsub.f32 %v2596, %v2608
        %v2613 = vmul.f32 %v2609, 1.442695
        %v2614 = vpow.pop %v2613
        %v2615 = vmul.f32 %v2610, 1.442695
        %v2616 = vpow.pop %v2615
        %v2617 = vmul.f32 %v2611, 1.442695
        %v2618 = vpow.pop %v2617
        %v2619 = vmul.f32 %v2612, 1.442695
        %v2620 = vpow.pop %v2619
        %v2621 = vsel %vm1350, %v2614, 0.0
        %2622 = vadd.xlane.f32.xlu0 %v2621
        %v2623 = vpop.xlane.xlu0 %2622
        %v2624 = vsel %vm1350, %v2616, 0.0
        %2625 = vadd.xlane.f32.xlu0 %v2624
        %v2626 = vpop.xlane.xlu0 %2625
        %v2627 = vsel %vm1350, %v2618, 0.0
        %2628 = vadd.xlane.f32.xlu0 %v2627
        %v2629 = vpop.xlane.xlu0 %2628
        %v2630 = vsel %vm1350, %v2620, 0.0
        %2631 = vadd.xlane.f32.xlu0 %v2630
        %v2632 = vpop.xlane.xlu0 %2631
        %v2633 = vrcp.pop %v2623
        %v2634 = vrcp.pop %v2626
        %v2635 = vrcp.pop %v2629
        %v2636 = vrcp.pop %v2632
        %v2637 = vmul.f32 %v2614, %v2633
        %v2638 = vmul.f32 %v2616, %v2634
        %v2639 = vmul.f32 %v2618, %v2635
        %v2640 = vmul.f32 %v2620, %v2636
        %v2641 = vpack.c.bf16 %v2638, %v2637
        %v2642 = vpack.c.bf16 %v2640, %v2639
        %2643 = vrot.lane.b32.xlu0 %v1334, 64
        %v2644 = vpop.permute.xlu0 %2643
        %2645 = vrot.lane.b32.xlu0 %v1337, 64
        %v2646 = vpop.permute.xlu0 %2645
        %v2650 = vsel %vm1350, %v2641, 0
        %v2653 = vsel %vm1350, %v2642, 0
        %2655 = vmatprep.subr.bf16.mxu0 0
        %2656 = vmatpush1.bf16.msra.mxu0 %v2644
        %2657 = vmatprep.subr.bf16.mxu0 0
        %2658 = vmatpush1.bf16.msra.mxu0 %v2646
        %2659 = vmatprep.subr.bf16.mxu0 0
        %2660 = vmatpush1.bf16.msra.mxu0 0
        %2661 = vmatprep.subr.bf16.mxu0 0
        %2662 = vmatpush1.bf16.msra.mxu0 0
        %2663 = vmatprep.subr.bf16.mxu0 0
        %2664 = vmatpush1.bf16.msra.mxu0 0
        %2665 = vmatprep.subr.bf16.mxu0 0
        %2666 = vmatpush1.bf16.msra.mxu0 0
        %2667 = vmatprep.subr.bf16.mxu0 0
        %2668 = vmatpush1.bf16.msra.mxu0 0
        %2669 = vmatprep.subr.bf16.mxu0 0
        %2670 = vmatpush1.bf16.msra.mxu0 0
        %2671 = vmatprep.subr.bf16.mxu0 0
        %2672 = vmatpush1.bf16.msra.mxu0 0
        %2673 = vmatprep.subr.bf16.mxu0 0
        %2674 = vmatpush1.bf16.msra.mxu0 0
        %2675 = vmatprep.subr.bf16.mxu0 0
        %2676 = vmatpush1.bf16.msra.mxu0 0
        %2677 = vmatprep.subr.bf16.mxu0 0
        %2678 = vmatpush1.bf16.msra.mxu0 0
        %2679 = vmatprep.subr.bf16.mxu0 0
        %2680 = vmatpush1.bf16.msra.mxu0 0
        %2681 = vmatprep.subr.bf16.mxu0 0
        %2682 = vmatpush1.bf16.msra.mxu0 0
        %2683 = vmatprep.subr.bf16.mxu0 0
        %2684 = vmatpush1.bf16.msra.mxu0 0
        %2685 = vmatprep.subr.bf16.mxu0 0
        %2686 = vmatpush1.bf16.msra.mxu0 0
        %2687 = vmatprep.mubr.bf16.mxu0 0
        %2688 = vmatmul.mubr.bf16.gmra.mrb[0].mxu0 %v2650
        %v2689 = vpop.f32.mrb[0].mxu0
        %v2690 = vadd.f32 0.0, %v2689
        %v2691 = vpop.f32.mrb[0].mxu0
        %v2692 = vpop.f32.mrb[0].mxu0
        %v2693 = vadd.f32 0.0, %v2692
        %v2694 = vpop.f32.mrb[0].mxu0
        %2695 = vmatprep.mubr.bf16.mxu0 0
        %2696 = vmatmul.mubr.bf16.gmra.mrb[0].mxu0 %v2653
        %v2697 = vpop.f32.mrb[0].mxu0
        %v2698 = vadd.f32 0.0, %v2697
        %v2699 = vpop.f32.mrb[0].mxu0
        %v2700 = vpop.f32.mrb[0].mxu0
        %v2701 = vadd.f32 0.0, %v2700
        %v2702 = vpop.f32.mrb[0].mxu0
        %2703 = vdwg.mxu0
        %2704 = vrot.lane.b32.xlu0 %v1332, 32
        %v2705 = vpop.permute.xlu0 %2704
        %2706 = vrot.lane.b32.xlu0 %v1335, 32
        %v2707 = vpop.permute.xlu0 %2706
        %2708 = vrot.lane.b32.xlu0 %v1333, 32
        %v2709 = vpop.permute.xlu0 %2708
        %2710 = vrot.lane.b32.xlu0 %v1336, 32
        %v2711 = vpop.permute.xlu0 %2710
        %v2713 = vsel %vm1350, %v2705, 0
        %v2716 = vsel %vm1350, %v2707, 0
        %v2719 = vsel %vm1350, %v2709, 0
        %v2722 = vsel %vm1350, %v2711, 0
        %2724 = vmatprep.subr.bf16.mxu0 0
        %2725 = vmatpush1.bf16.xpose.msra.mxu0 %v2719
        %2726 = vmatprep.subr.bf16.mxu0 0
        %2727 = vmatpush1.bf16.xpose.msra.mxu0 %v2722
        %2728 = vmatprep.subr.bf16.mxu0 0
        %2729 = vmatpush1.bf16.xpose.msra.mxu0 0
        %2730 = vmatprep.subr.bf16.mxu0 0
        %2731 = vmatpush1.bf16.xpose.msra.mxu0 0
        %2732 = vmatprep.subr.bf16.mxu0 0
        %2733 = vmatpush1.bf16.xpose.msra.mxu0 0
        %2734 = vmatprep.subr.bf16.mxu0 0
        %2735 = vmatpush1.bf16.xpose.msra.mxu0 0
        %2736 = vmatprep.subr.bf16.mxu0 0
        %2737 = vmatpush1.bf16.xpose.msra.mxu0 0
        %2738 = vmatprep.subr.bf16.mxu0 0
        %2739 = vmatpush1.bf16.xpose.msra.mxu0 0
        %2740 = vmatprep.subr.bf16.mxu0 0
        %2741 = vmatpush1.bf16.xpose.msra.mxu0 0
        %2742 = vmatprep.subr.bf16.mxu0 0
        %2743 = vmatpush1.bf16.xpose.msra.mxu0 0
        %2744 = vmatprep.subr.bf16.mxu0 0
        %2745 = vmatpush1.bf16.xpose.msra.mxu0 0
        %2746 = vmatprep.subr.bf16.mxu0 0
        %2747 = vmatpush1.bf16.xpose.msra.mxu0 0
        %2748 = vmatprep.subr.bf16.mxu0 0
        %2749 = vmatpush1.bf16.xpose.msra.mxu0 0
        %2750 = vmatprep.subr.bf16.mxu0 0
        %2751 = vmatpush1.bf16.xpose.msra.mxu0 0
        %2752 = vmatprep.subr.bf16.mxu0 0
        %2753 = vmatpush1.bf16.xpose.msra.mxu0 0
        %2754 = vmatprep.subr.bf16.mxu0 0
        %2755 = vmatpush1.bf16.xpose.msra.mxu0 0
        %2756 = vmatprep.mubr.bf16.mxu0 0
        %2757 = vmatmul.mubr.bf16.gmra.mrb[0].mxu0 %v2713
        %v2758 = vpop.f32.mrb[0].mxu0
        %v2759 = vadd.f32 0.0, %v2758
        %v2760 = vpop.f32.mrb[0].mxu0
        %v2761 = vpop.f32.mrb[0].mxu0
        %v2762 = vadd.f32 0.0, %v2761
        %v2763 = vpop.f32.mrb[0].mxu0
        %2764 = vmatprep.mubr.bf16.mxu0 0
        %2765 = vmatmul.mubr.bf16.gmra.mrb[0].mxu0 %v2716
        %v2766 = vpop.f32.mrb[0].mxu0
        %v2767 = vadd.f32 0.0, %v2766
        %v2768 = vpop.f32.mrb[0].mxu0
        %v2769 = vpop.f32.mrb[0].mxu0
        %v2770 = vadd.f32 0.0, %v2769
        %v2771 = vpop.f32.mrb[0].mxu0
        %2772 = vdwg.mxu0
        %v2773 = vmul.f32 %v2759, 0.17677669
        %v2774 = vmul.f32 %v2762, 0.17677669
        %v2775 = vmul.f32 %v2767, 0.17677669
        %v2776 = vmul.f32 %v2770, 0.17677669
        %v2777 = vadd.f32 %v2773, %v1983
        %v2778 = vadd.f32 %v2774, %v1984
        %v2779 = vadd.f32 %v2775, %v1985
        %v2780 = vadd.f32 %v2776, %v1986
        %v2781 = vsel %vm1350, %v2777, -inf
        %2782 = vmax.xlane.f32.xlu0 %v2781
        %v2783 = vpop.xlane.xlu0 %2782
        %v2784 = vsel %vm1350, %v2778, -inf
        %2785 = vmax.xlane.f32.xlu0 %v2784
        %v2786 = vpop.xlane.xlu0 %2785
        %v2787 = vsel %vm1350, %v2779, -inf
        %2788 = vmax.xlane.f32.xlu0 %v2787
        %v2789 = vpop.xlane.xlu0 %2788
        %v2790 = vsel %vm1350, %v2780, -inf
        %2791 = vmax.xlane.f32.xlu0 %v2790
        %v2792 = vpop.xlane.xlu0 %2791
        %v2793 = vsub.f32 %v2777, %v2783
        %v2794 = vsub.f32 %v2778, %v2786
        %v2795 = vsub.f32 %v2779, %v2789
        %v2796 = vsub.f32 %v2780, %v2792
        %v2797 = vmul.f32 %v2793, 1.442695
        %v2798 = vpow.pop %v2797
        %v2799 = vmul.f32 %v2794, 1.442695
        %v2800 = vpow.pop %v2799
        %v2801 = vmul.f32 %v2795, 1.442695
        %v2802 = vpow.pop %v2801
        %v2803 = vmul.f32 %v2796, 1.442695
        %v2804 = vpow.pop %v2803
        %v2805 = vsel %vm1350, %v2798, 0.0
        %2806 = vadd.xlane.f32.xlu0 %v2805
        %v2807 = vpop.xlane.xlu0 %2806
        %v2808 = vsel %vm1350, %v2800, 0.0
        %2809 = vadd.xlane.f32.xlu0 %v2808
        %v2810 = vpop.xlane.xlu0 %2809
        %v2811 = vsel %vm1350, %v2802, 0.0
        %2812 = vadd.xlane.f32.xlu0 %v2811
        %v2813 = vpop.xlane.xlu0 %2812
        %v2814 = vsel %vm1350, %v2804, 0.0
        %2815 = vadd.xlane.f32.xlu0 %v2814
        %v2816 = vpop.xlane.xlu0 %2815
        %v2817 = vrcp.pop %v2807
        %v2818 = vrcp.pop %v2810
        %v2819 = vrcp.pop %v2813
        %v2820 = vrcp.pop %v2816
        %v2821 = vmul.f32 %v2798, %v2817
        %v2822 = vmul.f32 %v2800, %v2818
        %v2823 = vmul.f32 %v2802, %v2819
        %v2824 = vmul.f32 %v2804, %v2820
        %v2825 = vpack.c.bf16 %v2822, %v2821
        %v2826 = vpack.c.bf16 %v2824, %v2823
        %2827 = vrot.lane.b32.xlu0 %v1334, 32
        %v2828 = vpop.permute.xlu0 %2827
        %2829 = vrot.lane.b32.xlu0 %v1337, 32
        %v2830 = vpop.permute.xlu0 %2829
        %v2834 = vsel %vm1350, %v2825, 0
        %v2837 = vsel %vm1350, %v2826, 0
        %2839 = vmatprep.subr.bf16.mxu0 0
        %2840 = vmatpush1.bf16.msra.mxu0 %v2828
        %2841 = vmatprep.subr.bf16.mxu0 0
        %2842 = vmatpush1.bf16.msra.mxu0 %v2830
        %2843 = vmatprep.subr.bf16.mxu0 0
        %2844 = vmatpush1.bf16.msra.mxu0 0
        %2845 = vmatprep.subr.bf16.mxu0 0
        %2846 = vmatpush1.bf16.msra.mxu0 0
        %2847 = vmatprep.subr.bf16.mxu0 0
        %2848 = vmatpush1.bf16.msra.mxu0 0
        %2849 = vmatprep.subr.bf16.mxu0 0
        %2850 = vmatpush1.bf16.msra.mxu0 0
        %2851 = vmatprep.subr.bf16.mxu0 0
        %2852 = vmatpush1.bf16.msra.mxu0 0
        %2853 = vmatprep.subr.bf16.mxu0 0
        %2854 = vmatpush1.bf16.msra.mxu0 0
        %2855 = vmatprep.subr.bf16.mxu0 0
        %2856 = vmatpush1.bf16.msra.mxu0 0
        %2857 = vmatprep.subr.bf16.mxu0 0
        %2858 = vmatpush1.bf16.msra.mxu0 0
        %2859 = vmatprep.subr.bf16.mxu0 0
        %2860 = vmatpush1.bf16.msra.mxu0 0
        %2861 = vmatprep.subr.bf16.mxu0 0
        %2862 = vmatpush1.bf16.msra.mxu0 0
        %2863 = vmatprep.subr.bf16.mxu0 0
        %2864 = vmatpush1.bf16.msra.mxu0 0
        %2865 = vmatprep.subr.bf16.mxu0 0
        %2866 = vmatpush1.bf16.msra.mxu0 0
        %2867 = vmatprep.subr.bf16.mxu0 0
        %2868 = vmatpush1.bf16.msra.mxu0 0
        %2869 = vmatprep.subr.bf16.mxu0 0
        %2870 = vmatpush1.bf16.msra.mxu0 0
        %2871 = vmatprep.mubr.bf16.mxu0 0
        %2872 = vmatmul.mubr.bf16.gmra.mrb[0].mxu0 %v2834
        %v2873 = vpop.f32.mrb[0].mxu0
        %v2874 = vadd.f32 0.0, %v2873
        %v2875 = vpop.f32.mrb[0].mxu0
        %v2876 = vpop.f32.mrb[0].mxu0
        %v2877 = vadd.f32 0.0, %v2876
        %v2878 = vpop.f32.mrb[0].mxu0
        %2879 = vmatprep.mubr.bf16.mxu0 0
        %2880 = vmatmul.mubr.bf16.gmra.mrb[0].mxu0 %v2837
        %v2881 = vpop.f32.mrb[0].mxu0
        %v2882 = vadd.f32 0.0, %v2881
        %v2883 = vpop.f32.mrb[0].mxu0
        %v2884 = vpop.f32.mrb[0].mxu0
        %v2885 = vadd.f32 0.0, %v2884
        %v2886 = vpop.f32.mrb[0].mxu0
        %2887 = vdwg.mxu0
        %2892 = vrot.lane.b32.xlu0 %v2506, 32
        %v2893 = vpop.permute.xlu0 %2892
        %2894 = vrot.lane.b32.xlu0 %v2509, 32
        %v2895 = vpop.permute.xlu0 %2894
        %2896 = vrot.lane.b32.xlu0 %v2514, 32
        %v2897 = vpop.permute.xlu0 %2896
        %2898 = vrot.lane.b32.xlu0 %v2517, 32
        %v2899 = vpop.permute.xlu0 %2898
        %2908 = vrot.lane.b32.xlu0 %v2690, 64
        %v2909 = vpop.permute.xlu0 %2908
        %2910 = vrot.lane.b32.xlu0 %v2693, 64
        %v2911 = vpop.permute.xlu0 %2910
        %2912 = vrot.lane.b32.xlu0 %v2698, 64
        %v2913 = vpop.permute.xlu0 %2912
        %2914 = vrot.lane.b32.xlu0 %v2701, 64
        %v2915 = vpop.permute.xlu0 %2914
        %2924 = vrot.lane.b32.xlu0 %v2874, 96
        %v2925 = vpop.permute.xlu0 %2924
        %2926 = vrot.lane.b32.xlu0 %v2877, 96
        %v2927 = vpop.permute.xlu0 %2926
        %2928 = vrot.lane.b32.xlu0 %v2882, 96
        %v2929 = vpop.permute.xlu0 %2928
        %2930 = vrot.lane.b32.xlu0 %v2885, 96
        %v2931 = vpop.permute.xlu0 %2930
        %v2936 = vsel %vm1350, %v2316, %v2893
        %v2937 = vsel %vm1350, %v2319, %v2895
        %v2938 = vsel %vm1350, %v2324, %v2897
        %v2939 = vsel %vm1350, %v2327, %v2899
        %v2940 = vsel %vm2150, %v2936, %v2909
        %v2941 = vsel %vm2150, %v2937, %v2911
        %v2942 = vsel %vm2150, %v2938, %v2913
        %v2943 = vsel %vm2150, %v2939, %v2915
        %v2944 = vsel %vm2155, %v2940, %v2925
        %v2945 = vsel %vm2155, %v2941, %v2927
        %v2946 = vsel %vm2155, %v2942, %v2929
        %v2947 = vsel %vm2155, %v2943, %v2931
        %v2949 = vsel %vm1350, %v1338, 0
        %v2952 = vsel %vm1350, %v1341, 0
        %v2955 = vsel %vm1350, %v1339, 0
        %v2958 = vsel %vm1350, %v1342, 0
        %2960 = vmatprep.subr.bf16.mxu0 0
        %2961 = vmatpush1.bf16.xpose.msra.mxu0 %v2955
        %2962 = vmatprep.subr.bf16.mxu0 0
        %2963 = vmatpush1.bf16.xpose.msra.mxu0 %v2958
        %2964 = vmatprep.subr.bf16.mxu0 0
        %2965 = vmatpush1.bf16.xpose.msra.mxu0 0
        %2966 = vmatprep.subr.bf16.mxu0 0
        %2967 = vmatpush1.bf16.xpose.msra.mxu0 0
        %2968 = vmatprep.subr.bf16.mxu0 0
        %2969 = vmatpush1.bf16.xpose.msra.mxu0 0
        %2970 = vmatprep.subr.bf16.mxu0 0
        %2971 = vmatpush1.bf16.xpose.msra.mxu0 0
        %2972 = vmatprep.subr.bf16.mxu0 0
        %2973 = vmatpush1.bf16.xpose.msra.mxu0 0
        %2974 = vmatprep.subr.bf16.mxu0 0
        %2975 = vmatpush1.bf16.xpose.msra.mxu0 0
        %2976 = vmatprep.subr.bf16.mxu0 0
        %2977 = vmatpush1.bf16.xpose.msra.mxu0 0
        %2978 = vmatprep.subr.bf16.mxu0 0
        %2979 = vmatpush1.bf16.xpose.msra.mxu0 0
        %2980 = vmatprep.subr.bf16.mxu0 0
        %2981 = vmatpush1.bf16.xpose.msra.mxu0 0
        %2982 = vmatprep.subr.bf16.mxu0 0
        %2983 = vmatpush1.bf16.xpose.msra.mxu0 0
        %2984 = vmatprep.subr.bf16.mxu0 0
        %2985 = vmatpush1.bf16.xpose.msra.mxu0 0
        %2986 = vmatprep.subr.bf16.mxu0 0
        %2987 = vmatpush1.bf16.xpose.msra.mxu0 0
        %2988 = vmatprep.subr.bf16.mxu0 0
        %2989 = vmatpush1.bf16.xpose.msra.mxu0 0
        %2990 = vmatprep.subr.bf16.mxu0 0
        %2991 = vmatpush1.bf16.xpose.msra.mxu0 0
        %2992 = vmatprep.mubr.bf16.mxu0 0
        %2993 = vmatmul.mubr.bf16.gmra.mrb[0].mxu0 %v2949
        %v2994 = vpop.f32.mrb[0].mxu0
        %v2995 = vadd.f32 0.0, %v2994
        %v2996 = vpop.f32.mrb[0].mxu0
        %v2997 = vpop.f32.mrb[0].mxu0
        %v2998 = vadd.f32 0.0, %v2997
        %v2999 = vpop.f32.mrb[0].mxu0
        %3000 = vmatprep.mubr.bf16.mxu0 0
        %3001 = vmatmul.mubr.bf16.gmra.mrb[0].mxu0 %v2952
        %v3002 = vpop.f32.mrb[0].mxu0
        %v3003 = vadd.f32 0.0, %v3002
        %v3004 = vpop.f32.mrb[0].mxu0
        %v3005 = vpop.f32.mrb[0].mxu0
        %v3006 = vadd.f32 0.0, %v3005
        %v3007 = vpop.f32.mrb[0].mxu0
        %3008 = vdwg.mxu0
        %v3009 = vmul.f32 %v2995, 0.17677669
        %v3010 = vmul.f32 %v2998, 0.17677669
        %v3011 = vmul.f32 %v3003, 0.17677669
        %v3012 = vmul.f32 %v3006, 0.17677669
        %v3013 = vadd.f32 %v3009, %v1416
        %v3014 = vadd.f32 %v3010, %v1417
        %v3015 = vadd.f32 %v3011, %v1418
        %v3016 = vadd.f32 %v3012, %v1419
        %v3017 = vsel %vm1350, %v3013, -inf
        %3018 = vmax.xlane.f32.xlu0 %v3017
        %v3019 = vpop.xlane.xlu0 %3018
        %v3020 = vsel %vm1350, %v3014, -inf
        %3021 = vmax.xlane.f32.xlu0 %v3020
        %v3022 = vpop.xlane.xlu0 %3021
        %v3023 = vsel %vm1350, %v3015, -inf
        %3024 = vmax.xlane.f32.xlu0 %v3023
        %v3025 = vpop.xlane.xlu0 %3024
        %v3026 = vsel %vm1350, %v3016, -inf
        %3027 = vmax.xlane.f32.xlu0 %v3026
        %v3028 = vpop.xlane.xlu0 %3027
        %v3029 = vsub.f32 %v3013, %v3019
        %v3030 = vsub.f32 %v3014, %v3022
        %v3031 = vsub.f32 %v3015, %v3025
        %v3032 = vsub.f32 %v3016, %v3028
        %v3033 = vmul.f32 %v3029, 1.442695
        %v3034 = vpow.pop %v3033
        %v3035 = vmul.f32 %v3030, 1.442695
        %v3036 = vpow.pop %v3035
        %v3037 = vmul.f32 %v3031, 1.442695
        %v3038 = vpow.pop %v3037
        %v3039 = vmul.f32 %v3032, 1.442695
        %v3040 = vpow.pop %v3039
        %v3041 = vsel %vm1350, %v3034, 0.0
        %3042 = vadd.xlane.f32.xlu0 %v3041
        %v3043 = vpop.xlane.xlu0 %3042
        %v3044 = vsel %vm1350, %v3036, 0.0
        %3045 = vadd.xlane.f32.xlu0 %v3044
        %v3046 = vpop.xlane.xlu0 %3045
        %v3047 = vsel %vm1350, %v3038, 0.0
        %3048 = vadd.xlane.f32.xlu0 %v3047
        %v3049 = vpop.xlane.xlu0 %3048
        %v3050 = vsel %vm1350, %v3040, 0.0
        %3051 = vadd.xlane.f32.xlu0 %v3050
        %v3052 = vpop.xlane.xlu0 %3051
        %v3053 = vrcp.pop %v3043
        %v3054 = vrcp.pop %v3046
        %v3055 = vrcp.pop %v3049
        %v3056 = vrcp.pop %v3052
        %v3057 = vmul.f32 %v3034, %v3053
        %v3058 = vmul.f32 %v3036, %v3054
        %v3059 = vmul.f32 %v3038, %v3055
        %v3060 = vmul.f32 %v3040, %v3056
        %v3061 = vpack.c.bf16 %v3058, %v3057
        %v3062 = vpack.c.bf16 %v3060, %v3059
        %v3064 = vsel %vm1350, %v3061, 0
        %v3067 = vsel %vm1350, %v3062, 0
        %3069 = vmatprep.subr.bf16.mxu0 0
        %3070 = vmatpush1.bf16.msra.mxu0 %v1340
        %3071 = vmatprep.subr.bf16.mxu0 0
        %3072 = vmatpush1.bf16.msra.mxu0 %v1343
        %3073 = vmatprep.subr.bf16.mxu0 0
        %3074 = vmatpush1.bf16.msra.mxu0 0
        %3075 = vmatprep.subr.bf16.mxu0 0
        %3076 = vmatpush1.bf16.msra.mxu0 0
        %3077 = vmatprep.subr.bf16.mxu0 0
        %3078 = vmatpush1.bf16.msra.mxu0 0
        %3079 = vmatprep.subr.bf16.mxu0 0
        %3080 = vmatpush1.bf16.msra.mxu0 0
        %3081 = vmatprep.subr.bf16.mxu0 0
        %3082 = vmatpush1.bf16.msra.mxu0 0
        %3083 = vmatprep.subr.bf16.mxu0 0
        %3084 = vmatpush1.bf16.msra.mxu0 0
        %3085 = vmatprep.subr.bf16.mxu0 0
        %3086 = vmatpush1.bf16.msra.mxu0 0
        %3087 = vmatprep.subr.bf16.mxu0 0
        %3088 = vmatpush1.bf16.msra.mxu0 0
        %3089 = vmatprep.subr.bf16.mxu0 0
        %3090 = vmatpush1.bf16.msra.mxu0 0
        %3091 = vmatprep.subr.bf16.mxu0 0
        %3092 = vmatpush1.bf16.msra.mxu0 0
        %3093 = vmatprep.subr.bf16.mxu0 0
        %3094 = vmatpush1.bf16.msra.mxu0 0
        %3095 = vmatprep.subr.bf16.mxu0 0
        %3096 = vmatpush1.bf16.msra.mxu0 0
        %3097 = vmatprep.subr.bf16.mxu0 0
        %3098 = vmatpush1.bf16.msra.mxu0 0
        %3099 = vmatprep.subr.bf16.mxu0 0
        %3100 = vmatpush1.bf16.msra.mxu0 0
        %3101 = vmatprep.mubr.bf16.mxu0 0
        %3102 = vmatmul.mubr.bf16.gmra.mrb[0].mxu0 %v3064
        %v3103 = vpop.f32.mrb[0].mxu0
        %v3104 = vadd.f32 0.0, %v3103
        %v3105 = vpop.f32.mrb[0].mxu0
        %v3106 = vpop.f32.mrb[0].mxu0
        %v3107 = vadd.f32 0.0, %v3106
        %v3108 = vpop.f32.mrb[0].mxu0
        %3109 = vmatprep.mubr.bf16.mxu0 0
        %3110 = vmatmul.mubr.bf16.gmra.mrb[0].mxu0 %v3067
        %v3111 = vpop.f32.mrb[0].mxu0
        %v3112 = vadd.f32 0.0, %v3111
        %v3113 = vpop.f32.mrb[0].mxu0
        %v3114 = vpop.f32.mrb[0].mxu0
        %v3115 = vadd.f32 0.0, %v3114
        %v3116 = vpop.f32.mrb[0].mxu0
        %3117 = vdwg.mxu0
        %3120 = vrot.lane.b32.xlu0 %v1338, 96
        %v3121 = vpop.permute.xlu0 %3120
        %3122 = vrot.lane.b32.xlu0 %v1341, 96
        %v3123 = vpop.permute.xlu0 %3122
        %3126 = vrot.lane.b32.xlu0 %v1339, 96
        %v3127 = vpop.permute.xlu0 %3126
        %3128 = vrot.lane.b32.xlu0 %v1342, 96
        %v3129 = vpop.permute.xlu0 %3128
        %v3131 = vsel %vm1350, %v3121, 0
        %v3134 = vsel %vm1350, %v3123, 0
        %v3137 = vsel %vm1350, %v3127, 0
        %v3140 = vsel %vm1350, %v3129, 0
        %3142 = vmatprep.subr.bf16.mxu0 0
        %3143 = vmatpush1.bf16.xpose.msra.mxu0 %v3137
        %3144 = vmatprep.subr.bf16.mxu0 0
        %3145 = vmatpush1.bf16.xpose.msra.mxu0 %v3140
        %3146 = vmatprep.subr.bf16.mxu0 0
        %3147 = vmatpush1.bf16.xpose.msra.mxu0 0
        %3148 = vmatprep.subr.bf16.mxu0 0
        %3149 = vmatpush1.bf16.xpose.msra.mxu0 0
        %3150 = vmatprep.subr.bf16.mxu0 0
        %3151 = vmatpush1.bf16.xpose.msra.mxu0 0
        %3152 = vmatprep.subr.bf16.mxu0 0
        %3153 = vmatpush1.bf16.xpose.msra.mxu0 0
        %3154 = vmatprep.subr.bf16.mxu0 0
        %3155 = vmatpush1.bf16.xpose.msra.mxu0 0
        %3156 = vmatprep.subr.bf16.mxu0 0
        %3157 = vmatpush1.bf16.xpose.msra.mxu0 0
        %3158 = vmatprep.subr.bf16.mxu0 0
        %3159 = vmatpush1.bf16.xpose.msra.mxu0 0
        %3160 = vmatprep.subr.bf16.mxu0 0
        %3161 = vmatpush1.bf16.xpose.msra.mxu0 0
        %3162 = vmatprep.subr.bf16.mxu0 0
        %3163 = vmatpush1.bf16.xpose.msra.mxu0 0
        %3164 = vmatprep.subr.bf16.mxu0 0
        %3165 = vmatpush1.bf16.xpose.msra.mxu0 0
        %3166 = vmatprep.subr.bf16.mxu0 0
        %3167 = vmatpush1.bf16.xpose.msra.mxu0 0
        %3168 = vmatprep.subr.bf16.mxu0 0
        %3169 = vmatpush1.bf16.xpose.msra.mxu0 0
        %3170 = vmatprep.subr.bf16.mxu0 0
        %3171 = vmatpush1.bf16.xpose.msra.mxu0 0
        %3172 = vmatprep.subr.bf16.mxu0 0
        %3173 = vmatpush1.bf16.xpose.msra.mxu0 0
        %3174 = vmatprep.mubr.bf16.mxu0 0
        %3175 = vmatmul.mubr.bf16.gmra.mrb[0].mxu0 %v3131
        %v3176 = vpop.f32.mrb[0].mxu0
        %v3177 = vadd.f32 0.0, %v3176
        %v3178 = vpop.f32.mrb[0].mxu0
        %v3179 = vpop.f32.mrb[0].mxu0
        %v3180 = vadd.f32 0.0, %v3179
        %v3181 = vpop.f32.mrb[0].mxu0
        %3182 = vmatprep.mubr.bf16.mxu0 0
        %3183 = vmatmul.mubr.bf16.gmra.mrb[0].mxu0 %v3134
        %v3184 = vpop.f32.mrb[0].mxu0
        %v3185 = vadd.f32 0.0, %v3184
        %v3186 = vpop.f32.mrb[0].mxu0
        %v3187 = vpop.f32.mrb[0].mxu0
        %v3188 = vadd.f32 0.0, %v3187
        %v3189 = vpop.f32.mrb[0].mxu0
        %3190 = vdwg.mxu0
        %v3191 = vmul.f32 %v3177, 0.17677669
        %v3192 = vmul.f32 %v3180, 0.17677669
        %v3193 = vmul.f32 %v3185, 0.17677669
        %v3194 = vmul.f32 %v3188, 0.17677669
        %v3195 = vadd.f32 %v3191, %v1603
        %v3196 = vadd.f32 %v3192, %v1604
        %v3197 = vadd.f32 %v3193, %v1605
        %v3198 = vadd.f32 %v3194, %v1606
        %v3199 = vsel %vm1350, %v3195, -inf
        %3200 = vmax.xlane.f32.xlu0 %v3199
        %v3201 = vpop.xlane.xlu0 %3200
        %v3202 = vsel %vm1350, %v3196, -inf
        %3203 = vmax.xlane.f32.xlu0 %v3202
        %v3204 = vpop.xlane.xlu0 %3203
        %v3205 = vsel %vm1350, %v3197, -inf
        %3206 = vmax.xlane.f32.xlu0 %v3205
        %v3207 = vpop.xlane.xlu0 %3206
        %v3208 = vsel %vm1350, %v3198, -inf
        %3209 = vmax.xlane.f32.xlu0 %v3208
        %v3210 = vpop.xlane.xlu0 %3209
        %v3211 = vsub.f32 %v3195, %v3201
        %v3212 = vsub.f32 %v3196, %v3204
        %v3213 = vsub.f32 %v3197, %v3207
        %v3214 = vsub.f32 %v3198, %v3210
        %v3215 = vmul.f32 %v3211, 1.442695
        %v3216 = vpow.pop %v3215
        %v3217 = vmul.f32 %v3212, 1.442695
        %v3218 = vpow.pop %v3217
        %v3219 = vmul.f32 %v3213, 1.442695
        %v3220 = vpow.pop %v3219
        %v3221 = vmul.f32 %v3214, 1.442695
        %v3222 = vpow.pop %v3221
        %v3223 = vsel %vm1350, %v3216, 0.0
        %3224 = vadd.xlane.f32.xlu0 %v3223
        %v3225 = vpop.xlane.xlu0 %3224
        %v3226 = vsel %vm1350, %v3218, 0.0
        %3227 = vadd.xlane.f32.xlu0 %v3226
        %v3228 = vpop.xlane.xlu0 %3227
        %v3229 = vsel %vm1350, %v3220, 0.0
        %3230 = vadd.xlane.f32.xlu0 %v3229
        %v3231 = vpop.xlane.xlu0 %3230
        %v3232 = vsel %vm1350, %v3222, 0.0
        %3233 = vadd.xlane.f32.xlu0 %v3232
        %v3234 = vpop.xlane.xlu0 %3233
        %v3235 = vrcp.pop %v3225
        %v3236 = vrcp.pop %v3228
        %v3237 = vrcp.pop %v3231
        %v3238 = vrcp.pop %v3234
        %v3239 = vmul.f32 %v3216, %v3235
        %v3240 = vmul.f32 %v3218, %v3236
        %v3241 = vmul.f32 %v3220, %v3237
        %v3242 = vmul.f32 %v3222, %v3238
        %v3243 = vpack.c.bf16 %v3240, %v3239
        %v3244 = vpack.c.bf16 %v3242, %v3241
        %3247 = vrot.lane.b32.xlu0 %v1340, 96
        %v3248 = vpop.permute.xlu0 %3247
        %3249 = vrot.lane.b32.xlu0 %v1343, 96
        %v3250 = vpop.permute.xlu0 %3249
        %v3254 = vsel %vm1350, %v3243, 0
        %v3257 = vsel %vm1350, %v3244, 0
        %3259 = vmatprep.subr.bf16.mxu0 0
        %3260 = vmatpush1.bf16.msra.mxu0 %v3248
        %3261 = vmatprep.subr.bf16.mxu0 0
        %3262 = vmatpush1.bf16.msra.mxu0 %v3250
        %3263 = vmatprep.subr.bf16.mxu0 0
        %3264 = vmatpush1.bf16.msra.mxu0 0
        %3265 = vmatprep.subr.bf16.mxu0 0
        %3266 = vmatpush1.bf16.msra.mxu0 0
        %3267 = vmatprep.subr.bf16.mxu0 0
        %3268 = vmatpush1.bf16.msra.mxu0 0
        %3269 = vmatprep.subr.bf16.mxu0 0
        %3270 = vmatpush1.bf16.msra.mxu0 0
        %3271 = vmatprep.subr.bf16.mxu0 0
        %3272 = vmatpush1.bf16.msra.mxu0 0
        %3273 = vmatprep.subr.bf16.mxu0 0
        %3274 = vmatpush1.bf16.msra.mxu0 0
        %3275 = vmatprep.subr.bf16.mxu0 0
        %3276 = vmatpush1.bf16.msra.mxu0 0
        %3277 = vmatprep.subr.bf16.mxu0 0
        %3278 = vmatpush1.bf16.msra.mxu0 0
        %3279 = vmatprep.subr.bf16.mxu0 0
        %3280 = vmatpush1.bf16.msra.mxu0 0
        %3281 = vmatprep.subr.bf16.mxu0 0
        %3282 = vmatpush1.bf16.msra.mxu0 0
        %3283 = vmatprep.subr.bf16.mxu0 0
        %3284 = vmatpush1.bf16.msra.mxu0 0
        %3285 = vmatprep.subr.bf16.mxu0 0
        %3286 = vmatpush1.bf16.msra.mxu0 0
        %3287 = vmatprep.subr.bf16.mxu0 0
        %3288 = vmatpush1.bf16.msra.mxu0 0
        %3289 = vmatprep.subr.bf16.mxu0 0
        %3290 = vmatpush1.bf16.msra.mxu0 0
        %3291 = vmatprep.mubr.bf16.mxu0 0
        %3292 = vmatmul.mubr.bf16.gmra.mrb[0].mxu0 %v3254
        %v3293 = vpop.f32.mrb[0].mxu0
        %v3294 = vadd.f32 0.0, %v3293
        %v3295 = vpop.f32.mrb[0].mxu0
        %v3296 = vpop.f32.mrb[0].mxu0
        %v3297 = vadd.f32 0.0, %v3296
        %v3298 = vpop.f32.mrb[0].mxu0
        %3299 = vmatprep.mubr.bf16.mxu0 0
        %3300 = vmatmul.mubr.bf16.gmra.mrb[0].mxu0 %v3257
        %v3301 = vpop.f32.mrb[0].mxu0
        %v3302 = vadd.f32 0.0, %v3301
        %v3303 = vpop.f32.mrb[0].mxu0
        %v3304 = vpop.f32.mrb[0].mxu0
        %v3305 = vadd.f32 0.0, %v3304
        %v3306 = vpop.f32.mrb[0].mxu0
        %3307 = vdwg.mxu0
        %3308 = vrot.lane.b32.xlu0 %v1338, 64
        %v3309 = vpop.permute.xlu0 %3308
        %3310 = vrot.lane.b32.xlu0 %v1341, 64
        %v3311 = vpop.permute.xlu0 %3310
        %3312 = vrot.lane.b32.xlu0 %v1339, 64
        %v3313 = vpop.permute.xlu0 %3312
        %3314 = vrot.lane.b32.xlu0 %v1342, 64
        %v3315 = vpop.permute.xlu0 %3314
        %v3317 = vsel %vm1350, %v3309, 0
        %v3320 = vsel %vm1350, %v3311, 0
        %v3323 = vsel %vm1350, %v3313, 0
        %v3326 = vsel %vm1350, %v3315, 0
        %3328 = vmatprep.subr.bf16.mxu0 0
        %3329 = vmatpush1.bf16.xpose.msra.mxu0 %v3323
        %3330 = vmatprep.subr.bf16.mxu0 0
        %3331 = vmatpush1.bf16.xpose.msra.mxu0 %v3326
        %3332 = vmatprep.subr.bf16.mxu0 0
        %3333 = vmatpush1.bf16.xpose.msra.mxu0 0
        %3334 = vmatprep.subr.bf16.mxu0 0
        %3335 = vmatpush1.bf16.xpose.msra.mxu0 0
        %3336 = vmatprep.subr.bf16.mxu0 0
        %3337 = vmatpush1.bf16.xpose.msra.mxu0 0
        %3338 = vmatprep.subr.bf16.mxu0 0
        %3339 = vmatpush1.bf16.xpose.msra.mxu0 0
        %3340 = vmatprep.subr.bf16.mxu0 0
        %3341 = vmatpush1.bf16.xpose.msra.mxu0 0
        %3342 = vmatprep.subr.bf16.mxu0 0
        %3343 = vmatpush1.bf16.xpose.msra.mxu0 0
        %3344 = vmatprep.subr.bf16.mxu0 0
        %3345 = vmatpush1.bf16.xpose.msra.mxu0 0
        %3346 = vmatprep.subr.bf16.mxu0 0
        %3347 = vmatpush1.bf16.xpose.msra.mxu0 0
        %3348 = vmatprep.subr.bf16.mxu0 0
        %3349 = vmatpush1.bf16.xpose.msra.mxu0 0
        %3350 = vmatprep.subr.bf16.mxu0 0
        %3351 = vmatpush1.bf16.xpose.msra.mxu0 0
        %3352 = vmatprep.subr.bf16.mxu0 0
        %3353 = vmatpush1.bf16.xpose.msra.mxu0 0
        %3354 = vmatprep.subr.bf16.mxu0 0
        %3355 = vmatpush1.bf16.xpose.msra.mxu0 0
        %3356 = vmatprep.subr.bf16.mxu0 0
        %3357 = vmatpush1.bf16.xpose.msra.mxu0 0
        %3358 = vmatprep.subr.bf16.mxu0 0
        %3359 = vmatpush1.bf16.xpose.msra.mxu0 0
        %3360 = vmatprep.mubr.bf16.mxu0 0
        %3361 = vmatmul.mubr.bf16.gmra.mrb[0].mxu0 %v3317
        %v3362 = vpop.f32.mrb[0].mxu0
        %v3363 = vadd.f32 0.0, %v3362
        %v3364 = vpop.f32.mrb[0].mxu0
        %v3365 = vpop.f32.mrb[0].mxu0
        %v3366 = vadd.f32 0.0, %v3365
        %v3367 = vpop.f32.mrb[0].mxu0
        %3368 = vmatprep.mubr.bf16.mxu0 0
        %3369 = vmatmul.mubr.bf16.gmra.mrb[0].mxu0 %v3320
        %v3370 = vpop.f32.mrb[0].mxu0
        %v3371 = vadd.f32 0.0, %v3370
        %v3372 = vpop.f32.mrb[0].mxu0
        %v3373 = vpop.f32.mrb[0].mxu0
        %v3374 = vadd.f32 0.0, %v3373
        %v3375 = vpop.f32.mrb[0].mxu0
        %3376 = vdwg.mxu0
        %v3377 = vmul.f32 %v3363, 0.17677669
        %v3378 = vmul.f32 %v3366, 0.17677669
        %v3379 = vmul.f32 %v3371, 0.17677669
        %v3380 = vmul.f32 %v3374, 0.17677669
        %v3381 = vadd.f32 %v3377, %v1794
        %v3382 = vadd.f32 %v3378, %v1795
        %v3383 = vadd.f32 %v3379, %v1796
        %v3384 = vadd.f32 %v3380, %v1797
        %v3385 = vsel %vm1350, %v3381, -inf
        %3386 = vmax.xlane.f32.xlu0 %v3385
        %v3387 = vpop.xlane.xlu0 %3386
        %v3388 = vsel %vm1350, %v3382, -inf
        %3389 = vmax.xlane.f32.xlu0 %v3388
        %v3390 = vpop.xlane.xlu0 %3389
        %v3391 = vsel %vm1350, %v3383, -inf
        %3392 = vmax.xlane.f32.xlu0 %v3391
        %v3393 = vpop.xlane.xlu0 %3392
        %v3394 = vsel %vm1350, %v3384, -inf
        %3395 = vmax.xlane.f32.xlu0 %v3394
        %v3396 = vpop.xlane.xlu0 %3395
        %v3397 = vsub.f32 %v3381, %v3387
        %v3398 = vsub.f32 %v3382, %v3390
        %v3399 = vsub.f32 %v3383, %v3393
        %v3400 = vsub.f32 %v3384, %v3396
        %v3401 = vmul.f32 %v3397, 1.442695
        %v3402 = vpow.pop %v3401
        %v3403 = vmul.f32 %v3398, 1.442695
        %v3404 = vpow.pop %v3403
        %v3405 = vmul.f32 %v3399, 1.442695
        %v3406 = vpow.pop %v3405
        %v3407 = vmul.f32 %v3400, 1.442695
        %v3408 = vpow.pop %v3407
        %v3409 = vsel %vm1350, %v3402, 0.0
        %3410 = vadd.xlane.f32.xlu0 %v3409
        %v3411 = vpop.xlane.xlu0 %3410
        %v3412 = vsel %vm1350, %v3404, 0.0
        %3413 = vadd.xlane.f32.xlu0 %v3412
        %v3414 = vpop.xlane.xlu0 %3413
        %v3415 = vsel %vm1350, %v3406, 0.0
        %3416 = vadd.xlane.f32.xlu0 %v3415
        %v3417 = vpop.xlane.xlu0 %3416
        %v3418 = vsel %vm1350, %v3408, 0.0
        %3419 = vadd.xlane.f32.xlu0 %v3418
        %v3420 = vpop.xlane.xlu0 %3419
        %v3421 = vrcp.pop %v3411
        %v3422 = vrcp.pop %v3414
        %v3423 = vrcp.pop %v3417
        %v3424 = vrcp.pop %v3420
        %v3425 = vmul.f32 %v3402, %v3421
        %v3426 = vmul.f32 %v3404, %v3422
        %v3427 = vmul.f32 %v3406, %v3423
        %v3428 = vmul.f32 %v3408, %v3424
        %v3429 = vpack.c.bf16 %v3426, %v3425
        %v3430 = vpack.c.bf16 %v3428, %v3427
        %3431 = vrot.lane.b32.xlu0 %v1340, 64
        %v3432 = vpop.permute.xlu0 %3431
        %3433 = vrot.lane.b32.xlu0 %v1343, 64
        %v3434 = vpop.permute.xlu0 %3433
        %v3438 = vsel %vm1350, %v3429, 0
        %v3441 = vsel %vm1350, %v3430, 0
        %3443 = vmatprep.subr.bf16.mxu0 0
        %3444 = vmatpush1.bf16.msra.mxu0 %v3432
        %3445 = vmatprep.subr.bf16.mxu0 0
        %3446 = vmatpush1.bf16.msra.mxu0 %v3434
        %3447 = vmatprep.subr.bf16.mxu0 0
        %3448 = vmatpush1.bf16.msra.mxu0 0
        %3449 = vmatprep.subr.bf16.mxu0 0
        %3450 = vmatpush1.bf16.msra.mxu0 0
        %3451 = vmatprep.subr.bf16.mxu0 0
        %3452 = vmatpush1.bf16.msra.mxu0 0
        %3453 = vmatprep.subr.bf16.mxu0 0
        %3454 = vmatpush1.bf16.msra.mxu0 0
        %3455 = vmatprep.subr.bf16.mxu0 0
        %3456 = vmatpush1.bf16.msra.mxu0 0
        %3457 = vmatprep.subr.bf16.mxu0 0
        %3458 = vmatpush1.bf16.msra.mxu0 0
        %3459 = vmatprep.subr.bf16.mxu0 0
        %3460 = vmatpush1.bf16.msra.mxu0 0
        %3461 = vmatprep.subr.bf16.mxu0 0
        %3462 = vmatpush1.bf16.msra.mxu0 0
        %3463 = vmatprep.subr.bf16.mxu0 0
        %3464 = vmatpush1.bf16.msra.mxu0 0
        %3465 = vmatprep.subr.bf16.mxu0 0
        %3466 = vmatpush1.bf16.msra.mxu0 0
        %3467 = vmatprep.subr.bf16.mxu0 0
        %3468 = vmatpush1.bf16.msra.mxu0 0
        %3469 = vmatprep.subr.bf16.mxu0 0
        %3470 = vmatpush1.bf16.msra.mxu0 0
        %3471 = vmatprep.subr.bf16.mxu0 0
        %3472 = vmatpush1.bf16.msra.mxu0 0
        %3473 = vmatprep.subr.bf16.mxu0 0
        %3474 = vmatpush1.bf16.msra.mxu0 0
        %3475 = vmatprep.mubr.bf16.mxu0 0
        %3476 = vmatmul.mubr.bf16.gmra.mrb[0].mxu0 %v3438
        %v3477 = vpop.f32.mrb[0].mxu0
        %v3478 = vadd.f32 0.0, %v3477
        %v3479 = vpop.f32.mrb[0].mxu0
        %v3480 = vpop.f32.mrb[0].mxu0
        %v3481 = vadd.f32 0.0, %v3480
        %v3482 = vpop.f32.mrb[0].mxu0
        %3483 = vmatprep.mubr.bf16.mxu0 0
        %3484 = vmatmul.mubr.bf16.gmra.mrb[0].mxu0 %v3441
        %v3485 = vpop.f32.mrb[0].mxu0
        %v3486 = vadd.f32 0.0, %v3485
        %v3487 = vpop.f32.mrb[0].mxu0
        %v3488 = vpop.f32.mrb[0].mxu0
        %v3489 = vadd.f32 0.0, %v3488
        %v3490 = vpop.f32.mrb[0].mxu0
        %3491 = vdwg.mxu0
        %3492 = vrot.lane.b32.xlu0 %v1338, 32
        %v3493 = vpop.permute.xlu0 %3492
        %3494 = vrot.lane.b32.xlu0 %v1341, 32
        %v3495 = vpop.permute.xlu0 %3494
        %3496 = vrot.lane.b32.xlu0 %v1339, 32
        %v3497 = vpop.permute.xlu0 %3496
        %3498 = vrot.lane.b32.xlu0 %v1342, 32
        %v3499 = vpop.permute.xlu0 %3498
        %v3501 = vsel %vm1350, %v3493, 0
        %v3504 = vsel %vm1350, %v3495, 0
        %v3507 = vsel %vm1350, %v3497, 0
        %v3510 = vsel %vm1350, %v3499, 0
        %3512 = vmatprep.subr.bf16.mxu0 0
        %3513 = vmatpush1.bf16.xpose.msra.mxu0 %v3507
        %3514 = vmatprep.subr.bf16.mxu0 0
        %3515 = vmatpush1.bf16.xpose.msra.mxu0 %v3510
        %3516 = vmatprep.subr.bf16.mxu0 0
        %3517 = vmatpush1.bf16.xpose.msra.mxu0 0
        %3518 = vmatprep.subr.bf16.mxu0 0
        %3519 = vmatpush1.bf16.xpose.msra.mxu0 0
        %3520 = vmatprep.subr.bf16.mxu0 0
        %3521 = vmatpush1.bf16.xpose.msra.mxu0 0
        %3522 = vmatprep.subr.bf16.mxu0 0
        %3523 = vmatpush1.bf16.xpose.msra.mxu0 0
        %3524 = vmatprep.subr.bf16.mxu0 0
        %3525 = vmatpush1.bf16.xpose.msra.mxu0 0
        %3526 = vmatprep.subr.bf16.mxu0 0
        %3527 = vmatpush1.bf16.xpose.msra.mxu0 0
        %3528 = vmatprep.subr.bf16.mxu0 0
        %3529 = vmatpush1.bf16.xpose.msra.mxu0 0
        %3530 = vmatprep.subr.bf16.mxu0 0
        %3531 = vmatpush1.bf16.xpose.msra.mxu0 0
        %3532 = vmatprep.subr.bf16.mxu0 0
        %3533 = vmatpush1.bf16.xpose.msra.mxu0 0
        %3534 = vmatprep.subr.bf16.mxu0 0
        %3535 = vmatpush1.bf16.xpose.msra.mxu0 0
        %3536 = vmatprep.subr.bf16.mxu0 0
        %3537 = vmatpush1.bf16.xpose.msra.mxu0 0
        %3538 = vmatprep.subr.bf16.mxu0 0
        %3539 = vmatpush1.bf16.xpose.msra.mxu0 0
        %3540 = vmatprep.subr.bf16.mxu0 0
        %3541 = vmatpush1.bf16.xpose.msra.mxu0 0
        %3542 = vmatprep.subr.bf16.mxu0 0
        %3543 = vmatpush1.bf16.xpose.msra.mxu0 0
        %3544 = vmatprep.mubr.bf16.mxu0 0
        %3545 = vmatmul.mubr.bf16.gmra.mrb[0].mxu0 %v3501
        %v3546 = vpop.f32.mrb[0].mxu0
        %v3547 = vadd.f32 0.0, %v3546
        %v3548 = vpop.f32.mrb[0].mxu0
        %v3549 = vpop.f32.mrb[0].mxu0
        %v3550 = vadd.f32 0.0, %v3549
        %v3551 = vpop.f32.mrb[0].mxu0
        %3552 = vmatprep.mubr.bf16.mxu0 0
        %3553 = vmatmul.mubr.bf16.gmra.mrb[0].mxu0 %v3504
        %v3554 = vpop.f32.mrb[0].mxu0
        %v3555 = vadd.f32 0.0, %v3554
        %v3556 = vpop.f32.mrb[0].mxu0
        %v3557 = vpop.f32.mrb[0].mxu0
        %v3558 = vadd.f32 0.0, %v3557
        %v3559 = vpop.f32.mrb[0].mxu0
        %3560 = vdwg.mxu0
        %v3561 = vmul.f32 %v3547, 0.17677669
        %v3562 = vmul.f32 %v3550, 0.17677669
        %v3563 = vmul.f32 %v3555, 0.17677669
        %v3564 = vmul.f32 %v3558, 0.17677669
        %v3565 = vadd.f32 %v3561, %v1983
        %v3566 = vadd.f32 %v3562, %v1984
        %v3567 = vadd.f32 %v3563, %v1985
        %v3568 = vadd.f32 %v3564, %v1986
        %v3569 = vsel %vm1350, %v3565, -inf
        %3570 = vmax.xlane.f32.xlu0 %v3569
        %v3571 = vpop.xlane.xlu0 %3570
        %v3572 = vsel %vm1350, %v3566, -inf
        %3573 = vmax.xlane.f32.xlu0 %v3572
        %v3574 = vpop.xlane.xlu0 %3573
        %v3575 = vsel %vm1350, %v3567, -inf
        %3576 = vmax.xlane.f32.xlu0 %v3575
        %v3577 = vpop.xlane.xlu0 %3576
        %v3578 = vsel %vm1350, %v3568, -inf
        %3579 = vmax.xlane.f32.xlu0 %v3578
        %v3580 = vpop.xlane.xlu0 %3579
        %v3581 = vsub.f32 %v3565, %v3571
        %v3582 = vsub.f32 %v3566, %v3574
        %v3583 = vsub.f32 %v3567, %v3577
        %v3584 = vsub.f32 %v3568, %v3580
        %v3585 = vmul.f32 %v3581, 1.442695
        %v3586 = vpow.pop %v3585
        %v3587 = vmul.f32 %v3582, 1.442695
        %v3588 = vpow.pop %v3587
        %v3589 = vmul.f32 %v3583, 1.442695
        %v3590 = vpow.pop %v3589
        %v3591 = vmul.f32 %v3584, 1.442695
        %v3592 = vpow.pop %v3591
        %v3593 = vsel %vm1350, %v3586, 0.0
        %3594 = vadd.xlane.f32.xlu0 %v3593
        %v3595 = vpop.xlane.xlu0 %3594
        %v3596 = vsel %vm1350, %v3588, 0.0
        %3597 = vadd.xlane.f32.xlu0 %v3596
        %v3598 = vpop.xlane.xlu0 %3597
        %v3599 = vsel %vm1350, %v3590, 0.0
        %3600 = vadd.xlane.f32.xlu0 %v3599
        %v3601 = vpop.xlane.xlu0 %3600
        %v3602 = vsel %vm1350, %v3592, 0.0
        %3603 = vadd.xlane.f32.xlu0 %v3602
        %v3604 = vpop.xlane.xlu0 %3603
        %v3605 = vrcp.pop %v3595
        %v3606 = vrcp.pop %v3598
        %v3607 = vrcp.pop %v3601
        %v3608 = vrcp.pop %v3604
        %v3609 = vmul.f32 %v3586, %v3605
        %v3610 = vmul.f32 %v3588, %v3606
        %v3611 = vmul.f32 %v3590, %v3607
        %v3612 = vmul.f32 %v3592, %v3608
        %v3613 = vpack.c.bf16 %v3610, %v3609
        %v3614 = vpack.c.bf16 %v3612, %v3611
        %3615 = vrot.lane.b32.xlu0 %v1340, 32
        %v3616 = vpop.permute.xlu0 %3615
        %3617 = vrot.lane.b32.xlu0 %v1343, 32
        %v3618 = vpop.permute.xlu0 %3617
        %v3622 = vsel %vm1350, %v3613, 0
        %v3625 = vsel %vm1350, %v3614, 0
        %3627 = vmatprep.subr.bf16.mxu0 0
        %3628 = vmatpush1.bf16.msra.mxu0 %v3616
        %3629 = vmatprep.subr.bf16.mxu0 0
        %3630 = vmatpush1.bf16.msra.mxu0 %v3618
        %3631 = vmatprep.subr.bf16.mxu0 0
        %3632 = vmatpush1.bf16.msra.mxu0 0
        %3633 = vmatprep.subr.bf16.mxu0 0
        %3634 = vmatpush1.bf16.msra.mxu0 0
        %3635 = vmatprep.subr.bf16.mxu0 0
        %3636 = vmatpush1.bf16.msra.mxu0 0
        %3637 = vmatprep.subr.bf16.mxu0 0
        %3638 = vmatpush1.bf16.msra.mxu0 0
        %3639 = vmatprep.subr.bf16.mxu0 0
        %3640 = vmatpush1.bf16.msra.mxu0 0
        %3641 = vmatprep.subr.bf16.mxu0 0
        %3642 = vmatpush1.bf16.msra.mxu0 0
        %3643 = vmatprep.subr.bf16.mxu0 0
        %3644 = vmatpush1.bf16.msra.mxu0 0
        %3645 = vmatprep.subr.bf16.mxu0 0
        %3646 = vmatpush1.bf16.msra.mxu0 0
        %3647 = vmatprep.subr.bf16.mxu0 0
        %3648 = vmatpush1.bf16.msra.mxu0 0
        %3649 = vmatprep.subr.bf16.mxu0 0
        %3650 = vmatpush1.bf16.msra.mxu0 0
        %3651 = vmatprep.subr.bf16.mxu0 0
        %3652 = vmatpush1.bf16.msra.mxu0 0
        %3653 = vmatprep.subr.bf16.mxu0 0
        %3654 = vmatpush1.bf16.msra.mxu0 0
        %3655 = vmatprep.subr.bf16.mxu0 0
        %3656 = vmatpush1.bf16.msra.mxu0 0
        %3657 = vmatprep.subr.bf16.mxu0 0
        %3658 = vmatpush1.bf16.msra.mxu0 0
        %3659 = vmatprep.mubr.bf16.mxu0 0
        %3660 = vmatmul.mubr.bf16.gmra.mrb[0].mxu0 %v3622
        %v3661 = vpop.f32.mrb[0].mxu0
        %v3662 = vadd.f32 0.0, %v3661
        %v3663 = vpop.f32.mrb[0].mxu0
        %v3664 = vpop.f32.mrb[0].mxu0
        %v3665 = vadd.f32 0.0, %v3664
        %v3666 = vpop.f32.mrb[0].mxu0
        %3667 = vmatprep.mubr.bf16.mxu0 0
        %3668 = vmatmul.mubr.bf16.gmra.mrb[0].mxu0 %v3625
        %v3669 = vpop.f32.mrb[0].mxu0
        %v3670 = vadd.f32 0.0, %v3669
        %v3671 = vpop.f32.mrb[0].mxu0
        %v3672 = vpop.f32.mrb[0].mxu0
        %v3673 = vadd.f32 0.0, %v3672
        %v3674 = vpop.f32.mrb[0].mxu0
        %3675 = vdwg.mxu0
        %3680 = vrot.lane.b32.xlu0 %v3294, 32
        %v3681 = vpop.permute.xlu0 %3680
        %3682 = vrot.lane.b32.xlu0 %v3297, 32
        %v3683 = vpop.permute.xlu0 %3682
        %3684 = vrot.lane.b32.xlu0 %v3302, 32
        %v3685 = vpop.permute.xlu0 %3684
        %3686 = vrot.lane.b32.xlu0 %v3305, 32
        %v3687 = vpop.permute.xlu0 %3686
        %3696 = vrot.lane.b32.xlu0 %v3478, 64
        %v3697 = vpop.permute.xlu0 %3696
        %3698 = vrot.lane.b32.xlu0 %v3481, 64
        %v3699 = vpop.permute.xlu0 %3698
        %3700 = vrot.lane.b32.xlu0 %v3486, 64
        %v3701 = vpop.permute.xlu0 %3700
        %3702 = vrot.lane.b32.xlu0 %v3489, 64
        %v3703 = vpop.permute.xlu0 %3702
        %3712 = vrot.lane.b32.xlu0 %v3662, 96
        %v3713 = vpop.permute.xlu0 %3712
        %3714 = vrot.lane.b32.xlu0 %v3665, 96
        %v3715 = vpop.permute.xlu0 %3714
        %3716 = vrot.lane.b32.xlu0 %v3670, 96
        %v3717 = vpop.permute.xlu0 %3716
        %3718 = vrot.lane.b32.xlu0 %v3673, 96
        %v3719 = vpop.permute.xlu0 %3718
        %v3724 = vsel %vm1350, %v3104, %v3681
        %v3725 = vsel %vm1350, %v3107, %v3683
        %v3726 = vsel %vm1350, %v3112, %v3685
        %v3727 = vsel %vm1350, %v3115, %v3687
        %v3728 = vsel %vm2150, %v3724, %v3697
        %v3729 = vsel %vm2150, %v3725, %v3699
        %v3730 = vsel %vm2150, %v3726, %v3701
        %v3731 = vsel %vm2150, %v3727, %v3703
        %v3732 = vsel %vm2155, %v3728, %v3713
        %v3733 = vsel %vm2155, %v3729, %v3715
        %v3734 = vsel %vm2155, %v3730, %v3717
        %v3735 = vsel %vm2155, %v3731, %v3719
        %v3737 = vsel %vm1350, %v1344, 0
        %v3740 = vsel %vm1350, %v1347, 0
        %v3743 = vsel %vm1350, %v1345, 0
        %v3746 = vsel %vm1350, %v1348, 0
        %3748 = vmatprep.subr.bf16.mxu0 0
        %3749 = vmatpush1.bf16.xpose.msra.mxu0 %v3743
        %3750 = vmatprep.subr.bf16.mxu0 0
        %3751 = vmatpush1.bf16.xpose.msra.mxu0 %v3746
        %3752 = vmatprep.subr.bf16.mxu0 0
        %3753 = vmatpush1.bf16.xpose.msra.mxu0 0
        %3754 = vmatprep.subr.bf16.mxu0 0
        %3755 = vmatpush1.bf16.xpose.msra.mxu0 0
        %3756 = vmatprep.subr.bf16.mxu0 0
        %3757 = vmatpush1.bf16.xpose.msra.mxu0 0
        %3758 = vmatprep.subr.bf16.mxu0 0
        %3759 = vmatpush1.bf16.xpose.msra.mxu0 0
        %3760 = vmatprep.subr.bf16.mxu0 0
        %3761 = vmatpush1.bf16.xpose.msra.mxu0 0
        %3762 = vmatprep.subr.bf16.mxu0 0
        %3763 = vmatpush1.bf16.xpose.msra.mxu0 0
        %3764 = vmatprep.subr.bf16.mxu0 0
        %3765 = vmatpush1.bf16.xpose.msra.mxu0 0
        %3766 = vmatprep.subr.bf16.mxu0 0
        %3767 = vmatpush1.bf16.xpose.msra.mxu0 0
        %3768 = vmatprep.subr.bf16.mxu0 0
        %3769 = vmatpush1.bf16.xpose.msra.mxu0 0
        %3770 = vmatprep.subr.bf16.mxu0 0
        %3771 = vmatpush1.bf16.xpose.msra.mxu0 0
        %3772 = vmatprep.subr.bf16.mxu0 0
        %3773 = vmatpush1.bf16.xpose.msra.mxu0 0
        %3774 = vmatprep.subr.bf16.mxu0 0
        %3775 = vmatpush1.bf16.xpose.msra.mxu0 0
        %3776 = vmatprep.subr.bf16.mxu0 0
        %3777 = vmatpush1.bf16.xpose.msra.mxu0 0
        %3778 = vmatprep.subr.bf16.mxu0 0
        %3779 = vmatpush1.bf16.xpose.msra.mxu0 0
        %3780 = vmatprep.mubr.bf16.mxu0 0
        %3781 = vmatmul.mubr.bf16.gmra.mrb[0].mxu0 %v3737
        %v3782 = vpop.f32.mrb[0].mxu0
        %v3783 = vadd.f32 0.0, %v3782
        %v3784 = vpop.f32.mrb[0].mxu0
        %v3785 = vpop.f32.mrb[0].mxu0
        %v3786 = vadd.f32 0.0, %v3785
        %v3787 = vpop.f32.mrb[0].mxu0
        %3788 = vmatprep.mubr.bf16.mxu0 0
        %3789 = vmatmul.mubr.bf16.gmra.mrb[0].mxu0 %v3740
        %v3790 = vpop.f32.mrb[0].mxu0
        %v3791 = vadd.f32 0.0, %v3790
        %v3792 = vpop.f32.mrb[0].mxu0
        %v3793 = vpop.f32.mrb[0].mxu0
        %v3794 = vadd.f32 0.0, %v3793
        %v3795 = vpop.f32.mrb[0].mxu0
        %3796 = vdwg.mxu0
        %v3797 = vmul.f32 %v3783, 0.17677669
        %v3798 = vmul.f32 %v3786, 0.17677669
        %v3799 = vmul.f32 %v3791, 0.17677669
        %v3800 = vmul.f32 %v3794, 0.17677669
        %v3801 = vadd.f32 %v3797, %v1416
        %v3802 = vadd.f32 %v3798, %v1417
        %v3803 = vadd.f32 %v3799, %v1418
        %v3804 = vadd.f32 %v3800, %v1419
        %v3805 = vsel %vm1350, %v3801, -inf
        %3806 = vmax.xlane.f32.xlu0 %v3805
        %v3807 = vpop.xlane.xlu0 %3806
        %v3808 = vsel %vm1350, %v3802, -inf
        %3809 = vmax.xlane.f32.xlu0 %v3808
        %v3810 = vpop.xlane.xlu0 %3809
        %v3811 = vsel %vm1350, %v3803, -inf
        %3812 = vmax.xlane.f32.xlu0 %v3811
        %v3813 = vpop.xlane.xlu0 %3812
        %v3814 = vsel %vm1350, %v3804, -inf
        %3815 = vmax.xlane.f32.xlu0 %v3814
        %v3816 = vpop.xlane.xlu0 %3815
        %v3817 = vsub.f32 %v3801, %v3807
        %v3818 = vsub.f32 %v3802, %v3810
        %v3819 = vsub.f32 %v3803, %v3813
        %v3820 = vsub.f32 %v3804, %v3816
        %v3821 = vmul.f32 %v3817, 1.442695
        %v3822 = vpow.pop %v3821
        %v3823 = vmul.f32 %v3818, 1.442695
        %v3824 = vpow.pop %v3823
        %v3825 = vmul.f32 %v3819, 1.442695
        %v3826 = vpow.pop %v3825
        %v3827 = vmul.f32 %v3820, 1.442695
        %v3828 = vpow.pop %v3827
        %v3829 = vsel %vm1350, %v3822, 0.0
        %3830 = vadd.xlane.f32.xlu0 %v3829
        %v3831 = vpop.xlane.xlu0 %3830
        %v3832 = vsel %vm1350, %v3824, 0.0
        %3833 = vadd.xlane.f32.xlu0 %v3832
        %v3834 = vpop.xlane.xlu0 %3833
        %v3835 = vsel %vm1350, %v3826, 0.0
        %3836 = vadd.xlane.f32.xlu0 %v3835
        %v3837 = vpop.xlane.xlu0 %3836
        %v3838 = vsel %vm1350, %v3828, 0.0
        %3839 = vadd.xlane.f32.xlu0 %v3838
        %v3840 = vpop.xlane.xlu0 %3839
        %v3841 = vrcp.pop %v3831
        %v3842 = vrcp.pop %v3834
        %v3843 = vrcp.pop %v3837
        %v3844 = vrcp.pop %v3840
        %v3845 = vmul.f32 %v3822, %v3841
        %v3846 = vmul.f32 %v3824, %v3842
        %v3847 = vmul.f32 %v3826, %v3843
        %v3848 = vmul.f32 %v3828, %v3844
        %v3849 = vpack.c.bf16 %v3846, %v3845
        %v3850 = vpack.c.bf16 %v3848, %v3847
        %v3852 = vsel %vm1350, %v3849, 0
        %v3855 = vsel %vm1350, %v3850, 0
        %3857 = vmatprep.subr.bf16.mxu0 0
        %3858 = vmatpush1.bf16.msra.mxu0 %v1346
        %3859 = vmatprep.subr.bf16.mxu0 0
        %3860 = vmatpush1.bf16.msra.mxu0 %v1349
        %3861 = vmatprep.subr.bf16.mxu0 0
        %3862 = vmatpush1.bf16.msra.mxu0 0
        %3863 = vmatprep.subr.bf16.mxu0 0
        %3864 = vmatpush1.bf16.msra.mxu0 0
        %3865 = vmatprep.subr.bf16.mxu0 0
        %3866 = vmatpush1.bf16.msra.mxu0 0
        %3867 = vmatprep.subr.bf16.mxu0 0
        %3868 = vmatpush1.bf16.msra.mxu0 0
        %3869 = vmatprep.subr.bf16.mxu0 0
        %3870 = vmatpush1.bf16.msra.mxu0 0
        %3871 = vmatprep.subr.bf16.mxu0 0
        %3872 = vmatpush1.bf16.msra.mxu0 0
        %3873 = vmatprep.subr.bf16.mxu0 0
        %3874 = vmatpush1.bf16.msra.mxu0 0
        %3875 = vmatprep.subr.bf16.mxu0 0
        %3876 = vmatpush1.bf16.msra.mxu0 0
        %3877 = vmatprep.subr.bf16.mxu0 0
        %3878 = vmatpush1.bf16.msra.mxu0 0
        %3879 = vmatprep.subr.bf16.mxu0 0
        %3880 = vmatpush1.bf16.msra.mxu0 0
        %3881 = vmatprep.subr.bf16.mxu0 0
        %3882 = vmatpush1.bf16.msra.mxu0 0
        %3883 = vmatprep.subr.bf16.mxu0 0
        %3884 = vmatpush1.bf16.msra.mxu0 0
        %3885 = vmatprep.subr.bf16.mxu0 0
        %3886 = vmatpush1.bf16.msra.mxu0 0
        %3887 = vmatprep.subr.bf16.mxu0 0
        %3888 = vmatpush1.bf16.msra.mxu0 0
        %3889 = vmatprep.mubr.bf16.mxu0 0
        %3890 = vmatmul.mubr.bf16.gmra.mrb[0].mxu0 %v3852
        %v3891 = vpop.f32.mrb[0].mxu0
        %v3892 = vadd.f32 0.0, %v3891
        %v3893 = vpop.f32.mrb[0].mxu0
        %v3894 = vpop.f32.mrb[0].mxu0
        %v3895 = vadd.f32 0.0, %v3894
        %v3896 = vpop.f32.mrb[0].mxu0
        %3897 = vmatprep.mubr.bf16.mxu0 0
        %3898 = vmatmul.mubr.bf16.gmra.mrb[0].mxu0 %v3855
        %v3899 = vpop.f32.mrb[0].mxu0
        %v3900 = vadd.f32 0.0, %v3899
        %v3901 = vpop.f32.mrb[0].mxu0
        %v3902 = vpop.f32.mrb[0].mxu0
        %v3903 = vadd.f32 0.0, %v3902
        %v3904 = vpop.f32.mrb[0].mxu0
        %3905 = vdwg.mxu0
        %3908 = vrot.lane.b32.xlu0 %v1344, 96
        %v3909 = vpop.permute.xlu0 %3908
        %3910 = vrot.lane.b32.xlu0 %v1347, 96
        %v3911 = vpop.permute.xlu0 %3910
        %3914 = vrot.lane.b32.xlu0 %v1345, 96
        %v3915 = vpop.permute.xlu0 %3914
        %3916 = vrot.lane.b32.xlu0 %v1348, 96
        %v3917 = vpop.permute.xlu0 %3916
        %v3919 = vsel %vm1350, %v3909, 0
        %v3922 = vsel %vm1350, %v3911, 0
        %v3925 = vsel %vm1350, %v3915, 0
        %v3928 = vsel %vm1350, %v3917, 0
        %3930 = vmatprep.subr.bf16.mxu0 0
        %3931 = vmatpush1.bf16.xpose.msra.mxu0 %v3925
        %3932 = vmatprep.subr.bf16.mxu0 0
        %3933 = vmatpush1.bf16.xpose.msra.mxu0 %v3928
        %3934 = vmatprep.subr.bf16.mxu0 0
        %3935 = vmatpush1.bf16.xpose.msra.mxu0 0
        %3936 = vmatprep.subr.bf16.mxu0 0
        %3937 = vmatpush1.bf16.xpose.msra.mxu0 0
        %3938 = vmatprep.subr.bf16.mxu0 0
        %3939 = vmatpush1.bf16.xpose.msra.mxu0 0
        %3940 = vmatprep.subr.bf16.mxu0 0
        %3941 = vmatpush1.bf16.xpose.msra.mxu0 0
        %3942 = vmatprep.subr.bf16.mxu0 0
        %3943 = vmatpush1.bf16.xpose.msra.mxu0 0
        %3944 = vmatprep.subr.bf16.mxu0 0
        %3945 = vmatpush1.bf16.xpose.msra.mxu0 0
        %3946 = vmatprep.subr.bf16.mxu0 0
        %3947 = vmatpush1.bf16.xpose.msra.mxu0 0
        %3948 = vmatprep.subr.bf16.mxu0 0
        %3949 = vmatpush1.bf16.xpose.msra.mxu0 0
        %3950 = vmatprep.subr.bf16.mxu0 0
        %3951 = vmatpush1.bf16.xpose.msra.mxu0 0
        %3952 = vmatprep.subr.bf16.mxu0 0
        %3953 = vmatpush1.bf16.xpose.msra.mxu0 0
        %3954 = vmatprep.subr.bf16.mxu0 0
        %3955 = vmatpush1.bf16.xpose.msra.mxu0 0
        %3956 = vmatprep.subr.bf16.mxu0 0
        %3957 = vmatpush1.bf16.xpose.msra.mxu0 0
        %3958 = vmatprep.subr.bf16.mxu0 0
        %3959 = vmatpush1.bf16.xpose.msra.mxu0 0
        %3960 = vmatprep.subr.bf16.mxu0 0
        %3961 = vmatpush1.bf16.xpose.msra.mxu0 0
        %3962 = vmatprep.mubr.bf16.mxu0 0
        %3963 = vmatmul.mubr.bf16.gmra.mrb[0].mxu0 %v3919
        %v3964 = vpop.f32.mrb[0].mxu0
        %v3965 = vadd.f32 0.0, %v3964
        %v3966 = vpop.f32.mrb[0].mxu0
        %v3967 = vpop.f32.mrb[0].mxu0
        %v3968 = vadd.f32 0.0, %v3967
        %v3969 = vpop.f32.mrb[0].mxu0
        %3970 = vmatprep.mubr.bf16.mxu0 0
        %3971 = vmatmul.mubr.bf16.gmra.mrb[0].mxu0 %v3922
        %v3972 = vpop.f32.mrb[0].mxu0
        %v3973 = vadd.f32 0.0, %v3972
        %v3974 = vpop.f32.mrb[0].mxu0
        %v3975 = vpop.f32.mrb[0].mxu0
        %v3976 = vadd.f32 0.0, %v3975
        %v3977 = vpop.f32.mrb[0].mxu0
        %3978 = vdwg.mxu0
        %v3979 = vmul.f32 %v3965, 0.17677669
        %v3980 = vmul.f32 %v3968, 0.17677669
        %v3981 = vmul.f32 %v3973, 0.17677669
        %v3982 = vmul.f32 %v3976, 0.17677669
        %v3983 = vadd.f32 %v3979, %v1603
        %v3984 = vadd.f32 %v3980, %v1604
        %v3985 = vadd.f32 %v3981, %v1605
        %v3986 = vadd.f32 %v3982, %v1606
        %v3987 = vsel %vm1350, %v3983, -inf
        %3988 = vmax.xlane.f32.xlu0 %v3987
        %v3989 = vpop.xlane.xlu0 %3988
        %v3990 = vsel %vm1350, %v3984, -inf
        %3991 = vmax.xlane.f32.xlu0 %v3990
        %v3992 = vpop.xlane.xlu0 %3991
        %v3993 = vsel %vm1350, %v3985, -inf
        %3994 = vmax.xlane.f32.xlu0 %v3993
        %v3995 = vpop.xlane.xlu0 %3994
        %v3996 = vsel %vm1350, %v3986, -inf
        %3997 = vmax.xlane.f32.xlu0 %v3996
        %v3998 = vpop.xlane.xlu0 %3997
        %v3999 = vsub.f32 %v3983, %v3989
        %v4000 = vsub.f32 %v3984, %v3992
        %v4001 = vsub.f32 %v3985, %v3995
        %v4002 = vsub.f32 %v3986, %v3998
        %v4003 = vmul.f32 %v3999, 1.442695
        %v4004 = vpow.pop %v4003
        %v4005 = vmul.f32 %v4000, 1.442695
        %v4006 = vpow.pop %v4005
        %v4007 = vmul.f32 %v4001, 1.442695
        %v4008 = vpow.pop %v4007
        %v4009 = vmul.f32 %v4002, 1.442695
        %v4010 = vpow.pop %v4009
        %v4011 = vsel %vm1350, %v4004, 0.0
        %4012 = vadd.xlane.f32.xlu0 %v4011
        %v4013 = vpop.xlane.xlu0 %4012
        %v4014 = vsel %vm1350, %v4006, 0.0
        %4015 = vadd.xlane.f32.xlu0 %v4014
        %v4016 = vpop.xlane.xlu0 %4015
        %v4017 = vsel %vm1350, %v4008, 0.0
        %4018 = vadd.xlane.f32.xlu0 %v4017
        %v4019 = vpop.xlane.xlu0 %4018
        %v4020 = vsel %vm1350, %v4010, 0.0
        %4021 = vadd.xlane.f32.xlu0 %v4020
        %v4022 = vpop.xlane.xlu0 %4021
        %v4023 = vrcp.pop %v4013
        %v4024 = vrcp.pop %v4016
        %v4025 = vrcp.pop %v4019
        %v4026 = vrcp.pop %v4022
        %v4027 = vmul.f32 %v4004, %v4023
        %v4028 = vmul.f32 %v4006, %v4024
        %v4029 = vmul.f32 %v4008, %v4025
        %v4030 = vmul.f32 %v4010, %v4026
        %v4031 = vpack.c.bf16 %v4028, %v4027
        %v4032 = vpack.c.bf16 %v4030, %v4029
        %4035 = vrot.lane.b32.xlu0 %v1346, 96
        %v4036 = vpop.permute.xlu0 %4035
        %4037 = vrot.lane.b32.xlu0 %v1349, 96
        %v4038 = vpop.permute.xlu0 %4037
        %v4042 = vsel %vm1350, %v4031, 0
        %v4045 = vsel %vm1350, %v4032, 0
        %4047 = vmatprep.subr.bf16.mxu0 0
        %4048 = vmatpush1.bf16.msra.mxu0 %v4036
        %4049 = vmatprep.subr.bf16.mxu0 0
        %4050 = vmatpush1.bf16.msra.mxu0 %v4038
        %4051 = vmatprep.subr.bf16.mxu0 0
        %4052 = vmatpush1.bf16.msra.mxu0 0
        %4053 = vmatprep.subr.bf16.mxu0 0
        %4054 = vmatpush1.bf16.msra.mxu0 0
        %4055 = vmatprep.subr.bf16.mxu0 0
        %4056 = vmatpush1.bf16.msra.mxu0 0
        %4057 = vmatprep.subr.bf16.mxu0 0
        %4058 = vmatpush1.bf16.msra.mxu0 0
        %4059 = vmatprep.subr.bf16.mxu0 0
        %4060 = vmatpush1.bf16.msra.mxu0 0
        %4061 = vmatprep.subr.bf16.mxu0 0
        %4062 = vmatpush1.bf16.msra.mxu0 0
        %4063 = vmatprep.subr.bf16.mxu0 0
        %4064 = vmatpush1.bf16.msra.mxu0 0
        %4065 = vmatprep.subr.bf16.mxu0 0
        %4066 = vmatpush1.bf16.msra.mxu0 0
        %4067 = vmatprep.subr.bf16.mxu0 0
        %4068 = vmatpush1.bf16.msra.mxu0 0
        %4069 = vmatprep.subr.bf16.mxu0 0
        %4070 = vmatpush1.bf16.msra.mxu0 0
        %4071 = vmatprep.subr.bf16.mxu0 0
        %4072 = vmatpush1.bf16.msra.mxu0 0
        %4073 = vmatprep.subr.bf16.mxu0 0
        %4074 = vmatpush1.bf16.msra.mxu0 0
        %4075 = vmatprep.subr.bf16.mxu0 0
        %4076 = vmatpush1.bf16.msra.mxu0 0
        %4077 = vmatprep.subr.bf16.mxu0 0
        %4078 = vmatpush1.bf16.msra.mxu0 0
        %4079 = vmatprep.mubr.bf16.mxu0 0
        %4080 = vmatmul.mubr.bf16.gmra.mrb[0].mxu0 %v4042
        %v4081 = vpop.f32.mrb[0].mxu0
        %v4082 = vadd.f32 0.0, %v4081
        %v4083 = vpop.f32.mrb[0].mxu0
        %v4084 = vpop.f32.mrb[0].mxu0
        %v4085 = vadd.f32 0.0, %v4084
        %v4086 = vpop.f32.mrb[0].mxu0
        %4087 = vmatprep.mubr.bf16.mxu0 0
        %4088 = vmatmul.mubr.bf16.gmra.mrb[0].mxu0 %v4045
        %v4089 = vpop.f32.mrb[0].mxu0
        %v4090 = vadd.f32 0.0, %v4089
        %v4091 = vpop.f32.mrb[0].mxu0
        %v4092 = vpop.f32.mrb[0].mxu0
        %v4093 = vadd.f32 0.0, %v4092
        %v4094 = vpop.f32.mrb[0].mxu0
        %4095 = vdwg.mxu0
        %4096 = vrot.lane.b32.xlu0 %v1344, 64
        %v4097 = vpop.permute.xlu0 %4096
        %4098 = vrot.lane.b32.xlu0 %v1347, 64
        %v4099 = vpop.permute.xlu0 %4098
        %4100 = vrot.lane.b32.xlu0 %v1345, 64
        %v4101 = vpop.permute.xlu0 %4100
        %4102 = vrot.lane.b32.xlu0 %v1348, 64
        %v4103 = vpop.permute.xlu0 %4102
        %v4105 = vsel %vm1350, %v4097, 0
        %v4108 = vsel %vm1350, %v4099, 0
        %v4111 = vsel %vm1350, %v4101, 0
        %v4114 = vsel %vm1350, %v4103, 0
        %4116 = vmatprep.subr.bf16.mxu0 0
        %4117 = vmatpush1.bf16.xpose.msra.mxu0 %v4111
        %4118 = vmatprep.subr.bf16.mxu0 0
        %4119 = vmatpush1.bf16.xpose.msra.mxu0 %v4114
        %4120 = vmatprep.subr.bf16.mxu0 0
        %4121 = vmatpush1.bf16.xpose.msra.mxu0 0
        %4122 = vmatprep.subr.bf16.mxu0 0
        %4123 = vmatpush1.bf16.xpose.msra.mxu0 0
        %4124 = vmatprep.subr.bf16.mxu0 0
        %4125 = vmatpush1.bf16.xpose.msra.mxu0 0
        %4126 = vmatprep.subr.bf16.mxu0 0
        %4127 = vmatpush1.bf16.xpose.msra.mxu0 0
        %4128 = vmatprep.subr.bf16.mxu0 0
        %4129 = vmatpush1.bf16.xpose.msra.mxu0 0
        %4130 = vmatprep.subr.bf16.mxu0 0
        %4131 = vmatpush1.bf16.xpose.msra.mxu0 0
        %4132 = vmatprep.subr.bf16.mxu0 0
        %4133 = vmatpush1.bf16.xpose.msra.mxu0 0
        %4134 = vmatprep.subr.bf16.mxu0 0
        %4135 = vmatpush1.bf16.xpose.msra.mxu0 0
        %4136 = vmatprep.subr.bf16.mxu0 0
        %4137 = vmatpush1.bf16.xpose.msra.mxu0 0
        %4138 = vmatprep.subr.bf16.mxu0 0
        %4139 = vmatpush1.bf16.xpose.msra.mxu0 0
        %4140 = vmatprep.subr.bf16.mxu0 0
        %4141 = vmatpush1.bf16.xpose.msra.mxu0 0
        %4142 = vmatprep.subr.bf16.mxu0 0
        %4143 = vmatpush1.bf16.xpose.msra.mxu0 0
        %4144 = vmatprep.subr.bf16.mxu0 0
        %4145 = vmatpush1.bf16.xpose.msra.mxu0 0
        %4146 = vmatprep.subr.bf16.mxu0 0
        %4147 = vmatpush1.bf16.xpose.msra.mxu0 0
        %4148 = vmatprep.mubr.bf16.mxu0 0
        %4149 = vmatmul.mubr.bf16.gmra.mrb[0].mxu0 %v4105
        %v4150 = vpop.f32.mrb[0].mxu0
        %v4151 = vadd.f32 0.0, %v4150
        %v4152 = vpop.f32.mrb[0].mxu0
        %v4153 = vpop.f32.mrb[0].mxu0
        %v4154 = vadd.f32 0.0, %v4153
        %v4155 = vpop.f32.mrb[0].mxu0
        %4156 = vmatprep.mubr.bf16.mxu0 0
        %4157 = vmatmul.mubr.bf16.gmra.mrb[0].mxu0 %v4108
        %v4158 = vpop.f32.mrb[0].mxu0
        %v4159 = vadd.f32 0.0, %v4158
        %v4160 = vpop.f32.mrb[0].mxu0
        %v4161 = vpop.f32.mrb[0].mxu0
        %v4162 = vadd.f32 0.0, %v4161
        %v4163 = vpop.f32.mrb[0].mxu0
        %4164 = vdwg.mxu0
        %v4165 = vmul.f32 %v4151, 0.17677669
        %v4166 = vmul.f32 %v4154, 0.17677669
        %v4167 = vmul.f32 %v4159, 0.17677669
        %v4168 = vmul.f32 %v4162, 0.17677669
        %v4169 = vadd.f32 %v4165, %v1794
        %v4170 = vadd.f32 %v4166, %v1795
        %v4171 = vadd.f32 %v4167, %v1796
        %v4172 = vadd.f32 %v4168, %v1797
        %v4173 = vsel %vm1350, %v4169, -inf
        %4174 = vmax.xlane.f32.xlu0 %v4173
        %v4175 = vpop.xlane.xlu0 %4174
        %v4176 = vsel %vm1350, %v4170, -inf
        %4177 = vmax.xlane.f32.xlu0 %v4176
        %v4178 = vpop.xlane.xlu0 %4177
        %v4179 = vsel %vm1350, %v4171, -inf
        %4180 = vmax.xlane.f32.xlu0 %v4179
        %v4181 = vpop.xlane.xlu0 %4180
        %v4182 = vsel %vm1350, %v4172, -inf
        %4183 = vmax.xlane.f32.xlu0 %v4182
        %v4184 = vpop.xlane.xlu0 %4183
        %v4185 = vsub.f32 %v4169, %v4175
        %v4186 = vsub.f32 %v4170, %v4178
        %v4187 = vsub.f32 %v4171, %v4181
        %v4188 = vsub.f32 %v4172, %v4184
        %v4189 = vmul.f32 %v4185, 1.442695
        %v4190 = vpow.pop %v4189
        %v4191 = vmul.f32 %v4186, 1.442695
        %v4192 = vpow.pop %v4191
        %v4193 = vmul.f32 %v4187, 1.442695
        %v4194 = vpow.pop %v4193
        %v4195 = vmul.f32 %v4188, 1.442695
        %v4196 = vpow.pop %v4195
        %v4197 = vsel %vm1350, %v4190, 0.0
        %4198 = vadd.xlane.f32.xlu0 %v4197
        %v4199 = vpop.xlane.xlu0 %4198
        %v4200 = vsel %vm1350, %v4192, 0.0
        %4201 = vadd.xlane.f32.xlu0 %v4200
        %v4202 = vpop.xlane.xlu0 %4201
        %v4203 = vsel %vm1350, %v4194, 0.0
        %4204 = vadd.xlane.f32.xlu0 %v4203
        %v4205 = vpop.xlane.xlu0 %4204
        %v4206 = vsel %vm1350, %v4196, 0.0
        %4207 = vadd.xlane.f32.xlu0 %v4206
        %v4208 = vpop.xlane.xlu0 %4207
        %v4209 = vrcp.pop %v4199
        %v4210 = vrcp.pop %v4202
        %v4211 = vrcp.pop %v4205
        %v4212 = vrcp.pop %v4208
        %v4213 = vmul.f32 %v4190, %v4209
        %v4214 = vmul.f32 %v4192, %v4210
        %v4215 = vmul.f32 %v4194, %v4211
        %v4216 = vmul.f32 %v4196, %v4212
        %v4217 = vpack.c.bf16 %v4214, %v4213
        %v4218 = vpack.c.bf16 %v4216, %v4215
        %4219 = vrot.lane.b32.xlu0 %v1346, 64
        %v4220 = vpop.permute.xlu0 %4219
        %4221 = vrot.lane.b32.xlu0 %v1349, 64
        %v4222 = vpop.permute.xlu0 %4221
        %v4226 = vsel %vm1350, %v4217, 0
        %v4229 = vsel %vm1350, %v4218, 0
        %4231 = vmatprep.subr.bf16.mxu0 0
        %4232 = vmatpush1.bf16.msra.mxu0 %v4220
        %4233 = vmatprep.subr.bf16.mxu0 0
        %4234 = vmatpush1.bf16.msra.mxu0 %v4222
        %4235 = vmatprep.subr.bf16.mxu0 0
        %4236 = vmatpush1.bf16.msra.mxu0 0
        %4237 = vmatprep.subr.bf16.mxu0 0
        %4238 = vmatpush1.bf16.msra.mxu0 0
        %4239 = vmatprep.subr.bf16.mxu0 0
        %4240 = vmatpush1.bf16.msra.mxu0 0
        %4241 = vmatprep.subr.bf16.mxu0 0
        %4242 = vmatpush1.bf16.msra.mxu0 0
        %4243 = vmatprep.subr.bf16.mxu0 0
        %4244 = vmatpush1.bf16.msra.mxu0 0
        %4245 = vmatprep.subr.bf16.mxu0 0
        %4246 = vmatpush1.bf16.msra.mxu0 0
        %4247 = vmatprep.subr.bf16.mxu0 0
        %4248 = vmatpush1.bf16.msra.mxu0 0
        %4249 = vmatprep.subr.bf16.mxu0 0
        %4250 = vmatpush1.bf16.msra.mxu0 0
        %4251 = vmatprep.subr.bf16.mxu0 0
        %4252 = vmatpush1.bf16.msra.mxu0 0
        %4253 = vmatprep.subr.bf16.mxu0 0
        %4254 = vmatpush1.bf16.msra.mxu0 0
        %4255 = vmatprep.subr.bf16.mxu0 0
        %4256 = vmatpush1.bf16.msra.mxu0 0
        %4257 = vmatprep.subr.bf16.mxu0 0
        %4258 = vmatpush1.bf16.msra.mxu0 0
        %4259 = vmatprep.subr.bf16.mxu0 0
        %4260 = vmatpush1.bf16.msra.mxu0 0
        %4261 = vmatprep.subr.bf16.mxu0 0
        %4262 = vmatpush1.bf16.msra.mxu0 0
        %4263 = vmatprep.mubr.bf16.mxu0 0
        %4264 = vmatmul.mubr.bf16.gmra.mrb[0].mxu0 %v4226
        %v4265 = vpop.f32.mrb[0].mxu0
        %v4266 = vadd.f32 0.0, %v4265
        %v4267 = vpop.f32.mrb[0].mxu0
        %v4268 = vpop.f32.mrb[0].mxu0
        %v4269 = vadd.f32 0.0, %v4268
        %v4270 = vpop.f32.mrb[0].mxu0
        %4271 = vmatprep.mubr.bf16.mxu0 0
        %4272 = vmatmul.mubr.bf16.gmra.mrb[0].mxu0 %v4229
        %v4273 = vpop.f32.mrb[0].mxu0
        %v4274 = vadd.f32 0.0, %v4273
        %v4275 = vpop.f32.mrb[0].mxu0
        %v4276 = vpop.f32.mrb[0].mxu0
        %v4277 = vadd.f32 0.0, %v4276
        %v4278 = vpop.f32.mrb[0].mxu0
        %4279 = vdwg.mxu0
        %4280 = vrot.lane.b32.xlu0 %v1344, 32
        %v4281 = vpop.permute.xlu0 %4280
        %4282 = vrot.lane.b32.xlu0 %v1347, 32
        %v4283 = vpop.permute.xlu0 %4282
        %4284 = vrot.lane.b32.xlu0 %v1345, 32
        %v4285 = vpop.permute.xlu0 %4284
        %4286 = vrot.lane.b32.xlu0 %v1348, 32
        %v4287 = vpop.permute.xlu0 %4286
        %v4289 = vsel %vm1350, %v4281, 0
        %v4292 = vsel %vm1350, %v4283, 0
        %v4295 = vsel %vm1350, %v4285, 0
        %v4298 = vsel %vm1350, %v4287, 0
        %4300 = vmatprep.subr.bf16.mxu0 0
        %4301 = vmatpush1.bf16.xpose.msra.mxu0 %v4295
        %4302 = vmatprep.subr.bf16.mxu0 0
        %4303 = vmatpush1.bf16.xpose.msra.mxu0 %v4298
        %4304 = vmatprep.subr.bf16.mxu0 0
        %4305 = vmatpush1.bf16.xpose.msra.mxu0 0
        %4306 = vmatprep.subr.bf16.mxu0 0
        %4307 = vmatpush1.bf16.xpose.msra.mxu0 0
        %4308 = vmatprep.subr.bf16.mxu0 0
        %4309 = vmatpush1.bf16.xpose.msra.mxu0 0
        %4310 = vmatprep.subr.bf16.mxu0 0
        %4311 = vmatpush1.bf16.xpose.msra.mxu0 0
        %4312 = vmatprep.subr.bf16.mxu0 0
        %4313 = vmatpush1.bf16.xpose.msra.mxu0 0
        %4314 = vmatprep.subr.bf16.mxu0 0
        %4315 = vmatpush1.bf16.xpose.msra.mxu0 0
        %4316 = vmatprep.subr.bf16.mxu0 0
        %4317 = vmatpush1.bf16.xpose.msra.mxu0 0
        %4318 = vmatprep.subr.bf16.mxu0 0
        %4319 = vmatpush1.bf16.xpose.msra.mxu0 0
        %4320 = vmatprep.subr.bf16.mxu0 0
        %4321 = vmatpush1.bf16.xpose.msra.mxu0 0
        %4322 = vmatprep.subr.bf16.mxu0 0
        %4323 = vmatpush1.bf16.xpose.msra.mxu0 0
        %4324 = vmatprep.subr.bf16.mxu0 0
        %4325 = vmatpush1.bf16.xpose.msra.mxu0 0
        %4326 = vmatprep.subr.bf16.mxu0 0
        %4327 = vmatpush1.bf16.xpose.msra.mxu0 0
        %4328 = vmatprep.subr.bf16.mxu0 0
        %4329 = vmatpush1.bf16.xpose.msra.mxu0 0
        %4330 = vmatprep.subr.bf16.mxu0 0
        %4331 = vmatpush1.bf16.xpose.msra.mxu0 0
        %4332 = vmatprep.mubr.bf16.mxu0 0
        %4333 = vmatmul.mubr.bf16.gmra.mrb[0].mxu0 %v4289
        %v4334 = vpop.f32.mrb[0].mxu0
        %v4335 = vadd.f32 0.0, %v4334
        %v4336 = vpop.f32.mrb[0].mxu0
        %v4337 = vpop.f32.mrb[0].mxu0
        %v4338 = vadd.f32 0.0, %v4337
        %v4339 = vpop.f32.mrb[0].mxu0
        %4340 = vmatprep.mubr.bf16.mxu0 0
        %4341 = vmatmul.mubr.bf16.gmra.mrb[0].mxu0 %v4292
        %v4342 = vpop.f32.mrb[0].mxu0
        %v4343 = vadd.f32 0.0, %v4342
        %v4344 = vpop.f32.mrb[0].mxu0
        %v4345 = vpop.f32.mrb[0].mxu0
        %v4346 = vadd.f32 0.0, %v4345
        %v4347 = vpop.f32.mrb[0].mxu0
        %4348 = vdwg.mxu0
        %v4349 = vmul.f32 %v4335, 0.17677669
        %v4350 = vmul.f32 %v4338, 0.17677669
        %v4351 = vmul.f32 %v4343, 0.17677669
        %v4352 = vmul.f32 %v4346, 0.17677669
        %v4353 = vadd.f32 %v4349, %v1983
        %v4354 = vadd.f32 %v4350, %v1984
        %v4355 = vadd.f32 %v4351, %v1985
        %v4356 = vadd.f32 %v4352, %v1986
        %v4357 = vsel %vm1350, %v4353, -inf
        %4358 = vmax.xlane.f32.xlu0 %v4357
        %v4359 = vpop.xlane.xlu0 %4358
        %v4360 = vsel %vm1350, %v4354, -inf
        %4361 = vmax.xlane.f32.xlu0 %v4360
        %v4362 = vpop.xlane.xlu0 %4361
        %v4363 = vsel %vm1350, %v4355, -inf
        %4364 = vmax.xlane.f32.xlu0 %v4363
        %v4365 = vpop.xlane.xlu0 %4364
        %v4366 = vsel %vm1350, %v4356, -inf
        %4367 = vmax.xlane.f32.xlu0 %v4366
        %v4368 = vpop.xlane.xlu0 %4367
        %v4369 = vsub.f32 %v4353, %v4359
        %v4370 = vsub.f32 %v4354, %v4362
        %v4371 = vsub.f32 %v4355, %v4365
        %v4372 = vsub.f32 %v4356, %v4368
        %v4373 = vmul.f32 %v4369, 1.442695
        %v4374 = vpow.pop %v4373
        %v4375 = vmul.f32 %v4370, 1.442695
        %v4376 = vpow.pop %v4375
        %v4377 = vmul.f32 %v4371, 1.442695
        %v4378 = vpow.pop %v4377
        %v4379 = vmul.f32 %v4372, 1.442695
        %v4380 = vpow.pop %v4379
        %v4381 = vsel %vm1350, %v4374, 0.0
        %4382 = vadd.xlane.f32.xlu0 %v4381
        %v4383 = vpop.xlane.xlu0 %4382
        %v4384 = vsel %vm1350, %v4376, 0.0
        %4385 = vadd.xlane.f32.xlu0 %v4384
        %v4386 = vpop.xlane.xlu0 %4385
        %v4387 = vsel %vm1350, %v4378, 0.0
        %4388 = vadd.xlane.f32.xlu0 %v4387
        %v4389 = vpop.xlane.xlu0 %4388
        %v4390 = vsel %vm1350, %v4380, 0.0
        %4391 = vadd.xlane.f32.xlu0 %v4390
        %v4392 = vpop.xlane.xlu0 %4391
        %v4393 = vrcp.pop %v4383
        %v4394 = vrcp.pop %v4386
        %v4395 = vrcp.pop %v4389
        %v4396 = vrcp.pop %v4392
        %v4397 = vmul.f32 %v4374, %v4393
        %v4398 = vmul.f32 %v4376, %v4394
        %v4399 = vmul.f32 %v4378, %v4395
        %v4400 = vmul.f32 %v4380, %v4396
        %v4401 = vpack.c.bf16 %v4398, %v4397
        %v4402 = vpack.c.bf16 %v4400, %v4399
        %4403 = vrot.lane.b32.xlu0 %v1346, 32
        %v4404 = vpop.permute.xlu0 %4403
        %4405 = vrot.lane.b32.xlu0 %v1349, 32
        %v4406 = vpop.permute.xlu0 %4405
        %v4410 = vsel %vm1350, %v4401, 0
        %v4413 = vsel %vm1350, %v4402, 0
        %4415 = vmatprep.subr.bf16.mxu0 0
        %4416 = vmatpush1.bf16.msra.mxu0 %v4404
        %4417 = vmatprep.subr.bf16.mxu0 0
        %4418 = vmatpush1.bf16.msra.mxu0 %v4406
        %4419 = vmatprep.subr.bf16.mxu0 0
        %4420 = vmatpush1.bf16.msra.mxu0 0
        %4421 = vmatprep.subr.bf16.mxu0 0
        %4422 = vmatpush1.bf16.msra.mxu0 0
        %4423 = vmatprep.subr.bf16.mxu0 0
        %4424 = vmatpush1.bf16.msra.mxu0 0
        %4425 = vmatprep.subr.bf16.mxu0 0
        %4426 = vmatpush1.bf16.msra.mxu0 0
        %4427 = vmatprep.subr.bf16.mxu0 0
        %4428 = vmatpush1.bf16.msra.mxu0 0
        %4429 = vmatprep.subr.bf16.mxu0 0
        %4430 = vmatpush1.bf16.msra.mxu0 0
        %4431 = vmatprep.subr.bf16.mxu0 0
        %4432 = vmatpush1.bf16.msra.mxu0 0
        %4433 = vmatprep.subr.bf16.mxu0 0
        %4434 = vmatpush1.bf16.msra.mxu0 0
        %4435 = vmatprep.subr.bf16.mxu0 0
        %4436 = vmatpush1.bf16.msra.mxu0 0
        %4437 = vmatprep.subr.bf16.mxu0 0
        %4438 = vmatpush1.bf16.msra.mxu0 0
        %4439 = vmatprep.subr.bf16.mxu0 0
        %4440 = vmatpush1.bf16.msra.mxu0 0
        %4441 = vmatprep.subr.bf16.mxu0 0
        %4442 = vmatpush1.bf16.msra.mxu0 0
        %4443 = vmatprep.subr.bf16.mxu0 0
        %4444 = vmatpush1.bf16.msra.mxu0 0
        %4445 = vmatprep.subr.bf16.mxu0 0
        %4446 = vmatpush1.bf16.msra.mxu0 0
        %4447 = vmatprep.mubr.bf16.mxu0 0
        %4448 = vmatmul.mubr.bf16.gmra.mrb[0].mxu0 %v4410
        %v4449 = vpop.f32.mrb[0].mxu0
        %v4450 = vadd.f32 0.0, %v4449
        %v4451 = vpop.f32.mrb[0].mxu0
        %v4452 = vpop.f32.mrb[0].mxu0
        %v4453 = vadd.f32 0.0, %v4452
        %v4454 = vpop.f32.mrb[0].mxu0
        %4455 = vmatprep.mubr.bf16.mxu0 0
        %4456 = vmatmul.mubr.bf16.gmra.mrb[0].mxu0 %v4413
        %v4457 = vpop.f32.mrb[0].mxu0
        %v4458 = vadd.f32 0.0, %v4457
        %v4459 = vpop.f32.mrb[0].mxu0
        %v4460 = vpop.f32.mrb[0].mxu0
        %v4461 = vadd.f32 0.0, %v4460
        %v4462 = vpop.f32.mrb[0].mxu0
        %4463 = vdwg.mxu0
        %4468 = vrot.lane.b32.xlu0 %v4082, 32
        %v4469 = vpop.permute.xlu0 %4468
        %4470 = vrot.lane.b32.xlu0 %v4085, 32
        %v4471 = vpop.permute.xlu0 %4470
        %4472 = vrot.lane.b32.xlu0 %v4090, 32
        %v4473 = vpop.permute.xlu0 %4472
        %4474 = vrot.lane.b32.xlu0 %v4093, 32
        %v4475 = vpop.permute.xlu0 %4474
        %4484 = vrot.lane.b32.xlu0 %v4266, 64
        %v4485 = vpop.permute.xlu0 %4484
        %4486 = vrot.lane.b32.xlu0 %v4269, 64
        %v4487 = vpop.permute.xlu0 %4486
        %4488 = vrot.lane.b32.xlu0 %v4274, 64
        %v4489 = vpop.permute.xlu0 %4488
        %4490 = vrot.lane.b32.xlu0 %v4277, 64
        %v4491 = vpop.permute.xlu0 %4490
        %4500 = vrot.lane.b32.xlu0 %v4450, 96
        %v4501 = vpop.permute.xlu0 %4500
        %4502 = vrot.lane.b32.xlu0 %v4453, 96
        %v4503 = vpop.permute.xlu0 %4502
        %4504 = vrot.lane.b32.xlu0 %v4458, 96
        %v4505 = vpop.permute.xlu0 %4504
        %4506 = vrot.lane.b32.xlu0 %v4461, 96
        %v4507 = vpop.permute.xlu0 %4506
        %v4512 = vsel %vm1350, %v3892, %v4469
        %v4513 = vsel %vm1350, %v3895, %v4471
        %v4514 = vsel %vm1350, %v3900, %v4473
        %v4515 = vsel %vm1350, %v3903, %v4475
        %v4516 = vsel %vm2150, %v4512, %v4485
        %v4517 = vsel %vm2150, %v4513, %v4487
        %v4518 = vsel %vm2150, %v4514, %v4489
        %v4519 = vsel %vm2150, %v4515, %v4491
        %v4520 = vsel %vm2155, %v4516, %v4501
        %v4521 = vsel %vm2155, %v4517, %v4503
        %v4522 = vsel %vm2155, %v4518, %v4505
        %v4523 = vsel %vm2155, %v4519, %v4507
        %v4524 = vpack.c.bf16 %v2157, %v2156
        %v4525 = vpack.c.bf16 %v2159, %v2158
        %v4526 = vpack.c.bf16 %v2945, %v2944
        %v4527 = vpack.c.bf16 %v2947, %v2946
        %v4528 = vpack.c.bf16 %v3733, %v3732
        %v4529 = vpack.c.bf16 %v3735, %v3734
        %v4530 = vpack.c.bf16 %v4521, %v4520
        %v4531 = vpack.c.bf16 %v4523, %v4522
        %v4532 = vld [vmem:[%s7] sm:$0xf]
        %v4533 = vld [vmem:[%s7 + $0x4] sm:$0xf]
        %v4534 = vld [vmem:[%s7 + $0x8] sm:$0xf]
        %v4535 = vld [vmem:[%s7 + $0xc] sm:$0xf]
        %v4536 = vld [vmem:[%s7 + $0x10] sm:$0xf]
        %v4537 = vld [vmem:[%s7 + $0x14] sm:$0xf]
        %v4538 = vld [vmem:[%s7 + $0x18] sm:$0xf]
        %v4539 = vld [vmem:[%s7 + $0x1c] sm:$0xf]
        %v4540 = vld [vmem:[%s7 + $0x20] sm:$0xf]
        %v4541 = vld [vmem:[%s7 + $0x24] sm:$0xf]
        %v4542 = vld [vmem:[%s7 + $0x28] sm:$0xf]
        %v4543 = vld [vmem:[%s7 + $0x2c] sm:$0xf]
        %v4544 = vld [vmem:[%s7 + $0x30] sm:$0xf]
        %v4545 = vld [vmem:[%s7 + $0x34] sm:$0xf]
        %v4546 = vld [vmem:[%s7 + $0x38] sm:$0xf]
        %v4547 = vld [vmem:[%s7 + $0x3c] sm:$0xf]
        %v4548 = vld [vmem:[%s8] sm:$0x1]
        %v4550 = vlaneseq
        %v4551 = vshrl.u32 %v4550, 7
        %v4552 = vsub.s32 0, %v4551
        %v4553 = vrot.slane %v4548, %v4552
        %v4571 = vunpack.c.l.b16 %v4532
        %v4572 = vunpack.c.l.b16 %v4533
        %v4573 = vunpack.c.l.b16 %v4534
        %v4574 = vunpack.c.l.b16 %v4535
        %v4575 = vunpack.c.l.b16 %v4536
        %v4576 = vunpack.c.l.b16 %v4537
        %v4577 = vunpack.c.l.b16 %v4538
        %v4578 = vunpack.c.l.b16 %v4539
        %v4579 = vunpack.c.l.b16 %v4540
        %v4580 = vunpack.c.l.b16 %v4541
        %v4581 = vunpack.c.l.b16 %v4542
        %v4582 = vunpack.c.l.b16 %v4543
        %v4583 = vunpack.c.l.b16 %v4544
        %v4584 = vunpack.c.l.b16 %v4545
        %v4585 = vunpack.c.l.b16 %v4546
        %v4586 = vunpack.c.l.b16 %v4547
        %v4587 = vpack.c.b16 %v4572, %v4571
        %v4588 = vpack.c.b16 %v4574, %v4573
        %v4589 = vpack.c.b16 %v4576, %v4575
        %v4590 = vpack.c.b16 %v4578, %v4577
        %v4591 = vpack.c.b16 %v4580, %v4579
        %v4592 = vpack.c.b16 %v4582, %v4581
        %v4593 = vpack.c.b16 %v4584, %v4583
        %v4594 = vpack.c.b16 %v4586, %v4585
        %4603 = vmatprep.subr.bf16.mxu0 0
        %4604 = vmatpush1.bf16.msra.mxu0 %v4587
        %4605 = vmatprep.subr.bf16.mxu0 0
        %4606 = vmatpush1.bf16.msra.mxu0 %v4588
        %4607 = vmatprep.subr.bf16.mxu0 0
        %4608 = vmatpush1.bf16.msra.mxu0 %v4589
        %4609 = vmatprep.subr.bf16.mxu0 0
        %4610 = vmatpush1.bf16.msra.mxu0 %v4590
        %4611 = vmatprep.subr.bf16.mxu0 0
        %4612 = vmatpush1.bf16.msra.mxu0 %v4591
        %4613 = vmatprep.subr.bf16.mxu0 0
        %4614 = vmatpush1.bf16.msra.mxu0 %v4592
        %4615 = vmatprep.subr.bf16.mxu0 0
        %4616 = vmatpush1.bf16.msra.mxu0 %v4593
        %4617 = vmatprep.subr.bf16.mxu0 0
        %4618 = vmatpush1.bf16.msra.mxu0 %v4594
        %4619 = vmatprep.subr.bf16.mxu0 0
        %4620 = vmatpush1.bf16.msra.mxu0 0
        %4621 = vmatprep.subr.bf16.mxu0 0
        %4622 = vmatpush1.bf16.msra.mxu0 0
        %4623 = vmatprep.subr.bf16.mxu0 0
        %4624 = vmatpush1.bf16.msra.mxu0 0
        %4625 = vmatprep.subr.bf16.mxu0 0
        %4626 = vmatpush1.bf16.msra.mxu0 0
        %4627 = vmatprep.subr.bf16.mxu0 0
        %4628 = vmatpush1.bf16.msra.mxu0 0
        %4629 = vmatprep.subr.bf16.mxu0 0
        %4630 = vmatpush1.bf16.msra.mxu0 0
        %4631 = vmatprep.subr.bf16.mxu0 0
        %4632 = vmatpush1.bf16.msra.mxu0 0
        %4633 = vmatprep.subr.bf16.mxu0 0
        %4634 = vmatpush1.bf16.msra.mxu0 0
        %4635 = vmatprep.mubr.bf16.mxu0 0
        %4636 = vmatmul.mubr.bf16.gmra.mrb[0].mxu0 %v4524
        %v4637 = vpop.f32.mrb[0].mxu0
        %v4638 = vadd.f32 %v4553, %v4637
        %v4639 = vpop.f32.mrb[0].mxu0
        %v4640 = vpop.f32.mrb[0].mxu0
        %v4641 = vadd.f32 %v4553, %v4640
        %v4642 = vpop.f32.mrb[0].mxu0
        %4643 = vmatprep.mubr.bf16.mxu0 0
        %4644 = vmatmul.mubr.bf16.gmra.mrb[0].mxu0 %v4525
        %v4645 = vpop.f32.mrb[0].mxu0
        %v4646 = vadd.f32 %v4553, %v4645
        %v4647 = vpop.f32.mrb[0].mxu0
        %v4648 = vpop.f32.mrb[0].mxu0
        %v4649 = vadd.f32 %v4553, %v4648
        %v4650 = vpop.f32.mrb[0].mxu0
        %4651 = vmatprep.mubr.bf16.mxu0 0
        %4652 = vmatmul.mubr.bf16.gmra.mrb[0].mxu0 %v4526
        %v4653 = vpop.f32.mrb[0].mxu0
        %v4654 = vadd.f32 %v4553, %v4653
        %v4655 = vpop.f32.mrb[0].mxu0
        %v4656 = vpop.f32.mrb[0].mxu0
        %v4657 = vadd.f32 %v4553, %v4656
        %v4658 = vpop.f32.mrb[0].mxu0
        %4659 = vmatprep.mubr.bf16.mxu0 0
        %4660 = vmatmul.mubr.bf16.gmra.mrb[0].mxu0 %v4527
        %v4661 = vpop.f32.mrb[0].mxu0
        %v4662 = vadd.f32 %v4553, %v4661
        %v4663 = vpop.f32.mrb[0].mxu0
        %v4664 = vpop.f32.mrb[0].mxu0
        %v4665 = vadd.f32 %v4553, %v4664
        %v4666 = vpop.f32.mrb[0].mxu0
        %4667 = vmatprep.mubr.bf16.mxu0 0
        %4668 = vmatmul.mubr.bf16.gmra.mrb[0].mxu0 %v4528
        %v4669 = vpop.f32.mrb[0].mxu0
        %v4670 = vadd.f32 %v4553, %v4669
        %v4671 = vpop.f32.mrb[0].mxu0
        %v4672 = vpop.f32.mrb[0].mxu0
        %v4673 = vadd.f32 %v4553, %v4672
        %v4674 = vpop.f32.mrb[0].mxu0
        %4675 = vmatprep.mubr.bf16.mxu0 0
        %4676 = vmatmul.mubr.bf16.gmra.mrb[0].mxu0 %v4529
        %v4677 = vpop.f32.mrb[0].mxu0
        %v4678 = vadd.f32 %v4553, %v4677
        %v4679 = vpop.f32.mrb[0].mxu0
        %v4680 = vpop.f32.mrb[0].mxu0
        %v4681 = vadd.f32 %v4553, %v4680
        %v4682 = vpop.f32.mrb[0].mxu0
        %4683 = vmatprep.mubr.bf16.mxu0 0
        %4684 = vmatmul.mubr.bf16.gmra.mrb[0].mxu0 %v4530
        %v4685 = vpop.f32.mrb[0].mxu0
        %v4686 = vadd.f32 %v4553, %v4685
        %v4687 = vpop.f32.mrb[0].mxu0
        %v4688 = vpop.f32.mrb[0].mxu0
        %v4689 = vadd.f32 %v4553, %v4688
        %v4690 = vpop.f32.mrb[0].mxu0
        %4691 = vmatprep.mubr.bf16.mxu0 0
        %4692 = vmatmul.mubr.bf16.gmra.mrb[0].mxu0 %v4531
        %v4693 = vpop.f32.mrb[0].mxu0
        %v4694 = vadd.f32 %v4553, %v4693
        %v4695 = vpop.f32.mrb[0].mxu0
        %v4696 = vpop.f32.mrb[0].mxu0
        %v4697 = vadd.f32 %v4553, %v4696
        %v4698 = vpop.f32.mrb[0].mxu0
        %4699 = vdwg.mxu0
        %v4700 = vadd.f32 %v4638, %v579
        %v4701 = vadd.f32 %v4641, %v580
        %v4702 = vadd.f32 %v4646, %v581
        %v4703 = vadd.f32 %v4649, %v582
        %v4704 = vadd.f32 %v4654, %v583
        %v4705 = vadd.f32 %v4657, %v584
        %v4706 = vadd.f32 %v4662, %v585
        %v4707 = vadd.f32 %v4665, %v586
        %v4708 = vadd.f32 %v4670, %v587
        %v4709 = vadd.f32 %v4673, %v588
        %v4710 = vadd.f32 %v4678, %v589
        %v4711 = vadd.f32 %v4681, %v590
        %v4712 = vadd.f32 %v4686, %v591
        %v4713 = vadd.f32 %v4689, %v592
        %v4714 = vadd.f32 %v4694, %v593
        %v4715 = vadd.f32 %v4697, %v594
        %v4716 = vld [vmem:[%s9] sm:$0x1]
        %v4717 = vld [vmem:[%s10] sm:$0x1]
        %4718 = vadd.xlane.f32.xlu0 %v4700
        %v4719 = vpop.xlane.xlu0 %4718
        %4720 = vadd.xlane.f32.xlu0 %v4701
        %v4721 = vpop.xlane.xlu0 %4720
        %4722 = vadd.xlane.f32.xlu0 %v4702
        %v4723 = vpop.xlane.xlu0 %4722
        %4724 = vadd.xlane.f32.xlu0 %v4703
        %v4725 = vpop.xlane.xlu0 %4724
        %4726 = vadd.xlane.f32.xlu0 %v4704
        %v4727 = vpop.xlane.xlu0 %4726
        %4728 = vadd.xlane.f32.xlu0 %v4705
        %v4729 = vpop.xlane.xlu0 %4728
        %4730 = vadd.xlane.f32.xlu0 %v4706
        %v4731 = vpop.xlane.xlu0 %4730
        %4732 = vadd.xlane.f32.xlu0 %v4707
        %v4733 = vpop.xlane.xlu0 %4732
        %4734 = vadd.xlane.f32.xlu0 %v4708
        %v4735 = vpop.xlane.xlu0 %4734
        %4736 = vadd.xlane.f32.xlu0 %v4709
        %v4737 = vpop.xlane.xlu0 %4736
        %4738 = vadd.xlane.f32.xlu0 %v4710
        %v4739 = vpop.xlane.xlu0 %4738
        %4740 = vadd.xlane.f32.xlu0 %v4711
        %v4741 = vpop.xlane.xlu0 %4740
        %4742 = vadd.xlane.f32.xlu0 %v4712
        %v4743 = vpop.xlane.xlu0 %4742
        %4744 = vadd.xlane.f32.xlu0 %v4713
        %v4745 = vpop.xlane.xlu0 %4744
        %4746 = vadd.xlane.f32.xlu0 %v4714
        %v4747 = vpop.xlane.xlu0 %4746
        %4748 = vadd.xlane.f32.xlu0 %v4715
        %v4749 = vpop.xlane.xlu0 %4748
        %v4750 = vmul.f32 %v4719, %v629
        %v4751 = vmul.f32 %v4721, %v629
        %v4752 = vmul.f32 %v4723, %v629
        %v4753 = vmul.f32 %v4725, %v629
        %v4754 = vmul.f32 %v4727, %v629
        %v4755 = vmul.f32 %v4729, %v629
        %v4756 = vmul.f32 %v4731, %v629
        %v4757 = vmul.f32 %v4733, %v629
        %v4758 = vmul.f32 %v4735, %v629
        %v4759 = vmul.f32 %v4737, %v629
        %v4760 = vmul.f32 %v4739, %v629
        %v4761 = vmul.f32 %v4741, %v629
        %v4762 = vmul.f32 %v4743, %v629
        %v4763 = vmul.f32 %v4745, %v629
        %v4764 = vmul.f32 %v4747, %v629
        %v4765 = vmul.f32 %v4749, %v629
        %v4766 = vsub.f32 %v4700, %v4750
        %v4767 = vsub.f32 %v4701, %v4751
        %v4768 = vsub.f32 %v4702, %v4752
        %v4769 = vsub.f32 %v4703, %v4753
        %v4770 = vsub.f32 %v4704, %v4754
        %v4771 = vsub.f32 %v4705, %v4755
        %v4772 = vsub.f32 %v4706, %v4756
        %v4773 = vsub.f32 %v4707, %v4757
        %v4774 = vsub.f32 %v4708, %v4758
        %v4775 = vsub.f32 %v4709, %v4759
        %v4776 = vsub.f32 %v4710, %v4760
        %v4777 = vsub.f32 %v4711, %v4761
        %v4778 = vsub.f32 %v4712, %v4762
        %v4779 = vsub.f32 %v4713, %v4763
        %v4780 = vsub.f32 %v4714, %v4764
        %v4781 = vsub.f32 %v4715, %v4765
        %v4782 = vmul.f32 %v4766, %v4766
        %v4783 = vmul.f32 %v4767, %v4767
        %v4784 = vmul.f32 %v4768, %v4768
        %v4785 = vmul.f32 %v4769, %v4769
        %v4786 = vmul.f32 %v4770, %v4770
        %v4787 = vmul.f32 %v4771, %v4771
        %v4788 = vmul.f32 %v4772, %v4772
        %v4789 = vmul.f32 %v4773, %v4773
        %v4790 = vmul.f32 %v4774, %v4774
        %v4791 = vmul.f32 %v4775, %v4775
        %v4792 = vmul.f32 %v4776, %v4776
        %v4793 = vmul.f32 %v4777, %v4777
        %v4794 = vmul.f32 %v4778, %v4778
        %v4795 = vmul.f32 %v4779, %v4779
        %v4796 = vmul.f32 %v4780, %v4780
        %v4797 = vmul.f32 %v4781, %v4781
        %4798 = vadd.xlane.f32.xlu0 %v4782
        %v4799 = vpop.xlane.xlu0 %4798
        %4800 = vadd.xlane.f32.xlu0 %v4783
        %v4801 = vpop.xlane.xlu0 %4800
        %4802 = vadd.xlane.f32.xlu0 %v4784
        %v4803 = vpop.xlane.xlu0 %4802
        %4804 = vadd.xlane.f32.xlu0 %v4785
        %v4805 = vpop.xlane.xlu0 %4804
        %4806 = vadd.xlane.f32.xlu0 %v4786
        %v4807 = vpop.xlane.xlu0 %4806
        %4808 = vadd.xlane.f32.xlu0 %v4787
        %v4809 = vpop.xlane.xlu0 %4808
        %4810 = vadd.xlane.f32.xlu0 %v4788
        %v4811 = vpop.xlane.xlu0 %4810
        %4812 = vadd.xlane.f32.xlu0 %v4789
        %v4813 = vpop.xlane.xlu0 %4812
        %4814 = vadd.xlane.f32.xlu0 %v4790
        %v4815 = vpop.xlane.xlu0 %4814
        %4816 = vadd.xlane.f32.xlu0 %v4791
        %v4817 = vpop.xlane.xlu0 %4816
        %4818 = vadd.xlane.f32.xlu0 %v4792
        %v4819 = vpop.xlane.xlu0 %4818
        %4820 = vadd.xlane.f32.xlu0 %v4793
        %v4821 = vpop.xlane.xlu0 %4820
        %4822 = vadd.xlane.f32.xlu0 %v4794
        %v4823 = vpop.xlane.xlu0 %4822
        %4824 = vadd.xlane.f32.xlu0 %v4795
        %v4825 = vpop.xlane.xlu0 %4824
        %4826 = vadd.xlane.f32.xlu0 %v4796
        %v4827 = vpop.xlane.xlu0 %4826
        %4828 = vadd.xlane.f32.xlu0 %v4797
        %v4829 = vpop.xlane.xlu0 %4828
        %v4830 = vmul.f32 %v4799, %v629
        %v4831 = vmul.f32 %v4801, %v629
        %v4832 = vmul.f32 %v4803, %v629
        %v4833 = vmul.f32 %v4805, %v629
        %v4834 = vmul.f32 %v4807, %v629
        %v4835 = vmul.f32 %v4809, %v629
        %v4836 = vmul.f32 %v4811, %v629
        %v4837 = vmul.f32 %v4813, %v629
        %v4838 = vmul.f32 %v4815, %v629
        %v4839 = vmul.f32 %v4817, %v629
        %v4840 = vmul.f32 %v4819, %v629
        %v4841 = vmul.f32 %v4821, %v629
        %v4842 = vmul.f32 %v4823, %v629
        %v4843 = vmul.f32 %v4825, %v629
        %v4844 = vmul.f32 %v4827, %v629
        %v4845 = vmul.f32 %v4829, %v629
        %v4846 = vadd.f32 %v4830, 1e-05
        %v4847 = vadd.f32 %v4831, 1e-05
        %v4848 = vadd.f32 %v4832, 1e-05
        %v4849 = vadd.f32 %v4833, 1e-05
        %v4850 = vadd.f32 %v4834, 1e-05
        %v4851 = vadd.f32 %v4835, 1e-05
        %v4852 = vadd.f32 %v4836, 1e-05
        %v4853 = vadd.f32 %v4837, 1e-05
        %v4854 = vadd.f32 %v4838, 1e-05
        %v4855 = vadd.f32 %v4839, 1e-05
        %v4856 = vadd.f32 %v4840, 1e-05
        %v4857 = vadd.f32 %v4841, 1e-05
        %v4858 = vadd.f32 %v4842, 1e-05
        %v4859 = vadd.f32 %v4843, 1e-05
        %v4860 = vadd.f32 %v4844, 1e-05
        %v4861 = vadd.f32 %v4845, 1e-05
        %v4862 = vrsqrt.pop %v4846
        %v4863 = vrsqrt.pop %v4847
        %v4864 = vrsqrt.pop %v4848
        %v4865 = vrsqrt.pop %v4849
        %v4866 = vrsqrt.pop %v4850
        %v4867 = vrsqrt.pop %v4851
        %v4868 = vrsqrt.pop %v4852
        %v4869 = vrsqrt.pop %v4853
        %v4870 = vrsqrt.pop %v4854
        %v4871 = vrsqrt.pop %v4855
        %v4872 = vrsqrt.pop %v4856
        %v4873 = vrsqrt.pop %v4857
        %v4874 = vrsqrt.pop %v4858
        %v4875 = vrsqrt.pop %v4859
        %v4876 = vrsqrt.pop %v4860
        %v4877 = vrsqrt.pop %v4861
        %v4878 = vmul.f32 %v4766, %v4862
        %v4879 = vmul.f32 %v4767, %v4863
        %v4880 = vmul.f32 %v4768, %v4864
        %v4881 = vmul.f32 %v4769, %v4865
        %v4882 = vmul.f32 %v4770, %v4866
        %v4883 = vmul.f32 %v4771, %v4867
        %v4884 = vmul.f32 %v4772, %v4868
        %v4885 = vmul.f32 %v4773, %v4869
        %v4886 = vmul.f32 %v4774, %v4870
        %v4887 = vmul.f32 %v4775, %v4871
        %v4888 = vmul.f32 %v4776, %v4872
        %v4889 = vmul.f32 %v4777, %v4873
        %v4890 = vmul.f32 %v4778, %v4874
        %v4891 = vmul.f32 %v4779, %v4875
        %v4892 = vmul.f32 %v4780, %v4876
        %v4893 = vmul.f32 %v4781, %v4877
        %v4895 = vlaneseq
        %v4896 = vshrl.u32 %v4895, 7
        %v4897 = vsub.s32 0, %v4896
        %v4898 = vrot.slane %v4716, %v4897
        %v4900 = vmul.f32 %v4878, %v4898
        %v4901 = vmul.f32 %v4879, %v4898
        %v4902 = vmul.f32 %v4880, %v4898
        %v4903 = vmul.f32 %v4881, %v4898
        %v4904 = vmul.f32 %v4882, %v4898
        %v4905 = vmul.f32 %v4883, %v4898
        %v4906 = vmul.f32 %v4884, %v4898
        %v4907 = vmul.f32 %v4885, %v4898
        %v4908 = vmul.f32 %v4886, %v4898
        %v4909 = vmul.f32 %v4887, %v4898
        %v4910 = vmul.f32 %v4888, %v4898
        %v4911 = vmul.f32 %v4889, %v4898
        %v4912 = vmul.f32 %v4890, %v4898
        %v4913 = vmul.f32 %v4891, %v4898
        %v4914 = vmul.f32 %v4892, %v4898
        %v4915 = vmul.f32 %v4893, %v4898
        %v4917 = vlaneseq
        %v4918 = vshrl.u32 %v4917, 7
        %v4919 = vsub.s32 0, %v4918
        %v4920 = vrot.slane %v4717, %v4919
        %v4922 = vadd.f32 %v4900, %v4920
        %v4923 = vadd.f32 %v4901, %v4920
        %v4924 = vadd.f32 %v4902, %v4920
        %v4925 = vadd.f32 %v4903, %v4920
        %v4926 = vadd.f32 %v4904, %v4920
        %v4927 = vadd.f32 %v4905, %v4920
        %v4928 = vadd.f32 %v4906, %v4920
        %v4929 = vadd.f32 %v4907, %v4920
        %v4930 = vadd.f32 %v4908, %v4920
        %v4931 = vadd.f32 %v4909, %v4920
        %v4932 = vadd.f32 %v4910, %v4920
        %v4933 = vadd.f32 %v4911, %v4920
        %v4934 = vadd.f32 %v4912, %v4920
        %v4935 = vadd.f32 %v4913, %v4920
        %v4936 = vadd.f32 %v4914, %v4920
        %v4937 = vadd.f32 %v4915, %v4920
        %v4938 = vpack.c.bf16 %v4923, %v4922
        %v4939 = vpack.c.bf16 %v4925, %v4924
        %v4940 = vpack.c.bf16 %v4927, %v4926
        %v4941 = vpack.c.bf16 %v4929, %v4928
        %v4942 = vpack.c.bf16 %v4931, %v4930
        %v4943 = vpack.c.bf16 %v4933, %v4932
        %v4944 = vpack.c.bf16 %v4935, %v4934
        %v4945 = vpack.c.bf16 %v4937, %v4936
        %v4946 = vld [vmem:[#allocation8] sm:$0xff]
        %v4947 = vld [vmem:[#allocation8 + $0x8] sm:$0xff]
        %v4948 = vld [vmem:[#allocation8 + $0x10] sm:$0xff]
        %v4949 = vld [vmem:[#allocation8 + $0x18] sm:$0xff]
        %v4950 = vld [vmem:[#allocation8 + $0x20] sm:$0xff]
        %v4951 = vld [vmem:[#allocation8 + $0x28] sm:$0xff]
        %v4952 = vld [vmem:[#allocation8 + $0x30] sm:$0xff]
        %v4953 = vld [vmem:[#allocation8 + $0x38] sm:$0xff]
        %v4954 = vld [vmem:[#allocation8 + $0x40] sm:$0xff]
        %v4955 = vld [vmem:[#allocation8 + $0x48] sm:$0xff]
        %v4956 = vld [vmem:[#allocation8 + $0x50] sm:$0xff]
        %v4957 = vld [vmem:[#allocation8 + $0x58] sm:$0xff]
        %v4958 = vld [vmem:[#allocation8 + $0x60] sm:$0xff]
        %v4959 = vld [vmem:[#allocation8 + $0x68] sm:$0xff]
        %v4960 = vld [vmem:[#allocation8 + $0x70] sm:$0xff]
        %v4961 = vld [vmem:[#allocation8 + $0x78] sm:$0xff]
        %v4962 = vld [vmem:[#allocation8 + $0x80] sm:$0xff]
        %v4963 = vld [vmem:[#allocation8 + $0x88] sm:$0xff]
        %v4964 = vld [vmem:[#allocation8 + $0x90] sm:$0xff]
        %v4965 = vld [vmem:[#allocation8 + $0x98] sm:$0xff]
        %v4966 = vld [vmem:[#allocation8 + $0xa0] sm:$0xff]
        %v4967 = vld [vmem:[#allocation8 + $0xa8] sm:$0xff]
        %v4968 = vld [vmem:[#allocation8 + $0xb0] sm:$0xff]
        %v4969 = vld [vmem:[#allocation8 + $0xb8] sm:$0xff]
        %v4970 = vld [vmem:[#allocation8 + $0xc0] sm:$0xff]
        %v4971 = vld [vmem:[#allocation8 + $0xc8] sm:$0xff]
        %v4972 = vld [vmem:[#allocation8 + $0xd0] sm:$0xff]
        %v4973 = vld [vmem:[#allocation8 + $0xd8] sm:$0xff]
        %v4974 = vld [vmem:[#allocation8 + $0xe0] sm:$0xff]
        %v4975 = vld [vmem:[#allocation8 + $0xe8] sm:$0xff]
        %v4976 = vld [vmem:[#allocation8 + $0xf0] sm:$0xff]
        %v4977 = vld [vmem:[#allocation8 + $0xf8] sm:$0xff]
        %v4978 = vld [vmem:[%s12] sm:$0xf]
        %v4980 = vlaneseq
        %v4981 = vshrl.u32 %v4980, 7
        %v4982 = vsub.s32 0, %v4981
        %v4983 = vrot.slane %v4978, %v4982
        %v4984 = vlaneseq
        %v4985 = vshrl.u32 %v4984, 7
        %v4986 = vsub.s32 1, %v4985
        %v4987 = vrot.slane %v4978, %v4986
        %v4988 = vlaneseq
        %v4989 = vshrl.u32 %v4988, 7
        %v4990 = vsub.s32 2, %v4989
        %v4991 = vrot.slane %v4978, %v4990
        %v4992 = vlaneseq
        %v4993 = vshrl.u32 %v4992, 7
        %v4994 = vsub.s32 3, %v4993
        %v4995 = vrot.slane %v4978, %v4994
        %v5032 = vunpack.c.l.b16 %v4946
        %v5033 = vunpack.c.h.b16 %v4946
        %v5034 = vunpack.c.l.b16 %v4947
        %v5035 = vunpack.c.h.b16 %v4947
        %v5036 = vunpack.c.l.b16 %v4948
        %v5037 = vunpack.c.h.b16 %v4948
        %v5038 = vunpack.c.l.b16 %v4949
        %v5039 = vunpack.c.h.b16 %v4949
        %v5040 = vunpack.c.l.b16 %v4950
        %v5041 = vunpack.c.h.b16 %v4950
        %v5042 = vunpack.c.l.b16 %v4951
        %v5043 = vunpack.c.h.b16 %v4951
        %v5044 = vunpack.c.l.b16 %v4952
        %v5045 = vunpack.c.h.b16 %v4952
        %v5046 = vunpack.c.l.b16 %v4953
        %v5047 = vunpack.c.h.b16 %v4953
        %v5048 = vunpack.c.l.b16 %v4954
        %v5049 = vunpack.c.h.b16 %v4954
        %v5050 = vunpack.c.l.b16 %v4955
        %v5051 = vunpack.c.h.b16 %v4955
        %v5052 = vunpack.c.l.b16 %v4956
        %v5053 = vunpack.c.h.b16 %v4956
        %v5054 = vunpack.c.l.b16 %v4957
        %v5055 = vunpack.c.h.b16 %v4957
        %v5056 = vunpack.c.l.b16 %v4958
        %v5057 = vunpack.c.h.b16 %v4958
        %v5058 = vunpack.c.l.b16 %v4959
        %v5059 = vunpack.c.h.b16 %v4959
        %v5060 = vunpack.c.l.b16 %v4960
        %v5061 = vunpack.c.h.b16 %v4960
        %v5062 = vunpack.c.l.b16 %v4961
        %v5063 = vunpack.c.h.b16 %v4961
        %v5064 = vunpack.c.l.b16 %v4962
        %v5065 = vunpack.c.h.b16 %v4962
        %v5066 = vunpack.c.l.b16 %v4963
        %v5067 = vunpack.c.h.b16 %v4963
        %v5068 = vunpack.c.l.b16 %v4964
        %v5069 = vunpack.c.h.b16 %v4964
        %v5070 = vunpack.c.l.b16 %v4965
        %v5071 = vunpack.c.h.b16 %v4965
        %v5072 = vunpack.c.l.b16 %v4966
        %v5073 = vunpack.c.h.b16 %v4966
        %v5074 = vunpack.c.l.b16 %v4967
        %v5075 = vunpack.c.h.b16 %v4967
        %v5076 = vunpack.c.l.b16 %v4968
        %v5077 = vunpack.c.h.b16 %v4968
        %v5078 = vunpack.c.l.b16 %v4969
        %v5079 = vunpack.c.h.b16 %v4969
        %v5080 = vunpack.c.l.b16 %v4970
        %v5081 = vunpack.c.h.b16 %v4970
        %v5082 = vunpack.c.l.b16 %v4971
        %v5083 = vunpack.c.h.b16 %v4971
        %v5084 = vunpack.c.l.b16 %v4972
        %v5085 = vunpack.c.h.b16 %v4972
        %v5086 = vunpack.c.l.b16 %v4973
        %v5087 = vunpack.c.h.b16 %v4973
        %v5088 = vunpack.c.l.b16 %v4974
        %v5089 = vunpack.c.h.b16 %v4974
        %v5090 = vunpack.c.l.b16 %v4975
        %v5091 = vunpack.c.h.b16 %v4975
        %v5092 = vunpack.c.l.b16 %v4976
        %v5093 = vunpack.c.h.b16 %v4976
        %v5094 = vunpack.c.l.b16 %v4977
        %v5095 = vunpack.c.h.b16 %v4977
        %v5096 = vpack.c.b16 %v5036, %v5032
        %v5097 = vpack.c.b16 %v5037, %v5033
        %v5098 = vpack.c.b16 %v5038, %v5034
        %v5099 = vpack.c.b16 %v5039, %v5035
        %v5100 = vpack.c.b16 %v5044, %v5040
        %v5101 = vpack.c.b16 %v5045, %v5041
        %v5102 = vpack.c.b16 %v5046, %v5042
        %v5103 = vpack.c.b16 %v5047, %v5043
        %v5104 = vpack.c.b16 %v5052, %v5048
        %v5105 = vpack.c.b16 %v5053, %v5049
        %v5106 = vpack.c.b16 %v5054, %v5050
        %v5107 = vpack.c.b16 %v5055, %v5051
        %v5108 = vpack.c.b16 %v5060, %v5056
        %v5109 = vpack.c.b16 %v5061, %v5057
        %v5110 = vpack.c.b16 %v5062, %v5058
        %v5111 = vpack.c.b16 %v5063, %v5059
        %v5112 = vpack.c.b16 %v5068, %v5064
        %v5113 = vpack.c.b16 %v5069, %v5065
        %v5114 = vpack.c.b16 %v5070, %v5066
        %v5115 = vpack.c.b16 %v5071, %v5067
        %v5116 = vpack.c.b16 %v5076, %v5072
        %v5117 = vpack.c.b16 %v5077, %v5073
        %v5118 = vpack.c.b16 %v5078, %v5074
        %v5119 = vpack.c.b16 %v5079, %v5075
        %v5120 = vpack.c.b16 %v5084, %v5080
        %v5121 = vpack.c.b16 %v5085, %v5081
        %v5122 = vpack.c.b16 %v5086, %v5082
        %v5123 = vpack.c.b16 %v5087, %v5083
        %v5124 = vpack.c.b16 %v5092, %v5088
        %v5125 = vpack.c.b16 %v5093, %v5089
        %v5126 = vpack.c.b16 %v5094, %v5090
        %v5127 = vpack.c.b16 %v5095, %v5091
        %5160 = vmatprep.subr.bf16.mxu0 %v5097
        %5161 = vmatpush1.bf16.msra.mxu0 %v5096
        %5162 = vmatprep.subr.bf16.mxu0 %v5101
        %5163 = vmatpush1.bf16.msra.mxu0 %v5100
        %5164 = vmatprep.subr.bf16.mxu0 %v5105
        %5165 = vmatpush1.bf16.msra.mxu0 %v5104
        %5166 = vmatprep.subr.bf16.mxu0 %v5109
        %5167 = vmatpush1.bf16.msra.mxu0 %v5108
        %5168 = vmatprep.subr.bf16.mxu0 %v5113
        %5169 = vmatpush1.bf16.msra.mxu0 %v5112
        %5170 = vmatprep.subr.bf16.mxu0 %v5117
        %5171 = vmatpush1.bf16.msra.mxu0 %v5116
        %5172 = vmatprep.subr.bf16.mxu0 %v5121
        %5173 = vmatpush1.bf16.msra.mxu0 %v5120
        %5174 = vmatprep.subr.bf16.mxu0 %v5125
        %5175 = vmatpush1.bf16.msra.mxu0 %v5124
        %5176 = vmatprep.subr.bf16.mxu0 0
        %5177 = vmatpush1.bf16.msra.mxu0 0
        %5178 = vmatprep.subr.bf16.mxu0 0
        %5179 = vmatpush1.bf16.msra.mxu0 0
        %5180 = vmatprep.subr.bf16.mxu0 0
        %5181 = vmatpush1.bf16.msra.mxu0 0
        %5182 = vmatprep.subr.bf16.mxu0 0
        %5183 = vmatpush1.bf16.msra.mxu0 0
        %5184 = vmatprep.subr.bf16.mxu0 0
        %5185 = vmatpush1.bf16.msra.mxu0 0
        %5186 = vmatprep.subr.bf16.mxu0 0
        %5187 = vmatpush1.bf16.msra.mxu0 0
        %5188 = vmatprep.subr.bf16.mxu0 0
        %5189 = vmatpush1.bf16.msra.mxu0 0
        %5190 = vmatprep.subr.bf16.mxu0 0
        %5191 = vmatpush1.bf16.msra.mxu0 0
        %5192 = vmatprep.mubr.bf16.mxu0 0
        %5193 = vmatmul.mubr.bf16.gmra.mrb[0].mxu0 %v4938
        %v5194 = vpop.f32.mrb[0].mxu0
        %v5195 = vadd.f32 %v4983, %v5194
        %v5196 = vpop.f32.mrb[0].mxu0
        %v5197 = vadd.f32 %v4987, %v5196
        %v5198 = vpop.f32.mrb[0].mxu0
        %v5199 = vadd.f32 %v4983, %v5198
        %v5200 = vpop.f32.mrb[0].mxu0
        %v5201 = vadd.f32 %v4987, %v5200
        %5202 = vmatprep.mubr.bf16.mxu0 0
        %5203 = vmatmul.mubr.bf16.gmra.mrb[0].mxu0 %v4939
        %v5204 = vpop.f32.mrb[0].mxu0
        %v5205 = vadd.f32 %v4983, %v5204
        %v5206 = vpop.f32.mrb[0].mxu0
        %v5207 = vadd.f32 %v4987, %v5206
        %v5208 = vpop.f32.mrb[0].mxu0
        %v5209 = vadd.f32 %v4983, %v5208
        %v5210 = vpop.f32.mrb[0].mxu0
        %v5211 = vadd.f32 %v4987, %v5210
        %5212 = vmatprep.mubr.bf16.mxu0 0
        %5213 = vmatmul.mubr.bf16.gmra.mrb[0].mxu0 %v4940
        %v5214 = vpop.f32.mrb[0].mxu0
        %v5215 = vadd.f32 %v4983, %v5214
        %v5216 = vpop.f32.mrb[0].mxu0
        %v5217 = vadd.f32 %v4987, %v5216
        %v5218 = vpop.f32.mrb[0].mxu0
        %v5219 = vadd.f32 %v4983, %v5218
        %v5220 = vpop.f32.mrb[0].mxu0
        %v5221 = vadd.f32 %v4987, %v5220
        %5222 = vmatprep.mubr.bf16.mxu0 0
        %5223 = vmatmul.mubr.bf16.gmra.mrb[0].mxu0 %v4941
        %v5224 = vpop.f32.mrb[0].mxu0
        %v5225 = vadd.f32 %v4983, %v5224
        %v5226 = vpop.f32.mrb[0].mxu0
        %v5227 = vadd.f32 %v4987, %v5226
        %v5228 = vpop.f32.mrb[0].mxu0
        %v5229 = vadd.f32 %v4983, %v5228
        %v5230 = vpop.f32.mrb[0].mxu0
        %v5231 = vadd.f32 %v4987, %v5230
        %5232 = vmatprep.mubr.bf16.mxu0 0
        %5233 = vmatmul.mubr.bf16.gmra.mrb[0].mxu0 %v4942
        %v5234 = vpop.f32.mrb[0].mxu0
        %v5235 = vadd.f32 %v4983, %v5234
        %v5236 = vpop.f32.mrb[0].mxu0
        %v5237 = vadd.f32 %v4987, %v5236
        %v5238 = vpop.f32.mrb[0].mxu0
        %v5239 = vadd.f32 %v4983, %v5238
        %v5240 = vpop.f32.mrb[0].mxu0
        %v5241 = vadd.f32 %v4987, %v5240
        %5242 = vmatprep.mubr.bf16.mxu0 0
        %5243 = vmatmul.mubr.bf16.gmra.mrb[0].mxu0 %v4943
        %v5244 = vpop.f32.mrb[0].mxu0
        %v5245 = vadd.f32 %v4983, %v5244
        %v5246 = vpop.f32.mrb[0].mxu0
        %v5247 = vadd.f32 %v4987, %v5246
        %v5248 = vpop.f32.mrb[0].mxu0
        %v5249 = vadd.f32 %v4983, %v5248
        %v5250 = vpop.f32.mrb[0].mxu0
        %v5251 = vadd.f32 %v4987, %v5250
        %5252 = vmatprep.mubr.bf16.mxu0 0
        %5253 = vmatmul.mubr.bf16.gmra.mrb[0].mxu0 %v4944
        %v5254 = vpop.f32.mrb[0].mxu0
        %v5255 = vadd.f32 %v4983, %v5254
        %v5256 = vpop.f32.mrb[0].mxu0
        %v5257 = vadd.f32 %v4987, %v5256
        %v5258 = vpop.f32.mrb[0].mxu0
        %v5259 = vadd.f32 %v4983, %v5258
        %v5260 = vpop.f32.mrb[0].mxu0
        %v5261 = vadd.f32 %v4987, %v5260
        %5262 = vmatprep.mubr.bf16.mxu0 0
        %5263 = vmatmul.mubr.bf16.gmra.mrb[0].mxu0 %v4945
        %v5264 = vpop.f32.mrb[0].mxu0
        %v5265 = vadd.f32 %v4983, %v5264
        %v5266 = vpop.f32.mrb[0].mxu0
        %v5267 = vadd.f32 %v4987, %v5266
        %v5268 = vpop.f32.mrb[0].mxu0
        %v5269 = vadd.f32 %v4983, %v5268
        %v5270 = vpop.f32.mrb[0].mxu0
        %v5271 = vadd.f32 %v4987, %v5270
        %5272 = vdwg.mxu0
        %5273 = vmatprep.subr.bf16.mxu0 %v5099
        %5274 = vmatpush1.bf16.msra.mxu0 %v5098
        %5275 = vmatprep.subr.bf16.mxu0 %v5103
        %5276 = vmatpush1.bf16.msra.mxu0 %v5102
        %5277 = vmatprep.subr.bf16.mxu0 %v5107
        %5278 = vmatpush1.bf16.msra.mxu0 %v5106
        %5279 = vmatprep.subr.bf16.mxu0 %v5111
        %5280 = vmatpush1.bf16.msra.mxu0 %v5110
        %5281 = vmatprep.subr.bf16.mxu0 %v5115
        %5282 = vmatpush1.bf16.msra.mxu0 %v5114
        %5283 = vmatprep.subr.bf16.mxu0 %v5119
        %5284 = vmatpush1.bf16.msra.mxu0 %v5118
        %5285 = vmatprep.subr.bf16.mxu0 %v5123
        %5286 = vmatpush1.bf16.msra.mxu0 %v5122
        %5287 = vmatprep.subr.bf16.mxu0 %v5127
        %5288 = vmatpush1.bf16.msra.mxu0 %v5126
        %5289 = vmatprep.subr.bf16.mxu0 0
        %5290 = vmatpush1.bf16.msra.mxu0 0
        %5291 = vmatprep.subr.bf16.mxu0 0
        %5292 = vmatpush1.bf16.msra.mxu0 0
        %5293 = vmatprep.subr.bf16.mxu0 0
        %5294 = vmatpush1.bf16.msra.mxu0 0
        %5295 = vmatprep.subr.bf16.mxu0 0
        %5296 = vmatpush1.bf16.msra.mxu0 0
        %5297 = vmatprep.subr.bf16.mxu0 0
        %5298 = vmatpush1.bf16.msra.mxu0 0
        %5299 = vmatprep.subr.bf16.mxu0 0
        %5300 = vmatpush1.bf16.msra.mxu0 0
        %5301 = vmatprep.subr.bf16.mxu0 0
        %5302 = vmatpush1.bf16.msra.mxu0 0
        %5303 = vmatprep.subr.bf16.mxu0 0
        %5304 = vmatpush1.bf16.msra.mxu0 0
        %5305 = vmatprep.mubr.bf16.mxu0 0
        %5306 = vmatmul.mubr.bf16.gmra.mrb[0].mxu0 %v4938
        %v5307 = vpop.f32.mrb[0].mxu0
        %v5308 = vadd.f32 %v4991, %v5307
        %v5309 = vpop.f32.mrb[0].mxu0
        %v5310 = vadd.f32 %v4995, %v5309
        %v5311 = vpop.f32.mrb[0].mxu0
        %v5312 = vadd.f32 %v4991, %v5311
        %v5313 = vpop.f32.mrb[0].mxu0
        %v5314 = vadd.f32 %v4995, %v5313
        %5315 = vmatprep.mubr.bf16.mxu0 0
        %5316 = vmatmul.mubr.bf16.gmra.mrb[0].mxu0 %v4939
        %v5317 = vpop.f32.mrb[0].mxu0
        %v5318 = vadd.f32 %v4991, %v5317
        %v5319 = vpop.f32.mrb[0].mxu0
        %v5320 = vadd.f32 %v4995, %v5319
        %v5321 = vpop.f32.mrb[0].mxu0
        %v5322 = vadd.f32 %v4991, %v5321
        %v5323 = vpop.f32.mrb[0].mxu0
        %v5324 = vadd.f32 %v4995, %v5323
        %5325 = vmatprep.mubr.bf16.mxu0 0
        %5326 = vmatmul.mubr.bf16.gmra.mrb[0].mxu0 %v4940
        %v5327 = vpop.f32.mrb[0].mxu0
        %v5328 = vadd.f32 %v4991, %v5327
        %v5329 = vpop.f32.mrb[0].mxu0
        %v5330 = vadd.f32 %v4995, %v5329
        %v5331 = vpop.f32.mrb[0].mxu0
        %v5332 = vadd.f32 %v4991, %v5331
        %v5333 = vpop.f32.mrb[0].mxu0
        %v5334 = vadd.f32 %v4995, %v5333
        %5335 = vmatprep.mubr.bf16.mxu0 0
        %5336 = vmatmul.mubr.bf16.gmra.mrb[0].mxu0 %v4941
        %v5337 = vpop.f32.mrb[0].mxu0
        %v5338 = vadd.f32 %v4991, %v5337
        %v5339 = vpop.f32.mrb[0].mxu0
        %v5340 = vadd.f32 %v4995, %v5339
        %v5341 = vpop.f32.mrb[0].mxu0
        %v5342 = vadd.f32 %v4991, %v5341
        %v5343 = vpop.f32.mrb[0].mxu0
        %v5344 = vadd.f32 %v4995, %v5343
        %5345 = vmatprep.mubr.bf16.mxu0 0
        %5346 = vmatmul.mubr.bf16.gmra.mrb[0].mxu0 %v4942
        %v5347 = vpop.f32.mrb[0].mxu0
        %v5348 = vadd.f32 %v4991, %v5347
        %v5349 = vpop.f32.mrb[0].mxu0
        %v5350 = vadd.f32 %v4995, %v5349
        %v5351 = vpop.f32.mrb[0].mxu0
        %v5352 = vadd.f32 %v4991, %v5351
        %v5353 = vpop.f32.mrb[0].mxu0
        %v5354 = vadd.f32 %v4995, %v5353
        %5355 = vmatprep.mubr.bf16.mxu0 0
        %5356 = vmatmul.mubr.bf16.gmra.mrb[0].mxu0 %v4943
        %v5357 = vpop.f32.mrb[0].mxu0
        %v5358 = vadd.f32 %v4991, %v5357
        %v5359 = vpop.f32.mrb[0].mxu0
        %v5360 = vadd.f32 %v4995, %v5359
        %v5361 = vpop.f32.mrb[0].mxu0
        %v5362 = vadd.f32 %v4991, %v5361
        %v5363 = vpop.f32.mrb[0].mxu0
        %v5364 = vadd.f32 %v4995, %v5363
        %5365 = vmatprep.mubr.bf16.mxu0 0
        %5366 = vmatmul.mubr.bf16.gmra.mrb[0].mxu0 %v4944
        %v5367 = vpop.f32.mrb[0].mxu0
        %v5368 = vadd.f32 %v4991, %v5367
        %v5369 = vpop.f32.mrb[0].mxu0
        %v5370 = vadd.f32 %v4995, %v5369
        %v5371 = vpop.f32.mrb[0].mxu0
        %v5372 = vadd.f32 %v4991, %v5371
        %v5373 = vpop.f32.mrb[0].mxu0
        %v5374 = vadd.f32 %v4995, %v5373
        %5375 = vmatprep.mubr.bf16.mxu0 0
        %5376 = vmatmul.mubr.bf16.gmra.mrb[0].mxu0 %v4945
        %v5377 = vpop.f32.mrb[0].mxu0
        %v5378 = vadd.f32 %v4991, %v5377
        %v5379 = vpop.f32.mrb[0].mxu0
        %v5380 = vadd.f32 %v4995, %v5379
        %v5381 = vpop.f32.mrb[0].mxu0
        %v5382 = vadd.f32 %v4991, %v5381
        %v5383 = vpop.f32.mrb[0].mxu0
        %v5384 = vadd.f32 %v4995, %v5383
        %5385 = vdwg.mxu0
        %v5386 = vmul.f32 %v5195, 0.5
        %v5387 = vmul.f32 %v5197, 0.5
        %v5388 = vmul.f32 %v5308, 0.5
        %v5389 = vmul.f32 %v5310, 0.5
        %v5390 = vmul.f32 %v5199, 0.5
        %v5391 = vmul.f32 %v5201, 0.5
        %v5392 = vmul.f32 %v5312, 0.5
        %v5393 = vmul.f32 %v5314, 0.5
        %v5394 = vmul.f32 %v5205, 0.5
        %v5395 = vmul.f32 %v5207, 0.5
        %v5396 = vmul.f32 %v5318, 0.5
        %v5397 = vmul.f32 %v5320, 0.5
        %v5398 = vmul.f32 %v5209, 0.5
        %v5399 = vmul.f32 %v5211, 0.5
        %v5400 = vmul.f32 %v5322, 0.5
        %v5401 = vmul.f32 %v5324, 0.5
        %v5402 = vmul.f32 %v5215, 0.5
        %v5403 = vmul.f32 %v5217, 0.5
        %v5404 = vmul.f32 %v5328, 0.5
        %v5405 = vmul.f32 %v5330, 0.5
        %v5406 = vmul.f32 %v5219, 0.5
        %v5407 = vmul.f32 %v5221, 0.5
        %v5408 = vmul.f32 %v5332, 0.5
        %v5409 = vmul.f32 %v5334, 0.5
        %v5410 = vmul.f32 %v5225, 0.5
        %v5411 = vmul.f32 %v5227, 0.5
        %v5412 = vmul.f32 %v5338, 0.5
        %v5413 = vmul.f32 %v5340, 0.5
        %v5414 = vmul.f32 %v5229, 0.5
        %v5415 = vmul.f32 %v5231, 0.5
        %v5416 = vmul.f32 %v5342, 0.5
        %v5417 = vmul.f32 %v5344, 0.5
        %v5418 = vmul.f32 %v5235, 0.5
        %v5419 = vmul.f32 %v5237, 0.5
        %v5420 = vmul.f32 %v5348, 0.5
        %v5421 = vmul.f32 %v5350, 0.5
        %v5422 = vmul.f32 %v5239, 0.5
        %v5423 = vmul.f32 %v5241, 0.5
        %v5424 = vmul.f32 %v5352, 0.5
        %v5425 = vmul.f32 %v5354, 0.5
        %v5426 = vmul.f32 %v5245, 0.5
        %v5427 = vmul.f32 %v5247, 0.5
        %v5428 = vmul.f32 %v5358, 0.5
        %v5429 = vmul.f32 %v5360, 0.5
        %v5430 = vmul.f32 %v5249, 0.5
        %v5431 = vmul.f32 %v5251, 0.5
        %v5432 = vmul.f32 %v5362, 0.5
        %v5433 = vmul.f32 %v5364, 0.5
        %v5434 = vmul.f32 %v5255, 0.5
        %v5435 = vmul.f32 %v5257, 0.5
        %v5436 = vmul.f32 %v5368, 0.5
        %v5437 = vmul.f32 %v5370, 0.5
        %v5438 = vmul.f32 %v5259, 0.5
        %v5439 = vmul.f32 %v5261, 0.5
        %v5440 = vmul.f32 %v5372, 0.5
        %v5441 = vmul.f32 %v5374, 0.5
        %v5442 = vmul.f32 %v5265, 0.5
        %v5443 = vmul.f32 %v5267, 0.5
        %v5444 = vmul.f32 %v5378, 0.5
        %v5445 = vmul.f32 %v5380, 0.5
        %v5446 = vmul.f32 %v5269, 0.5
        %v5447 = vmul.f32 %v5271, 0.5
        %v5448 = vmul.f32 %v5382, 0.5
        %v5449 = vmul.f32 %v5384, 0.5
        %v5450 = vmul.f32 %v5195, 0.70710677
        %v5451 = vmul.f32 %v5197, 0.70710677
        %v5452 = vmul.f32 %v5308, 0.70710677
        %v5453 = vmul.f32 %v5310, 0.70710677
        %v5454 = vmul.f32 %v5199, 0.70710677
        %v5455 = vmul.f32 %v5201, 0.70710677
        %v5456 = vmul.f32 %v5312, 0.70710677
        %v5457 = vmul.f32 %v5314, 0.70710677
        %v5458 = vmul.f32 %v5205, 0.70710677
        %v5459 = vmul.f32 %v5207, 0.70710677
        %v5460 = vmul.f32 %v5318, 0.70710677
        %v5461 = vmul.f32 %v5320, 0.70710677
        %v5462 = vmul.f32 %v5209, 0.70710677
        %v5463 = vmul.f32 %v5211, 0.70710677
        %v5464 = vmul.f32 %v5322, 0.70710677
        %v5465 = vmul.f32 %v5324, 0.70710677
        %v5466 = vmul.f32 %v5215, 0.70710677
        %v5467 = vmul.f32 %v5217, 0.70710677
        %v5468 = vmul.f32 %v5328, 0.70710677
        %v5469 = vmul.f32 %v5330, 0.70710677
        %v5470 = vmul.f32 %v5219, 0.70710677
        %v5471 = vmul.f32 %v5221, 0.70710677
        %v5472 = vmul.f32 %v5332, 0.70710677
        %v5473 = vmul.f32 %v5334, 0.70710677
        %v5474 = vmul.f32 %v5225, 0.70710677
        %v5475 = vmul.f32 %v5227, 0.70710677
        %v5476 = vmul.f32 %v5338, 0.70710677
        %v5477 = vmul.f32 %v5340, 0.70710677
        %v5478 = vmul.f32 %v5229, 0.70710677
        %v5479 = vmul.f32 %v5231, 0.70710677
        %v5480 = vmul.f32 %v5342, 0.70710677
        %v5481 = vmul.f32 %v5344, 0.70710677
        %v5482 = vmul.f32 %v5235, 0.70710677
        %v5483 = vmul.f32 %v5237, 0.70710677
        %v5484 = vmul.f32 %v5348, 0.70710677
        %v5485 = vmul.f32 %v5350, 0.70710677
        %v5486 = vmul.f32 %v5239, 0.70710677
        %v5487 = vmul.f32 %v5241, 0.70710677
        %v5488 = vmul.f32 %v5352, 0.70710677
        %v5489 = vmul.f32 %v5354, 0.70710677
        %v5490 = vmul.f32 %v5245, 0.70710677
        %v5491 = vmul.f32 %v5247, 0.70710677
        %v5492 = vmul.f32 %v5358, 0.70710677
        %v5493 = vmul.f32 %v5360, 0.70710677
        %v5494 = vmul.f32 %v5249, 0.70710677
        %v5495 = vmul.f32 %v5251, 0.70710677
        %v5496 = vmul.f32 %v5362, 0.70710677
        %v5497 = vmul.f32 %v5364, 0.70710677
        %v5498 = vmul.f32 %v5255, 0.70710677
        %v5499 = vmul.f32 %v5257, 0.70710677
        %v5500 = vmul.f32 %v5368, 0.70710677
        %v5501 = vmul.f32 %v5370, 0.70710677
        %v5502 = vmul.f32 %v5259, 0.70710677
        %v5503 = vmul.f32 %v5261, 0.70710677
        %v5504 = vmul.f32 %v5372, 0.70710677
        %v5505 = vmul.f32 %v5374, 0.70710677
        %v5506 = vmul.f32 %v5265, 0.70710677
        %v5507 = vmul.f32 %v5267, 0.70710677
        %v5508 = vmul.f32 %v5378, 0.70710677
        %v5509 = vmul.f32 %v5380, 0.70710677
        %v5510 = vmul.f32 %v5269, 0.70710677
        %v5511 = vmul.f32 %v5271, 0.70710677
        %v5512 = vmul.f32 %v5382, 0.70710677
        %v5513 = vmul.f32 %v5384, 0.70710677
        %v5514 = vmax.f32 %v5450, -4.0
        %v5515 = vmax.f32 %v5451, -4.0
        %v5516 = vmax.f32 %v5452, -4.0
        %v5517 = vmax.f32 %v5453, -4.0
        %v5518 = vmax.f32 %v5454, -4.0
        %v5519 = vmax.f32 %v5455, -4.0
        %v5520 = vmax.f32 %v5456, -4.0
        %v5521 = vmax.f32 %v5457, -4.0
        %v5522 = vmax.f32 %v5458, -4.0
        %v5523 = vmax.f32 %v5459, -4.0
        %v5524 = vmax.f32 %v5460, -4.0
        %v5525 = vmax.f32 %v5461, -4.0
        %v5526 = vmax.f32 %v5462, -4.0
        %v5527 = vmax.f32 %v5463, -4.0
        %v5528 = vmax.f32 %v5464, -4.0
        %v5529 = vmax.f32 %v5465, -4.0
        %v5530 = vmax.f32 %v5466, -4.0
        %v5531 = vmax.f32 %v5467, -4.0
        %v5532 = vmax.f32 %v5468, -4.0
        %v5533 = vmax.f32 %v5469, -4.0
        %v5534 = vmax.f32 %v5470, -4.0
        %v5535 = vmax.f32 %v5471, -4.0
        %v5536 = vmax.f32 %v5472, -4.0
        %v5537 = vmax.f32 %v5473, -4.0
        %v5538 = vmax.f32 %v5474, -4.0
        %v5539 = vmax.f32 %v5475, -4.0
        %v5540 = vmax.f32 %v5476, -4.0
        %v5541 = vmax.f32 %v5477, -4.0
        %v5542 = vmax.f32 %v5478, -4.0
        %v5543 = vmax.f32 %v5479, -4.0
        %v5544 = vmax.f32 %v5480, -4.0
        %v5545 = vmax.f32 %v5481, -4.0
        %v5546 = vmax.f32 %v5482, -4.0
        %v5547 = vmax.f32 %v5483, -4.0
        %v5548 = vmax.f32 %v5484, -4.0
        %v5549 = vmax.f32 %v5485, -4.0
        %v5550 = vmax.f32 %v5486, -4.0
        %v5551 = vmax.f32 %v5487, -4.0
        %v5552 = vmax.f32 %v5488, -4.0
        %v5553 = vmax.f32 %v5489, -4.0
        %v5554 = vmax.f32 %v5490, -4.0
        %v5555 = vmax.f32 %v5491, -4.0
        %v5556 = vmax.f32 %v5492, -4.0
        %v5557 = vmax.f32 %v5493, -4.0
        %v5558 = vmax.f32 %v5494, -4.0
        %v5559 = vmax.f32 %v5495, -4.0
        %v5560 = vmax.f32 %v5496, -4.0
        %v5561 = vmax.f32 %v5497, -4.0
        %v5562 = vmax.f32 %v5498, -4.0
        %v5563 = vmax.f32 %v5499, -4.0
        %v5564 = vmax.f32 %v5500, -4.0
        %v5565 = vmax.f32 %v5501, -4.0
        %v5566 = vmax.f32 %v5502, -4.0
        %v5567 = vmax.f32 %v5503, -4.0
        %v5568 = vmax.f32 %v5504, -4.0
        %v5569 = vmax.f32 %v5505, -4.0
        %v5570 = vmax.f32 %v5506, -4.0
        %v5571 = vmax.f32 %v5507, -4.0
        %v5572 = vmax.f32 %v5508, -4.0
        %v5573 = vmax.f32 %v5509, -4.0
        %v5574 = vmax.f32 %v5510, -4.0
        %v5575 = vmax.f32 %v5511, -4.0
        %v5576 = vmax.f32 %v5512, -4.0
        %v5577 = vmax.f32 %v5513, -4.0
        %v5578 = vmin.f32 %v5514, 4.0
        %v5579 = vmin.f32 %v5515, 4.0
        %v5580 = vmin.f32 %v5516, 4.0
        %v5581 = vmin.f32 %v5517, 4.0
        %v5582 = vmin.f32 %v5518, 4.0
        %v5583 = vmin.f32 %v5519, 4.0
        %v5584 = vmin.f32 %v5520, 4.0
        %v5585 = vmin.f32 %v5521, 4.0
        %v5586 = vmin.f32 %v5522, 4.0
        %v5587 = vmin.f32 %v5523, 4.0
        %v5588 = vmin.f32 %v5524, 4.0
        %v5589 = vmin.f32 %v5525, 4.0
        %v5590 = vmin.f32 %v5526, 4.0
        %v5591 = vmin.f32 %v5527, 4.0
        %v5592 = vmin.f32 %v5528, 4.0
        %v5593 = vmin.f32 %v5529, 4.0
        %v5594 = vmin.f32 %v5530, 4.0
        %v5595 = vmin.f32 %v5531, 4.0
        %v5596 = vmin.f32 %v5532, 4.0
        %v5597 = vmin.f32 %v5533, 4.0
        %v5598 = vmin.f32 %v5534, 4.0
        %v5599 = vmin.f32 %v5535, 4.0
        %v5600 = vmin.f32 %v5536, 4.0
        %v5601 = vmin.f32 %v5537, 4.0
        %v5602 = vmin.f32 %v5538, 4.0
        %v5603 = vmin.f32 %v5539, 4.0
        %v5604 = vmin.f32 %v5540, 4.0
        %v5605 = vmin.f32 %v5541, 4.0
        %v5606 = vmin.f32 %v5542, 4.0
        %v5607 = vmin.f32 %v5543, 4.0
        %v5608 = vmin.f32 %v5544, 4.0
        %v5609 = vmin.f32 %v5545, 4.0
        %v5610 = vmin.f32 %v5546, 4.0
        %v5611 = vmin.f32 %v5547, 4.0
        %v5612 = vmin.f32 %v5548, 4.0
        %v5613 = vmin.f32 %v5549, 4.0
        %v5614 = vmin.f32 %v5550, 4.0
        %v5615 = vmin.f32 %v5551, 4.0
        %v5616 = vmin.f32 %v5552, 4.0
        %v5617 = vmin.f32 %v5553, 4.0
        %v5618 = vmin.f32 %v5554, 4.0
        %v5619 = vmin.f32 %v5555, 4.0
        %v5620 = vmin.f32 %v5556, 4.0
        %v5621 = vmin.f32 %v5557, 4.0
        %v5622 = vmin.f32 %v5558, 4.0
        %v5623 = vmin.f32 %v5559, 4.0
        %v5624 = vmin.f32 %v5560, 4.0
        %v5625 = vmin.f32 %v5561, 4.0
        %v5626 = vmin.f32 %v5562, 4.0
        %v5627 = vmin.f32 %v5563, 4.0
        %v5628 = vmin.f32 %v5564, 4.0
        %v5629 = vmin.f32 %v5565, 4.0
        %v5630 = vmin.f32 %v5566, 4.0
        %v5631 = vmin.f32 %v5567, 4.0
        %v5632 = vmin.f32 %v5568, 4.0
        %v5633 = vmin.f32 %v5569, 4.0
        %v5634 = vmin.f32 %v5570, 4.0
        %v5635 = vmin.f32 %v5571, 4.0
        %v5636 = vmin.f32 %v5572, 4.0
        %v5637 = vmin.f32 %v5573, 4.0
        %v5638 = vmin.f32 %v5574, 4.0
        %v5639 = vmin.f32 %v5575, 4.0
        %v5640 = vmin.f32 %v5576, 4.0
        %v5641 = vmin.f32 %v5577, 4.0
        %v5642 = vmul.f32 %v5578, %v5578
        %v5643 = vmul.f32 %v5579, %v5579
        %v5644 = vmul.f32 %v5580, %v5580
        %v5645 = vmul.f32 %v5581, %v5581
        %v5646 = vmul.f32 %v5582, %v5582
        %v5647 = vmul.f32 %v5583, %v5583
        %v5648 = vmul.f32 %v5584, %v5584
        %v5649 = vmul.f32 %v5585, %v5585
        %v5650 = vmul.f32 %v5586, %v5586
        %v5651 = vmul.f32 %v5587, %v5587
        %v5652 = vmul.f32 %v5588, %v5588
        %v5653 = vmul.f32 %v5589, %v5589
        %v5654 = vmul.f32 %v5590, %v5590
        %v5655 = vmul.f32 %v5591, %v5591
        %v5656 = vmul.f32 %v5592, %v5592
        %v5657 = vmul.f32 %v5593, %v5593
        %v5658 = vmul.f32 %v5594, %v5594
        %v5659 = vmul.f32 %v5595, %v5595
        %v5660 = vmul.f32 %v5596, %v5596
        %v5661 = vmul.f32 %v5597, %v5597
        %v5662 = vmul.f32 %v5598, %v5598
        %v5663 = vmul.f32 %v5599, %v5599
        %v5664 = vmul.f32 %v5600, %v5600
        %v5665 = vmul.f32 %v5601, %v5601
        %v5666 = vmul.f32 %v5602, %v5602
        %v5667 = vmul.f32 %v5603, %v5603
        %v5668 = vmul.f32 %v5604, %v5604
        %v5669 = vmul.f32 %v5605, %v5605
        %v5670 = vmul.f32 %v5606, %v5606
        %v5671 = vmul.f32 %v5607, %v5607
        %v5672 = vmul.f32 %v5608, %v5608
        %v5673 = vmul.f32 %v5609, %v5609
        %v5674 = vmul.f32 %v5610, %v5610
        %v5675 = vmul.f32 %v5611, %v5611
        %v5676 = vmul.f32 %v5612, %v5612
        %v5677 = vmul.f32 %v5613, %v5613
        %v5678 = vmul.f32 %v5614, %v5614
        %v5679 = vmul.f32 %v5615, %v5615
        %v5680 = vmul.f32 %v5616, %v5616
        %v5681 = vmul.f32 %v5617, %v5617
        %v5682 = vmul.f32 %v5618, %v5618
        %v5683 = vmul.f32 %v5619, %v5619
        %v5684 = vmul.f32 %v5620, %v5620
        %v5685 = vmul.f32 %v5621, %v5621
        %v5686 = vmul.f32 %v5622, %v5622
        %v5687 = vmul.f32 %v5623, %v5623
        %v5688 = vmul.f32 %v5624, %v5624
        %v5689 = vmul.f32 %v5625, %v5625
        %v5690 = vmul.f32 %v5626, %v5626
        %v5691 = vmul.f32 %v5627, %v5627
        %v5692 = vmul.f32 %v5628, %v5628
        %v5693 = vmul.f32 %v5629, %v5629
        %v5694 = vmul.f32 %v5630, %v5630
        %v5695 = vmul.f32 %v5631, %v5631
        %v5696 = vmul.f32 %v5632, %v5632
        %v5697 = vmul.f32 %v5633, %v5633
        %v5698 = vmul.f32 %v5634, %v5634
        %v5699 = vmul.f32 %v5635, %v5635
        %v5700 = vmul.f32 %v5636, %v5636
        %v5701 = vmul.f32 %v5637, %v5637
        %v5702 = vmul.f32 %v5638, %v5638
        %v5703 = vmul.f32 %v5639, %v5639
        %v5704 = vmul.f32 %v5640, %v5640
        %v5705 = vmul.f32 %v5641, %v5641
        %v5706 = vmul.f32 %v5642, -2.7261424e-10
        %v5707 = vmul.f32 %v5643, -2.7261424e-10
        %v5708 = vmul.f32 %v5644, -2.7261424e-10
        %v5709 = vmul.f32 %v5645, -2.7261424e-10
        %v5710 = vmul.f32 %v5646, -2.7261424e-10
        %v5711 = vmul.f32 %v5647, -2.7261424e-10
        %v5712 = vmul.f32 %v5648, -2.7261424e-10
        %v5713 = vmul.f32 %v5649, -2.7261424e-10
        %v5714 = vmul.f32 %v5650, -2.7261424e-10
        %v5715 = vmul.f32 %v5651, -2.7261424e-10
        %v5716 = vmul.f32 %v5652, -2.7261424e-10
        %v5717 = vmul.f32 %v5653, -2.7261424e-10
        %v5718 = vmul.f32 %v5654, -2.7261424e-10
        %v5719 = vmul.f32 %v5655, -2.7261424e-10
        %v5720 = vmul.f32 %v5656, -2.7261424e-10
        %v5721 = vmul.f32 %v5657, -2.7261424e-10
        %v5722 = vmul.f32 %v5658, -2.7261424e-10
        %v5723 = vmul.f32 %v5659, -2.7261424e-10
        %v5724 = vmul.f32 %v5660, -2.7261424e-10
        %v5725 = vmul.f32 %v5661, -2.7261424e-10
        %v5726 = vmul.f32 %v5662, -2.7261424e-10
        %v5727 = vmul.f32 %v5663, -2.7261424e-10
        %v5728 = vmul.f32 %v5664, -2.7261424e-10
        %v5729 = vmul.f32 %v5665, -2.7261424e-10
        %v5730 = vmul.f32 %v5666, -2.7261424e-10
        %v5731 = vmul.f32 %v5667, -2.7261424e-10
        %v5732 = vmul.f32 %v5668, -2.7261424e-10
        %v5733 = vmul.f32 %v5669, -2.7261424e-10
        %v5734 = vmul.f32 %v5670, -2.7261424e-10
        %v5735 = vmul.f32 %v5671, -2.7261424e-10
        %v5736 = vmul.f32 %v5672, -2.7261424e-10
        %v5737 = vmul.f32 %v5673, -2.7261424e-10
        %v5738 = vmul.f32 %v5674, -2.7261424e-10
        %v5739 = vmul.f32 %v5675, -2.7261424e-10
        %v5740 = vmul.f32 %v5676, -2.7261424e-10
        %v5741 = vmul.f32 %v5677, -2.7261424e-10
        %v5742 = vmul.f32 %v5678, -2.7261424e-10
        %v5743 = vmul.f32 %v5679, -2.7261424e-10
        %v5744 = vmul.f32 %v5680, -2.7261424e-10
        %v5745 = vmul.f32 %v5681, -2.7261424e-10
        %v5746 = vmul.f32 %v5682, -2.7261424e-10
        %v5747 = vmul.f32 %v5683, -2.7261424e-10
        %v5748 = vmul.f32 %v5684, -2.7261424e-10
        %v5749 = vmul.f32 %v5685, -2.7261424e-10
        %v5750 = vmul.f32 %v5686, -2.7261424e-10
        %v5751 = vmul.f32 %v5687, -2.7261424e-10
        %v5752 = vmul.f32 %v5688, -2.7261424e-10
        %v5753 = vmul.f32 %v5689, -2.7261424e-10
        %v5754 = vmul.f32 %v5690, -2.7261424e-10
        %v5755 = vmul.f32 %v5691, -2.7261424e-10
        %v5756 = vmul.f32 %v5692, -2.7261424e-10
        %v5757 = vmul.f32 %v5693, -2.7261424e-10
        %v5758 = vmul.f32 %v5694, -2.7261424e-10
        %v5759 = vmul.f32 %v5695, -2.7261424e-10
        %v5760 = vmul.f32 %v5696, -2.7261424e-10
        %v5761 = vmul.f32 %v5697, -2.7261424e-10
        %v5762 = vmul.f32 %v5698, -2.7261424e-10
        %v5763 = vmul.f32 %v5699, -2.7261424e-10
        %v5764 = vmul.f32 %v5700, -2.7261424e-10
        %v5765 = vmul.f32 %v5701, -2.7261424e-10
        %v5766 = vmul.f32 %v5702, -2.7261424e-10
        %v5767 = vmul.f32 %v5703, -2.7261424e-10
        %v5768 = vmul.f32 %v5704, -2.7261424e-10
        %v5769 = vmul.f32 %v5705, -2.7261424e-10
        %v5770 = vadd.f32 %v5706, 2.7706815e-08
        %v5771 = vadd.f32 %v5707, 2.7706815e-08
        %v5772 = vadd.f32 %v5708, 2.7706815e-08
        %v5773 = vadd.f32 %v5709, 2.7706815e-08
        %v5774 = vadd.f32 %v5710, 2.7706815e-08
        %v5775 = vadd.f32 %v5711, 2.7706815e-08
        %v5776 = vadd.f32 %v5712, 2.7706815e-08
        %v5777 = vadd.f32 %v5713, 2.7706815e-08
        %v5778 = vadd.f32 %v5714, 2.7706815e-08
        %v5779 = vadd.f32 %v5715, 2.7706815e-08
        %v5780 = vadd.f32 %v5716, 2.7706815e-08
        %v5781 = vadd.f32 %v5717, 2.7706815e-08
        %v5782 = vadd.f32 %v5718, 2.7706815e-08
        %v5783 = vadd.f32 %v5719, 2.7706815e-08
        %v5784 = vadd.f32 %v5720, 2.7706815e-08
        %v5785 = vadd.f32 %v5721, 2.7706815e-08
        %v5786 = vadd.f32 %v5722, 2.7706815e-08
        %v5787 = vadd.f32 %v5723, 2.7706815e-08
        %v5788 = vadd.f32 %v5724, 2.7706815e-08
        %v5789 = vadd.f32 %v5725, 2.7706815e-08
        %v5790 = vadd.f32 %v5726, 2.7706815e-08
        %v5791 = vadd.f32 %v5727, 2.7706815e-08
        %v5792 = vadd.f32 %v5728, 2.7706815e-08
        %v5793 = vadd.f32 %v5729, 2.7706815e-08
        %v5794 = vadd.f32 %v5730, 2.7706815e-08
        %v5795 = vadd.f32 %v5731, 2.7706815e-08
        %v5796 = vadd.f32 %v5732, 2.7706815e-08
        %v5797 = vadd.f32 %v5733, 2.7706815e-08
        %v5798 = vadd.f32 %v5734, 2.7706815e-08
        %v5799 = vadd.f32 %v5735, 2.7706815e-08
        %v5800 = vadd.f32 %v5736, 2.7706815e-08
        %v5801 = vadd.f32 %v5737, 2.7706815e-08
        %v5802 = vadd.f32 %v5738, 2.7706815e-08
        %v5803 = vadd.f32 %v5739, 2.7706815e-08
        %v5804 = vadd.f32 %v5740, 2.7706815e-08
        %v5805 = vadd.f32 %v5741, 2.7706815e-08
        %v5806 = vadd.f32 %v5742, 2.7706815e-08
        %v5807 = vadd.f32 %v5743, 2.7706815e-08
        %v5808 = vadd.f32 %v5744, 2.7706815e-08
        %v5809 = vadd.f32 %v5745, 2.7706815e-08
        %v5810 = vadd.f32 %v5746, 2.7706815e-08
        %v5811 = vadd.f32 %v5747, 2.7706815e-08
        %v5812 = vadd.f32 %v5748, 2.7706815e-08
        %v5813 = vadd.f32 %v5749, 2.7706815e-08
        %v5814 = vadd.f32 %v5750, 2.7706815e-08
        %v5815 = vadd.f32 %v5751, 2.7706815e-08
        %v5816 = vadd.f32 %v5752, 2.7706815e-08
        %v5817 = vadd.f32 %v5753, 2.7706815e-08
        %v5818 = vadd.f32 %v5754, 2.7706815e-08
        %v5819 = vadd.f32 %v5755, 2.7706815e-08
        %v5820 = vadd.f32 %v5756, 2.7706815e-08
        %v5821 = vadd.f32 %v5757, 2.7706815e-08
        %v5822 = vadd.f32 %v5758, 2.7706815e-08
        %v5823 = vadd.f32 %v5759, 2.7706815e-08
        %v5824 = vadd.f32 %v5760, 2.7706815e-08
        %v5825 = vadd.f32 %v5761, 2.7706815e-08
        %v5826 = vadd.f32 %v5762, 2.7706815e-08
        %v5827 = vadd.f32 %v5763, 2.7706815e-08
        %v5828 = vadd.f32 %v5764, 2.7706815e-08
        %v5829 = vadd.f32 %v5765, 2.7706815e-08
        %v5830 = vadd.f32 %v5766, 2.7706815e-08
        %v5831 = vadd.f32 %v5767, 2.7706815e-08
        %v5832 = vadd.f32 %v5768, 2.7706815e-08
        %v5833 = vadd.f32 %v5769, 2.7706815e-08
        %v5834 = vmul.f32 %v5770, %v5642
        %v5835 = vmul.f32 %v5771, %v5643
        %v5836 = vmul.f32 %v5772, %v5644
        %v5837 = vmul.f32 %v5773, %v5645
        %v5838 = vmul.f32 %v5774, %v5646
        %v5839 = vmul.f32 %v5775, %v5647
        %v5840 = vmul.f32 %v5776, %v5648
        %v5841 = vmul.f32 %v5777, %v5649
        %v5842 = vmul.f32 %v5778, %v5650
        %v5843 = vmul.f32 %v5779, %v5651
        %v5844 = vmul.f32 %v5780, %v5652
        %v5845 = vmul.f32 %v5781, %v5653
        %v5846 = vmul.f32 %v5782, %v5654
        %v5847 = vmul.f32 %v5783, %v5655
        %v5848 = vmul.f32 %v5784, %v5656
        %v5849 = vmul.f32 %v5785, %v5657
        %v5850 = vmul.f32 %v5786, %v5658
        %v5851 = vmul.f32 %v5787, %v5659
        %v5852 = vmul.f32 %v5788, %v5660
        %v5853 = vmul.f32 %v5789, %v5661
        %v5854 = vmul.f32 %v5790, %v5662
        %v5855 = vmul.f32 %v5791, %v5663
        %v5856 = vmul.f32 %v5792, %v5664
        %v5857 = vmul.f32 %v5793, %v5665
        %v5858 = vmul.f32 %v5794, %v5666
        %v5859 = vmul.f32 %v5795, %v5667
        %v5860 = vmul.f32 %v5796, %v5668
        %v5861 = vmul.f32 %v5797, %v5669
        %v5862 = vmul.f32 %v5798, %v5670
        %v5863 = vmul.f32 %v5799, %v5671
        %v5864 = vmul.f32 %v5800, %v5672
        %v5865 = vmul.f32 %v5801, %v5673
        %v5866 = vmul.f32 %v5802, %v5674
        %v5867 = vmul.f32 %v5803, %v5675
        %v5868 = vmul.f32 %v5804, %v5676
        %v5869 = vmul.f32 %v5805, %v5677
        %v5870 = vmul.f32 %v5806, %v5678
        %v5871 = vmul.f32 %v5807, %v5679
        %v5872 = vmul.f32 %v5808, %v5680
        %v5873 = vmul.f32 %v5809, %v5681
        %v5874 = vmul.f32 %v5810, %v5682
        %v5875 = vmul.f32 %v5811, %v5683
        %v5876 = vmul.f32 %v5812, %v5684
        %v5877 = vmul.f32 %v5813, %v5685
        %v5878 = vmul.f32 %v5814, %v5686
        %v5879 = vmul.f32 %v5815, %v5687
        %v5880 = vmul.f32 %v5816, %v5688
        %v5881 = vmul.f32 %v5817, %v5689
        %v5882 = vmul.f32 %v5818, %v5690
        %v5883 = vmul.f32 %v5819, %v5691
        %v5884 = vmul.f32 %v5820, %v5692
        %v5885 = vmul.f32 %v5821, %v5693
        %v5886 = vmul.f32 %v5822, %v5694
        %v5887 = vmul.f32 %v5823, %v5695
        %v5888 = vmul.f32 %v5824, %v5696
        %v5889 = vmul.f32 %v5825, %v5697
        %v5890 = vmul.f32 %v5826, %v5698
        %v5891 = vmul.f32 %v5827, %v5699
        %v5892 = vmul.f32 %v5828, %v5700
        %v5893 = vmul.f32 %v5829, %v5701
        %v5894 = vmul.f32 %v5830, %v5702
        %v5895 = vmul.f32 %v5831, %v5703
        %v5896 = vmul.f32 %v5832, %v5704
        %v5897 = vmul.f32 %v5833, %v5705
        %v5898 = vadd.f32 %v5834, -2.101024e-06
        %v5899 = vadd.f32 %v5835, -2.101024e-06
        %v5900 = vadd.f32 %v5836, -2.101024e-06
        %v5901 = vadd.f32 %v5837, -2.101024e-06
        %v5902 = vadd.f32 %v5838, -2.101024e-06
        %v5903 = vadd.f32 %v5839, -2.101024e-06
        %v5904 = vadd.f32 %v5840, -2.101024e-06
        %v5905 = vadd.f32 %v5841, -2.101024e-06
        %v5906 = vadd.f32 %v5842, -2.101024e-06
        %v5907 = vadd.f32 %v5843, -2.101024e-06
        %v5908 = vadd.f32 %v5844, -2.101024e-06
        %v5909 = vadd.f32 %v5845, -2.101024e-06
        %v5910 = vadd.f32 %v5846, -2.101024e-06
        %v5911 = vadd.f32 %v5847, -2.101024e-06
        %v5912 = vadd.f32 %v5848, -2.101024e-06
        %v5913 = vadd.f32 %v5849, -2.101024e-06
        %v5914 = vadd.f32 %v5850, -2.101024e-06
        %v5915 = vadd.f32 %v5851, -2.101024e-06
        %v5916 = vadd.f32 %v5852, -2.101024e-06
        %v5917 = vadd.f32 %v5853, -2.101024e-06
        %v5918 = vadd.f32 %v5854, -2.101024e-06
        %v5919 = vadd.f32 %v5855, -2.101024e-06
        %v5920 = vadd.f32 %v5856, -2.101024e-06
        %v5921 = vadd.f32 %v5857, -2.101024e-06
        %v5922 = vadd.f32 %v5858, -2.101024e-06
        %v5923 = vadd.f32 %v5859, -2.101024e-06
        %v5924 = vadd.f32 %v5860, -2.101024e-06
        %v5925 = vadd.f32 %v5861, -2.101024e-06
        %v5926 = vadd.f32 %v5862, -2.101024e-06
        %v5927 = vadd.f32 %v5863, -2.101024e-06
        %v5928 = vadd.f32 %v5864, -2.101024e-06
        %v5929 = vadd.f32 %v5865, -2.101024e-06
        %v5930 = vadd.f32 %v5866, -2.101024e-06
        %v5931 = vadd.f32 %v5867, -2.101024e-06
        %v5932 = vadd.f32 %v5868, -2.101024e-06
        %v5933 = vadd.f32 %v5869, -2.101024e-06
        %v5934 = vadd.f32 %v5870, -2.101024e-06
        %v5935 = vadd.f32 %v5871, -2.101024e-06
        %v5936 = vadd.f32 %v5872, -2.101024e-06
        %v5937 = vadd.f32 %v5873, -2.101024e-06
        %v5938 = vadd.f32 %v5874, -2.101024e-06
        %v5939 = vadd.f32 %v5875, -2.101024e-06
        %v5940 = vadd.f32 %v5876, -2.101024e-06
        %v5941 = vadd.f32 %v5877, -2.101024e-06
        %v5942 = vadd.f32 %v5878, -2.101024e-06
        %v5943 = vadd.f32 %v5879, -2.101024e-06
        %v5944 = vadd.f32 %v5880, -2.101024e-06
        %v5945 = vadd.f32 %v5881, -2.101024e-06
        %v5946 = vadd.f32 %v5882, -2.101024e-06
        %v5947 = vadd.f32 %v5883, -2.101024e-06
        %v5948 = vadd.f32 %v5884, -2.101024e-06
        %v5949 = vadd.f32 %v5885, -2.101024e-06
        %v5950 = vadd.f32 %v5886, -2.101024e-06
        %v5951 = vadd.f32 %v5887, -2.101024e-06
        %v5952 = vadd.f32 %v5888, -2.101024e-06
        %v5953 = vadd.f32 %v5889, -2.101024e-06
        %v5954 = vadd.f32 %v5890, -2.101024e-06
        %v5955 = vadd.f32 %v5891, -2.101024e-06
        %v5956 = vadd.f32 %v5892, -2.101024e-06
        %v5957 = vadd.f32 %v5893, -2.101024e-06
        %v5958 = vadd.f32 %v5894, -2.101024e-06
        %v5959 = vadd.f32 %v5895, -2.101024e-06
        %v5960 = vadd.f32 %v5896, -2.101024e-06
        %v5961 = vadd.f32 %v5897, -2.101024e-06
        %v5962 = vmul.f32 %v5898, %v5642
        %v5963 = vmul.f32 %v5899, %v5643
        %v5964 = vmul.f32 %v5900, %v5644
        %v5965 = vmul.f32 %v5901, %v5645
        %v5966 = vmul.f32 %v5902, %v5646
        %v5967 = vmul.f32 %v5903, %v5647
        %v5968 = vmul.f32 %v5904, %v5648
        %v5969 = vmul.f32 %v5905, %v5649
        %v5970 = vmul.f32 %v5906, %v5650
        %v5971 = vmul.f32 %v5907, %v5651
        %v5972 = vmul.f32 %v5908, %v5652
        %v5973 = vmul.f32 %v5909, %v5653
        %v5974 = vmul.f32 %v5910, %v5654
        %v5975 = vmul.f32 %v5911, %v5655
        %v5976 = vmul.f32 %v5912, %v5656
        %v5977 = vmul.f32 %v5913, %v5657
        %v5978 = vmul.f32 %v5914, %v5658
        %v5979 = vmul.f32 %v5915, %v5659
        %v5980 = vmul.f32 %v5916, %v5660
        %v5981 = vmul.f32 %v5917, %v5661
        %v5982 = vmul.f32 %v5918, %v5662
        %v5983 = vmul.f32 %v5919, %v5663
        %v5984 = vmul.f32 %v5920, %v5664
        %v5985 = vmul.f32 %v5921, %v5665
        %v5986 = vmul.f32 %v5922, %v5666
        %v5987 = vmul.f32 %v5923, %v5667
        %v5988 = vmul.f32 %v5924, %v5668
        %v5989 = vmul.f32 %v5925, %v5669
        %v5990 = vmul.f32 %v5926, %v5670
        %v5991 = vmul.f32 %v5927, %v5671
        %v5992 = vmul.f32 %v5928, %v5672
        %v5993 = vmul.f32 %v5929, %v5673
        %v5994 = vmul.f32 %v5930, %v5674
        %v5995 = vmul.f32 %v5931, %v5675
        %v5996 = vmul.f32 %v5932, %v5676
        %v5997 = vmul.f32 %v5933, %v5677
        %v5998 = vmul.f32 %v5934, %v5678
        %v5999 = vmul.f32 %v5935, %v5679
        %v6000 = vmul.f32 %v5936, %v5680
        %v6001 = vmul.f32 %v5937, %v5681
        %v6002 = vmul.f32 %v5938, %v5682
        %v6003 = vmul.f32 %v5939, %v5683
        %v6004 = vmul.f32 %v5940, %v5684
        %v6005 = vmul.f32 %v5941, %v5685
        %v6006 = vmul.f32 %v5942, %v5686
        %v6007 = vmul.f32 %v5943, %v5687
        %v6008 = vmul.f32 %v5944, %v5688
        %v6009 = vmul.f32 %v5945, %v5689
        %v6010 = vmul.f32 %v5946, %v5690
        %v6011 = vmul.f32 %v5947, %v5691
        %v6012 = vmul.f32 %v5948, %v5692
        %v6013 = vmul.f32 %v5949, %v5693
        %v6014 = vmul.f32 %v5950, %v5694
        %v6015 = vmul.f32 %v5951, %v5695
        %v6016 = vmul.f32 %v5952, %v5696
        %v6017 = vmul.f32 %v5953, %v5697
        %v6018 = vmul.f32 %v5954, %v5698
        %v6019 = vmul.f32 %v5955, %v5699
        %v6020 = vmul.f32 %v5956, %v5700
        %v6021 = vmul.f32 %v5957, %v5701
        %v6022 = vmul.f32 %v5958, %v5702
        %v6023 = vmul.f32 %v5959, %v5703
        %v6024 = vmul.f32 %v5960, %v5704
        %v6025 = vmul.f32 %v5961, %v5705
        %v6026 = vadd.f32 %v5962, -5.6925062e-05
        %v6027 = vadd.f32 %v5963, -5.6925062e-05
        %v6028 = vadd.f32 %v5964, -5.6925062e-05
        %v6029 = vadd.f32 %v5965, -5.6925062e-05
        %v6030 = vadd.f32 %v5966, -5.6925062e-05
        %v6031 = vadd.f32 %v5967, -5.6925062e-05
        %v6032 = vadd.f32 %v5968, -5.6925062e-05
        %v6033 = vadd.f32 %v5969, -5.6925062e-05
        %v6034 = vadd.f32 %v5970, -5.6925062e-05
        %v6035 = vadd.f32 %v5971, -5.6925062e-05
        %v6036 = vadd.f32 %v5972, -5.6925062e-05
        %v6037 = vadd.f32 %v5973, -5.6925062e-05
        %v6038 = vadd.f32 %v5974, -5.6925062e-05
        %v6039 = vadd.f32 %v5975, -5.6925062e-05
        %v6040 = vadd.f32 %v5976, -5.6925062e-05
        %v6041 = vadd.f32 %v5977, -5.6925062e-05
        %v6042 = vadd.f32 %v5978, -5.6925062e-05
        %v6043 = vadd.f32 %v5979, -5.6925062e-05
        %v6044 = vadd.f32 %v5980, -5.6925062e-05
        %v6045 = vadd.f32 %v5981, -5.6925062e-05
        %v6046 = vadd.f32 %v5982, -5.6925062e-05
        %v6047 = vadd.f32 %v5983, -5.6925062e-05
        %v6048 = vadd.f32 %v5984, -5.6925062e-05
        %v6049 = vadd.f32 %v5985, -5.6925062e-05
        %v6050 = vadd.f32 %v5986, -5.6925062e-05
        %v6051 = vadd.f32 %v5987, -5.6925062e-05
        %v6052 = vadd.f32 %v5988, -5.6925062e-05
        %v6053 = vadd.f32 %v5989, -5.6925062e-05
        %v6054 = vadd.f32 %v5990, -5.6925062e-05
        %v6055 = vadd.f32 %v5991, -5.6925062e-05
        %v6056 = vadd.f32 %v5992, -5.6925062e-05
        %v6057 = vadd.f32 %v5993, -5.6925062e-05
        %v6058 = vadd.f32 %v5994, -5.6925062e-05
        %v6059 = vadd.f32 %v5995, -5.6925062e-05
        %v6060 = vadd.f32 %v5996, -5.6925062e-05
        %v6061 = vadd.f32 %v5997, -5.6925062e-05
        %v6062 = vadd.f32 %v5998, -5.6925062e-05
        %v6063 = vadd.f32 %v5999, -5.6925062e-05
        %v6064 = vadd.f32 %v6000, -5.6925062e-05
        %v6065 = vadd.f32 %v6001, -5.6925062e-05
        %v6066 = vadd.f32 %v6002, -5.6925062e-05
        %v6067 = vadd.f32 %v6003, -5.6925062e-05
        %v6068 = vadd.f32 %v6004, -5.6925062e-05
        %v6069 = vadd.f32 %v6005, -5.6925062e-05
        %v6070 = vadd.f32 %v6006, -5.6925062e-05
        %v6071 = vadd.f32 %v6007, -5.6925062e-05
        %v6072 = vadd.f32 %v6008, -5.6925062e-05
        %v6073 = vadd.f32 %v6009, -5.6925062e-05
        %v6074 = vadd.f32 %v6010, -5.6925062e-05
        %v6075 = vadd.f32 %v6011, -5.6925062e-05
        %v6076 = vadd.f32 %v6012, -5.6925062e-05
        %v6077 = vadd.f32 %v6013, -5.6925062e-05
        %v6078 = vadd.f32 %v6014, -5.6925062e-05
        %v6079 = vadd.f32 %v6015, -5.6925062e-05
        %v6080 = vadd.f32 %v6016, -5.6925062e-05
        %v6081 = vadd.f32 %v6017, -5.6925062e-05
        %v6082 = vadd.f32 %v6018, -5.6925062e-05
        %v6083 = vadd.f32 %v6019, -5.6925062e-05
        %v6084 = vadd.f32 %v6020, -5.6925062e-05
        %v6085 = vadd.f32 %v6021, -5.6925062e-05
        %v6086 = vadd.f32 %v6022, -5.6925062e-05
        %v6087 = vadd.f32 %v6023, -5.6925062e-05
        %v6088 = vadd.f32 %v6024, -5.6925062e-05
        %v6089 = vadd.f32 %v6025, -5.6925062e-05
        %v6090 = vmul.f32 %v6026, %v5642
        %v6091 = vmul.f32 %v6027, %v5643
        %v6092 = vmul.f32 %v6028, %v5644
        %v6093 = vmul.f32 %v6029, %v5645
        %v6094 = vmul.f32 %v6030, %v5646
        %v6095 = vmul.f32 %v6031, %v5647
        %v6096 = vmul.f32 %v6032, %v5648
        %v6097 = vmul.f32 %v6033, %v5649
        %v6098 = vmul.f32 %v6034, %v5650
        %v6099 = vmul.f32 %v6035, %v5651
        %v6100 = vmul.f32 %v6036, %v5652
        %v6101 = vmul.f32 %v6037, %v5653
        %v6102 = vmul.f32 %v6038, %v5654
        %v6103 = vmul.f32 %v6039, %v5655
        %v6104 = vmul.f32 %v6040, %v5656
        %v6105 = vmul.f32 %v6041, %v5657
        %v6106 = vmul.f32 %v6042, %v5658
        %v6107 = vmul.f32 %v6043, %v5659
        %v6108 = vmul.f32 %v6044, %v5660
        %v6109 = vmul.f32 %v6045, %v5661
        %v6110 = vmul.f32 %v6046, %v5662
        %v6111 = vmul.f32 %v6047, %v5663
        %v6112 = vmul.f32 %v6048, %v5664
        %v6113 = vmul.f32 %v6049, %v5665
        %v6114 = vmul.f32 %v6050, %v5666
        %v6115 = vmul.f32 %v6051, %v5667
        %v6116 = vmul.f32 %v6052, %v5668
        %v6117 = vmul.f32 %v6053, %v5669
        %v6118 = vmul.f32 %v6054, %v5670
        %v6119 = vmul.f32 %v6055, %v5671
        %v6120 = vmul.f32 %v6056, %v5672
        %v6121 = vmul.f32 %v6057, %v5673
        %v6122 = vmul.f32 %v6058, %v5674
        %v6123 = vmul.f32 %v6059, %v5675
        %v6124 = vmul.f32 %v6060, %v5676
        %v6125 = vmul.f32 %v6061, %v5677
        %v6126 = vmul.f32 %v6062, %v5678
        %v6127 = vmul.f32 %v6063, %v5679
        %v6128 = vmul.f32 %v6064, %v5680
        %v6129 = vmul.f32 %v6065, %v5681
        %v6130 = vmul.f32 %v6066, %v5682
        %v6131 = vmul.f32 %v6067, %v5683
        %v6132 = vmul.f32 %v6068, %v5684
        %v6133 = vmul.f32 %v6069, %v5685
        %v6134 = vmul.f32 %v6070, %v5686
        %v6135 = vmul.f32 %v6071, %v5687
        %v6136 = vmul.f32 %v6072, %v5688
        %v6137 = vmul.f32 %v6073, %v5689
        %v6138 = vmul.f32 %v6074, %v5690
        %v6139 = vmul.f32 %v6075, %v5691
        %v6140 = vmul.f32 %v6076, %v5692
        %v6141 = vmul.f32 %v6077, %v5693
        %v6142 = vmul.f32 %v6078, %v5694
        %v6143 = vmul.f32 %v6079, %v5695
        %v6144 = vmul.f32 %v6080, %v5696
        %v6145 = vmul.f32 %v6081, %v5697
        %v6146 = vmul.f32 %v6082, %v5698
        %v6147 = vmul.f32 %v6083, %v5699
        %v6148 = vmul.f32 %v6084, %v5700
        %v6149 = vmul.f32 %v6085, %v5701
        %v6150 = vmul.f32 %v6086, %v5702
        %v6151 = vmul.f32 %v6087, %v5703
        %v6152 = vmul.f32 %v6088, %v5704
        %v6153 = vmul.f32 %v6089, %v5705
        %v6154 = vadd.f32 %v6090, -0.00073499064
        %v6155 = vadd.f32 %v6091, -0.00073499064
        %v6156 = vadd.f32 %v6092, -0.00073499064
        %v6157 = vadd.f32 %v6093, -0.00073499064
        %v6158 = vadd.f32 %v6094, -0.00073499064
        %v6159 = vadd.f32 %v6095, -0.00073499064
        %v6160 = vadd.f32 %v6096, -0.00073499064
        %v6161 = vadd.f32 %v6097, -0.00073499064
        %v6162 = vadd.f32 %v6098, -0.00073499064
        %v6163 = vadd.f32 %v6099, -0.00073499064
        %v6164 = vadd.f32 %v6100, -0.00073499064
        %v6165 = vadd.f32 %v6101, -0.00073499064
        %v6166 = vadd.f32 %v6102, -0.00073499064
        %v6167 = vadd.f32 %v6103, -0.00073499064
        %v6168 = vadd.f32 %v6104, -0.00073499064
        %v6169 = vadd.f32 %v6105, -0.00073499064
        %v6170 = vadd.f32 %v6106, -0.00073499064
        %v6171 = vadd.f32 %v6107, -0.00073499064
        %v6172 = vadd.f32 %v6108, -0.00073499064
        %v6173 = vadd.f32 %v6109, -0.00073499064
        %v6174 = vadd.f32 %v6110, -0.00073499064
        %v6175 = vadd.f32 %v6111, -0.00073499064
        %v6176 = vadd.f32 %v6112, -0.00073499064
        %v6177 = vadd.f32 %v6113, -0.00073499064
        %v6178 = vadd.f32 %v6114, -0.00073499064
        %v6179 = vadd.f32 %v6115, -0.00073499064
        %v6180 = vadd.f32 %v6116, -0.00073499064
        %v6181 = vadd.f32 %v6117, -0.00073499064
        %v6182 = vadd.f32 %v6118, -0.00073499064
        %v6183 = vadd.f32 %v6119, -0.00073499064
        %v6184 = vadd.f32 %v6120, -0.00073499064
        %v6185 = vadd.f32 %v6121, -0.00073499064
        %v6186 = vadd.f32 %v6122, -0.00073499064
        %v6187 = vadd.f32 %v6123, -0.00073499064
        %v6188 = vadd.f32 %v6124, -0.00073499064
        %v6189 = vadd.f32 %v6125, -0.00073499064
        %v6190 = vadd.f32 %v6126, -0.00073499064
        %v6191 = vadd.f32 %v6127, -0.00073499064
        %v6192 = vadd.f32 %v6128, -0.00073499064
        %v6193 = vadd.f32 %v6129, -0.00073499064
        %v6194 = vadd.f32 %v6130, -0.00073499064
        %v6195 = vadd.f32 %v6131, -0.00073499064
        %v6196 = vadd.f32 %v6132, -0.00073499064
        %v6197 = vadd.f32 %v6133, -0.00073499064
        %v6198 = vadd.f32 %v6134, -0.00073499064
        %v6199 = vadd.f32 %v6135, -0.00073499064
        %v6200 = vadd.f32 %v6136, -0.00073499064
        %v6201 = vadd.f32 %v6137, -0.00073499064
        %v6202 = vadd.f32 %v6138, -0.00073499064
        %v6203 = vadd.f32 %v6139, -0.00073499064
        %v6204 = vadd.f32 %v6140, -0.00073499064
        %v6205 = vadd.f32 %v6141, -0.00073499064
        %v6206 = vadd.f32 %v6142, -0.00073499064
        %v6207 = vadd.f32 %v6143, -0.00073499064
        %v6208 = vadd.f32 %v6144, -0.00073499064
        %v6209 = vadd.f32 %v6145, -0.00073499064
        %v6210 = vadd.f32 %v6146, -0.00073499064
        %v6211 = vadd.f32 %v6147, -0.00073499064
        %v6212 = vadd.f32 %v6148, -0.00073499064
        %v6213 = vadd.f32 %v6149, -0.00073499064
        %v6214 = vadd.f32 %v6150, -0.00073499064
        %v6215 = vadd.f32 %v6151, -0.00073499064
        %v6216 = vadd.f32 %v6152, -0.00073499064
        %v6217 = vadd.f32 %v6153, -0.00073499064
        %v6218 = vmul.f32 %v6154, %v5642
        %v6219 = vmul.f32 %v6155, %v5643
        %v6220 = vmul.f32 %v6156, %v5644
        %v6221 = vmul.f32 %v6157, %v5645
        %v6222 = vmul.f32 %v6158, %v5646
        %v6223 = vmul.f32 %v6159, %v5647
        %v6224 = vmul.f32 %v6160, %v5648
        %v6225 = vmul.f32 %v6161, %v5649
        %v6226 = vmul.f32 %v6162, %v5650
        %v6227 = vmul.f32 %v6163, %v5651
        %v6228 = vmul.f32 %v6164, %v5652
        %v6229 = vmul.f32 %v6165, %v5653
        %v6230 = vmul.f32 %v6166, %v5654
        %v6231 = vmul.f32 %v6167, %v5655
        %v6232 = vmul.f32 %v6168, %v5656
        %v6233 = vmul.f32 %v6169, %v5657
        %v6234 = vmul.f32 %v6170, %v5658
        %v6235 = vmul.f32 %v6171, %v5659
        %v6236 = vmul.f32 %v6172, %v5660
        %v6237 = vmul.f32 %v6173, %v5661
        %v6238 = vmul.f32 %v6174, %v5662
        %v6239 = vmul.f32 %v6175, %v5663
        %v6240 = vmul.f32 %v6176, %v5664
        %v6241 = vmul.f32 %v6177, %v5665
        %v6242 = vmul.f32 %v6178, %v5666
        %v6243 = vmul.f32 %v6179, %v5667
        %v6244 = vmul.f32 %v6180, %v5668
        %v6245 = vmul.f32 %v6181, %v5669
        %v6246 = vmul.f32 %v6182, %v5670
        %v6247 = vmul.f32 %v6183, %v5671
        %v6248 = vmul.f32 %v6184, %v5672
        %v6249 = vmul.f32 %v6185, %v5673
        %v6250 = vmul.f32 %v6186, %v5674
        %v6251 = vmul.f32 %v6187, %v5675
        %v6252 = vmul.f32 %v6188, %v5676
        %v6253 = vmul.f32 %v6189, %v5677
        %v6254 = vmul.f32 %v6190, %v5678
        %v6255 = vmul.f32 %v6191, %v5679
        %v6256 = vmul.f32 %v6192, %v5680
        %v6257 = vmul.f32 %v6193, %v5681
        %v6258 = vmul.f32 %v6194, %v5682
        %v6259 = vmul.f32 %v6195, %v5683
        %v6260 = vmul.f32 %v6196, %v5684
        %v6261 = vmul.f32 %v6197, %v5685
        %v6262 = vmul.f32 %v6198, %v5686
        %v6263 = vmul.f32 %v6199, %v5687
        %v6264 = vmul.f32 %v6200, %v5688
        %v6265 = vmul.f32 %v6201, %v5689
        %v6266 = vmul.f32 %v6202, %v5690
        %v6267 = vmul.f32 %v6203, %v5691
        %v6268 = vmul.f32 %v6204, %v5692
        %v6269 = vmul.f32 %v6205, %v5693
        %v6270 = vmul.f32 %v6206, %v5694
        %v6271 = vmul.f32 %v6207, %v5695
        %v6272 = vmul.f32 %v6208, %v5696
        %v6273 = vmul.f32 %v6209, %v5697
        %v6274 = vmul.f32 %v6210, %v5698
        %v6275 = vmul.f32 %v6211, %v5699
        %v6276 = vmul.f32 %v6212, %v5700
        %v6277 = vmul.f32 %v6213, %v5701
        %v6278 = vmul.f32 %v6214, %v5702
        %v6279 = vmul.f32 %v6215, %v5703
        %v6280 = vmul.f32 %v6216, %v5704
        %v6281 = vmul.f32 %v6217, %v5705
        %v6282 = vadd.f32 %v6218, -0.0029546
        %v6283 = vadd.f32 %v6219, -0.0029546
        %v6284 = vadd.f32 %v6220, -0.0029546
        %v6285 = vadd.f32 %v6221, -0.0029546
        %v6286 = vadd.f32 %v6222, -0.0029546
        %v6287 = vadd.f32 %v6223, -0.0029546
        %v6288 = vadd.f32 %v6224, -0.0029546
        %v6289 = vadd.f32 %v6225, -0.0029546
        %v6290 = vadd.f32 %v6226, -0.0029546
        %v6291 = vadd.f32 %v6227, -0.0029546
        %v6292 = vadd.f32 %v6228, -0.0029546
        %v6293 = vadd.f32 %v6229, -0.0029546
        %v6294 = vadd.f32 %v6230, -0.0029546
        %v6295 = vadd.f32 %v6231, -0.0029546
        %v6296 = vadd.f32 %v6232, -0.0029546
        %v6297 = vadd.f32 %v6233, -0.0029546
        %v6298 = vadd.f32 %v6234, -0.0029546
        %v6299 = vadd.f32 %v6235, -0.0029546
        %v6300 = vadd.f32 %v6236, -0.0029546
        %v6301 = vadd.f32 %v6237, -0.0029546
        %v6302 = vadd.f32 %v6238, -0.0029546
        %v6303 = vadd.f32 %v6239, -0.0029546
        %v6304 = vadd.f32 %v6240, -0.0029546
        %v6305 = vadd.f32 %v6241, -0.0029546
        %v6306 = vadd.f32 %v6242, -0.0029546
        %v6307 = vadd.f32 %v6243, -0.0029546
        %v6308 = vadd.f32 %v6244, -0.0029546
        %v6309 = vadd.f32 %v6245, -0.0029546
        %v6310 = vadd.f32 %v6246, -0.0029546
        %v6311 = vadd.f32 %v6247, -0.0029546
        %v6312 = vadd.f32 %v6248, -0.0029546
        %v6313 = vadd.f32 %v6249, -0.0029546
        %v6314 = vadd.f32 %v6250, -0.0029546
        %v6315 = vadd.f32 %v6251, -0.0029546
        %v6316 = vadd.f32 %v6252, -0.0029546
        %v6317 = vadd.f32 %v6253, -0.0029546
        %v6318 = vadd.f32 %v6254, -0.0029546
        %v6319 = vadd.f32 %v6255, -0.0029546
        %v6320 = vadd.f32 %v6256, -0.0029546
        %v6321 = vadd.f32 %v6257, -0.0029546
        %v6322 = vadd.f32 %v6258, -0.0029546
        %v6323 = vadd.f32 %v6259, -0.0029546
        %v6324 = vadd.f32 %v6260, -0.0029546
        %v6325 = vadd.f32 %v6261, -0.0029546
        %v6326 = vadd.f32 %v6262, -0.0029546
        %v6327 = vadd.f32 %v6263, -0.0029546
        %v6328 = vadd.f32 %v6264, -0.0029546
        %v6329 = vadd.f32 %v6265, -0.0029546
        %v6330 = vadd.f32 %v6266, -0.0029546
        %v6331 = vadd.f32 %v6267, -0.0029546
        %v6332 = vadd.f32 %v6268, -0.0029546
        %v6333 = vadd.f32 %v6269, -0.0029546
        %v6334 = vadd.f32 %v6270, -0.0029546
        %v6335 = vadd.f32 %v6271, -0.0029546
        %v6336 = vadd.f32 %v6272, -0.0029546
        %v6337 = vadd.f32 %v6273, -0.0029546
        %v6338 = vadd.f32 %v6274, -0.0029546
        %v6339 = vadd.f32 %v6275, -0.0029546
        %v6340 = vadd.f32 %v6276, -0.0029546
        %v6341 = vadd.f32 %v6277, -0.0029546
        %v6342 = vadd.f32 %v6278, -0.0029546
        %v6343 = vadd.f32 %v6279, -0.0029546
        %v6344 = vadd.f32 %v6280, -0.0029546
        %v6345 = vadd.f32 %v6281, -0.0029546
        %v6346 = vmul.f32 %v6282, %v5642
        %v6347 = vmul.f32 %v6283, %v5643
        %v6348 = vmul.f32 %v6284, %v5644
        %v6349 = vmul.f32 %v6285, %v5645
        %v6350 = vmul.f32 %v6286, %v5646
        %v6351 = vmul.f32 %v6287, %v5647
        %v6352 = vmul.f32 %v6288, %v5648
        %v6353 = vmul.f32 %v6289, %v5649
        %v6354 = vmul.f32 %v6290, %v5650
        %v6355 = vmul.f32 %v6291, %v5651
        %v6356 = vmul.f32 %v6292, %v5652
        %v6357 = vmul.f32 %v6293, %v5653
        %v6358 = vmul.f32 %v6294, %v5654
        %v6359 = vmul.f32 %v6295, %v5655
        %v6360 = vmul.f32 %v6296, %v5656
        %v6361 = vmul.f32 %v6297, %v5657
        %v6362 = vmul.f32 %v6298, %v5658
        %v6363 = vmul.f32 %v6299, %v5659
        %v6364 = vmul.f32 %v6300, %v5660
        %v6365 = vmul.f32 %v6301, %v5661
        %v6366 = vmul.f32 %v6302, %v5662
        %v6367 = vmul.f32 %v6303, %v5663
        %v6368 = vmul.f32 %v6304, %v5664
        %v6369 = vmul.f32 %v6305, %v5665
        %v6370 = vmul.f32 %v6306, %v5666
        %v6371 = vmul.f32 %v6307, %v5667
        %v6372 = vmul.f32 %v6308, %v5668
        %v6373 = vmul.f32 %v6309, %v5669
        %v6374 = vmul.f32 %v6310, %v5670
        %v6375 = vmul.f32 %v6311, %v5671
        %v6376 = vmul.f32 %v6312, %v5672
        %v6377 = vmul.f32 %v6313, %v5673
        %v6378 = vmul.f32 %v6314, %v5674
        %v6379 = vmul.f32 %v6315, %v5675
        %v6380 = vmul.f32 %v6316, %v5676
        %v6381 = vmul.f32 %v6317, %v5677
        %v6382 = vmul.f32 %v6318, %v5678
        %v6383 = vmul.f32 %v6319, %v5679
        %v6384 = vmul.f32 %v6320, %v5680
        %v6385 = vmul.f32 %v6321, %v5681
        %v6386 = vmul.f32 %v6322, %v5682
        %v6387 = vmul.f32 %v6323, %v5683
        %v6388 = vmul.f32 %v6324, %v5684
        %v6389 = vmul.f32 %v6325, %v5685
        %v6390 = vmul.f32 %v6326, %v5686
        %v6391 = vmul.f32 %v6327, %v5687
        %v6392 = vmul.f32 %v6328, %v5688
        %v6393 = vmul.f32 %v6329, %v5689
        %v6394 = vmul.f32 %v6330, %v5690
        %v6395 = vmul.f32 %v6331, %v5691
        %v6396 = vmul.f32 %v6332, %v5692
        %v6397 = vmul.f32 %v6333, %v5693
        %v6398 = vmul.f32 %v6334, %v5694
        %v6399 = vmul.f32 %v6335, %v5695
        %v6400 = vmul.f32 %v6336, %v5696
        %v6401 = vmul.f32 %v6337, %v5697
        %v6402 = vmul.f32 %v6338, %v5698
        %v6403 = vmul.f32 %v6339, %v5699
        %v6404 = vmul.f32 %v6340, %v5700
        %v6405 = vmul.f32 %v6341, %v5701
        %v6406 = vmul.f32 %v6342, %v5702
        %v6407 = vmul.f32 %v6343, %v5703
        %v6408 = vmul.f32 %v6344, %v5704
        %v6409 = vmul.f32 %v6345, %v5705
        %v6410 = vadd.f32 %v6346, -0.016096033
        %v6411 = vadd.f32 %v6347, -0.016096033
        %v6412 = vadd.f32 %v6348, -0.016096033
        %v6413 = vadd.f32 %v6349, -0.016096033
        %v6414 = vadd.f32 %v6350, -0.016096033
        %v6415 = vadd.f32 %v6351, -0.016096033
        %v6416 = vadd.f32 %v6352, -0.016096033
        %v6417 = vadd.f32 %v6353, -0.016096033
        %v6418 = vadd.f32 %v6354, -0.016096033
        %v6419 = vadd.f32 %v6355, -0.016096033
        %v6420 = vadd.f32 %v6356, -0.016096033
        %v6421 = vadd.f32 %v6357, -0.016096033
        %v6422 = vadd.f32 %v6358, -0.016096033
        %v6423 = vadd.f32 %v6359, -0.016096033
        %v6424 = vadd.f32 %v6360, -0.016096033
        %v6425 = vadd.f32 %v6361, -0.016096033
        %v6426 = vadd.f32 %v6362, -0.016096033
        %v6427 = vadd.f32 %v6363, -0.016096033
        %v6428 = vadd.f32 %v6364, -0.016096033
        %v6429 = vadd.f32 %v6365, -0.016096033
        %v6430 = vadd.f32 %v6366, -0.016096033
        %v6431 = vadd.f32 %v6367, -0.016096033
        %v6432 = vadd.f32 %v6368, -0.016096033
        %v6433 = vadd.f32 %v6369, -0.016096033
        %v6434 = vadd.f32 %v6370, -0.016096033
        %v6435 = vadd.f32 %v6371, -0.016096033
        %v6436 = vadd.f32 %v6372, -0.016096033
        %v6437 = vadd.f32 %v6373, -0.016096033
        %v6438 = vadd.f32 %v6374, -0.016096033
        %v6439 = vadd.f32 %v6375, -0.016096033
        %v6440 = vadd.f32 %v6376, -0.016096033
        %v6441 = vadd.f32 %v6377, -0.016096033
        %v6442 = vadd.f32 %v6378, -0.016096033
        %v6443 = vadd.f32 %v6379, -0.016096033
        %v6444 = vadd.f32 %v6380, -0.016096033
        %v6445 = vadd.f32 %v6381, -0.016096033
        %v6446 = vadd.f32 %v6382, -0.016096033
        %v6447 = vadd.f32 %v6383, -0.016096033
        %v6448 = vadd.f32 %v6384, -0.016096033
        %v6449 = vadd.f32 %v6385, -0.016096033
        %v6450 = vadd.f32 %v6386, -0.016096033
        %v6451 = vadd.f32 %v6387, -0.016096033
        %v6452 = vadd.f32 %v6388, -0.016096033
        %v6453 = vadd.f32 %v6389, -0.016096033
        %v6454 = vadd.f32 %v6390, -0.016096033
        %v6455 = vadd.f32 %v6391, -0.016096033
        %v6456 = vadd.f32 %v6392, -0.016096033
        %v6457 = vadd.f32 %v6393, -0.016096033
        %v6458 = vadd.f32 %v6394, -0.016096033
        %v6459 = vadd.f32 %v6395, -0.016096033
        %v6460 = vadd.f32 %v6396, -0.016096033
        %v6461 = vadd.f32 %v6397, -0.016096033
        %v6462 = vadd.f32 %v6398, -0.016096033
        %v6463 = vadd.f32 %v6399, -0.016096033
        %v6464 = vadd.f32 %v6400, -0.016096033
        %v6465 = vadd.f32 %v6401, -0.016096033
        %v6466 = vadd.f32 %v6402, -0.016096033
        %v6467 = vadd.f32 %v6403, -0.016096033
        %v6468 = vadd.f32 %v6404, -0.016096033
        %v6469 = vadd.f32 %v6405, -0.016096033
        %v6470 = vadd.f32 %v6406, -0.016096033
        %v6471 = vadd.f32 %v6407, -0.016096033
        %v6472 = vadd.f32 %v6408, -0.016096033
        %v6473 = vadd.f32 %v6409, -0.016096033
        %v6474 = vmul.f32 %v5642, -1.45660715e-05
        %v6475 = vmul.f32 %v5643, -1.45660715e-05
        %v6476 = vmul.f32 %v5644, -1.45660715e-05
        %v6477 = vmul.f32 %v5645, -1.45660715e-05
        %v6478 = vmul.f32 %v5646, -1.45660715e-05
        %v6479 = vmul.f32 %v5647, -1.45660715e-05
        %v6480 = vmul.f32 %v5648, -1.45660715e-05
        %v6481 = vmul.f32 %v5649, -1.45660715e-05
        %v6482 = vmul.f32 %v5650, -1.45660715e-05
        %v6483 = vmul.f32 %v5651, -1.45660715e-05
        %v6484 = vmul.f32 %v5652, -1.45660715e-05
        %v6485 = vmul.f32 %v5653, -1.45660715e-05
        %v6486 = vmul.f32 %v5654, -1.45660715e-05
        %v6487 = vmul.f32 %v5655, -1.45660715e-05
        %v6488 = vmul.f32 %v5656, -1.45660715e-05
        %v6489 = vmul.f32 %v5657, -1.45660715e-05
        %v6490 = vmul.f32 %v5658, -1.45660715e-05
        %v6491 = vmul.f32 %v5659, -1.45660715e-05
        %v6492 = vmul.f32 %v5660, -1.45660715e-05
        %v6493 = vmul.f32 %v5661, -1.45660715e-05
        %v6494 = vmul.f32 %v5662, -1.45660715e-05
        %v6495 = vmul.f32 %v5663, -1.45660715e-05
        %v6496 = vmul.f32 %v5664, -1.45660715e-05
        %v6497 = vmul.f32 %v5665, -1.45660715e-05
        %v6498 = vmul.f32 %v5666, -1.45660715e-05
        %v6499 = vmul.f32 %v5667, -1.45660715e-05
        %v6500 = vmul.f32 %v5668, -1.45660715e-05
        %v6501 = vmul.f32 %v5669, -1.45660715e-05
        %v6502 = vmul.f32 %v5670, -1.45660715e-05
        %v6503 = vmul.f32 %v5671, -1.45660715e-05
        %v6504 = vmul.f32 %v5672, -1.45660715e-05
        %v6505 = vmul.f32 %v5673, -1.45660715e-05
        %v6506 = vmul.f32 %v5674, -1.45660715e-05
        %v6507 = vmul.f32 %v5675, -1.45660715e-05
        %v6508 = vmul.f32 %v5676, -1.45660715e-05
        %v6509 = vmul.f32 %v5677, -1.45660715e-05
        %v6510 = vmul.f32 %v5678, -1.45660715e-05
        %v6511 = vmul.f32 %v5679, -1.45660715e-05
        %v6512 = vmul.f32 %v5680, -1.45660715e-05
        %v6513 = vmul.f32 %v5681, -1.45660715e-05
        %v6514 = vmul.f32 %v5682, -1.45660715e-05
        %v6515 = vmul.f32 %v5683, -1.45660715e-05
        %v6516 = vmul.f32 %v5684, -1.45660715e-05
        %v6517 = vmul.f32 %v5685, -1.45660715e-05
        %v6518 = vmul.f32 %v5686, -1.45660715e-05
        %v6519 = vmul.f32 %v5687, -1.45660715e-05
        %v6520 = vmul.f32 %v5688, -1.45660715e-05
        %v6521 = vmul.f32 %v5689, -1.45660715e-05
        %v6522 = vmul.f32 %v5690, -1.45660715e-05
        %v6523 = vmul.f32 %v5691, -1.45660715e-05
        %v6524 = vmul.f32 %v5692, -1.45660715e-05
        %v6525 = vmul.f32 %v5693, -1.45660715e-05
        %v6526 = vmul.f32 %v5694, -1.45660715e-05
        %v6527 = vmul.f32 %v5695, -1.45660715e-05
        %v6528 = vmul.f32 %v5696, -1.45660715e-05
        %v6529 = vmul.f32 %v5697, -1.45660715e-05
        %v6530 = vmul.f32 %v5698, -1.45660715e-05
        %v6531 = vmul.f32 %v5699, -1.45660715e-05
        %v6532 = vmul.f32 %v5700, -1.45660715e-05
        %v6533 = vmul.f32 %v5701, -1.45660715e-05
        %v6534 = vmul.f32 %v5702, -1.45660715e-05
        %v6535 = vmul.f32 %v5703, -1.45660715e-05
        %v6536 = vmul.f32 %v5704, -1.45660715e-05
        %v6537 = vmul.f32 %v5705, -1.45660715e-05
        %v6538 = vadd.f32 %v6474, -0.00021337405
        %v6539 = vadd.f32 %v6475, -0.00021337405
        %v6540 = vadd.f32 %v6476, -0.00021337405
        %v6541 = vadd.f32 %v6477, -0.00021337405
        %v6542 = vadd.f32 %v6478, -0.00021337405
        %v6543 = vadd.f32 %v6479, -0.00021337405
        %v6544 = vadd.f32 %v6480, -0.00021337405
        %v6545 = vadd.f32 %v6481, -0.00021337405
        %v6546 = vadd.f32 %v6482, -0.00021337405
        %v6547 = vadd.f32 %v6483, -0.00021337405
        %v6548 = vadd.f32 %v6484, -0.00021337405
        %v6549 = vadd.f32 %v6485, -0.00021337405
        %v6550 = vadd.f32 %v6486, -0.00021337405
        %v6551 = vadd.f32 %v6487, -0.00021337405
        %v6552 = vadd.f32 %v6488, -0.00021337405
        %v6553 = vadd.f32 %v6489, -0.00021337405
        %v6554 = vadd.f32 %v6490, -0.00021337405
        %v6555 = vadd.f32 %v6491, -0.00021337405
        %v6556 = vadd.f32 %v6492, -0.00021337405
        %v6557 = vadd.f32 %v6493, -0.00021337405
        %v6558 = vadd.f32 %v6494, -0.00021337405
        %v6559 = vadd.f32 %v6495, -0.00021337405
        %v6560 = vadd.f32 %v6496, -0.00021337405
        %v6561 = vadd.f32 %v6497, -0.00021337405
        %v6562 = vadd.f32 %v6498, -0.00021337405
        %v6563 = vadd.f32 %v6499, -0.00021337405
        %v6564 = vadd.f32 %v6500, -0.00021337405
        %v6565 = vadd.f32 %v6501, -0.00021337405
        %v6566 = vadd.f32 %v6502, -0.00021337405
        %v6567 = vadd.f32 %v6503, -0.00021337405
        %v6568 = vadd.f32 %v6504, -0.00021337405
        %v6569 = vadd.f32 %v6505, -0.00021337405
        %v6570 = vadd.f32 %v6506, -0.00021337405
        %v6571 = vadd.f32 %v6507, -0.00021337405
        %v6572 = vadd.f32 %v6508, -0.00021337405
        %v6573 = vadd.f32 %v6509, -0.00021337405
        %v6574 = vadd.f32 %v6510, -0.00021337405
        %v6575 = vadd.f32 %v6511, -0.00021337405
        %v6576 = vadd.f32 %v6512, -0.00021337405
        %v6577 = vadd.f32 %v6513, -0.00021337405
        %v6578 = vadd.f32 %v6514, -0.00021337405
        %v6579 = vadd.f32 %v6515, -0.00021337405
        %v6580 = vadd.f32 %v6516, -0.00021337405
        %v6581 = vadd.f32 %v6517, -0.00021337405
        %v6582 = vadd.f32 %v6518, -0.00021337405
        %v6583 = vadd.f32 %v6519, -0.00021337405
        %v6584 = vadd.f32 %v6520, -0.00021337405
        %v6585 = vadd.f32 %v6521, -0.00021337405
        %v6586 = vadd.f32 %v6522, -0.00021337405
        %v6587 = vadd.f32 %v6523, -0.00021337405
        %v6588 = vadd.f32 %v6524, -0.00021337405
        %v6589 = vadd.f32 %v6525, -0.00021337405
        %v6590 = vadd.f32 %v6526, -0.00021337405
        %v6591 = vadd.f32 %v6527, -0.00021337405
        %v6592 = vadd.f32 %v6528, -0.00021337405
        %v6593 = vadd.f32 %v6529, -0.00021337405
        %v6594 = vadd.f32 %v6530, -0.00021337405
        %v6595 = vadd.f32 %v6531, -0.00021337405
        %v6596 = vadd.f32 %v6532, -0.00021337405
        %v6597 = vadd.f32 %v6533, -0.00021337405
        %v6598 = vadd.f32 %v6534, -0.00021337405
        %v6599 = vadd.f32 %v6535, -0.00021337405
        %v6600 = vadd.f32 %v6536, -0.00021337405
        %v6601 = vadd.f32 %v6537, -0.00021337405
        %v6602 = vmul.f32 %v6538, %v5642
        %v6603 = vmul.f32 %v6539, %v5643
        %v6604 = vmul.f32 %v6540, %v5644
        %v6605 = vmul.f32 %v6541, %v5645
        %v6606 = vmul.f32 %v6542, %v5646
        %v6607 = vmul.f32 %v6543, %v5647
        %v6608 = vmul.f32 %v6544, %v5648
        %v6609 = vmul.f32 %v6545, %v5649
        %v6610 = vmul.f32 %v6546, %v5650
        %v6611 = vmul.f32 %v6547, %v5651
        %v6612 = vmul.f32 %v6548, %v5652
        %v6613 = vmul.f32 %v6549, %v5653
        %v6614 = vmul.f32 %v6550, %v5654
        %v6615 = vmul.f32 %v6551, %v5655
        %v6616 = vmul.f32 %v6552, %v5656
        %v6617 = vmul.f32 %v6553, %v5657
        %v6618 = vmul.f32 %v6554, %v5658
        %v6619 = vmul.f32 %v6555, %v5659
        %v6620 = vmul.f32 %v6556, %v5660
        %v6621 = vmul.f32 %v6557, %v5661
        %v6622 = vmul.f32 %v6558, %v5662
        %v6623 = vmul.f32 %v6559, %v5663
        %v6624 = vmul.f32 %v6560, %v5664
        %v6625 = vmul.f32 %v6561, %v5665
        %v6626 = vmul.f32 %v6562, %v5666
        %v6627 = vmul.f32 %v6563, %v5667
        %v6628 = vmul.f32 %v6564, %v5668
        %v6629 = vmul.f32 %v6565, %v5669
        %v6630 = vmul.f32 %v6566, %v5670
        %v6631 = vmul.f32 %v6567, %v5671
        %v6632 = vmul.f32 %v6568, %v5672
        %v6633 = vmul.f32 %v6569, %v5673
        %v6634 = vmul.f32 %v6570, %v5674
        %v6635 = vmul.f32 %v6571, %v5675
        %v6636 = vmul.f32 %v6572, %v5676
        %v6637 = vmul.f32 %v6573, %v5677
        %v6638 = vmul.f32 %v6574, %v5678
        %v6639 = vmul.f32 %v6575, %v5679
        %v6640 = vmul.f32 %v6576, %v5680
        %v6641 = vmul.f32 %v6577, %v5681
        %v6642 = vmul.f32 %v6578, %v5682
        %v6643 = vmul.f32 %v6579, %v5683
        %v6644 = vmul.f32 %v6580, %v5684
        %v6645 = vmul.f32 %v6581, %v5685
        %v6646 = vmul.f32 %v6582, %v5686
        %v6647 = vmul.f32 %v6583, %v5687
        %v6648 = vmul.f32 %v6584, %v5688
        %v6649 = vmul.f32 %v6585, %v5689
        %v6650 = vmul.f32 %v6586, %v5690
        %v6651 = vmul.f32 %v6587, %v5691
        %v6652 = vmul.f32 %v6588, %v5692
        %v6653 = vmul.f32 %v6589, %v5693
        %v6654 = vmul.f32 %v6590, %v5694
        %v6655 = vmul.f32 %v6591, %v5695
        %v6656 = vmul.f32 %v6592, %v5696
        %v6657 = vmul.f32 %v6593, %v5697
        %v6658 = vmul.f32 %v6594, %v5698
        %v6659 = vmul.f32 %v6595, %v5699
        %v6660 = vmul.f32 %v6596, %v5700
        %v6661 = vmul.f32 %v6597, %v5701
        %v6662 = vmul.f32 %v6598, %v5702
        %v6663 = vmul.f32 %v6599, %v5703
        %v6664 = vmul.f32 %v6600, %v5704
        %v6665 = vmul.f32 %v6601, %v5705
        %v6666 = vadd.f32 %v6602, -0.001682827
        %v6667 = vadd.f32 %v6603, -0.001682827
        %v6668 = vadd.f32 %v6604, -0.001682827
        %v6669 = vadd.f32 %v6605, -0.001682827
        %v6670 = vadd.f32 %v6606, -0.001682827
        %v6671 = vadd.f32 %v6607, -0.001682827
        %v6672 = vadd.f32 %v6608, -0.001682827
        %v6673 = vadd.f32 %v6609, -0.001682827
        %v6674 = vadd.f32 %v6610, -0.001682827
        %v6675 = vadd.f32 %v6611, -0.001682827
        %v6676 = vadd.f32 %v6612, -0.001682827
        %v6677 = vadd.f32 %v6613, -0.001682827
        %v6678 = vadd.f32 %v6614, -0.001682827
        %v6679 = vadd.f32 %v6615, -0.001682827
        %v6680 = vadd.f32 %v6616, -0.001682827
        %v6681 = vadd.f32 %v6617, -0.001682827
        %v6682 = vadd.f32 %v6618, -0.001682827
        %v6683 = vadd.f32 %v6619, -0.001682827
        %v6684 = vadd.f32 %v6620, -0.001682827
        %v6685 = vadd.f32 %v6621, -0.001682827
        %v6686 = vadd.f32 %v6622, -0.001682827
        %v6687 = vadd.f32 %v6623, -0.001682827
        %v6688 = vadd.f32 %v6624, -0.001682827
        %v6689 = vadd.f32 %v6625, -0.001682827
        %v6690 = vadd.f32 %v6626, -0.001682827
        %v6691 = vadd.f32 %v6627, -0.001682827
        %v6692 = vadd.f32 %v6628, -0.001682827
        %v6693 = vadd.f32 %v6629, -0.001682827
        %v6694 = vadd.f32 %v6630, -0.001682827
        %v6695 = vadd.f32 %v6631, -0.001682827
        %v6696 = vadd.f32 %v6632, -0.001682827
        %v6697 = vadd.f32 %v6633, -0.001682827
        %v6698 = vadd.f32 %v6634, -0.001682827
        %v6699 = vadd.f32 %v6635, -0.001682827
        %v6700 = vadd.f32 %v6636, -0.001682827
        %v6701 = vadd.f32 %v6637, -0.001682827
        %v6702 = vadd.f32 %v6638, -0.001682827
        %v6703 = vadd.f32 %v6639, -0.001682827
        %v6704 = vadd.f32 %v6640, -0.001682827
        %v6705 = vadd.f32 %v6641, -0.001682827
        %v6706 = vadd.f32 %v6642, -0.001682827
        %v6707 = vadd.f32 %v6643, -0.001682827
        %v6708 = vadd.f32 %v6644, -0.001682827
        %v6709 = vadd.f32 %v6645, -0.001682827
        %v6710 = vadd.f32 %v6646, -0.001682827
        %v6711 = vadd.f32 %v6647, -0.001682827
        %v6712 = vadd.f32 %v6648, -0.001682827
        %v6713 = vadd.f32 %v6649, -0.001682827
        %v6714 = vadd.f32 %v6650, -0.001682827
        %v6715 = vadd.f32 %v6651, -0.001682827
        %v6716 = vadd.f32 %v6652, -0.001682827
        %v6717 = vadd.f32 %v6653, -0.001682827
        %v6718 = vadd.f32 %v6654, -0.001682827
        %v6719 = vadd.f32 %v6655, -0.001682827
        %v6720 = vadd.f32 %v6656, -0.001682827
        %v6721 = vadd.f32 %v6657, -0.001682827
        %v6722 = vadd.f32 %v6658, -0.001682827
        %v6723 = vadd.f32 %v6659, -0.001682827
        %v6724 = vadd.f32 %v6660, -0.001682827
        %v6725 = vadd.f32 %v6661, -0.001682827
        %v6726 = vadd.f32 %v6662, -0.001682827
        %v6727 = vadd.f32 %v6663, -0.001682827
        %v6728 = vadd.f32 %v6664, -0.001682827
        %v6729 = vadd.f32 %v6665, -0.001682827
        %v6730 = vmul.f32 %v6666, %v5642
        %v6731 = vmul.f32 %v6667, %v5643
        %v6732 = vmul.f32 %v6668, %v5644
        %v6733 = vmul.f32 %v6669, %v5645
        %v6734 = vmul.f32 %v6670, %v5646
        %v6735 = vmul.f32 %v6671, %v5647
        %v6736 = vmul.f32 %v6672, %v5648
        %v6737 = vmul.f32 %v6673, %v5649
        %v6738 = vmul.f32 %v6674, %v5650
        %v6739 = vmul.f32 %v6675, %v5651
        %v6740 = vmul.f32 %v6676, %v5652
        %v6741 = vmul.f32 %v6677, %v5653
        %v6742 = vmul.f32 %v6678, %v5654
        %v6743 = vmul.f32 %v6679, %v5655
        %v6744 = vmul.f32 %v6680, %v5656
        %v6745 = vmul.f32 %v6681, %v5657
        %v6746 = vmul.f32 %v6682, %v5658
        %v6747 = vmul.f32 %v6683, %v5659
        %v6748 = vmul.f32 %v6684, %v5660
        %v6749 = vmul.f32 %v6685, %v5661
        %v6750 = vmul.f32 %v6686, %v5662
        %v6751 = vmul.f32 %v6687, %v5663
        %v6752 = vmul.f32 %v6688, %v5664
        %v6753 = vmul.f32 %v6689, %v5665
        %v6754 = vmul.f32 %v6690, %v5666
        %v6755 = vmul.f32 %v6691, %v5667
        %v6756 = vmul.f32 %v6692, %v5668
        %v6757 = vmul.f32 %v6693, %v5669
        %v6758 = vmul.f32 %v6694, %v5670
        %v6759 = vmul.f32 %v6695, %v5671
        %v6760 = vmul.f32 %v6696, %v5672
        %v6761 = vmul.f32 %v6697, %v5673
        %v6762 = vmul.f32 %v6698, %v5674
        %v6763 = vmul.f32 %v6699, %v5675
        %v6764 = vmul.f32 %v6700, %v5676
        %v6765 = vmul.f32 %v6701, %v5677
        %v6766 = vmul.f32 %v6702, %v5678
        %v6767 = vmul.f32 %v6703, %v5679
        %v6768 = vmul.f32 %v6704, %v5680
        %v6769 = vmul.f32 %v6705, %v5681
        %v6770 = vmul.f32 %v6706, %v5682
        %v6771 = vmul.f32 %v6707, %v5683
        %v6772 = vmul.f32 %v6708, %v5684
        %v6773 = vmul.f32 %v6709, %v5685
        %v6774 = vmul.f32 %v6710, %v5686
        %v6775 = vmul.f32 %v6711, %v5687
        %v6776 = vmul.f32 %v6712, %v5688
        %v6777 = vmul.f32 %v6713, %v5689
        %v6778 = vmul.f32 %v6714, %v5690
        %v6779 = vmul.f32 %v6715, %v5691
        %v6780 = vmul.f32 %v6716, %v5692
        %v6781 = vmul.f32 %v6717, %v5693
        %v6782 = vmul.f32 %v6718, %v5694
        %v6783 = vmul.f32 %v6719, %v5695
        %v6784 = vmul.f32 %v6720, %v5696
        %v6785 = vmul.f32 %v6721, %v5697
        %v6786 = vmul.f32 %v6722, %v5698
        %v6787 = vmul.f32 %v6723, %v5699
        %v6788 = vmul.f32 %v6724, %v5700
        %v6789 = vmul.f32 %v6725, %v5701
        %v6790 = vmul.f32 %v6726, %v5702
        %v6791 = vmul.f32 %v6727, %v5703
        %v6792 = vmul.f32 %v6728, %v5704
        %v6793 = vmul.f32 %v6729, %v5705
        %v6794 = vadd.f32 %v6730, -0.0073733293
        %v6795 = vadd.f32 %v6731, -0.0073733293
        %v6796 = vadd.f32 %v6732, -0.0073733293
        %v6797 = vadd.f32 %v6733, -0.0073733293
        %v6798 = vadd.f32 %v6734, -0.0073733293
        %v6799 = vadd.f32 %v6735, -0.0073733293
        %v6800 = vadd.f32 %v6736, -0.0073733293
        %v6801 = vadd.f32 %v6737, -0.0073733293
        %v6802 = vadd.f32 %v6738, -0.0073733293
        %v6803 = vadd.f32 %v6739, -0.0073733293
        %v6804 = vadd.f32 %v6740, -0.0073733293
        %v6805 = vadd.f32 %v6741, -0.0073733293
        %v6806 = vadd.f32 %v6742, -0.0073733293
        %v6807 = vadd.f32 %v6743, -0.0073733293
        %v6808 = vadd.f32 %v6744, -0.0073733293
        %v6809 = vadd.f32 %v6745, -0.0073733293
        %v6810 = vadd.f32 %v6746, -0.0073733293
        %v6811 = vadd.f32 %v6747, -0.0073733293
        %v6812 = vadd.f32 %v6748, -0.0073733293
        %v6813 = vadd.f32 %v6749, -0.0073733293
        %v6814 = vadd.f32 %v6750, -0.0073733293
        %v6815 = vadd.f32 %v6751, -0.0073733293
        %v6816 = vadd.f32 %v6752, -0.0073733293
        %v6817 = vadd.f32 %v6753, -0.0073733293
        %v6818 = vadd.f32 %v6754, -0.0073733293
        %v6819 = vadd.f32 %v6755, -0.0073733293
        %v6820 = vadd.f32 %v6756, -0.0073733293
        %v6821 = vadd.f32 %v6757, -0.0073733293
        %v6822 = vadd.f32 %v6758, -0.0073733293
        %v6823 = vadd.f32 %v6759, -0.0073733293
        %v6824 = vadd.f32 %v6760, -0.0073733293
        %v6825 = vadd.f32 %v6761, -0.0073733293
        %v6826 = vadd.f32 %v6762, -0.0073733293
        %v6827 = vadd.f32 %v6763, -0.0073733293
        %v6828 = vadd.f32 %v6764, -0.0073733293
        %v6829 = vadd.f32 %v6765, -0.0073733293
        %v6830 = vadd.f32 %v6766, -0.0073733293
        %v6831 = vadd.f32 %v6767, -0.0073733293
        %v6832 = vadd.f32 %v6768, -0.0073733293
        %v6833 = vadd.f32 %v6769, -0.0073733293
        %v6834 = vadd.f32 %v6770, -0.0073733293
        %v6835 = vadd.f32 %v6771, -0.0073733293
        %v6836 = vadd.f32 %v6772, -0.0073733293
        %v6837 = vadd.f32 %v6773, -0.0073733293
        %v6838 = vadd.f32 %v6774, -0.0073733293
        %v6839 = vadd.f32 %v6775, -0.0073733293
        %v6840 = vadd.f32 %v6776, -0.0073733293
        %v6841 = vadd.f32 %v6777, -0.0073733293
        %v6842 = vadd.f32 %v6778, -0.0073733293
        %v6843 = vadd.f32 %v6779, -0.0073733293
        %v6844 = vadd.f32 %v6780, -0.0073733293
        %v6845 = vadd.f32 %v6781, -0.0073733293
        %v6846 = vadd.f32 %v6782, -0.0073733293
        %v6847 = vadd.f32 %v6783, -0.0073733293
        %v6848 = vadd.f32 %v6784, -0.0073733293
        %v6849 = vadd.f32 %v6785, -0.0073733293
        %v6850 = vadd.f32 %v6786, -0.0073733293
        %v6851 = vadd.f32 %v6787, -0.0073733293
        %v6852 = vadd.f32 %v6788, -0.0073733293
        %v6853 = vadd.f32 %v6789, -0.0073733293
        %v6854 = vadd.f32 %v6790, -0.0073733293
        %v6855 = vadd.f32 %v6791, -0.0073733293
        %v6856 = vadd.f32 %v6792, -0.0073733293
        %v6857 = vadd.f32 %v6793, -0.0073733293
        %v6858 = vmul.f32 %v6794, %v5642
        %v6859 = vmul.f32 %v6795, %v5643
        %v6860 = vmul.f32 %v6796, %v5644
        %v6861 = vmul.f32 %v6797, %v5645
        %v6862 = vmul.f32 %v6798, %v5646
        %v6863 = vmul.f32 %v6799, %v5647
        %v6864 = vmul.f32 %v6800, %v5648
        %v6865 = vmul.f32 %v6801, %v5649
        %v6866 = vmul.f32 %v6802, %v5650
        %v6867 = vmul.f32 %v6803, %v5651
        %v6868 = vmul.f32 %v6804, %v5652
        %v6869 = vmul.f32 %v6805, %v5653
        %v6870 = vmul.f32 %v6806, %v5654
        %v6871 = vmul.f32 %v6807, %v5655
        %v6872 = vmul.f32 %v6808, %v5656
        %v6873 = vmul.f32 %v6809, %v5657
        %v6874 = vmul.f32 %v6810, %v5658
        %v6875 = vmul.f32 %v6811, %v5659
        %v6876 = vmul.f32 %v6812, %v5660
        %v6877 = vmul.f32 %v6813, %v5661
        %v6878 = vmul.f32 %v6814, %v5662
        %v6879 = vmul.f32 %v6815, %v5663
        %v6880 = vmul.f32 %v6816, %v5664
        %v6881 = vmul.f32 %v6817, %v5665
        %v6882 = vmul.f32 %v6818, %v5666
        %v6883 = vmul.f32 %v6819, %v5667
        %v6884 = vmul.f32 %v6820, %v5668
        %v6885 = vmul.f32 %v6821, %v5669
        %v6886 = vmul.f32 %v6822, %v5670
        %v6887 = vmul.f32 %v6823, %v5671
        %v6888 = vmul.f32 %v6824, %v5672
        %v6889 = vmul.f32 %v6825, %v5673
        %v6890 = vmul.f32 %v6826, %v5674
        %v6891 = vmul.f32 %v6827, %v5675
        %v6892 = vmul.f32 %v6828, %v5676
        %v6893 = vmul.f32 %v6829, %v5677
        %v6894 = vmul.f32 %v6830, %v5678
        %v6895 = vmul.f32 %v6831, %v5679
        %v6896 = vmul.f32 %v6832, %v5680
        %v6897 = vmul.f32 %v6833, %v5681
        %v6898 = vmul.f32 %v6834, %v5682
        %v6899 = vmul.f32 %v6835, %v5683
        %v6900 = vmul.f32 %v6836, %v5684
        %v6901 = vmul.f32 %v6837, %v5685
        %v6902 = vmul.f32 %v6838, %v5686
        %v6903 = vmul.f32 %v6839, %v5687
        %v6904 = vmul.f32 %v6840, %v5688
        %v6905 = vmul.f32 %v6841, %v5689
        %v6906 = vmul.f32 %v6842, %v5690
        %v6907 = vmul.f32 %v6843, %v5691
        %v6908 = vmul.f32 %v6844, %v5692
        %v6909 = vmul.f32 %v6845, %v5693
        %v6910 = vmul.f32 %v6846, %v5694
        %v6911 = vmul.f32 %v6847, %v5695
        %v6912 = vmul.f32 %v6848, %v5696
        %v6913 = vmul.f32 %v6849, %v5697
        %v6914 = vmul.f32 %v6850, %v5698
        %v6915 = vmul.f32 %v6851, %v5699
        %v6916 = vmul.f32 %v6852, %v5700
        %v6917 = vmul.f32 %v6853, %v5701
        %v6918 = vmul.f32 %v6854, %v5702
        %v6919 = vmul.f32 %v6855, %v5703
        %v6920 = vmul.f32 %v6856, %v5704
        %v6921 = vmul.f32 %v6857, %v5705
        %v6922 = vadd.f32 %v6858, -0.014264739
        %v6923 = vadd.f32 %v6859, -0.014264739
        %v6924 = vadd.f32 %v6860, -0.014264739
        %v6925 = vadd.f32 %v6861, -0.014264739
        %v6926 = vadd.f32 %v6862, -0.014264739
        %v6927 = vadd.f32 %v6863, -0.014264739
        %v6928 = vadd.f32 %v6864, -0.014264739
        %v6929 = vadd.f32 %v6865, -0.014264739
        %v6930 = vadd.f32 %v6866, -0.014264739
        %v6931 = vadd.f32 %v6867, -0.014264739
        %v6932 = vadd.f32 %v6868, -0.014264739
        %v6933 = vadd.f32 %v6869, -0.014264739
        %v6934 = vadd.f32 %v6870, -0.014264739
        %v6935 = vadd.f32 %v6871, -0.014264739
        %v6936 = vadd.f32 %v6872, -0.014264739
        %v6937 = vadd.f32 %v6873, -0.014264739
        %v6938 = vadd.f32 %v6874, -0.014264739
        %v6939 = vadd.f32 %v6875, -0.014264739
        %v6940 = vadd.f32 %v6876, -0.014264739
        %v6941 = vadd.f32 %v6877, -0.014264739
        %v6942 = vadd.f32 %v6878, -0.014264739
        %v6943 = vadd.f32 %v6879, -0.014264739
        %v6944 = vadd.f32 %v6880, -0.014264739
        %v6945 = vadd.f32 %v6881, -0.014264739
        %v6946 = vadd.f32 %v6882, -0.014264739
        %v6947 = vadd.f32 %v6883, -0.014264739
        %v6948 = vadd.f32 %v6884, -0.014264739
        %v6949 = vadd.f32 %v6885, -0.014264739
        %v6950 = vadd.f32 %v6886, -0.014264739
        %v6951 = vadd.f32 %v6887, -0.014264739
        %v6952 = vadd.f32 %v6888, -0.014264739
        %v6953 = vadd.f32 %v6889, -0.014264739
        %v6954 = vadd.f32 %v6890, -0.014264739
        %v6955 = vadd.f32 %v6891, -0.014264739
        %v6956 = vadd.f32 %v6892, -0.014264739
        %v6957 = vadd.f32 %v6893, -0.014264739
        %v6958 = vadd.f32 %v6894, -0.014264739
        %v6959 = vadd.f32 %v6895, -0.014264739
        %v6960 = vadd.f32 %v6896, -0.014264739
        %v6961 = vadd.f32 %v6897, -0.014264739
        %v6962 = vadd.f32 %v6898, -0.014264739
        %v6963 = vadd.f32 %v6899, -0.014264739
        %v6964 = vadd.f32 %v6900, -0.014264739
        %v6965 = vadd.f32 %v6901, -0.014264739
        %v6966 = vadd.f32 %v6902, -0.014264739
        %v6967 = vadd.f32 %v6903, -0.014264739
        %v6968 = vadd.f32 %v6904, -0.014264739
        %v6969 = vadd.f32 %v6905, -0.014264739
        %v6970 = vadd.f32 %v6906, -0.014264739
        %v6971 = vadd.f32 %v6907, -0.014264739
        %v6972 = vadd.f32 %v6908, -0.014264739
        %v6973 = vadd.f32 %v6909, -0.014264739
        %v6974 = vadd.f32 %v6910, -0.014264739
        %v6975 = vadd.f32 %v6911, -0.014264739
        %v6976 = vadd.f32 %v6912, -0.014264739
        %v6977 = vadd.f32 %v6913, -0.014264739
        %v6978 = vadd.f32 %v6914, -0.014264739
        %v6979 = vadd.f32 %v6915, -0.014264739
        %v6980 = vadd.f32 %v6916, -0.014264739
        %v6981 = vadd.f32 %v6917, -0.014264739
        %v6982 = vadd.f32 %v6918, -0.014264739
        %v6983 = vadd.f32 %v6919, -0.014264739
        %v6984 = vadd.f32 %v6920, -0.014264739
        %v6985 = vadd.f32 %v6921, -0.014264739
        %v6986 = vmul.f32 %v5578, %v6410
        %v6987 = vmul.f32 %v5579, %v6411
        %v6988 = vmul.f32 %v5580, %v6412
        %v6989 = vmul.f32 %v5581, %v6413
        %v6990 = vmul.f32 %v5582, %v6414
        %v6991 = vmul.f32 %v5583, %v6415
        %v6992 = vmul.f32 %v5584, %v6416
        %v6993 = vmul.f32 %v5585, %v6417
        %v6994 = vmul.f32 %v5586, %v6418
        %v6995 = vmul.f32 %v5587, %v6419
        %v6996 = vmul.f32 %v5588, %v6420
        %v6997 = vmul.f32 %v5589, %v6421
        %v6998 = vmul.f32 %v5590, %v6422
        %v6999 = vmul.f32 %v5591, %v6423
        %v7000 = vmul.f32 %v5592, %v6424
        %v7001 = vmul.f32 %v5593, %v6425
        %v7002 = vmul.f32 %v5594, %v6426
        %v7003 = vmul.f32 %v5595, %v6427
        %v7004 = vmul.f32 %v5596, %v6428
        %v7005 = vmul.f32 %v5597, %v6429
        %v7006 = vmul.f32 %v5598, %v6430
        %v7007 = vmul.f32 %v5599, %v6431
        %v7008 = vmul.f32 %v5600, %v6432
        %v7009 = vmul.f32 %v5601, %v6433
        %v7010 = vmul.f32 %v5602, %v6434
        %v7011 = vmul.f32 %v5603, %v6435
        %v7012 = vmul.f32 %v5604, %v6436
        %v7013 = vmul.f32 %v5605, %v6437
        %v7014 = vmul.f32 %v5606, %v6438
        %v7015 = vmul.f32 %v5607, %v6439
        %v7016 = vmul.f32 %v5608, %v6440
        %v7017 = vmul.f32 %v5609, %v6441
        %v7018 = vmul.f32 %v5610, %v6442
        %v7019 = vmul.f32 %v5611, %v6443
        %v7020 = vmul.f32 %v5612, %v6444
        %v7021 = vmul.f32 %v5613, %v6445
        %v7022 = vmul.f32 %v5614, %v6446
        %v7023 = vmul.f32 %v5615, %v6447
        %v7024 = vmul.f32 %v5616, %v6448
        %v7025 = vmul.f32 %v5617, %v6449
        %v7026 = vmul.f32 %v5618, %v6450
        %v7027 = vmul.f32 %v5619, %v6451
        %v7028 = vmul.f32 %v5620, %v6452
        %v7029 = vmul.f32 %v5621, %v6453
        %v7030 = vmul.f32 %v5622, %v6454
        %v7031 = vmul.f32 %v5623, %v6455
        %v7032 = vmul.f32 %v5624, %v6456
        %v7033 = vmul.f32 %v5625, %v6457
        %v7034 = vmul.f32 %v5626, %v6458
        %v7035 = vmul.f32 %v5627, %v6459
        %v7036 = vmul.f32 %v5628, %v6460
        %v7037 = vmul.f32 %v5629, %v6461
        %v7038 = vmul.f32 %v5630, %v6462
        %v7039 = vmul.f32 %v5631, %v6463
        %v7040 = vmul.f32 %v5632, %v6464
        %v7041 = vmul.f32 %v5633, %v6465
        %v7042 = vmul.f32 %v5634, %v6466
        %v7043 = vmul.f32 %v5635, %v6467
        %v7044 = vmul.f32 %v5636, %v6468
        %v7045 = vmul.f32 %v5637, %v6469
        %v7046 = vmul.f32 %v5638, %v6470
        %v7047 = vmul.f32 %v5639, %v6471
        %v7048 = vmul.f32 %v5640, %v6472
        %v7049 = vmul.f32 %v5641, %v6473
        %v7050 = vrcp.pop %v6922
        %v7051 = vrcp.pop %v6923
        %v7052 = vrcp.pop %v6924
        %v7053 = vrcp.pop %v6925
        %v7054 = vrcp.pop %v6926
        %v7055 = vrcp.pop %v6927
        %v7056 = vrcp.pop %v6928
        %v7057 = vrcp.pop %v6929
        %v7058 = vrcp.pop %v6930
        %v7059 = vrcp.pop %v6931
        %v7060 = vrcp.pop %v6932
        %v7061 = vrcp.pop %v6933
        %v7062 = vrcp.pop %v6934
        %v7063 = vrcp.pop %v6935
        %v7064 = vrcp.pop %v6936
        %v7065 = vrcp.pop %v6937
        %v7066 = vrcp.pop %v6938
        %v7067 = vrcp.pop %v6939
        %v7068 = vrcp.pop %v6940
        %v7069 = vrcp.pop %v6941
        %v7070 = vrcp.pop %v6942
        %v7071 = vrcp.pop %v6943
        %v7072 = vrcp.pop %v6944
        %v7073 = vrcp.pop %v6945
        %v7074 = vrcp.pop %v6946
        %v7075 = vrcp.pop %v6947
        %v7076 = vrcp.pop %v6948
        %v7077 = vrcp.pop %v6949
        %v7078 = vrcp.pop %v6950
        %v7079 = vrcp.pop %v6951
        %v7080 = vrcp.pop %v6952
        %v7081 = vrcp.pop %v6953
        %v7082 = vrcp.pop %v6954
        %v7083 = vrcp.pop %v6955
        %v7084 = vrcp.pop %v6956
        %v7085 = vrcp.pop %v6957
        %v7086 = vrcp.pop %v6958
        %v7087 = vrcp.pop %v6959
        %v7088 = vrcp.pop %v6960
        %v7089 = vrcp.pop %v6961
        %v7090 = vrcp.pop %v6962
        %v7091 = vrcp.pop %v6963
        %v7092 = vrcp.pop %v6964
        %v7093 = vrcp.pop %v6965
        %v7094 = vrcp.pop %v6966
        %v7095 = vrcp.pop %v6967
        %v7096 = vrcp.pop %v6968
        %v7097 = vrcp.pop %v6969
        %v7098 = vrcp.pop %v6970
        %v7099 = vrcp.pop %v6971
        %v7100 = vrcp.pop %v6972
        %v7101 = vrcp.pop %v6973
        %v7102 = vrcp.pop %v6974
        %v7103 = vrcp.pop %v6975
        %v7104 = vrcp.pop %v6976
        %v7105 = vrcp.pop %v6977
        %v7106 = vrcp.pop %v6978
        %v7107 = vrcp.pop %v6979
        %v7108 = vrcp.pop %v6980
        %v7109 = vrcp.pop %v6981
        %v7110 = vrcp.pop %v6982
        %v7111 = vrcp.pop %v6983
        %v7112 = vrcp.pop %v6984
        %v7113 = vrcp.pop %v6985
        %v7114 = vmul.f32 %v6986, %v7050
        %v7115 = vmul.f32 %v6987, %v7051
        %v7116 = vmul.f32 %v6988, %v7052
        %v7117 = vmul.f32 %v6989, %v7053
        %v7118 = vmul.f32 %v6990, %v7054
        %v7119 = vmul.f32 %v6991, %v7055
        %v7120 = vmul.f32 %v6992, %v7056
        %v7121 = vmul.f32 %v6993, %v7057
        %v7122 = vmul.f32 %v6994, %v7058
        %v7123 = vmul.f32 %v6995, %v7059
        %v7124 = vmul.f32 %v6996, %v7060
        %v7125 = vmul.f32 %v6997, %v7061
        %v7126 = vmul.f32 %v6998, %v7062
        %v7127 = vmul.f32 %v6999, %v7063
        %v7128 = vmul.f32 %v7000, %v7064
        %v7129 = vmul.f32 %v7001, %v7065
        %v7130 = vmul.f32 %v7002, %v7066
        %v7131 = vmul.f32 %v7003, %v7067
        %v7132 = vmul.f32 %v7004, %v7068
        %v7133 = vmul.f32 %v7005, %v7069
        %v7134 = vmul.f32 %v7006, %v7070
        %v7135 = vmul.f32 %v7007, %v7071
        %v7136 = vmul.f32 %v7008, %v7072
        %v7137 = vmul.f32 %v7009, %v7073
        %v7138 = vmul.f32 %v7010, %v7074
        %v7139 = vmul.f32 %v7011, %v7075
        %v7140 = vmul.f32 %v7012, %v7076
        %v7141 = vmul.f32 %v7013, %v7077
        %v7142 = vmul.f32 %v7014, %v7078
        %v7143 = vmul.f32 %v7015, %v7079
        %v7144 = vmul.f32 %v7016, %v7080
        %v7145 = vmul.f32 %v7017, %v7081
        %v7146 = vmul.f32 %v7018, %v7082
        %v7147 = vmul.f32 %v7019, %v7083
        %v7148 = vmul.f32 %v7020, %v7084
        %v7149 = vmul.f32 %v7021, %v7085
        %v7150 = vmul.f32 %v7022, %v7086
        %v7151 = vmul.f32 %v7023, %v7087
        %v7152 = vmul.f32 %v7024, %v7088
        %v7153 = vmul.f32 %v7025, %v7089
        %v7154 = vmul.f32 %v7026, %v7090
        %v7155 = vmul.f32 %v7027, %v7091
        %v7156 = vmul.f32 %v7028, %v7092
        %v7157 = vmul.f32 %v7029, %v7093
        %v7158 = vmul.f32 %v7030, %v7094
        %v7159 = vmul.f32 %v7031, %v7095
        %v7160 = vmul.f32 %v7032, %v7096
        %v7161 = vmul.f32 %v7033, %v7097
        %v7162 = vmul.f32 %v7034, %v7098
        %v7163 = vmul.f32 %v7035, %v7099
        %v7164 = vmul.f32 %v7036, %v7100
        %v7165 = vmul.f32 %v7037, %v7101
        %v7166 = vmul.f32 %v7038, %v7102
        %v7167 = vmul.f32 %v7039, %v7103
        %v7168 = vmul.f32 %v7040, %v7104
        %v7169 = vmul.f32 %v7041, %v7105
        %v7170 = vmul.f32 %v7042, %v7106
        %v7171 = vmul.f32 %v7043, %v7107
        %v7172 = vmul.f32 %v7044, %v7108
        %v7173 = vmul.f32 %v7045, %v7109
        %v7174 = vmul.f32 %v7046, %v7110
        %v7175 = vmul.f32 %v7047, %v7111
        %v7176 = vmul.f32 %v7048, %v7112
        %v7177 = vmul.f32 %v7049, %v7113
        %v7178 = vadd.f32 %v7114, 1.0
        %v7179 = vadd.f32 %v7115, 1.0
        %v7180 = vadd.f32 %v7116, 1.0
        %v7181 = vadd.f32 %v7117, 1.0
        %v7182 = vadd.f32 %v7118, 1.0
        %v7183 = vadd.f32 %v7119, 1.0
        %v7184 = vadd.f32 %v7120, 1.0
        %v7185 = vadd.f32 %v7121, 1.0
        %v7186 = vadd.f32 %v7122, 1.0
        %v7187 = vadd.f32 %v7123, 1.0
        %v7188 = vadd.f32 %v7124, 1.0
        %v7189 = vadd.f32 %v7125, 1.0
        %v7190 = vadd.f32 %v7126, 1.0
        %v7191 = vadd.f32 %v7127, 1.0
        %v7192 = vadd.f32 %v7128, 1.0
        %v7193 = vadd.f32 %v7129, 1.0
        %v7194 = vadd.f32 %v7130, 1.0
        %v7195 = vadd.f32 %v7131, 1.0
        %v7196 = vadd.f32 %v7132, 1.0
        %v7197 = vadd.f32 %v7133, 1.0
        %v7198 = vadd.f32 %v7134, 1.0
        %v7199 = vadd.f32 %v7135, 1.0
        %v7200 = vadd.f32 %v7136, 1.0
        %v7201 = vadd.f32 %v7137, 1.0
        %v7202 = vadd.f32 %v7138, 1.0
        %v7203 = vadd.f32 %v7139, 1.0
        %v7204 = vadd.f32 %v7140, 1.0
        %v7205 = vadd.f32 %v7141, 1.0
        %v7206 = vadd.f32 %v7142, 1.0
        %v7207 = vadd.f32 %v7143, 1.0
        %v7208 = vadd.f32 %v7144, 1.0
        %v7209 = vadd.f32 %v7145, 1.0
        %v7210 = vadd.f32 %v7146, 1.0
        %v7211 = vadd.f32 %v7147, 1.0
        %v7212 = vadd.f32 %v7148, 1.0
        %v7213 = vadd.f32 %v7149, 1.0
        %v7214 = vadd.f32 %v7150, 1.0
        %v7215 = vadd.f32 %v7151, 1.0
        %v7216 = vadd.f32 %v7152, 1.0
        %v7217 = vadd.f32 %v7153, 1.0
        %v7218 = vadd.f32 %v7154, 1.0
        %v7219 = vadd.f32 %v7155, 1.0
        %v7220 = vadd.f32 %v7156, 1.0
        %v7221 = vadd.f32 %v7157, 1.0
        %v7222 = vadd.f32 %v7158, 1.0
        %v7223 = vadd.f32 %v7159, 1.0
        %v7224 = vadd.f32 %v7160, 1.0
        %v7225 = vadd.f32 %v7161, 1.0
        %v7226 = vadd.f32 %v7162, 1.0
        %v7227 = vadd.f32 %v7163, 1.0
        %v7228 = vadd.f32 %v7164, 1.0
        %v7229 = vadd.f32 %v7165, 1.0
        %v7230 = vadd.f32 %v7166, 1.0
        %v7231 = vadd.f32 %v7167, 1.0
        %v7232 = vadd.f32 %v7168, 1.0
        %v7233 = vadd.f32 %v7169, 1.0
        %v7234 = vadd.f32 %v7170, 1.0
        %v7235 = vadd.f32 %v7171, 1.0
        %v7236 = vadd.f32 %v7172, 1.0
        %v7237 = vadd.f32 %v7173, 1.0
        %v7238 = vadd.f32 %v7174, 1.0
        %v7239 = vadd.f32 %v7175, 1.0
        %v7240 = vadd.f32 %v7176, 1.0
        %v7241 = vadd.f32 %v7177, 1.0
        %v7242 = vmul.f32 %v5386, %v7178
        %v7243 = vmul.f32 %v5387, %v7179
        %v7244 = vmul.f32 %v5388, %v7180
        %v7245 = vmul.f32 %v5389, %v7181
        %v7246 = vmul.f32 %v5390, %v7182
        %v7247 = vmul.f32 %v5391, %v7183
        %v7248 = vmul.f32 %v5392, %v7184
        %v7249 = vmul.f32 %v5393, %v7185
        %v7250 = vmul.f32 %v5394, %v7186
        %v7251 = vmul.f32 %v5395, %v7187
        %v7252 = vmul.f32 %v5396, %v7188
        %v7253 = vmul.f32 %v5397, %v7189
        %v7254 = vmul.f32 %v5398, %v7190
        %v7255 = vmul.f32 %v5399, %v7191
        %v7256 = vmul.f32 %v5400, %v7192
        %v7257 = vmul.f32 %v5401, %v7193
        %v7258 = vmul.f32 %v5402, %v7194
        %v7259 = vmul.f32 %v5403, %v7195
        %v7260 = vmul.f32 %v5404, %v7196
        %v7261 = vmul.f32 %v5405, %v7197
        %v7262 = vmul.f32 %v5406, %v7198
        %v7263 = vmul.f32 %v5407, %v7199
        %v7264 = vmul.f32 %v5408, %v7200
        %v7265 = vmul.f32 %v5409, %v7201
        %v7266 = vmul.f32 %v5410, %v7202
        %v7267 = vmul.f32 %v5411, %v7203
        %v7268 = vmul.f32 %v5412, %v7204
        %v7269 = vmul.f32 %v5413, %v7205
        %v7270 = vmul.f32 %v5414, %v7206
        %v7271 = vmul.f32 %v5415, %v7207
        %v7272 = vmul.f32 %v5416, %v7208
        %v7273 = vmul.f32 %v5417, %v7209
        %v7274 = vmul.f32 %v5418, %v7210
        %v7275 = vmul.f32 %v5419, %v7211
        %v7276 = vmul.f32 %v5420, %v7212
        %v7277 = vmul.f32 %v5421, %v7213
        %v7278 = vmul.f32 %v5422, %v7214
        %v7279 = vmul.f32 %v5423, %v7215
        %v7280 = vmul.f32 %v5424, %v7216
        %v7281 = vmul.f32 %v5425, %v7217
        %v7282 = vmul.f32 %v5426, %v7218
        %v7283 = vmul.f32 %v5427, %v7219
        %v7284 = vmul.f32 %v5428, %v7220
        %v7285 = vmul.f32 %v5429, %v7221
        %v7286 = vmul.f32 %v5430, %v7222
        %v7287 = vmul.f32 %v5431, %v7223
        %v7288 = vmul.f32 %v5432, %v7224
        %v7289 = vmul.f32 %v5433, %v7225
        %v7290 = vmul.f32 %v5434, %v7226
        %v7291 = vmul.f32 %v5435, %v7227
        %v7292 = vmul.f32 %v5436, %v7228
        %v7293 = vmul.f32 %v5437, %v7229
        %v7294 = vmul.f32 %v5438, %v7230
        %v7295 = vmul.f32 %v5439, %v7231
        %v7296 = vmul.f32 %v5440, %v7232
        %v7297 = vmul.f32 %v5441, %v7233
        %v7298 = vmul.f32 %v5442, %v7234
        %v7299 = vmul.f32 %v5443, %v7235
        %v7300 = vmul.f32 %v5444, %v7236
        %v7301 = vmul.f32 %v5445, %v7237
        %v7302 = vmul.f32 %v5446, %v7238
        %v7303 = vmul.f32 %v5447, %v7239
        %v7304 = vmul.f32 %v5448, %v7240
        %v7305 = vmul.f32 %v5449, %v7241
        %v7306 = vpack.c.bf16 %v7246, %v7242
        %v7307 = vpack.c.bf16 %v7247, %v7243
        %v7308 = vpack.c.bf16 %v7248, %v7244
        %v7309 = vpack.c.bf16 %v7249, %v7245
        %v7310 = vpack.c.bf16 %v7254, %v7250
        %v7311 = vpack.c.bf16 %v7255, %v7251
        %v7312 = vpack.c.bf16 %v7256, %v7252
        %v7313 = vpack.c.bf16 %v7257, %v7253
        %v7314 = vpack.c.bf16 %v7262, %v7258
        %v7315 = vpack.c.bf16 %v7263, %v7259
        %v7316 = vpack.c.bf16 %v7264, %v7260
        %v7317 = vpack.c.bf16 %v7265, %v7261
        %v7318 = vpack.c.bf16 %v7270, %v7266
        %v7319 = vpack.c.bf16 %v7271, %v7267
        %v7320 = vpack.c.bf16 %v7272, %v7268
        %v7321 = vpack.c.bf16 %v7273, %v7269
        %v7322 = vpack.c.bf16 %v7278, %v7274
        %v7323 = vpack.c.bf16 %v7279, %v7275
        %v7324 = vpack.c.bf16 %v7280, %v7276
        %v7325 = vpack.c.bf16 %v7281, %v7277
        %v7326 = vpack.c.bf16 %v7286, %v7282
        %v7327 = vpack.c.bf16 %v7287, %v7283
        %v7328 = vpack.c.bf16 %v7288, %v7284
        %v7329 = vpack.c.bf16 %v7289, %v7285
        %v7330 = vpack.c.bf16 %v7294, %v7290
        %v7331 = vpack.c.bf16 %v7295, %v7291
        %v7332 = vpack.c.bf16 %v7296, %v7292
        %v7333 = vpack.c.bf16 %v7297, %v7293
        %v7334 = vpack.c.bf16 %v7302, %v7298
        %v7335 = vpack.c.bf16 %v7303, %v7299
        %v7336 = vpack.c.bf16 %v7304, %v7300
        %v7337 = vpack.c.bf16 %v7305, %v7301
        %v7338 = vld [vmem:[#allocation9] sm:$0xf]
        %v7339 = vld [vmem:[#allocation9 + $0x4] sm:$0xf]
        %v7340 = vld [vmem:[#allocation9 + $0x8] sm:$0xf]
        %v7341 = vld [vmem:[#allocation9 + $0xc] sm:$0xf]
        %v7342 = vld [vmem:[#allocation9 + $0x10] sm:$0xf]
        %v7343 = vld [vmem:[#allocation9 + $0x14] sm:$0xf]
        %v7344 = vld [vmem:[#allocation9 + $0x18] sm:$0xf]
        %v7345 = vld [vmem:[#allocation9 + $0x1c] sm:$0xf]
        %v7346 = vld [vmem:[#allocation9 + $0x20] sm:$0xf]
        %v7347 = vld [vmem:[#allocation9 + $0x24] sm:$0xf]
        %v7348 = vld [vmem:[#allocation9 + $0x28] sm:$0xf]
        %v7349 = vld [vmem:[#allocation9 + $0x2c] sm:$0xf]
        %v7350 = vld [vmem:[#allocation9 + $0x30] sm:$0xf]
        %v7351 = vld [vmem:[#allocation9 + $0x34] sm:$0xf]
        %v7352 = vld [vmem:[#allocation9 + $0x38] sm:$0xf]
        %v7353 = vld [vmem:[#allocation9 + $0x3c] sm:$0xf]
        %v7354 = vld [vmem:[#allocation9 + $0x40] sm:$0xf]
        %v7355 = vld [vmem:[#allocation9 + $0x44] sm:$0xf]
        %v7356 = vld [vmem:[#allocation9 + $0x48] sm:$0xf]
        %v7357 = vld [vmem:[#allocation9 + $0x4c] sm:$0xf]
        %v7358 = vld [vmem:[#allocation9 + $0x50] sm:$0xf]
        %v7359 = vld [vmem:[#allocation9 + $0x54] sm:$0xf]
        %v7360 = vld [vmem:[#allocation9 + $0x58] sm:$0xf]
        %v7361 = vld [vmem:[#allocation9 + $0x5c] sm:$0xf]
        %v7362 = vld [vmem:[#allocation9 + $0x60] sm:$0xf]
        %v7363 = vld [vmem:[#allocation9 + $0x64] sm:$0xf]
        %v7364 = vld [vmem:[#allocation9 + $0x68] sm:$0xf]
        %v7365 = vld [vmem:[#allocation9 + $0x6c] sm:$0xf]
        %v7366 = vld [vmem:[#allocation9 + $0x70] sm:$0xf]
        %v7367 = vld [vmem:[#allocation9 + $0x74] sm:$0xf]
        %v7368 = vld [vmem:[#allocation9 + $0x78] sm:$0xf]
        %v7369 = vld [vmem:[#allocation9 + $0x7c] sm:$0xf]
        %v7370 = vld [vmem:[#allocation9 + $0x80] sm:$0xf]
        %v7371 = vld [vmem:[#allocation9 + $0x84] sm:$0xf]
        %v7372 = vld [vmem:[#allocation9 + $0x88] sm:$0xf]
        %v7373 = vld [vmem:[#allocation9 + $0x8c] sm:$0xf]
        %v7374 = vld [vmem:[#allocation9 + $0x90] sm:$0xf]
        %v7375 = vld [vmem:[#allocation9 + $0x94] sm:$0xf]
        %v7376 = vld [vmem:[#allocation9 + $0x98] sm:$0xf]
        %v7377 = vld [vmem:[#allocation9 + $0x9c] sm:$0xf]
        %v7378 = vld [vmem:[#allocation9 + $0xa0] sm:$0xf]
        %v7379 = vld [vmem:[#allocation9 + $0xa4] sm:$0xf]
        %v7380 = vld [vmem:[#allocation9 + $0xa8] sm:$0xf]
        %v7381 = vld [vmem:[#allocation9 + $0xac] sm:$0xf]
        %v7382 = vld [vmem:[#allocation9 + $0xb0] sm:$0xf]
        %v7383 = vld [vmem:[#allocation9 + $0xb4] sm:$0xf]
        %v7384 = vld [vmem:[#allocation9 + $0xb8] sm:$0xf]
        %v7385 = vld [vmem:[#allocation9 + $0xbc] sm:$0xf]
        %v7386 = vld [vmem:[#allocation9 + $0xc0] sm:$0xf]
        %v7387 = vld [vmem:[#allocation9 + $0xc4] sm:$0xf]
        %v7388 = vld [vmem:[#allocation9 + $0xc8] sm:$0xf]
        %v7389 = vld [vmem:[#allocation9 + $0xcc] sm:$0xf]
        %v7390 = vld [vmem:[#allocation9 + $0xd0] sm:$0xf]
        %v7391 = vld [vmem:[#allocation9 + $0xd4] sm:$0xf]
        %v7392 = vld [vmem:[#allocation9 + $0xd8] sm:$0xf]
        %v7393 = vld [vmem:[#allocation9 + $0xdc] sm:$0xf]
        %v7394 = vld [vmem:[#allocation9 + $0xe0] sm:$0xf]
        %v7395 = vld [vmem:[#allocation9 + $0xe4] sm:$0xf]
        %v7396 = vld [vmem:[#allocation9 + $0xe8] sm:$0xf]
        %v7397 = vld [vmem:[#allocation9 + $0xec] sm:$0xf]
        %v7398 = vld [vmem:[#allocation9 + $0xf0] sm:$0xf]
        %v7399 = vld [vmem:[#allocation9 + $0xf4] sm:$0xf]
        %v7400 = vld [vmem:[#allocation9 + $0xf8] sm:$0xf]
        %v7401 = vld [vmem:[#allocation9 + $0xfc] sm:$0xf]
        %v7402 = vld [vmem:[%s14] sm:$0x1]
        %v7404 = vlaneseq
        %v7405 = vshrl.u32 %v7404, 7
        %v7406 = vsub.s32 0, %v7405
        %v7407 = vrot.slane %v7402, %v7406
        %v7473 = vunpack.c.l.b16 %v7338
        %v7474 = vunpack.c.l.b16 %v7339
        %v7475 = vunpack.c.l.b16 %v7340
        %v7476 = vunpack.c.l.b16 %v7341
        %v7477 = vunpack.c.l.b16 %v7342
        %v7478 = vunpack.c.l.b16 %v7343
        %v7479 = vunpack.c.l.b16 %v7344
        %v7480 = vunpack.c.l.b16 %v7345
        %v7481 = vunpack.c.l.b16 %v7346
        %v7482 = vunpack.c.l.b16 %v7347
        %v7483 = vunpack.c.l.b16 %v7348
        %v7484 = vunpack.c.l.b16 %v7349
        %v7485 = vunpack.c.l.b16 %v7350
        %v7486 = vunpack.c.l.b16 %v7351
        %v7487 = vunpack.c.l.b16 %v7352
        %v7488 = vunpack.c.l.b16 %v7353
        %v7489 = vunpack.c.l.b16 %v7354
        %v7490 = vunpack.c.l.b16 %v7355
        %v7491 = vunpack.c.l.b16 %v7356
        %v7492 = vunpack.c.l.b16 %v7357
        %v7493 = vunpack.c.l.b16 %v7358
        %v7494 = vunpack.c.l.b16 %v7359
        %v7495 = vunpack.c.l.b16 %v7360
        %v7496 = vunpack.c.l.b16 %v7361
        %v7497 = vunpack.c.l.b16 %v7362
        %v7498 = vunpack.c.l.b16 %v7363
        %v7499 = vunpack.c.l.b16 %v7364
        %v7500 = vunpack.c.l.b16 %v7365
        %v7501 = vunpack.c.l.b16 %v7366
        %v7502 = vunpack.c.l.b16 %v7367
        %v7503 = vunpack.c.l.b16 %v7368
        %v7504 = vunpack.c.l.b16 %v7369
        %v7505 = vunpack.c.l.b16 %v7370
        %v7506 = vunpack.c.l.b16 %v7371
        %v7507 = vunpack.c.l.b16 %v7372
        %v7508 = vunpack.c.l.b16 %v7373
        %v7509 = vunpack.c.l.b16 %v7374
        %v7510 = vunpack.c.l.b16 %v7375
        %v7511 = vunpack.c.l.b16 %v7376
        %v7512 = vunpack.c.l.b16 %v7377
        %v7513 = vunpack.c.l.b16 %v7378
        %v7514 = vunpack.c.l.b16 %v7379
        %v7515 = vunpack.c.l.b16 %v7380
        %v7516 = vunpack.c.l.b16 %v7381
        %v7517 = vunpack.c.l.b16 %v7382
        %v7518 = vunpack.c.l.b16 %v7383
        %v7519 = vunpack.c.l.b16 %v7384
        %v7520 = vunpack.c.l.b16 %v7385
        %v7521 = vunpack.c.l.b16 %v7386
        %v7522 = vunpack.c.l.b16 %v7387
        %v7523 = vunpack.c.l.b16 %v7388
        %v7524 = vunpack.c.l.b16 %v7389
        %v7525 = vunpack.c.l.b16 %v7390
        %v7526 = vunpack.c.l.b16 %v7391
        %v7527 = vunpack.c.l.b16 %v7392
        %v7528 = vunpack.c.l.b16 %v7393
        %v7529 = vunpack.c.l.b16 %v7394
        %v7530 = vunpack.c.l.b16 %v7395
        %v7531 = vunpack.c.l.b16 %v7396
        %v7532 = vunpack.c.l.b16 %v7397
        %v7533 = vunpack.c.l.b16 %v7398
        %v7534 = vunpack.c.l.b16 %v7399
        %v7535 = vunpack.c.l.b16 %v7400
        %v7536 = vunpack.c.l.b16 %v7401
        %v7537 = vpack.c.b16 %v7474, %v7473
        %v7538 = vpack.c.b16 %v7476, %v7475
        %v7539 = vpack.c.b16 %v7478, %v7477
        %v7540 = vpack.c.b16 %v7480, %v7479
        %v7541 = vpack.c.b16 %v7482, %v7481
        %v7542 = vpack.c.b16 %v7484, %v7483
        %v7543 = vpack.c.b16 %v7486, %v7485
        %v7544 = vpack.c.b16 %v7488, %v7487
        %v7545 = vpack.c.b16 %v7490, %v7489
        %v7546 = vpack.c.b16 %v7492, %v7491
        %v7547 = vpack.c.b16 %v7494, %v7493
        %v7548 = vpack.c.b16 %v7496, %v7495
        %v7549 = vpack.c.b16 %v7498, %v7497
        %v7550 = vpack.c.b16 %v7500, %v7499
        %v7551 = vpack.c.b16 %v7502, %v7501
        %v7552 = vpack.c.b16 %v7504, %v7503
        %v7553 = vpack.c.b16 %v7506, %v7505
        %v7554 = vpack.c.b16 %v7508, %v7507
        %v7555 = vpack.c.b16 %v7510, %v7509
        %v7556 = vpack.c.b16 %v7512, %v7511
        %v7557 = vpack.c.b16 %v7514, %v7513
        %v7558 = vpack.c.b16 %v7516, %v7515
        %v7559 = vpack.c.b16 %v7518, %v7517
        %v7560 = vpack.c.b16 %v7520, %v7519
        %v7561 = vpack.c.b16 %v7522, %v7521
        %v7562 = vpack.c.b16 %v7524, %v7523
        %v7563 = vpack.c.b16 %v7526, %v7525
        %v7564 = vpack.c.b16 %v7528, %v7527
        %v7565 = vpack.c.b16 %v7530, %v7529
        %v7566 = vpack.c.b16 %v7532, %v7531
        %v7567 = vpack.c.b16 %v7534, %v7533
        %v7568 = vpack.c.b16 %v7536, %v7535
        %7601 = vmatprep.subr.bf16.mxu0 0
        %7602 = vmatpush1.bf16.msra.mxu0 %v7537
        %7603 = vmatprep.subr.bf16.mxu0 0
        %7604 = vmatpush1.bf16.msra.mxu0 %v7538
        %7605 = vmatprep.subr.bf16.mxu0 0
        %7606 = vmatpush1.bf16.msra.mxu0 %v7539
        %7607 = vmatprep.subr.bf16.mxu0 0
        %7608 = vmatpush1.bf16.msra.mxu0 %v7540
        %7609 = vmatprep.subr.bf16.mxu0 0
        %7610 = vmatpush1.bf16.msra.mxu0 %v7541
        %7611 = vmatprep.subr.bf16.mxu0 0
        %7612 = vmatpush1.bf16.msra.mxu0 %v7542
        %7613 = vmatprep.subr.bf16.mxu0 0
        %7614 = vmatpush1.bf16.msra.mxu0 %v7543
        %7615 = vmatprep.subr.bf16.mxu0 0
        %7616 = vmatpush1.bf16.msra.mxu0 %v7544
        %7617 = vmatprep.subr.bf16.mxu0 0
        %7618 = vmatpush1.bf16.msra.mxu0 %v7545
        %7619 = vmatprep.subr.bf16.mxu0 0
        %7620 = vmatpush1.bf16.msra.mxu0 %v7546
        %7621 = vmatprep.subr.bf16.mxu0 0
        %7622 = vmatpush1.bf16.msra.mxu0 %v7547
        %7623 = vmatprep.subr.bf16.mxu0 0
        %7624 = vmatpush1.bf16.msra.mxu0 %v7548
        %7625 = vmatprep.subr.bf16.mxu0 0
        %7626 = vmatpush1.bf16.msra.mxu0 %v7549
        %7627 = vmatprep.subr.bf16.mxu0 0
        %7628 = vmatpush1.bf16.msra.mxu0 %v7550
        %7629 = vmatprep.subr.bf16.mxu0 0
        %7630 = vmatpush1.bf16.msra.mxu0 %v7551
        %7631 = vmatprep.subr.bf16.mxu0 0
        %7632 = vmatpush1.bf16.msra.mxu0 %v7552
        %7633 = vmatprep.mubr.bf16.mxu0 %v7307
        %7634 = vmatmul.mubr.bf16.gmra.mrb[0].mxu0 %v7306
        %v7635 = vpop.f32.mrb[0].mxu0
        %v7636 = vadd.f32 %v7407, %v7635
        %v7637 = vpop.f32.mrb[0].mxu0
        %v7638 = vpop.f32.mrb[0].mxu0
        %v7639 = vadd.f32 %v7407, %v7638
        %v7640 = vpop.f32.mrb[0].mxu0
        %7641 = vmatprep.mubr.bf16.mxu0 %v7311
        %7642 = vmatmul.mubr.bf16.gmra.mrb[0].mxu0 %v7310
        %v7643 = vpop.f32.mrb[0].mxu0
        %v7644 = vadd.f32 %v7407, %v7643
        %v7645 = vpop.f32.mrb[0].mxu0
        %v7646 = vpop.f32.mrb[0].mxu0
        %v7647 = vadd.f32 %v7407, %v7646
        %v7648 = vpop.f32.mrb[0].mxu0
        %7649 = vmatprep.mubr.bf16.mxu0 %v7315
        %7650 = vmatmul.mubr.bf16.gmra.mrb[0].mxu0 %v7314
        %v7651 = vpop.f32.mrb[0].mxu0
        %v7652 = vadd.f32 %v7407, %v7651
        %v7653 = vpop.f32.mrb[0].mxu0
        %v7654 = vpop.f32.mrb[0].mxu0
        %v7655 = vadd.f32 %v7407, %v7654
        %v7656 = vpop.f32.mrb[0].mxu0
        %7657 = vmatprep.mubr.bf16.mxu0 %v7319
        %7658 = vmatmul.mubr.bf16.gmra.mrb[0].mxu0 %v7318
        %v7659 = vpop.f32.mrb[0].mxu0
        %v7660 = vadd.f32 %v7407, %v7659
        %v7661 = vpop.f32.mrb[0].mxu0
        %v7662 = vpop.f32.mrb[0].mxu0
        %v7663 = vadd.f32 %v7407, %v7662
        %v7664 = vpop.f32.mrb[0].mxu0
        %7665 = vmatprep.mubr.bf16.mxu0 %v7323
        %7666 = vmatmul.mubr.bf16.gmra.mrb[0].mxu0 %v7322
        %v7667 = vpop.f32.mrb[0].mxu0
        %v7668 = vadd.f32 %v7407, %v7667
        %v7669 = vpop.f32.mrb[0].mxu0
        %v7670 = vpop.f32.mrb[0].mxu0
        %v7671 = vadd.f32 %v7407, %v7670
        %v7672 = vpop.f32.mrb[0].mxu0
        %7673 = vmatprep.mubr.bf16.mxu0 %v7327
        %7674 = vmatmul.mubr.bf16.gmra.mrb[0].mxu0 %v7326
        %v7675 = vpop.f32.mrb[0].mxu0
        %v7676 = vadd.f32 %v7407, %v7675
        %v7677 = vpop.f32.mrb[0].mxu0
        %v7678 = vpop.f32.mrb[0].mxu0
        %v7679 = vadd.f32 %v7407, %v7678
        %v7680 = vpop.f32.mrb[0].mxu0
        %7681 = vmatprep.mubr.bf16.mxu0 %v7331
        %7682 = vmatmul.mubr.bf16.gmra.mrb[0].mxu0 %v7330
        %v7683 = vpop.f32.mrb[0].mxu0
        %v7684 = vadd.f32 %v7407, %v7683
        %v7685 = vpop.f32.mrb[0].mxu0
        %v7686 = vpop.f32.mrb[0].mxu0
        %v7687 = vadd.f32 %v7407, %v7686
        %v7688 = vpop.f32.mrb[0].mxu0
        %7689 = vmatprep.mubr.bf16.mxu0 %v7335
        %7690 = vmatmul.mubr.bf16.gmra.mrb[0].mxu0 %v7334
        %v7691 = vpop.f32.mrb[0].mxu0
        %v7692 = vadd.f32 %v7407, %v7691
        %v7693 = vpop.f32.mrb[0].mxu0
        %v7694 = vpop.f32.mrb[0].mxu0
        %v7695 = vadd.f32 %v7407, %v7694
        %v7696 = vpop.f32.mrb[0].mxu0
        %7697 = vdwg.mxu0
        %7698 = vmatprep.subr.bf16.mxu0 0
        %7699 = vmatpush1.bf16.msra.mxu0 %v7553
        %7700 = vmatprep.subr.bf16.mxu0 0
        %7701 = vmatpush1.bf16.msra.mxu0 %v7554
        %7702 = vmatprep.subr.bf16.mxu0 0
        %7703 = vmatpush1.bf16.msra.mxu0 %v7555
        %7704 = vmatprep.subr.bf16.mxu0 0
        %7705 = vmatpush1.bf16.msra.mxu0 %v7556
        %7706 = vmatprep.subr.bf16.mxu0 0
        %7707 = vmatpush1.bf16.msra.mxu0 %v7557
        %7708 = vmatprep.subr.bf16.mxu0 0
        %7709 = vmatpush1.bf16.msra.mxu0 %v7558
        %7710 = vmatprep.subr.bf16.mxu0 0
        %7711 = vmatpush1.bf16.msra.mxu0 %v7559
        %7712 = vmatprep.subr.bf16.mxu0 0
        %7713 = vmatpush1.bf16.msra.mxu0 %v7560
        %7714 = vmatprep.subr.bf16.mxu0 0
        %7715 = vmatpush1.bf16.msra.mxu0 %v7561
        %7716 = vmatprep.subr.bf16.mxu0 0
        %7717 = vmatpush1.bf16.msra.mxu0 %v7562
        %7718 = vmatprep.subr.bf16.mxu0 0
        %7719 = vmatpush1.bf16.msra.mxu0 %v7563
        %7720 = vmatprep.subr.bf16.mxu0 0
        %7721 = vmatpush1.bf16.msra.mxu0 %v7564
        %7722 = vmatprep.subr.bf16.mxu0 0
        %7723 = vmatpush1.bf16.msra.mxu0 %v7565
        %7724 = vmatprep.subr.bf16.mxu0 0
        %7725 = vmatpush1.bf16.msra.mxu0 %v7566
        %7726 = vmatprep.subr.bf16.mxu0 0
        %7727 = vmatpush1.bf16.msra.mxu0 %v7567
        %7728 = vmatprep.subr.bf16.mxu0 0
        %7729 = vmatpush1.bf16.msra.mxu0 %v7568
        %7730 = vmatprep.mubr.bf16.mxu0 %v7309
        %7731 = vmatmul.mubr.bf16.gmra.mrb[0].mxu0 %v7308
        %v7732 = vpop.f32.mrb[0].mxu0
        %v7733 = vadd.f32 %v7636, %v7732
        %v7734 = vpop.f32.mrb[0].mxu0
        %v7735 = vpop.f32.mrb[0].mxu0
        %v7736 = vadd.f32 %v7639, %v7735
        %v7737 = vpop.f32.mrb[0].mxu0
        %7738 = vmatprep.mubr.bf16.mxu0 %v7313
        %7739 = vmatmul.mubr.bf16.gmra.mrb[0].mxu0 %v7312
        %v7740 = vpop.f32.mrb[0].mxu0
        %v7741 = vadd.f32 %v7644, %v7740
        %v7742 = vpop.f32.mrb[0].mxu0
        %v7743 = vpop.f32.mrb[0].mxu0
        %v7744 = vadd.f32 %v7647, %v7743
        %v7745 = vpop.f32.mrb[0].mxu0
        %7746 = vmatprep.mubr.bf16.mxu0 %v7317
        %7747 = vmatmul.mubr.bf16.gmra.mrb[0].mxu0 %v7316
        %v7748 = vpop.f32.mrb[0].mxu0
        %v7749 = vadd.f32 %v7652, %v7748
        %v7750 = vpop.f32.mrb[0].mxu0
        %v7751 = vpop.f32.mrb[0].mxu0
        %v7752 = vadd.f32 %v7655, %v7751
        %v7753 = vpop.f32.mrb[0].mxu0
        %7754 = vmatprep.mubr.bf16.mxu0 %v7321
        %7755 = vmatmul.mubr.bf16.gmra.mrb[0].mxu0 %v7320
        %v7756 = vpop.f32.mrb[0].mxu0
        %v7757 = vadd.f32 %v7660, %v7756
        %v7758 = vpop.f32.mrb[0].mxu0
        %v7759 = vpop.f32.mrb[0].mxu0
        %v7760 = vadd.f32 %v7663, %v7759
        %v7761 = vpop.f32.mrb[0].mxu0
        %7762 = vmatprep.mubr.bf16.mxu0 %v7325
        %7763 = vmatmul.mubr.bf16.gmra.mrb[0].mxu0 %v7324
        %v7764 = vpop.f32.mrb[0].mxu0
        %v7765 = vadd.f32 %v7668, %v7764
        %v7766 = vpop.f32.mrb[0].mxu0
        %v7767 = vpop.f32.mrb[0].mxu0
        %v7768 = vadd.f32 %v7671, %v7767
        %v7769 = vpop.f32.mrb[0].mxu0
        %7770 = vmatprep.mubr.bf16.mxu0 %v7329
        %7771 = vmatmul.mubr.bf16.gmra.mrb[0].mxu0 %v7328
        %v7772 = vpop.f32.mrb[0].mxu0
        %v7773 = vadd.f32 %v7676, %v7772
        %v7774 = vpop.f32.mrb[0].mxu0
        %v7775 = vpop.f32.mrb[0].mxu0
        %v7776 = vadd.f32 %v7679, %v7775
        %v7777 = vpop.f32.mrb[0].mxu0
        %7778 = vmatprep.mubr.bf16.mxu0 %v7333
        %7779 = vmatmul.mubr.bf16.gmra.mrb[0].mxu0 %v7332
        %v7780 = vpop.f32.mrb[0].mxu0
        %v7781 = vadd.f32 %v7684, %v7780
        %v7782 = vpop.f32.mrb[0].mxu0
        %v7783 = vpop.f32.mrb[0].mxu0
        %v7784 = vadd.f32 %v7687, %v7783
        %v7785 = vpop.f32.mrb[0].mxu0
        %7786 = vmatprep.mubr.bf16.mxu0 %v7337
        %7787 = vmatmul.mubr.bf16.gmra.mrb[0].mxu0 %v7336
        %v7788 = vpop.f32.mrb[0].mxu0
        %v7789 = vadd.f32 %v7692, %v7788
        %v7790 = vpop.f32.mrb[0].mxu0
        %v7791 = vpop.f32.mrb[0].mxu0
        %v7792 = vadd.f32 %v7695, %v7791
        %v7793 = vpop.f32.mrb[0].mxu0
        %7794 = vdwg.mxu0
        %v7795 = vadd.f32 %v7733, %v7733
        %v7796 = vadd.f32 %v7736, %v7736
        %v7797 = vadd.f32 %v7741, %v7741
        %v7798 = vadd.f32 %v7744, %v7744
        %v7799 = vadd.f32 %v7749, %v7749
        %v7800 = vadd.f32 %v7752, %v7752
        %v7801 = vadd.f32 %v7757, %v7757
        %v7802 = vadd.f32 %v7760, %v7760
        %v7803 = vadd.f32 %v7765, %v7765
        %v7804 = vadd.f32 %v7768, %v7768
        %v7805 = vadd.f32 %v7773, %v7773
        %v7806 = vadd.f32 %v7776, %v7776
        %v7807 = vadd.f32 %v7781, %v7781
        %v7808 = vadd.f32 %v7784, %v7784
        %v7809 = vadd.f32 %v7789, %v7789
        %v7810 = vadd.f32 %v7792, %v7792
        %7811 = vst [vmem:[%s564] sm:$0xff] %v7795
        %7812 = vst [vmem:[%s564 + $0x8] sm:$0xff] %v7796
        %7813 = vst [vmem:[%s564 + $0x10] sm:$0xff] %v7797
        %7814 = vst [vmem:[%s564 + $0x18] sm:$0xff] %v7798
        %7815 = vst [vmem:[%s564 + $0x20] sm:$0xff] %v7799
        %7816 = vst [vmem:[%s564 + $0x28] sm:$0xff] %v7800
        %7817 = vst [vmem:[%s564 + $0x30] sm:$0xff] %v7801
        %7818 = vst [vmem:[%s564 + $0x38] sm:$0xff] %v7802
        %7819 = vst [vmem:[%s564 + $0x40] sm:$0xff] %v7803
        %7820 = vst [vmem:[%s564 + $0x48] sm:$0xff] %v7804
        %7821 = vst [vmem:[%s564 + $0x50] sm:$0xff] %v7805
        %7822 = vst [vmem:[%s564 + $0x58] sm:$0xff] %v7806
        %7823 = vst [vmem:[%s564 + $0x60] sm:$0xff] %v7807
        %7824 = vst [vmem:[%s564 + $0x68] sm:$0xff] %v7808
        %7825 = vst [vmem:[%s564 + $0x70] sm:$0xff] %v7809
        %7826 = vst [vmem:[%s564 + $0x78] sm:$0xff] %v7810
        %s7827 = sand.u32 %s366, 1
        %s7828 = scalar_lea.sflag [#allocation5], %s7827
        %s7829 = sand.u32 %s366, 1
        %s7830 = smul.addr %s7829, 128
        %s7831 = scalar_lea.vmem [#allocation11], %s7830
        // Predicated region
        $region97: #{block_forward_pallas.1} parent=79 // pred_check
          %p7832 = pneg %p376
        $region98: #{block_forward_pallas.1} parent=79 // pred_check_branch
          %7834 = sbr.rel (%p7832) target = $region100
        $region99: #{block_forward_pallas.1} parent=79 // pred_region
          %s7835 = smul.u32 16, %s33
          %s7837 = ssub.s32 2048, 2048
          %7838 = vsyncadd %s7828, %s7837
          %s7839 = smul.addr %s7835, 128
          %s7840 = scalar_lea.hbm %s15, %s7839
          %s7841 = sshll.u32 %s7831, 4
          %s7842 = int_to_ptr.vmem [resolvable:$true] %s7841
          %7847 = dma.vmem_to_hbm [thread:$0]  %s7842, 2048, %s7840, %s7828, 128, 128, 8
        $region100: #{block_forward_pallas.1} parent=79 // pred_fallthru
          _
      $region80: #{block_forward_pallas.1} parent=5 // pred_fallthru
        _
      %p7848 = scmp.le.s32.totalorder 2, %s28
      // Predicated region
      $region101: #{block_forward_pallas.1} parent=5 // pred_check
        %p7849 = pneg %p7848
      $region102: #{block_forward_pallas.1} parent=5 // pred_check_branch
        %7851 = sbr.rel (%p7849) target = $region104
      $region103: #{block_forward_pallas.1} parent=5 // pred_region
        %s7852 = ssub.s32 %s28, 2
        // Predicated region
        $region105: #{block_forward_pallas.1} parent=103 // pred_check
          %p7853 = pneg %p382
        $region106: #{block_forward_pallas.1} parent=103 // pred_check_branch
          %7855 = sbr.rel (%p7853) target = $region108
        $region107: #{block_forward_pallas.1} parent=103 // pred_region
          %s7856 = sand.u32 %s367, 1
          %s7857 = scalar_lea.sflag [#allocation5], %s7856
          %s7858 = sand.u32 %s367, 1
          %s7859 = smul.addr %s7858, 128
          %s7860 = scalar_lea.vmem [#allocation11], %s7859
          %7861 = dma.done %s7857, 2048
        $region108: #{block_forward_pallas.1} parent=103 // pred_fallthru
          _
      $region104: #{block_forward_pallas.1} parent=5 // pred_fallthru
        _
    $region6: #{block_forward_pallas.1} parent=1 // loop_footer
      %s32 = sadd.s32 1, %s28
    $region7: #{block_forward_pallas.1} parent=1 // loop_footer_branch
      %27 = sbr.rel target = $region3
    $region8: #{block_forward_pallas.1} parent=1 // loop_exit
      _
    %7862 = vsyncpa [#allocation4], 1
    %s7863 = scalar_lea.sflag [#allocation4], 1
    %7864 = vsyncpa %s7863, 1
    %7865 = vsyncpa [#allocation7], 1
    %7866 = vsyncpa [#allocation10], 1
    %7867 = vsyncpa [#allocation5], 1
    %s7868 = scalar_lea.sflag [#allocation5], 1
    %7869 = vsyncpa %s7868, 1

</llo_original>
